<compile_context>
chip_gen: v7x
topology: tpu7x:2x2x1
jax: 0.10.0
libtpu: 0.0.40
codegen_flags: <defaults>
</compile_context>

<pallas_src>
import math
import jax
import jax.numpy as jnp
from jax import lax
from jax.experimental import pallas as pl
from jax.experimental.pallas import tpu as pltpu

# ----------------------------------------------------------------------------
# "irreps_in" for this synthetic instance: "4x0e + 4x1o + 2x2e"
IRREPS = [(4, 0), (4, 1), (2, 2)]   # (multiplicity, l)
EPS = 1e-8
NORMALIZATION = "component"          # 'component' or 'norm'
AFFINE = "per_feature"
BALANCED = False
# TODO(synk): affine modes 'unique' / 'per_l' / None are not wired into the
# kernel; only the module defaults ('component', 'per_feature') are implemented.

if BALANCED:
    _mult = 1.0 if isinstance(BALANCED, bool) else float(BALANCED)
    if NORMALIZATION == "norm":
        _BC = sum(mul * (2 * l + 1) for mul, l in IRREPS) / _mult
    else:
        _muls = [mul for mul, _ in IRREPS]
        _BC = (sum(_muls) / len(_muls)) * len(IRREPS) / _mult
else:
    _BC = 1.0
SQRT_BC = math.sqrt(_BC)

_NUM_L = len(IRREPS)
_NUM_SCALAR = sum(mul for mul, l in IRREPS if l == 0)
_D_TOTAL = sum(mul * (2 * l + 1) for mul, l in IRREPS)


# ----------------------------------------------------------------------------
# Kernel refs (in order):
#   x_0..x_{L-1}            [TBR, R*K_l]   batch-tiled, lane-dense
#   sred_0..sred_{L-1}      [R*K_l, R]     segment-reduce matrices (grid-invariant)
#   sbc_0..sbc_{L-1}        [R, R*K_l]     segment-broadcast matrices (grid-invariant)
#   w_0..w_{L-1}            [1, R*K_l]     per-feature affine weights (grid-invariant)
#   bias                    [1, R*K_0]     l=0 bias row (grid-invariant)
#   out_0..out_{L-1}        [TBR, R*K_l]
def signal_norm_kernel(*refs):
    xs = refs[0:_NUM_L]
    sreds = refs[_NUM_L:2 * _NUM_L]
    sbcs = refs[2 * _NUM_L:3 * _NUM_L]
    ws = refs[3 * _NUM_L:4 * _NUM_L]
    bias_ref = refs[4 * _NUM_L]
    outs = refs[4 * _NUM_L + 1:]

    # Pass 1: per-batch-row (segmented within the lane axis) squared sum.
    # (x*x) @ S_red does the segmented reduce on the otherwise-idle MXU, with
    # the 1/(2l+1) 'component' factor folded into S_red.
    nf = None
    for xr, sred in zip(xs, sreds):
        x = xr[...].astype(jnp.float32)                 # cast in-kernel (VPU)
        part = jnp.dot(x * x, sred[...],
                       precision=jax.lax.Precision.HIGHEST,
                       preferred_element_type=jnp.float32)       # [TBR, R]
        nf = part if nf is None else nf + part

    # 1 / (sqrt(nf + eps) / sqrt(balancing_constant)) -> EUP rsqrt
    inv = lax.rsqrt(nf + EPS) * SQRT_BC                 # [TBR, R]

    # Pass 2: broadcast inv back to the lane-dense layout (inv @ S_bcast on
    # the MXU), apply per-feature affine, l=0 bias, store lane-dense.
    for (mul, l), xr, sbc, wr, o_ref in zip(IRREPS, xs, sbcs, ws, outs):
        inv_dense = jnp.dot(inv, sbc[...],
                            precision=jax.lax.Precision.HIGHEST,
                            preferred_element_type=jnp.float32)  # [TBR, R*K_l]
        x = xr[...].astype(jnp.float32)   # re-read from VMEM ref (no f32 cache)
        y = x * inv_dense * wr[...]
        if l == 0:
            y = y + bias_ref[...]
        o_ref[...] = y.astype(o_ref.dtype)


# ----------------------------------------------------------------------------
def _pick_tbr(n_super, tbr_max):
    """Tile (in super-rows): multiple of 8, >=2 grid steps when possible."""
    if n_super <= 8:
        return n_super                      # full extent (allowed by (8,128) rule)
    half = ((n_super // 2) // 8) * 8        # aim for >=2 grid steps (megacore)
    return max(8, min(tbr_max, half if half >= 8 else 8))


def signal_norm_forward(x_dict, weights, bias, *, r=32, tbr=256):
    """x_dict: {l: [B, mul_l, 2l+1]}, weights: {l: [mul_l]}, bias: [num_scalar, 1]."""
    B = next(iter(x_dict.values())).shape[0]

    # Batch-fold factor for lane density (R*K_l multiples of 128 when possible).
    R = r
    while R > 1 and B % R != 0:
        R //= 2
    n_super = B // R
    TBR = _pick_tbr(n_super, tbr)
    grid = (pl.cdiv(n_super, TBR),)

    x_flat, sred_mats, sbc_mats, w_rows = [], [], [], []
    for (mul, l) in IRREPS:
        dim_m = 2 * l + 1
        K = mul * dim_m
        # contiguous reshape: pure view, zero extra HBM traffic
        x_flat.append(x_dict[l].reshape(n_super, R * K))
        # segment matrices: block-diag reduce / broadcast over the K_l segment
        c = (1.0 / dim_m) if NORMALIZATION == "component" else 1.0
        sred_mats.append(jnp.kron(jnp.eye(R, dtype=jnp.float32),
                                  jnp.ones((K, 1), jnp.float32)) * c)      # [R*K, R]
        sbc_mats.append(jnp.kron(jnp.eye(R, dtype=jnp.float32),
                                 jnp.ones((1, K), jnp.float32)))           # [R, R*K]
        # per-feature weight broadcast over m, tiled over the R folded rows
        w_rows.append(jnp.tile(jnp.repeat(weights[l].astype(jnp.float32), dim_m),
                               R).reshape(1, R * K))
    K0 = _NUM_SCALAR  # l=0 segment width (2l+1 == 1)
    bias_row = jnp.tile(bias.astype(jnp.float32).reshape(-1), R).reshape(1, R * K0)

    in_specs = []
    for (mul, l) in IRREPS:                                   # batch-tiled x blocks
        K = mul * (2 * l + 1)
        in_specs.append(pl.BlockSpec((TBR, R * K), lambda i: (i, 0)))
    for (mul, l) in IRREPS:                                   # reduce matrices
        K = mul * (2 * l + 1)
        in_specs.append(pl.BlockSpec((R * K, R), lambda i: (0, 0)))
    for (mul, l) in IRREPS:                                   # broadcast matrices
        K = mul * (2 * l + 1)
        in_specs.append(pl.BlockSpec((R, R * K), lambda i: (0, 0)))
    for (mul, l) in IRREPS:                                   # weight rows
        K = mul * (2 * l + 1)
        in_specs.append(pl.BlockSpec((1, R * K), lambda i: (0, 0)))
    in_specs.append(pl.BlockSpec((1, R * K0), lambda i: (0, 0)))   # bias row

    out_shapes = tuple(
        jax.ShapeDtypeStruct((n_super, R * mul * (2 * l + 1)), x_dict[l].dtype)
        for (mul, l) in IRREPS
    )
    out_specs = tuple(
        pl.BlockSpec((TBR, R * mul * (2 * l + 1)), lambda i: (i, 0))
        for (mul, l) in IRREPS
    )

    itemsize = jnp.dtype(next(iter(x_dict.values())).dtype).itemsize
    cost = pl.CostEstimate(
        flops=int(4 * B * R * _D_TOTAL + 8 * B * _D_TOTAL),
        transcendentals=int(B),
        bytes_accessed=int(2 * B * _D_TOTAL * itemsize),
    )

    outs = pl.pallas_call(
        signal_norm_kernel,
        out_shape=out_shapes,
        grid=grid,
        in_specs=in_specs,
        out_specs=out_specs,
        cost_estimate=cost,
        compiler_params=pltpu.CompilerParams(
            dimension_semantics=("parallel",)),      # megacore sharding on v7x
    )(*x_flat, *sred_mats, *sbc_mats, *w_rows, bias_row)

    # reshape back to the dict 'bim' layout (free views)
    return {
        l: outs[idx].reshape(B, mul, 2 * l + 1)
        for idx, (mul, l) in enumerate(IRREPS)
    }


# ----------------------------------------------------------------------------
# Pure-JAX reference (mirrors the PyTorch forward exactly) for verification.
def signal_norm_reference(x_dict, weights, bias):
    nf = 0.0
    for l, feat in x_dict.items():
        if NORMALIZATION == "norm":
            nf = nf + jnp.sum(jnp.sum(feat ** 2, axis=-1), axis=-1)
        else:
            nf = nf + jnp.sum(jnp.mean(feat ** 2, axis=-1), axis=-1)
    norm_factors = jnp.sqrt(nf + EPS) / math.sqrt(_BC)            # [B]
    out = {}
    for l, feat in x_dict.items():
        o = jnp.einsum("bim,b,i->bim", feat, 1.0 / norm_factors, weights[l])
        if l == 0:
            o = o + bias                                          # [num_scalar, 1]
        out[l] = o
    return out


if __name__ == "__main__":
    key = jax.random.PRNGKey(0)
    B = 512          # 16 super-rows at R=32 -> TBR=8, a real 2-step pipelined grid

    # deterministic inputs: one tensor per l, shape [B, mul, 2l+1]
    x_dict = {}
    for (mul, l) in IRREPS:
        key, sub = jax.random.split(key)
        x_dict[l] = jax.random.normal(sub, (B, mul, 2 * l + 1), dtype=jnp.float32)

    # deterministic parameters (same shapes as the module __init__:
    #   per_feature weights[l] ~ [mul_l], bias ~ [num_scalar, 1])
    weights = {}
    for (mul, l) in IRREPS:
        key, sub = jax.random.split(key)
        weights[l] = 1.0 + 0.1 * jax.random.normal(sub, (mul,), dtype=jnp.float32)
    key, sub = jax.random.split(key)
    bias = 0.1 * jax.random.normal(sub, (_NUM_SCALAR, 1), dtype=jnp.float32)

    out = signal_norm_forward(x_dict, weights, bias)
    out = jax.tree_util.tree_map(jax.block_until_ready, out)

    ref = signal_norm_reference(x_dict, weights, bias)
    for l in x_dict:
        assert out[l].shape == x_dict[l].shape
        assert jnp.allclose(out[l], ref[l], atol=1e-5, rtol=1e-5), f"mismatch at l={l}"

    print("KERNEL_OK")
</pallas_src>

<mosaic_0001>
module attributes {stable_mosaic.version = 11 : i64} {
  func.func @signal_norm_kernel(%arg0: i32, %arg1: memref<8x128xf32, #tpu.memory_space<vmem>>, %arg2: memref<8x384xf32, #tpu.memory_space<vmem>>, %arg3: memref<8x320xf32, #tpu.memory_space<vmem>>, %arg4: memref<128x32xf32, #tpu.memory_space<vmem>>, %arg5: memref<384x32xf32, #tpu.memory_space<vmem>>, %arg6: memref<320x32xf32, #tpu.memory_space<vmem>>, %arg7: memref<32x128xf32, #tpu.memory_space<vmem>>, %arg8: memref<32x384xf32, #tpu.memory_space<vmem>>, %arg9: memref<32x320xf32, #tpu.memory_space<vmem>>, %arg10: memref<1x128xf32, #tpu.memory_space<vmem>>, %arg11: memref<1x384xf32, #tpu.memory_space<vmem>>, %arg12: memref<1x320xf32, #tpu.memory_space<vmem>>, %arg13: memref<1x128xf32, #tpu.memory_space<vmem>>, %arg14: memref<8x128xf32, #tpu.memory_space<vmem>>, %arg15: memref<8x384xf32, #tpu.memory_space<vmem>>, %arg16: memref<8x320xf32, #tpu.memory_space<vmem>>) attributes {dimension_semantics = [#tpu.dimension_semantics<parallel>], iteration_bounds = array<i64: 2>, scalar_prefetch = 0 : i64, scratch_operands = 0 : i64, tpu.core_type = #tpu.core_type<tc>, window_params = [{transform_indices = @transform_0, window_bounds = array<i64: 8, 128>}, {transform_indices = @transform_1, window_bounds = array<i64: 8, 384>}, {transform_indices = @transform_2, window_bounds = array<i64: 8, 320>}, {pipeline_mode = #tpu.pipeline_mode<synchronous>, transform_indices = @transform_3, window_bounds = array<i64: 128, 32>}, {pipeline_mode = #tpu.pipeline_mode<synchronous>, transform_indices = @transform_4, window_bounds = array<i64: 384, 32>}, {pipeline_mode = #tpu.pipeline_mode<synchronous>, transform_indices = @transform_5, window_bounds = array<i64: 320, 32>}, {pipeline_mode = #tpu.pipeline_mode<synchronous>, transform_indices = @transform_6, window_bounds = array<i64: 32, 128>}, {pipeline_mode = #tpu.pipeline_mode<synchronous>, transform_indices = @transform_7, window_bounds = array<i64: 32, 384>}, {pipeline_mode = #tpu.pipeline_mode<synchronous>, transform_indices = @transform_8, window_bounds = array<i64: 32, 320>}, {pipeline_mode = #tpu.pipeline_mode<synchronous>, transform_indices = @transform_9, window_bounds = array<i64: 1, 128>}, {pipeline_mode = #tpu.pipeline_mode<synchronous>, transform_indices = @transform_10, window_bounds = array<i64: 1, 384>}, {pipeline_mode = #tpu.pipeline_mode<synchronous>, transform_indices = @transform_11, window_bounds = array<i64: 1, 320>}, {pipeline_mode = #tpu.pipeline_mode<synchronous>, transform_indices = @transform_12, window_bounds = array<i64: 1, 128>}, {transform_indices = @transform_13, window_bounds = array<i64: 8, 128>}, {transform_indices = @transform_14, window_bounds = array<i64: 8, 384>}, {transform_indices = @transform_15, window_bounds = array<i64: 8, 320>}]} {
    %c0 = arith.constant 0 : index
    %c0_0 = arith.constant 0 : index
    %0 = vector.load %arg1[%c0, %c0_0] : memref<8x128xf32, #tpu.memory_space<vmem>>, vector<8x128xf32>
    %1 = arith.mulf %0, %0 : vector<8x128xf32>
    %c0_1 = arith.constant 0 : index
    %c0_2 = arith.constant 0 : index
    %2 = vector.load %arg4[%c0_1, %c0_2] : memref<128x32xf32, #tpu.memory_space<vmem>>, vector<128x32xf32>
    %cst = arith.constant dense<0.000000e+00> : vector<8x32xf32>
    %3 = tpu.matmul %1, %2, %cst {dimension_numbers = #tpu.dot_dimension_numbers<[1], [0], [0], [1], [0, 0, 1, 1], [], []>, precision = #tpu.contract_precision<fp32>} : vector<8x128xf32>, vector<128x32xf32>, vector<8x32xf32> -> vector<8x32xf32>
    %c0_3 = arith.constant 0 : index
    %c0_4 = arith.constant 0 : index
    %4 = vector.load %arg2[%c0_3, %c0_4] : memref<8x384xf32, #tpu.memory_space<vmem>>, vector<8x384xf32>
    %5 = arith.mulf %4, %4 : vector<8x384xf32>
    %c0_5 = arith.constant 0 : index
    %c0_6 = arith.constant 0 : index
    %6 = vector.load %arg5[%c0_5, %c0_6] : memref<384x32xf32, #tpu.memory_space<vmem>>, vector<384x32xf32>
    %cst_7 = arith.constant dense<0.000000e+00> : vector<8x32xf32>
    %7 = tpu.matmul %5, %6, %cst_7 {dimension_numbers = #tpu.dot_dimension_numbers<[1], [0], [0], [1], [0, 0, 1, 1], [], []>, precision = #tpu.contract_precision<fp32>} : vector<8x384xf32>, vector<384x32xf32>, vector<8x32xf32> -> vector<8x32xf32>
    %8 = arith.addf %3, %7 : vector<8x32xf32>
    %c0_8 = arith.constant 0 : index
    %c0_9 = arith.constant 0 : index
    %9 = vector.load %arg3[%c0_8, %c0_9] : memref<8x320xf32, #tpu.memory_space<vmem>>, vector<8x320xf32>
    %10 = arith.mulf %9, %9 : vector<8x320xf32>
    %c0_10 = arith.constant 0 : index
    %c0_11 = arith.constant 0 : index
    %11 = vector.load %arg6[%c0_10, %c0_11] : memref<320x32xf32, #tpu.memory_space<vmem>>, vector<320x32xf32>
    %cst_12 = arith.constant dense<0.000000e+00> : vector<8x32xf32>
    %12 = tpu.matmul %10, %11, %cst_12 {dimension_numbers = #tpu.dot_dimension_numbers<[1], [0], [0], [1], [0, 0, 1, 1], [], []>, precision = #tpu.contract_precision<fp32>} : vector<8x320xf32>, vector<320x32xf32>, vector<8x32xf32> -> vector<8x32xf32>
    %13 = arith.addf %8, %12 : vector<8x32xf32>
    %cst_13 = arith.constant 9.99999993E-9 : f32
    %14 = vector.broadcast %cst_13 : f32 to vector<8x32xf32>
    %15 = arith.addf %13, %14 : vector<8x32xf32>
    %16 = math.rsqrt %15 : vector<8x32xf32>
    %cst_14 = arith.constant 1.000000e+00 : f32
    %17 = vector.broadcast %cst_14 : f32 to vector<8x32xf32>
    %18 = arith.mulf %16, %17 : vector<8x32xf32>
    %c0_15 = arith.constant 0 : index
    %c0_16 = arith.constant 0 : index
    %19 = vector.load %arg7[%c0_15, %c0_16] : memref<32x128xf32, #tpu.memory_space<vmem>>, vector<32x128xf32>
    %cst_17 = arith.constant dense<0.000000e+00> : vector<8x128xf32>
    %20 = tpu.matmul %18, %19, %cst_17 {dimension_numbers = #tpu.dot_dimension_numbers<[1], [0], [0], [1], [0, 0, 1, 1], [], []>, precision = #tpu.contract_precision<fp32>} : vector<8x32xf32>, vector<32x128xf32>, vector<8x128xf32> -> vector<8x128xf32>
    %c0_18 = arith.constant 0 : index
    %c0_19 = arith.constant 0 : index
    %21 = vector.load %arg1[%c0_18, %c0_19] : memref<8x128xf32, #tpu.memory_space<vmem>>, vector<8x128xf32>
    %22 = arith.mulf %21, %20 : vector<8x128xf32>
    %c0_20 = arith.constant 0 : index
    %c0_21 = arith.constant 0 : index
    %23 = vector.load %arg10[%c0_20, %c0_21] : memref<1x128xf32, #tpu.memory_space<vmem>>, vector<1x128xf32>
    %24 = vector.broadcast %23 : vector<1x128xf32> to vector<8x128xf32>
    %25 = arith.mulf %22, %24 : vector<8x128xf32>
    %c0_22 = arith.constant 0 : index
    %c0_23 = arith.constant 0 : index
    %26 = vector.load %arg13[%c0_22, %c0_23] : memref<1x128xf32, #tpu.memory_space<vmem>>, vector<1x128xf32>
    %27 = vector.broadcast %26 : vector<1x128xf32> to vector<8x128xf32>
    %28 = arith.addf %25, %27 : vector<8x128xf32>
    %c0_24 = arith.constant 0 : index
    %c0_25 = arith.constant 0 : index
    %29 = vector.load %arg14[%c0_24, %c0_25] : memref<8x128xf32, #tpu.memory_space<vmem>>, vector<8x128xf32>
    tpu.vector_store %arg14[%c0_24, %c0_25], %28 {strides = array<i32>} : memref<8x128xf32, #tpu.memory_space<vmem>>, vector<8x128xf32>,
    %c0_26 = arith.constant 0 : index
    %c0_27 = arith.constant 0 : index
    %30 = vector.load %arg8[%c0_26, %c0_27] : memref<32x384xf32, #tpu.memory_space<vmem>>, vector<32x384xf32>
    %cst_28 = arith.constant dense<0.000000e+00> : vector<8x384xf32>
    %31 = tpu.matmul %18, %30, %cst_28 {dimension_numbers = #tpu.dot_dimension_numbers<[1], [0], [0], [1], [0, 0, 1, 1], [], []>, precision = #tpu.contract_precision<fp32>} : vector<8x32xf32>, vector<32x384xf32>, vector<8x384xf32> -> vector<8x384xf32>
    %c0_29 = arith.constant 0 : index
    %c0_30 = arith.constant 0 : index
    %32 = vector.load %arg2[%c0_29, %c0_30] : memref<8x384xf32, #tpu.memory_space<vmem>>, vector<8x384xf32>
    %33 = arith.mulf %32, %31 : vector<8x384xf32>
    %c0_31 = arith.constant 0 : index
    %c0_32 = arith.constant 0 : index
    %34 = vector.load %arg11[%c0_31, %c0_32] : memref<1x384xf32, #tpu.memory_space<vmem>>, vector<1x384xf32>
    %35 = vector.broadcast %34 : vector<1x384xf32> to vector<8x384xf32>
    %36 = arith.mulf %33, %35 : vector<8x384xf32>
    %c0_33 = arith.constant 0 : index
    %c0_34 = arith.constant 0 : index
    %37 = vector.load %arg15[%c0_33, %c0_34] : memref<8x384xf32, #tpu.memory_space<vmem>>, vector<8x384xf32>
    tpu.vector_store %arg15[%c0_33, %c0_34], %36 {strides = array<i32>} : memref<8x384xf32, #tpu.memory_space<vmem>>, vector<8x384xf32>,
    %c0_35 = arith.constant 0 : index
    %c0_36 = arith.constant 0 : index
    %38 = vector.load %arg9[%c0_35, %c0_36] : memref<32x320xf32, #tpu.memory_space<vmem>>, vector<32x320xf32>
    %cst_37 = arith.constant dense<0.000000e+00> : vector<8x320xf32>
    %39 = tpu.matmul %18, %38, %cst_37 {dimension_numbers = #tpu.dot_dimension_numbers<[1], [0], [0], [1], [0, 0, 1, 1], [], []>, precision = #tpu.contract_precision<fp32>} : vector<8x32xf32>, vector<32x320xf32>, vector<8x320xf32> -> vector<8x320xf32>
    %c0_38 = arith.constant 0 : index
    %c0_39 = arith.constant 0 : index
    %40 = vector.load %arg3[%c0_38, %c0_39] : memref<8x320xf32, #tpu.memory_space<vmem>>, vector<8x320xf32>
    %41 = arith.mulf %40, %39 : vector<8x320xf32>
    %c0_40 = arith.constant 0 : index
    %c0_41 = arith.constant 0 : index
    %42 = vector.load %arg12[%c0_40, %c0_41] : memref<1x320xf32, #tpu.memory_space<vmem>>, vector<1x320xf32>
    %43 = vector.broadcast %42 : vector<1x320xf32> to vector<8x320xf32>
    %44 = arith.mulf %41, %43 : vector<8x320xf32>
    %c0_42 = arith.constant 0 : index
    %c0_43 = arith.constant 0 : index
    %45 = vector.load %arg16[%c0_42, %c0_43] : memref<8x320xf32, #tpu.memory_space<vmem>>, vector<8x320xf32>
    tpu.vector_store %arg16[%c0_42, %c0_43], %44 {strides = array<i32>} : memref<8x320xf32, #tpu.memory_space<vmem>>, vector<8x320xf32>,
    return
  }
  func.func @transform_0(%arg0: i32) -> (i32, i32) {
    %c0_i32 = arith.constant 0 : i32
    %c0_i32_0 = arith.constant 0 : i32
    return %arg0, %c0_i32 : i32, i32
  }
  func.func @transform_1(%arg0: i32) -> (i32, i32) {
    %c0_i32 = arith.constant 0 : i32
    %c0_i32_0 = arith.constant 0 : i32
    return %arg0, %c0_i32 : i32, i32
  }
  func.func @transform_2(%arg0: i32) -> (i32, i32) {
    %c0_i32 = arith.constant 0 : i32
    %c0_i32_0 = arith.constant 0 : i32
    return %arg0, %c0_i32 : i32, i32
  }
  func.func @transform_3(%arg0: i32) -> (i32, i32) {
    %c0_i32 = arith.constant 0 : i32
    %c0_i32_0 = arith.constant 0 : i32
    %c0_i32_1 = arith.constant 0 : i32
    return %c0_i32, %c0_i32_0 : i32, i32
  }
  func.func @transform_4(%arg0: i32) -> (i32, i32) {
    %c0_i32 = arith.constant 0 : i32
    %c0_i32_0 = arith.constant 0 : i32
    %c0_i32_1 = arith.constant 0 : i32
    return %c0_i32, %c0_i32_0 : i32, i32
  }
  func.func @transform_5(%arg0: i32) -> (i32, i32) {
    %c0_i32 = arith.constant 0 : i32
    %c0_i32_0 = arith.constant 0 : i32
    %c0_i32_1 = arith.constant 0 : i32
    return %c0_i32, %c0_i32_0 : i32, i32
  }
  func.func @transform_6(%arg0: i32) -> (i32, i32) {
    %c0_i32 = arith.constant 0 : i32
    %c0_i32_0 = arith.constant 0 : i32
    %c0_i32_1 = arith.constant 0 : i32
    return %c0_i32, %c0_i32_0 : i32, i32
  }
  func.func @transform_7(%arg0: i32) -> (i32, i32) {
    %c0_i32 = arith.constant 0 : i32
    %c0_i32_0 = arith.constant 0 : i32
    %c0_i32_1 = arith.constant 0 : i32
    return %c0_i32, %c0_i32_0 : i32, i32
  }
  func.func @transform_8(%arg0: i32) -> (i32, i32) {
    %c0_i32 = arith.constant 0 : i32
    %c0_i32_0 = arith.constant 0 : i32
    %c0_i32_1 = arith.constant 0 : i32
    return %c0_i32, %c0_i32_0 : i32, i32
  }
  func.func @transform_9(%arg0: i32) -> (i32, i32) {
    %c0_i32 = arith.constant 0 : i32
    %c0_i32_0 = arith.constant 0 : i32
    %c0_i32_1 = arith.constant 0 : i32
    return %c0_i32, %c0_i32_0 : i32, i32
  }
  func.func @transform_10(%arg0: i32) -> (i32, i32) {
    %c0_i32 = arith.constant 0 : i32
    %c0_i32_0 = arith.constant 0 : i32
    %c0_i32_1 = arith.constant 0 : i32
    return %c0_i32, %c0_i32_0 : i32, i32
  }
  func.func @transform_11(%arg0: i32) -> (i32, i32) {
    %c0_i32 = arith.constant 0 : i32
    %c0_i32_0 = arith.constant 0 : i32
    %c0_i32_1 = arith.constant 0 : i32
    return %c0_i32, %c0_i32_0 : i32, i32
  }
  func.func @transform_12(%arg0: i32) -> (i32, i32) {
    %c0_i32 = arith.constant 0 : i32
    %c0_i32_0 = arith.constant 0 : i32
    %c0_i32_1 = arith.constant 0 : i32
    return %c0_i32, %c0_i32_0 : i32, i32
  }
  func.func @transform_13(%arg0: i32) -> (i32, i32) {
    %c0_i32 = arith.constant 0 : i32
    %c0_i32_0 = arith.constant 0 : i32
    return %arg0, %c0_i32 : i32, i32
  }
  func.func @transform_14(%arg0: i32) -> (i32, i32) {
    %c0_i32 = arith.constant 0 : i32
    %c0_i32_0 = arith.constant 0 : i32
    return %arg0, %c0_i32 : i32, i32
  }
  func.func @transform_15(%arg0: i32) -> (i32, i32) {
    %c0_i32 = arith.constant 0 : i32
    %c0_i32_0 = arith.constant 0 : i32
    return %arg0, %c0_i32 : i32, i32
  }
}

</mosaic_0001>

<llo_original>
// kernel: tpu_custom_call.1
$region0: #{tpu_custom_call.1}
  #allocation0 [shape = 'u32[]', space=smem, size = 0x4, offset = 0x4, fixed_abs, tag = 'smem constant byte address 0x4 - core index']
  #allocation1 [shape = 'u32[144,128]{1,0:T(1,128)}', space=vmem, size = 0x12000, scoped, tag = 'internal scratch']
  %s0 = inlined_call_operand.vmem [shape: f32[16,128], index: 0, kind: input, shape index: {}]
  %s1 = inlined_call_operand.vmem [shape: f32[16,384], index: 1, kind: input, shape index: {}]
  %s2 = inlined_call_operand.vmem [shape: f32[16,320], index: 2, kind: input, shape index: {}]
  %s3 = inlined_call_operand.vmem [shape: f32[128,32], index: 3, kind: input, shape index: {}]
  %s4 = inlined_call_operand.vmem [shape: f32[384,32], index: 4, kind: input, shape index: {}]
  %s5 = inlined_call_operand.vmem [shape: f32[320,32], index: 5, kind: input, shape index: {}]
  %s6 = inlined_call_operand.vmem [shape: f32[32,128], index: 6, kind: input, shape index: {}]
  %s7 = inlined_call_operand.vmem [shape: f32[32,384], index: 7, kind: input, shape index: {}]
  %s8 = inlined_call_operand.vmem [shape: f32[32,320], index: 8, kind: input, shape index: {}]
  %s9 = inlined_call_operand.vmem [shape: f32[1,128], index: 9, kind: input, shape index: {}]
  %s10 = inlined_call_operand.vmem [shape: f32[1,384], index: 10, kind: input, shape index: {}]
  %s11 = inlined_call_operand.vmem [shape: f32[1,320], index: 11, kind: input, shape index: {}]
  %s12 = inlined_call_operand.vmem [shape: f32[1,128], index: 12, kind: input, shape index: {}]
  %s13 = inlined_call_operand.hbm [shape: f32[16,128], index: 13, kind: output, shape index: {0}]
  %s14 = inlined_call_operand.hbm [shape: f32[16,384], index: 14, kind: output, shape index: {1}]
  %s15 = inlined_call_operand.hbm [shape: f32[16,320], index: 15, kind: output, shape index: {2}]
  %16 = xla_tuple %s13, %s14, %s15
  %s17 = sld [smem:[#allocation0]]
  $region101: #{tpu_custom_call.1} parent=0
    _
  %s19 = ssub.s32 1, %s17
  %s20 = scalar_select 0, %s19, %s17
  $region1: #{tpu_custom_call.1} parent=0
    #allocation2 [shape = 'u8[8192]{0}', space=vmem, size = 0x2000, scoped, tag = 'output window, operand 0']
    #allocation3 [shape = 's32[2]{0}', space=sflag, size = 0x8, scoped, tag = 'scoped memory for tpu_custom_call.1']
    #allocation4 [shape = 'u8[24576]{0}', space=vmem, size = 0x6000, scoped, tag = 'output window, operand 1']
    #allocation5 [shape = 's32[2]{0}', space=sflag, size = 0x8, scoped, tag = 'scoped memory for tpu_custom_call.1']
    #allocation6 [shape = 'u8[24576]{0}', space=vmem, size = 0x6000, scoped, tag = 'output window, operand 2']
    %21 = vsyncpa [#allocation3], 0
    %s22 = scalar_lea.sflag [#allocation3], 1
    %23 = vsyncpa %s22, 0
    %24 = vsyncpa [#allocation5], 0
    %s25 = scalar_lea.sflag [#allocation5], 1
    %26 = vsyncpa %s25, 0
    loop: start=0, step=1, limit=4
    $region2: #{tpu_custom_call.1} parent=1 // loop_pre_header
      _
    $region3: #{tpu_custom_call.1} parent=1 // loop_header
      %s28 = sphi 0, %s32
      %p29 = scmp.ge.s32.totalorder %s28, 4
      %s38 = sphi 0, %s40
      %s41 = sphi 0, %s38
      %s42 = sphi 0, %s41
      %s58 = sphi 0, %s42
      %s64 = sphi 0, %s66
      %s67 = sphi 0, %s64
      %s68 = sphi 0, %s67
      %s84 = sphi 0, %s68
      %s90 = sphi 0, %s92
      %s93 = sphi 0, %s90
      %s94 = sphi 0, %s93
      %s110 = sphi 0, %s94
      %s114 = sphi 0, %s114
      %s116 = sphi 0, %s114
      %s117 = sphi 0, %s116
      %s131 = sphi 0, %s117
      %s135 = sphi 0, %s135
      %s137 = sphi 0, %s135
      %s138 = sphi 0, %s137
      %s152 = sphi 0, %s138
      %s156 = sphi 0, %s156
      %s158 = sphi 0, %s156
      %s159 = sphi 0, %s158
      %s173 = sphi 0, %s159
      %s177 = sphi 0, %s177
      %s179 = sphi 0, %s177
      %s180 = sphi 0, %s179
      %s194 = sphi 0, %s180
      %s198 = sphi 0, %s198
      %s200 = sphi 0, %s198
      %s201 = sphi 0, %s200
      %s215 = sphi 0, %s201
      %s219 = sphi 0, %s219
      %s221 = sphi 0, %s219
      %s222 = sphi 0, %s221
      %s236 = sphi 0, %s222
      %s240 = sphi 0, %s240
      %s242 = sphi 0, %s240
      %s243 = sphi 0, %s242
      %s257 = sphi 0, %s243
      %s261 = sphi 0, %s261
      %s263 = sphi 0, %s261
      %s264 = sphi 0, %s263
      %s278 = sphi 0, %s264
      %s282 = sphi 0, %s282
      %s284 = sphi 0, %s282
      %s285 = sphi 0, %s284
      %s299 = sphi 0, %s285
      %s303 = sphi 0, %s303
      %s305 = sphi 0, %s303
      %s306 = sphi 0, %s305
      %s320 = sphi 0, %s306
      %s326 = sphi 0, %s328
      %s329 = sphi 0, %s326
      %s330 = sphi 0, %s329
      %s346 = sphi 0, %s330
      %s352 = sphi 0, %s354
      %s355 = sphi 0, %s352
      %s356 = sphi 0, %s355
      %s372 = sphi 0, %s356
      %s378 = sphi 0, %s380
      %s381 = sphi 0, %s378
      %s382 = sphi 0, %s381
      %s398 = sphi 0, %s382
    $region4: #{tpu_custom_call.1} parent=1 // loop_header_branch
      %31 = sbr.rel (%p29) target = $region8
    $region5: #{tpu_custom_call.1} parent=1 // loop_body
      %s33 = ssub.s32 %s28, 1
      %s34 = ssub.s32 %s28, 2
      %s35 = sadd.s32 %s28, 1
      %s36 = ssub.s32 %s28, %s35
      %p37 = scmp.eq.s32.totalorder %s36, 0
      %s39 = sadd.s32 %s38, 1
      %s40 = scalar_select %p37, %s38, %s39
      %p43 = pneg %p37
      %p44 = scmp.eq.s32.totalorder %s28, 1
      %p45 = por %p43, %p44
      %p46 = scmp.ne.s32.totalorder %s38, %s41
      %p47 = scmp.eq.s32.totalorder %s28, 0
      %p48 = por %p46, %p47
      %p49 = scmp.ne.s32.totalorder %s38, %s41
      %p50 = scmp.eq.s32.totalorder %s33, 1
      %p51 = por %p49, %p50
      %p52 = scmp.ne.s32.totalorder %s41, %s42
      %p53 = scmp.eq.s32.totalorder %s33, 0
      %p54 = por %p52, %p53
      %p55 = scmp.ne.s32.totalorder %s41, %s42
      %p56 = scmp.eq.s32.totalorder %s34, 1
      %p57 = por %p55, %p56
      %p59 = scmp.ne.s32.totalorder %s42, %s58
      %p60 = scmp.eq.s32.totalorder %s34, 0
      %p61 = por %p59, %p60
      %s62 = ssub.s32 %s28, %s35
      %p63 = scmp.eq.s32.totalorder %s62, 0
      %s65 = sadd.s32 %s64, 1
      %s66 = scalar_select %p63, %s64, %s65
      %p69 = pneg %p63
      %p70 = scmp.eq.s32.totalorder %s28, 1
      %p71 = por %p69, %p70
      %p72 = scmp.ne.s32.totalorder %s64, %s67
      %p73 = scmp.eq.s32.totalorder %s28, 0
      %p74 = por %p72, %p73
      %p75 = scmp.ne.s32.totalorder %s64, %s67
      %p76 = scmp.eq.s32.totalorder %s33, 1
      %p77 = por %p75, %p76
      %p78 = scmp.ne.s32.totalorder %s67, %s68
      %p79 = scmp.eq.s32.totalorder %s33, 0
      %p80 = por %p78, %p79
      %p81 = scmp.ne.s32.totalorder %s67, %s68
      %p82 = scmp.eq.s32.totalorder %s34, 1
      %p83 = por %p81, %p82
      %p85 = scmp.ne.s32.totalorder %s68, %s84
      %p86 = scmp.eq.s32.totalorder %s34, 0
      %p87 = por %p85, %p86
      %s88 = ssub.s32 %s28, %s35
      %p89 = scmp.eq.s32.totalorder %s88, 0
      %s91 = sadd.s32 %s90, 1
      %s92 = scalar_select %p89, %s90, %s91
      %p95 = pneg %p89
      %p96 = scmp.eq.s32.totalorder %s28, 1
      %p97 = por %p95, %p96
      %p98 = scmp.ne.s32.totalorder %s90, %s93
      %p99 = scmp.eq.s32.totalorder %s28, 0
      %p100 = por %p98, %p99
      %p101 = scmp.ne.s32.totalorder %s90, %s93
      %p102 = scmp.eq.s32.totalorder %s33, 1
      %p103 = por %p101, %p102
      %p104 = scmp.ne.s32.totalorder %s93, %s94
      %p105 = scmp.eq.s32.totalorder %s33, 0
      %p106 = por %p104, %p105
      %p107 = scmp.ne.s32.totalorder %s93, %s94
      %p108 = scmp.eq.s32.totalorder %s34, 1
      %p109 = por %p107, %p108
      %p111 = scmp.ne.s32.totalorder %s94, %s110
      %p112 = scmp.eq.s32.totalorder %s34, 0
      %p113 = por %p111, %p112
      %s115 = sadd.s32 %s114, 1
      %p118 = scmp.eq.s32.totalorder %s28, 1
      %p119 = scmp.ne.s32.totalorder %s114, %s116
      %p120 = scmp.eq.s32.totalorder %s28, 0
      %p121 = por %p119, %p120
      %p122 = scmp.ne.s32.totalorder %s114, %s116
      %p123 = scmp.eq.s32.totalorder %s33, 1
      %p124 = por %p122, %p123
      %p125 = scmp.ne.s32.totalorder %s116, %s117
      %p126 = scmp.eq.s32.totalorder %s33, 0
      %p127 = por %p125, %p126
      %p128 = scmp.ne.s32.totalorder %s116, %s117
      %p129 = scmp.eq.s32.totalorder %s34, 1
      %p130 = por %p128, %p129
      %p132 = scmp.ne.s32.totalorder %s117, %s131
      %p133 = scmp.eq.s32.totalorder %s34, 0
      %p134 = por %p132, %p133
      %s136 = sadd.s32 %s135, 1
      %p139 = scmp.eq.s32.totalorder %s28, 1
      %p140 = scmp.ne.s32.totalorder %s135, %s137
      %p141 = scmp.eq.s32.totalorder %s28, 0
      %p142 = por %p140, %p141
      %p143 = scmp.ne.s32.totalorder %s135, %s137
      %p144 = scmp.eq.s32.totalorder %s33, 1
      %p145 = por %p143, %p144
      %p146 = scmp.ne.s32.totalorder %s137, %s138
      %p147 = scmp.eq.s32.totalorder %s33, 0
      %p148 = por %p146, %p147
      %p149 = scmp.ne.s32.totalorder %s137, %s138
      %p150 = scmp.eq.s32.totalorder %s34, 1
      %p151 = por %p149, %p150
      %p153 = scmp.ne.s32.totalorder %s138, %s152
      %p154 = scmp.eq.s32.totalorder %s34, 0
      %p155 = por %p153, %p154
      %s157 = sadd.s32 %s156, 1
      %p160 = scmp.eq.s32.totalorder %s28, 1
      %p161 = scmp.ne.s32.totalorder %s156, %s158
      %p162 = scmp.eq.s32.totalorder %s28, 0
      %p163 = por %p161, %p162
      %p164 = scmp.ne.s32.totalorder %s156, %s158
      %p165 = scmp.eq.s32.totalorder %s33, 1
      %p166 = por %p164, %p165
      %p167 = scmp.ne.s32.totalorder %s158, %s159
      %p168 = scmp.eq.s32.totalorder %s33, 0
      %p169 = por %p167, %p168
      %p170 = scmp.ne.s32.totalorder %s158, %s159
      %p171 = scmp.eq.s32.totalorder %s34, 1
      %p172 = por %p170, %p171
      %p174 = scmp.ne.s32.totalorder %s159, %s173
      %p175 = scmp.eq.s32.totalorder %s34, 0
      %p176 = por %p174, %p175
      %s178 = sadd.s32 %s177, 1
      %p181 = scmp.eq.s32.totalorder %s28, 1
      %p182 = scmp.ne.s32.totalorder %s177, %s179
      %p183 = scmp.eq.s32.totalorder %s28, 0
      %p184 = por %p182, %p183
      %p185 = scmp.ne.s32.totalorder %s177, %s179
      %p186 = scmp.eq.s32.totalorder %s33, 1
      %p187 = por %p185, %p186
      %p188 = scmp.ne.s32.totalorder %s179, %s180
      %p189 = scmp.eq.s32.totalorder %s33, 0
      %p190 = por %p188, %p189
      %p191 = scmp.ne.s32.totalorder %s179, %s180
      %p192 = scmp.eq.s32.totalorder %s34, 1
      %p193 = por %p191, %p192
      %p195 = scmp.ne.s32.totalorder %s180, %s194
      %p196 = scmp.eq.s32.totalorder %s34, 0
      %p197 = por %p195, %p196
      %s199 = sadd.s32 %s198, 1
      %p202 = scmp.eq.s32.totalorder %s28, 1
      %p203 = scmp.ne.s32.totalorder %s198, %s200
      %p204 = scmp.eq.s32.totalorder %s28, 0
      %p205 = por %p203, %p204
      %p206 = scmp.ne.s32.totalorder %s198, %s200
      %p207 = scmp.eq.s32.totalorder %s33, 1
      %p208 = por %p206, %p207
      %p209 = scmp.ne.s32.totalorder %s200, %s201
      %p210 = scmp.eq.s32.totalorder %s33, 0
      %p211 = por %p209, %p210
      %p212 = scmp.ne.s32.totalorder %s200, %s201
      %p213 = scmp.eq.s32.totalorder %s34, 1
      %p214 = por %p212, %p213
      %p216 = scmp.ne.s32.totalorder %s201, %s215
      %p217 = scmp.eq.s32.totalorder %s34, 0
      %p218 = por %p216, %p217
      %s220 = sadd.s32 %s219, 1
      %p223 = scmp.eq.s32.totalorder %s28, 1
      %p224 = scmp.ne.s32.totalorder %s219, %s221
      %p225 = scmp.eq.s32.totalorder %s28, 0
      %p226 = por %p224, %p225
      %p227 = scmp.ne.s32.totalorder %s219, %s221
      %p228 = scmp.eq.s32.totalorder %s33, 1
      %p229 = por %p227, %p228
      %p230 = scmp.ne.s32.totalorder %s221, %s222
      %p231 = scmp.eq.s32.totalorder %s33, 0
      %p232 = por %p230, %p231
      %p233 = scmp.ne.s32.totalorder %s221, %s222
      %p234 = scmp.eq.s32.totalorder %s34, 1
      %p235 = por %p233, %p234
      %p237 = scmp.ne.s32.totalorder %s222, %s236
      %p238 = scmp.eq.s32.totalorder %s34, 0
      %p239 = por %p237, %p238
      %s241 = sadd.s32 %s240, 1
      %p244 = scmp.eq.s32.totalorder %s28, 1
      %p245 = scmp.ne.s32.totalorder %s240, %s242
      %p246 = scmp.eq.s32.totalorder %s28, 0
      %p247 = por %p245, %p246
      %p248 = scmp.ne.s32.totalorder %s240, %s242
      %p249 = scmp.eq.s32.totalorder %s33, 1
      %p250 = por %p248, %p249
      %p251 = scmp.ne.s32.totalorder %s242, %s243
      %p252 = scmp.eq.s32.totalorder %s33, 0
      %p253 = por %p251, %p252
      %p254 = scmp.ne.s32.totalorder %s242, %s243
      %p255 = scmp.eq.s32.totalorder %s34, 1
      %p256 = por %p254, %p255
      %p258 = scmp.ne.s32.totalorder %s243, %s257
      %p259 = scmp.eq.s32.totalorder %s34, 0
      %p260 = por %p258, %p259
      %s262 = sadd.s32 %s261, 1
      %p265 = scmp.eq.s32.totalorder %s28, 1
      %p266 = scmp.ne.s32.totalorder %s261, %s263
      %p267 = scmp.eq.s32.totalorder %s28, 0
      %p268 = por %p266, %p267
      %p269 = scmp.ne.s32.totalorder %s261, %s263
      %p270 = scmp.eq.s32.totalorder %s33, 1
      %p271 = por %p269, %p270
      %p272 = scmp.ne.s32.totalorder %s263, %s264
      %p273 = scmp.eq.s32.totalorder %s33, 0
      %p274 = por %p272, %p273
      %p275 = scmp.ne.s32.totalorder %s263, %s264
      %p276 = scmp.eq.s32.totalorder %s34, 1
      %p277 = por %p275, %p276
      %p279 = scmp.ne.s32.totalorder %s264, %s278
      %p280 = scmp.eq.s32.totalorder %s34, 0
      %p281 = por %p279, %p280
      %s283 = sadd.s32 %s282, 1
      %p286 = scmp.eq.s32.totalorder %s28, 1
      %p287 = scmp.ne.s32.totalorder %s282, %s284
      %p288 = scmp.eq.s32.totalorder %s28, 0
      %p289 = por %p287, %p288
      %p290 = scmp.ne.s32.totalorder %s282, %s284
      %p291 = scmp.eq.s32.totalorder %s33, 1
      %p292 = por %p290, %p291
      %p293 = scmp.ne.s32.totalorder %s284, %s285
      %p294 = scmp.eq.s32.totalorder %s33, 0
      %p295 = por %p293, %p294
      %p296 = scmp.ne.s32.totalorder %s284, %s285
      %p297 = scmp.eq.s32.totalorder %s34, 1
      %p298 = por %p296, %p297
      %p300 = scmp.ne.s32.totalorder %s285, %s299
      %p301 = scmp.eq.s32.totalorder %s34, 0
      %p302 = por %p300, %p301
      %s304 = sadd.s32 %s303, 1
      %p307 = scmp.eq.s32.totalorder %s28, 1
      %p308 = scmp.ne.s32.totalorder %s303, %s305
      %p309 = scmp.eq.s32.totalorder %s28, 0
      %p310 = por %p308, %p309
      %p311 = scmp.ne.s32.totalorder %s303, %s305
      %p312 = scmp.eq.s32.totalorder %s33, 1
      %p313 = por %p311, %p312
      %p314 = scmp.ne.s32.totalorder %s305, %s306
      %p315 = scmp.eq.s32.totalorder %s33, 0
      %p316 = por %p314, %p315
      %p317 = scmp.ne.s32.totalorder %s305, %s306
      %p318 = scmp.eq.s32.totalorder %s34, 1
      %p319 = por %p317, %p318
      %p321 = scmp.ne.s32.totalorder %s306, %s320
      %p322 = scmp.eq.s32.totalorder %s34, 0
      %p323 = por %p321, %p322
      %s324 = ssub.s32 %s28, %s35
      %p325 = scmp.eq.s32.totalorder %s324, 0
      %s327 = sadd.s32 %s326, 1
      %s328 = scalar_select %p325, %s326, %s327
      %p331 = pneg %p325
      %p332 = scmp.eq.s32.totalorder %s28, 1
      %p333 = por %p331, %p332
      %p334 = scmp.ne.s32.totalorder %s326, %s329
      %p335 = scmp.eq.s32.totalorder %s28, 0
      %p336 = por %p334, %p335
      %p337 = scmp.ne.s32.totalorder %s326, %s329
      %p338 = scmp.eq.s32.totalorder %s33, 1
      %p339 = por %p337, %p338
      %p340 = scmp.ne.s32.totalorder %s329, %s330
      %p341 = scmp.eq.s32.totalorder %s33, 0
      %p342 = por %p340, %p341
      %p343 = scmp.ne.s32.totalorder %s329, %s330
      %p344 = scmp.eq.s32.totalorder %s34, 1
      %p345 = por %p343, %p344
      %p347 = scmp.ne.s32.totalorder %s330, %s346
      %p348 = scmp.eq.s32.totalorder %s34, 0
      %p349 = por %p347, %p348
      %s350 = ssub.s32 %s28, %s35
      %p351 = scmp.eq.s32.totalorder %s350, 0
      %s353 = sadd.s32 %s352, 1
      %s354 = scalar_select %p351, %s352, %s353
      %p357 = pneg %p351
      %p358 = scmp.eq.s32.totalorder %s28, 1
      %p359 = por %p357, %p358
      %p360 = scmp.ne.s32.totalorder %s352, %s355
      %p361 = scmp.eq.s32.totalorder %s28, 0
      %p362 = por %p360, %p361
      %p363 = scmp.ne.s32.totalorder %s352, %s355
      %p364 = scmp.eq.s32.totalorder %s33, 1
      %p365 = por %p363, %p364
      %p366 = scmp.ne.s32.totalorder %s355, %s356
      %p367 = scmp.eq.s32.totalorder %s33, 0
      %p368 = por %p366, %p367
      %p369 = scmp.ne.s32.totalorder %s355, %s356
      %p370 = scmp.eq.s32.totalorder %s34, 1
      %p371 = por %p369, %p370
      %p373 = scmp.ne.s32.totalorder %s356, %s372
      %p374 = scmp.eq.s32.totalorder %s34, 0
      %p375 = por %p373, %p374
      %s376 = ssub.s32 %s28, %s35
      %p377 = scmp.eq.s32.totalorder %s376, 0
      %s379 = sadd.s32 %s378, 1
      %s380 = scalar_select %p377, %s378, %s379
      %p383 = pneg %p377
      %p384 = scmp.eq.s32.totalorder %s28, 1
      %p385 = por %p383, %p384
      %p386 = scmp.ne.s32.totalorder %s378, %s381
      %p387 = scmp.eq.s32.totalorder %s28, 0
      %p388 = por %p386, %p387
      %p389 = scmp.ne.s32.totalorder %s378, %s381
      %p390 = scmp.eq.s32.totalorder %s33, 1
      %p391 = por %p389, %p390
      %p392 = scmp.ne.s32.totalorder %s381, %s382
      %p393 = scmp.eq.s32.totalorder %s33, 0
      %p394 = por %p392, %p393
      %p395 = scmp.ne.s32.totalorder %s381, %s382
      %p396 = scmp.eq.s32.totalorder %s34, 1
      %p397 = por %p395, %p396
      %p399 = scmp.ne.s32.totalorder %s382, %s398
      %p400 = scmp.eq.s32.totalorder %s34, 0
      %p401 = por %p399, %p400
      %p402 = scmp.le.s32.totalorder 1, %s28
      %p403 = scmp.lt.s32.totalorder %s28, 3
      %p404 = pnand %p402, %p403
      %p405 = pneg %p404
      // Predicated region
      $region9: #{tpu_custom_call.1} parent=5 // pred_check
        _
      $region10: #{tpu_custom_call.1} parent=5 // pred_check_branch
        %407 = sbr.rel (%p404) target = $region12
      $region11: #{tpu_custom_call.1} parent=5 // pred_region
        %s408 = ssub.s32 %s28, 1
        // Predicated region
        $region13: #{tpu_custom_call.1} parent=11 // pred_check
          %p409 = pneg %p127
        $region14: #{tpu_custom_call.1} parent=11 // pred_check_branch
          %411 = sbr.rel (%p409) target = $region16
        $region15: #{tpu_custom_call.1} parent=11 // pred_region
          _
        $region16: #{tpu_custom_call.1} parent=11 // pred_fallthru
          _
        // Predicated region
        $region17: #{tpu_custom_call.1} parent=11 // pred_check
          %p412 = pneg %p148
        $region18: #{tpu_custom_call.1} parent=11 // pred_check_branch
          %414 = sbr.rel (%p412) target = $region20
        $region19: #{tpu_custom_call.1} parent=11 // pred_region
          _
        $region20: #{tpu_custom_call.1} parent=11 // pred_fallthru
          _
        // Predicated region
        $region21: #{tpu_custom_call.1} parent=11 // pred_check
          %p415 = pneg %p169
        $region22: #{tpu_custom_call.1} parent=11 // pred_check_branch
          %417 = sbr.rel (%p415) target = $region24
        $region23: #{tpu_custom_call.1} parent=11 // pred_region
          _
        $region24: #{tpu_custom_call.1} parent=11 // pred_fallthru
          _
        // Predicated region
        $region25: #{tpu_custom_call.1} parent=11 // pred_check
          %p418 = pneg %p190
        $region26: #{tpu_custom_call.1} parent=11 // pred_check_branch
          %420 = sbr.rel (%p418) target = $region28
        $region27: #{tpu_custom_call.1} parent=11 // pred_region
          _
        $region28: #{tpu_custom_call.1} parent=11 // pred_fallthru
          _
        // Predicated region
        $region29: #{tpu_custom_call.1} parent=11 // pred_check
          %p421 = pneg %p211
        $region30: #{tpu_custom_call.1} parent=11 // pred_check_branch
          %423 = sbr.rel (%p421) target = $region32
        $region31: #{tpu_custom_call.1} parent=11 // pred_region
          _
        $region32: #{tpu_custom_call.1} parent=11 // pred_fallthru
          _
        // Predicated region
        $region33: #{tpu_custom_call.1} parent=11 // pred_check
          %p424 = pneg %p232
        $region34: #{tpu_custom_call.1} parent=11 // pred_check_branch
          %426 = sbr.rel (%p424) target = $region36
        $region35: #{tpu_custom_call.1} parent=11 // pred_region
          _
        $region36: #{tpu_custom_call.1} parent=11 // pred_fallthru
          _
        // Predicated region
        $region37: #{tpu_custom_call.1} parent=11 // pred_check
          %p427 = pneg %p253
        $region38: #{tpu_custom_call.1} parent=11 // pred_check_branch
          %429 = sbr.rel (%p427) target = $region40
        $region39: #{tpu_custom_call.1} parent=11 // pred_region
          _
        $region40: #{tpu_custom_call.1} parent=11 // pred_fallthru
          _
        // Predicated region
        $region41: #{tpu_custom_call.1} parent=11 // pred_check
          %p430 = pneg %p274
        $region42: #{tpu_custom_call.1} parent=11 // pred_check_branch
          %432 = sbr.rel (%p430) target = $region44
        $region43: #{tpu_custom_call.1} parent=11 // pred_region
          _
        $region44: #{tpu_custom_call.1} parent=11 // pred_fallthru
          _
        // Predicated region
        $region45: #{tpu_custom_call.1} parent=11 // pred_check
          %p433 = pneg %p295
        $region46: #{tpu_custom_call.1} parent=11 // pred_check_branch
          %435 = sbr.rel (%p433) target = $region48
        $region47: #{tpu_custom_call.1} parent=11 // pred_region
          _
        $region48: #{tpu_custom_call.1} parent=11 // pred_fallthru
          _
        // Predicated region
        $region49: #{tpu_custom_call.1} parent=11 // pred_check
          %p436 = pneg %p316
        $region50: #{tpu_custom_call.1} parent=11 // pred_check_branch
          %438 = sbr.rel (%p436) target = $region52
        $region51: #{tpu_custom_call.1} parent=11 // pred_region
          _
        $region52: #{tpu_custom_call.1} parent=11 // pred_fallthru
          _
      $region12: #{tpu_custom_call.1} parent=5 // pred_fallthru
        _
      %p439 = scmp.lt.s32.totalorder %s28, 2
      // Predicated region
      $region53: #{tpu_custom_call.1} parent=5 // pred_check
        %p440 = pneg %p439
      $region54: #{tpu_custom_call.1} parent=5 // pred_check_branch
        %442 = sbr.rel (%p440) target = $region56
      $region55: #{tpu_custom_call.1} parent=5 // pred_region
        // Predicated region
        $region57: #{tpu_custom_call.1} parent=55 // pred_check
          %p443 = pneg %p48
        $region58: #{tpu_custom_call.1} parent=55 // pred_check_branch
          %445 = sbr.rel (%p443) target = $region60
        $region59: #{tpu_custom_call.1} parent=55 // pred_region
          %p446 = scmp.lt.s32.totalorder %s28, 1
          %s447 = scalar_select %p446, %s28, 1
          %s448 = smul.addr %s447, 8
          %s449 = scalar_lea.vmem %s0, %s448
        $region60: #{tpu_custom_call.1} parent=55 // pred_fallthru
          _
        // Predicated region
        $region61: #{tpu_custom_call.1} parent=55 // pred_check
          %p450 = pneg %p74
        $region62: #{tpu_custom_call.1} parent=55 // pred_check_branch
          %452 = sbr.rel (%p450) target = $region64
        $region63: #{tpu_custom_call.1} parent=55 // pred_region
          %p453 = scmp.lt.s32.totalorder %s28, 1
          %s454 = scalar_select %p453, %s28, 1
          %s455 = smul.addr %s454, 3
          %s456 = smul.addr %s455, 8
          %s457 = scalar_lea.vmem %s1, %s456
        $region64: #{tpu_custom_call.1} parent=55 // pred_fallthru
          _
        // Predicated region
        $region65: #{tpu_custom_call.1} parent=55 // pred_check
          %p458 = pneg %p100
        $region66: #{tpu_custom_call.1} parent=55 // pred_check_branch
          %460 = sbr.rel (%p458) target = $region68
        $region67: #{tpu_custom_call.1} parent=55 // pred_region
          %p461 = scmp.lt.s32.totalorder %s28, 1
          %s462 = scalar_select %p461, %s28, 1
          %s463 = smul.addr %s462, 3
          %s464 = smul.addr %s463, 8
          %s465 = scalar_lea.vmem %s2, %s464
        $region68: #{tpu_custom_call.1} parent=55 // pred_fallthru
          _
      $region56: #{tpu_custom_call.1} parent=5 // pred_fallthru
        _
      %p466 = scmp.le.s32.totalorder 1, %s28
      %p467 = scmp.lt.s32.totalorder %s28, 3
      %p468 = pnand %p466, %p467
      %p469 = pneg %p468
      // Predicated region
      $region69: #{tpu_custom_call.1} parent=5 // pred_check
        _
      $region70: #{tpu_custom_call.1} parent=5 // pred_check_branch
        %471 = sbr.rel (%p468) target = $region72
      $region71: #{tpu_custom_call.1} parent=5 // pred_region
        %s472 = ssub.s32 %s28, 1
        %p473 = scmp.lt.s32.totalorder %s33, 1
        %s474 = scalar_select %p473, %s33, 1
        %s475 = smul.addr %s474, 8
        %s476 = scalar_lea.vmem %s0, %s475
        %p477 = pneg %p54
        %p478 = pneg %p51
        %p479 = scmp.lt.s32.totalorder %s33, 1
        %s480 = scalar_select %p479, %s33, 1
        %s481 = smul.addr %s480, 3
        %s482 = smul.addr %s481, 8
        %s483 = scalar_lea.vmem %s1, %s482
        %p484 = pneg %p80
        %p485 = pneg %p77
        %p486 = scmp.lt.s32.totalorder %s33, 1
        %s487 = scalar_select %p486, %s33, 1
        %s488 = smul.addr %s487, 3
        %s489 = smul.addr %s488, 8
        %s490 = scalar_lea.vmem %s2, %s489
        %p491 = pneg %p106
        %p492 = pneg %p103
        %p493 = pneg %p127
        %p494 = pneg %p124
        %p495 = pneg %p148
        %p496 = pneg %p145
        %p497 = pneg %p169
        %p498 = pneg %p166
        %p499 = pneg %p190
        %p500 = pneg %p187
        %p501 = pneg %p211
        %p502 = pneg %p208
        %p503 = pneg %p232
        %p504 = pneg %p229
        %p505 = pneg %p253
        %p506 = pneg %p250
        %p507 = pneg %p274
        %p508 = pneg %p271
        %p509 = pneg %p295
        %p510 = pneg %p292
        %p511 = pneg %p316
        %p512 = pneg %p313
        %p513 = pneg %p342
        %p514 = pneg %p339
        %s515 = sand.u32 %s329, 1
        %s516 = scalar_lea.sflag [#allocation3], %s515
        %s517 = sand.u32 %s329, 1
        %s518 = smul.addr %s517, 8
        %s519 = scalar_lea.vmem [#allocation2], %s518
        %p520 = pneg %p368
        %p521 = pneg %p365
        %s522 = sand.u32 %s33, 1
        %s523 = scalar_lea.sflag [#allocation5], %s522
        %s524 = sand.u32 %s355, 1
        %s525 = smul.addr %s524, 24
        %s526 = scalar_lea.vmem [#allocation4], %s525
        %p527 = pneg %p394
        %p528 = pneg %p391
        %s529 = sand.u32 %s33, 1
        %s530 = scalar_lea.sflag [#allocation5], %s529
        %s531 = sand.u32 %s381, 1
        %s532 = smul.addr %s531, 24
        %s533 = scalar_lea.vmem [#allocation6], %s532
        %p534 = scmp.lt.s32.totalorder %s33, 1
        %s535 = scalar_select %p534, %s33, 1
        %s536 = smul.addr %s535, 8
        %s537 = scalar_lea.vmem %s0, %s536
        %p538 = scmp.lt.s32.totalorder %s33, 1
        %s539 = scalar_select %p538, %s33, 1
        %s540 = smul.addr %s539, 3
        %s541 = smul.addr %s540, 8
        %s542 = scalar_lea.vmem %s1, %s541
        %p543 = scmp.lt.s32.totalorder %s33, 1
        %s544 = scalar_select %p543, %s33, 1
        %s545 = smul.addr %s544, 3
        %s546 = smul.addr %s545, 8
        %s547 = scalar_lea.vmem %s2, %s546
        %v548 = vld [vmem:[%s537] sm:$0xff]
        %v549 = vmul.f32 %v548, %v548
        %v550 = vld [vmem:[%s3] sm:$0xff]
        %v551 = vld [vmem:[%s3 + $0x8] sm:$0xff]
        %v552 = vld [vmem:[%s3 + $0x10] sm:$0xff]
        %v553 = vld [vmem:[%s3 + $0x18] sm:$0xff]
        %v554 = vld [vmem:[%s3 + $0x20] sm:$0xff]
        %v555 = vld [vmem:[%s3 + $0x28] sm:$0xff]
        %v556 = vld [vmem:[%s3 + $0x30] sm:$0xff]
        %v557 = vld [vmem:[%s3 + $0x38] sm:$0xff]
        %v558 = vld [vmem:[%s3 + $0x40] sm:$0xff]
        %v559 = vld [vmem:[%s3 + $0x48] sm:$0xff]
        %v560 = vld [vmem:[%s3 + $0x50] sm:$0xff]
        %v561 = vld [vmem:[%s3 + $0x58] sm:$0xff]
        %v562 = vld [vmem:[%s3 + $0x60] sm:$0xff]
        %v563 = vld [vmem:[%s3 + $0x68] sm:$0xff]
        %v564 = vld [vmem:[%s3 + $0x70] sm:$0xff]
        %v565 = vld [vmem:[%s3 + $0x78] sm:$0xff]
        %v566 = vld [vmem:[%s542] sm:$0xff]
        %v567 = vld [vmem:[%s542 + $0x8] sm:$0xff]
        %v568 = vld [vmem:[%s542 + $0x10] sm:$0xff]
        %v569 = vmul.f32 %v566, %v566
        %v570 = vmul.f32 %v567, %v567
        %v571 = vmul.f32 %v568, %v568
        %v572 = vld [vmem:[%s4] sm:$0xff]
        %v573 = vld [vmem:[%s4 + $0x8] sm:$0xff]
        %v574 = vld [vmem:[%s4 + $0x10] sm:$0xff]
        %v575 = vld [vmem:[%s4 + $0x18] sm:$0xff]
        %v576 = vld [vmem:[%s4 + $0x20] sm:$0xff]
        %v577 = vld [vmem:[%s4 + $0x28] sm:$0xff]
        %v578 = vld [vmem:[%s4 + $0x30] sm:$0xff]
        %v579 = vld [vmem:[%s4 + $0x38] sm:$0xff]
        %v580 = vld [vmem:[%s4 + $0x40] sm:$0xff]
        %v581 = vld [vmem:[%s4 + $0x48] sm:$0xff]
        %v582 = vld [vmem:[%s4 + $0x50] sm:$0xff]
        %v583 = vld [vmem:[%s4 + $0x58] sm:$0xff]
        %v584 = vld [vmem:[%s4 + $0x60] sm:$0xff]
        %v585 = vld [vmem:[%s4 + $0x68] sm:$0xff]
        %v586 = vld [vmem:[%s4 + $0x70] sm:$0xff]
        %v587 = vld [vmem:[%s4 + $0x78] sm:$0xff]
        %v588 = vld [vmem:[%s4 + $0x80] sm:$0xff]
        %v589 = vld [vmem:[%s4 + $0x88] sm:$0xff]
        %v590 = vld [vmem:[%s4 + $0x90] sm:$0xff]
        %v591 = vld [vmem:[%s4 + $0x98] sm:$0xff]
        %v592 = vld [vmem:[%s4 + $0xa0] sm:$0xff]
        %v593 = vld [vmem:[%s4 + $0xa8] sm:$0xff]
        %v594 = vld [vmem:[%s4 + $0xb0] sm:$0xff]
        %v595 = vld [vmem:[%s4 + $0xb8] sm:$0xff]
        %v596 = vld [vmem:[%s4 + $0xc0] sm:$0xff]
        %v597 = vld [vmem:[%s4 + $0xc8] sm:$0xff]
        %v598 = vld [vmem:[%s4 + $0xd0] sm:$0xff]
        %v599 = vld [vmem:[%s4 + $0xd8] sm:$0xff]
        %v600 = vld [vmem:[%s4 + $0xe0] sm:$0xff]
        %v601 = vld [vmem:[%s4 + $0xe8] sm:$0xff]
        %v602 = vld [vmem:[%s4 + $0xf0] sm:$0xff]
        %v603 = vld [vmem:[%s4 + $0xf8] sm:$0xff]
        %v604 = vld [vmem:[%s4 + $0x100] sm:$0xff]
        %v605 = vld [vmem:[%s4 + $0x108] sm:$0xff]
        %v606 = vld [vmem:[%s4 + $0x110] sm:$0xff]
        %v607 = vld [vmem:[%s4 + $0x118] sm:$0xff]
        %v608 = vld [vmem:[%s4 + $0x120] sm:$0xff]
        %v609 = vld [vmem:[%s4 + $0x128] sm:$0xff]
        %v610 = vld [vmem:[%s4 + $0x130] sm:$0xff]
        %v611 = vld [vmem:[%s4 + $0x138] sm:$0xff]
        %v612 = vld [vmem:[%s4 + $0x140] sm:$0xff]
        %v613 = vld [vmem:[%s4 + $0x148] sm:$0xff]
        %v614 = vld [vmem:[%s4 + $0x150] sm:$0xff]
        %v615 = vld [vmem:[%s4 + $0x158] sm:$0xff]
        %v616 = vld [vmem:[%s4 + $0x160] sm:$0xff]
        %v617 = vld [vmem:[%s4 + $0x168] sm:$0xff]
        %v618 = vld [vmem:[%s4 + $0x170] sm:$0xff]
        %v619 = vld [vmem:[%s4 + $0x178] sm:$0xff]
        %620 = vmatprep.subr.mxu0 0.0
        %v621 = vand.u32 %v572, 4294901760
        %622 = vmatpush1.msra.mxu0 %v621
        %623 = vmatprep.subr.mxu0 0.0
        %v624 = vand.u32 %v573, 4294901760
        %625 = vmatpush1.msra.mxu0 %v624
        %626 = vmatprep.subr.mxu0 0.0
        %v627 = vand.u32 %v574, 4294901760
        %628 = vmatpush1.msra.mxu0 %v627
        %629 = vmatprep.subr.mxu0 0.0
        %v630 = vand.u32 %v575, 4294901760
        %631 = vmatpush1.msra.mxu0 %v630
        %632 = vmatprep.subr.mxu0 0.0
        %v633 = vand.u32 %v576, 4294901760
        %634 = vmatpush1.msra.mxu0 %v633
        %635 = vmatprep.subr.mxu0 0.0
        %v636 = vand.u32 %v577, 4294901760
        %637 = vmatpush1.msra.mxu0 %v636
        %638 = vmatprep.subr.mxu0 0.0
        %v639 = vand.u32 %v578, 4294901760
        %640 = vmatpush1.msra.mxu0 %v639
        %641 = vmatprep.subr.mxu0 0.0
        %v642 = vand.u32 %v579, 4294901760
        %643 = vmatpush1.msra.mxu0 %v642
        %644 = vmatprep.subr.mxu0 0.0
        %v645 = vand.u32 %v580, 4294901760
        %646 = vmatpush1.msra.mxu0 %v645
        %647 = vmatprep.subr.mxu0 0.0
        %v648 = vand.u32 %v581, 4294901760
        %649 = vmatpush1.msra.mxu0 %v648
        %650 = vmatprep.subr.mxu0 0.0
        %v651 = vand.u32 %v582, 4294901760
        %652 = vmatpush1.msra.mxu0 %v651
        %653 = vmatprep.subr.mxu0 0.0
        %v654 = vand.u32 %v583, 4294901760
        %655 = vmatpush1.msra.mxu0 %v654
        %656 = vmatprep.subr.mxu0 0.0
        %v657 = vand.u32 %v584, 4294901760
        %658 = vmatpush1.msra.mxu0 %v657
        %659 = vmatprep.subr.mxu0 0.0
        %v660 = vand.u32 %v585, 4294901760
        %661 = vmatpush1.msra.mxu0 %v660
        %662 = vmatprep.subr.mxu0 0.0
        %v663 = vand.u32 %v586, 4294901760
        %664 = vmatpush1.msra.mxu0 %v663
        %665 = vmatprep.subr.mxu0 0.0
        %v666 = vand.u32 %v587, 4294901760
        %667 = vmatpush1.msra.mxu0 %v666
        %668 = vmatprep.subr.mxu0 0.0
        %v669 = vand.u32 %v588, 4294901760
        %670 = vmatpush1.msra.mxu0 %v669
        %671 = vmatprep.subr.mxu0 0.0
        %v672 = vand.u32 %v589, 4294901760
        %673 = vmatpush1.msra.mxu0 %v672
        %674 = vmatprep.subr.mxu0 0.0
        %v675 = vand.u32 %v590, 4294901760
        %676 = vmatpush1.msra.mxu0 %v675
        %677 = vmatprep.subr.mxu0 0.0
        %v678 = vand.u32 %v591, 4294901760
        %679 = vmatpush1.msra.mxu0 %v678
        %680 = vmatprep.subr.mxu0 0.0
        %v681 = vand.u32 %v592, 4294901760
        %682 = vmatpush1.msra.mxu0 %v681
        %683 = vmatprep.subr.mxu0 0.0
        %v684 = vand.u32 %v593, 4294901760
        %685 = vmatpush1.msra.mxu0 %v684
        %686 = vmatprep.subr.mxu0 0.0
        %v687 = vand.u32 %v594, 4294901760
        %688 = vmatpush1.msra.mxu0 %v687
        %689 = vmatprep.subr.mxu0 0.0
        %v690 = vand.u32 %v595, 4294901760
        %691 = vmatpush1.msra.mxu0 %v690
        %692 = vmatprep.subr.mxu0 0.0
        %v693 = vand.u32 %v596, 4294901760
        %694 = vmatpush1.msra.mxu0 %v693
        %695 = vmatprep.subr.mxu0 0.0
        %v696 = vand.u32 %v597, 4294901760
        %697 = vmatpush1.msra.mxu0 %v696
        %698 = vmatprep.subr.mxu0 0.0
        %v699 = vand.u32 %v598, 4294901760
        %700 = vmatpush1.msra.mxu0 %v699
        %701 = vmatprep.subr.mxu0 0.0
        %v702 = vand.u32 %v599, 4294901760
        %703 = vmatpush1.msra.mxu0 %v702
        %704 = vmatprep.subr.mxu0 0.0
        %v705 = vand.u32 %v600, 4294901760
        %706 = vmatpush1.msra.mxu0 %v705
        %707 = vmatprep.subr.mxu0 0.0
        %v708 = vand.u32 %v601, 4294901760
        %709 = vmatpush1.msra.mxu0 %v708
        %710 = vmatprep.subr.mxu0 0.0
        %v711 = vand.u32 %v602, 4294901760
        %712 = vmatpush1.msra.mxu0 %v711
        %713 = vmatprep.subr.mxu0 0.0
        %v714 = vand.u32 %v603, 4294901760
        %715 = vmatpush1.msra.mxu0 %v714
        %v716 = vand.u32 %v570, 4294901760
        %v717 = vsub.f32 %v570, %v716
        %v718 = vand.u32 %v717, 4294901760
        %v719 = vsub.f32 %v717, %v718
        %v720 = vand.u32 %v719, 4294901760
        %721 = vmatprep.mubr.f32.mxu0 %v720
        %v722 = vand.u32 %v569, 4294901760
        %v723 = vsub.f32 %v569, %v722
        %v724 = vand.u32 %v723, 4294901760
        %v725 = vsub.f32 %v723, %v724
        %v726 = vand.u32 %v725, 4294901760
        %727 = vmatmul.mubr.f32.gmra.mrb[0].mxu0 %v726
        %v728 = vpop.f32.mrb[0].mxu0
        %v729 = vadd.f32 0.0, %v728
        %v730 = vpop.f32.mrb[0].mxu0
        %731 = vdwg.mxu0
        %732 = vmatprep.subr.mxu0 0.0
        %v733 = vand.u32 %v572, 4294901760
        %v734 = vsub.f32 %v572, %v733
        %v735 = vand.u32 %v734, 4294901760
        %v736 = vsub.f32 %v734, %v735
        %v737 = vand.u32 %v736, 4294901760
        %738 = vmatpush1.msra.mxu0 %v737
        %739 = vmatprep.subr.mxu0 0.0
        %v740 = vand.u32 %v573, 4294901760
        %v741 = vsub.f32 %v573, %v740
        %v742 = vand.u32 %v741, 4294901760
        %v743 = vsub.f32 %v741, %v742
        %v744 = vand.u32 %v743, 4294901760
        %745 = vmatpush1.msra.mxu0 %v744
        %746 = vmatprep.subr.mxu0 0.0
        %v747 = vand.u32 %v574, 4294901760
        %v748 = vsub.f32 %v574, %v747
        %v749 = vand.u32 %v748, 4294901760
        %v750 = vsub.f32 %v748, %v749
        %v751 = vand.u32 %v750, 4294901760
        %752 = vmatpush1.msra.mxu0 %v751
        %753 = vmatprep.subr.mxu0 0.0
        %v754 = vand.u32 %v575, 4294901760
        %v755 = vsub.f32 %v575, %v754
        %v756 = vand.u32 %v755, 4294901760
        %v757 = vsub.f32 %v755, %v756
        %v758 = vand.u32 %v757, 4294901760
        %759 = vmatpush1.msra.mxu0 %v758
        %760 = vmatprep.subr.mxu0 0.0
        %v761 = vand.u32 %v576, 4294901760
        %v762 = vsub.f32 %v576, %v761
        %v763 = vand.u32 %v762, 4294901760
        %v764 = vsub.f32 %v762, %v763
        %v765 = vand.u32 %v764, 4294901760
        %766 = vmatpush1.msra.mxu0 %v765
        %767 = vmatprep.subr.mxu0 0.0
        %v768 = vand.u32 %v577, 4294901760
        %v769 = vsub.f32 %v577, %v768
        %v770 = vand.u32 %v769, 4294901760
        %v771 = vsub.f32 %v769, %v770
        %v772 = vand.u32 %v771, 4294901760
        %773 = vmatpush1.msra.mxu0 %v772
        %774 = vmatprep.subr.mxu0 0.0
        %v775 = vand.u32 %v578, 4294901760
        %v776 = vsub.f32 %v578, %v775
        %v777 = vand.u32 %v776, 4294901760
        %v778 = vsub.f32 %v776, %v777
        %v779 = vand.u32 %v778, 4294901760
        %780 = vmatpush1.msra.mxu0 %v779
        %781 = vmatprep.subr.mxu0 0.0
        %v782 = vand.u32 %v579, 4294901760
        %v783 = vsub.f32 %v579, %v782
        %v784 = vand.u32 %v783, 4294901760
        %v785 = vsub.f32 %v783, %v784
        %v786 = vand.u32 %v785, 4294901760
        %787 = vmatpush1.msra.mxu0 %v786
        %788 = vmatprep.subr.mxu0 0.0
        %v789 = vand.u32 %v580, 4294901760
        %v790 = vsub.f32 %v580, %v789
        %v791 = vand.u32 %v790, 4294901760
        %v792 = vsub.f32 %v790, %v791
        %v793 = vand.u32 %v792, 4294901760
        %794 = vmatpush1.msra.mxu0 %v793
        %795 = vmatprep.subr.mxu0 0.0
        %v796 = vand.u32 %v581, 4294901760
        %v797 = vsub.f32 %v581, %v796
        %v798 = vand.u32 %v797, 4294901760
        %v799 = vsub.f32 %v797, %v798
        %v800 = vand.u32 %v799, 4294901760
        %801 = vmatpush1.msra.mxu0 %v800
        %802 = vmatprep.subr.mxu0 0.0
        %v803 = vand.u32 %v582, 4294901760
        %v804 = vsub.f32 %v582, %v803
        %v805 = vand.u32 %v804, 4294901760
        %v806 = vsub.f32 %v804, %v805
        %v807 = vand.u32 %v806, 4294901760
        %808 = vmatpush1.msra.mxu0 %v807
        %809 = vmatprep.subr.mxu0 0.0
        %v810 = vand.u32 %v583, 4294901760
        %v811 = vsub.f32 %v583, %v810
        %v812 = vand.u32 %v811, 4294901760
        %v813 = vsub.f32 %v811, %v812
        %v814 = vand.u32 %v813, 4294901760
        %815 = vmatpush1.msra.mxu0 %v814
        %816 = vmatprep.subr.mxu0 0.0
        %v817 = vand.u32 %v584, 4294901760
        %v818 = vsub.f32 %v584, %v817
        %v819 = vand.u32 %v818, 4294901760
        %v820 = vsub.f32 %v818, %v819
        %v821 = vand.u32 %v820, 4294901760
        %822 = vmatpush1.msra.mxu0 %v821
        %823 = vmatprep.subr.mxu0 0.0
        %v824 = vand.u32 %v585, 4294901760
        %v825 = vsub.f32 %v585, %v824
        %v826 = vand.u32 %v825, 4294901760
        %v827 = vsub.f32 %v825, %v826
        %v828 = vand.u32 %v827, 4294901760
        %829 = vmatpush1.msra.mxu0 %v828
        %830 = vmatprep.subr.mxu0 0.0
        %v831 = vand.u32 %v586, 4294901760
        %v832 = vsub.f32 %v586, %v831
        %v833 = vand.u32 %v832, 4294901760
        %v834 = vsub.f32 %v832, %v833
        %v835 = vand.u32 %v834, 4294901760
        %836 = vmatpush1.msra.mxu0 %v835
        %837 = vmatprep.subr.mxu0 0.0
        %v838 = vand.u32 %v587, 4294901760
        %v839 = vsub.f32 %v587, %v838
        %v840 = vand.u32 %v839, 4294901760
        %v841 = vsub.f32 %v839, %v840
        %v842 = vand.u32 %v841, 4294901760
        %843 = vmatpush1.msra.mxu0 %v842
        %844 = vmatprep.subr.mxu0 0.0
        %v845 = vand.u32 %v588, 4294901760
        %v846 = vsub.f32 %v588, %v845
        %v847 = vand.u32 %v846, 4294901760
        %v848 = vsub.f32 %v846, %v847
        %v849 = vand.u32 %v848, 4294901760
        %850 = vmatpush1.msra.mxu0 %v849
        %851 = vmatprep.subr.mxu0 0.0
        %v852 = vand.u32 %v589, 4294901760
        %v853 = vsub.f32 %v589, %v852
        %v854 = vand.u32 %v853, 4294901760
        %v855 = vsub.f32 %v853, %v854
        %v856 = vand.u32 %v855, 4294901760
        %857 = vmatpush1.msra.mxu0 %v856
        %858 = vmatprep.subr.mxu0 0.0
        %v859 = vand.u32 %v590, 4294901760
        %v860 = vsub.f32 %v590, %v859
        %v861 = vand.u32 %v860, 4294901760
        %v862 = vsub.f32 %v860, %v861
        %v863 = vand.u32 %v862, 4294901760
        %864 = vmatpush1.msra.mxu0 %v863
        %865 = vmatprep.subr.mxu0 0.0
        %v866 = vand.u32 %v591, 4294901760
        %v867 = vsub.f32 %v591, %v866
        %v868 = vand.u32 %v867, 4294901760
        %v869 = vsub.f32 %v867, %v868
        %v870 = vand.u32 %v869, 4294901760
        %871 = vmatpush1.msra.mxu0 %v870
        %872 = vmatprep.subr.mxu0 0.0
        %v873 = vand.u32 %v592, 4294901760
        %v874 = vsub.f32 %v592, %v873
        %v875 = vand.u32 %v874, 4294901760
        %v876 = vsub.f32 %v874, %v875
        %v877 = vand.u32 %v876, 4294901760
        %878 = vmatpush1.msra.mxu0 %v877
        %879 = vmatprep.subr.mxu0 0.0
        %v880 = vand.u32 %v593, 4294901760
        %v881 = vsub.f32 %v593, %v880
        %v882 = vand.u32 %v881, 4294901760
        %v883 = vsub.f32 %v881, %v882
        %v884 = vand.u32 %v883, 4294901760
        %885 = vmatpush1.msra.mxu0 %v884
        %886 = vmatprep.subr.mxu0 0.0
        %v887 = vand.u32 %v594, 4294901760
        %v888 = vsub.f32 %v594, %v887
        %v889 = vand.u32 %v888, 4294901760
        %v890 = vsub.f32 %v888, %v889
        %v891 = vand.u32 %v890, 4294901760
        %892 = vmatpush1.msra.mxu0 %v891
        %893 = vmatprep.subr.mxu0 0.0
        %v894 = vand.u32 %v595, 4294901760
        %v895 = vsub.f32 %v595, %v894
        %v896 = vand.u32 %v895, 4294901760
        %v897 = vsub.f32 %v895, %v896
        %v898 = vand.u32 %v897, 4294901760
        %899 = vmatpush1.msra.mxu0 %v898
        %900 = vmatprep.subr.mxu0 0.0
        %v901 = vand.u32 %v596, 4294901760
        %v902 = vsub.f32 %v596, %v901
        %v903 = vand.u32 %v902, 4294901760
        %v904 = vsub.f32 %v902, %v903
        %v905 = vand.u32 %v904, 4294901760
        %906 = vmatpush1.msra.mxu0 %v905
        %907 = vmatprep.subr.mxu0 0.0
        %v908 = vand.u32 %v597, 4294901760
        %v909 = vsub.f32 %v597, %v908
        %v910 = vand.u32 %v909, 4294901760
        %v911 = vsub.f32 %v909, %v910
        %v912 = vand.u32 %v911, 4294901760
        %913 = vmatpush1.msra.mxu0 %v912
        %914 = vmatprep.subr.mxu0 0.0
        %v915 = vand.u32 %v598, 4294901760
        %v916 = vsub.f32 %v598, %v915
        %v917 = vand.u32 %v916, 4294901760
        %v918 = vsub.f32 %v916, %v917
        %v919 = vand.u32 %v918, 4294901760
        %920 = vmatpush1.msra.mxu0 %v919
        %921 = vmatprep.subr.mxu0 0.0
        %v922 = vand.u32 %v599, 4294901760
        %v923 = vsub.f32 %v599, %v922
        %v924 = vand.u32 %v923, 4294901760
        %v925 = vsub.f32 %v923, %v924
        %v926 = vand.u32 %v925, 4294901760
        %927 = vmatpush1.msra.mxu0 %v926
        %928 = vmatprep.subr.mxu0 0.0
        %v929 = vand.u32 %v600, 4294901760
        %v930 = vsub.f32 %v600, %v929
        %v931 = vand.u32 %v930, 4294901760
        %v932 = vsub.f32 %v930, %v931
        %v933 = vand.u32 %v932, 4294901760
        %934 = vmatpush1.msra.mxu0 %v933
        %935 = vmatprep.subr.mxu0 0.0
        %v936 = vand.u32 %v601, 4294901760
        %v937 = vsub.f32 %v601, %v936
        %v938 = vand.u32 %v937, 4294901760
        %v939 = vsub.f32 %v937, %v938
        %v940 = vand.u32 %v939, 4294901760
        %941 = vmatpush1.msra.mxu0 %v940
        %942 = vmatprep.subr.mxu0 0.0
        %v943 = vand.u32 %v602, 4294901760
        %v944 = vsub.f32 %v602, %v943
        %v945 = vand.u32 %v944, 4294901760
        %v946 = vsub.f32 %v944, %v945
        %v947 = vand.u32 %v946, 4294901760
        %948 = vmatpush1.msra.mxu0 %v947
        %949 = vmatprep.subr.mxu0 0.0
        %v950 = vand.u32 %v603, 4294901760
        %v951 = vsub.f32 %v603, %v950
        %v952 = vand.u32 %v951, 4294901760
        %v953 = vsub.f32 %v951, %v952
        %v954 = vand.u32 %v953, 4294901760
        %955 = vmatpush1.msra.mxu0 %v954
        %v956 = vand.u32 %v570, 4294901760
        %957 = vmatprep.mubr.f32.mxu0 %v956
        %v958 = vand.u32 %v569, 4294901760
        %959 = vmatmul.mubr.f32.gmra.mrb[0].mxu0 %v958
        %v960 = vpop.f32.mrb[0].mxu0
        %v961 = vadd.f32 %v729, %v960
        %v962 = vpop.f32.mrb[0].mxu0
        %963 = vdwg.mxu0
        %964 = vmatprep.subr.mxu0 0.0
        %v965 = vand.u32 %v572, 4294901760
        %v966 = vsub.f32 %v572, %v965
        %967 = vmatpush1.msra.mxu0 %v966
        %968 = vmatprep.subr.mxu0 0.0
        %v969 = vand.u32 %v573, 4294901760
        %v970 = vsub.f32 %v573, %v969
        %971 = vmatpush1.msra.mxu0 %v970
        %972 = vmatprep.subr.mxu0 0.0
        %v973 = vand.u32 %v574, 4294901760
        %v974 = vsub.f32 %v574, %v973
        %975 = vmatpush1.msra.mxu0 %v974
        %976 = vmatprep.subr.mxu0 0.0
        %v977 = vand.u32 %v575, 4294901760
        %v978 = vsub.f32 %v575, %v977
        %979 = vmatpush1.msra.mxu0 %v978
        %980 = vmatprep.subr.mxu0 0.0
        %v981 = vand.u32 %v576, 4294901760
        %v982 = vsub.f32 %v576, %v981
        %983 = vmatpush1.msra.mxu0 %v982
        %984 = vmatprep.subr.mxu0 0.0
        %v985 = vand.u32 %v577, 4294901760
        %v986 = vsub.f32 %v577, %v985
        %987 = vmatpush1.msra.mxu0 %v986
        %988 = vmatprep.subr.mxu0 0.0
        %v989 = vand.u32 %v578, 4294901760
        %v990 = vsub.f32 %v578, %v989
        %991 = vmatpush1.msra.mxu0 %v990
        %992 = vmatprep.subr.mxu0 0.0
        %v993 = vand.u32 %v579, 4294901760
        %v994 = vsub.f32 %v579, %v993
        %995 = vmatpush1.msra.mxu0 %v994
        %996 = vmatprep.subr.mxu0 0.0
        %v997 = vand.u32 %v580, 4294901760
        %v998 = vsub.f32 %v580, %v997
        %999 = vmatpush1.msra.mxu0 %v998
        %1000 = vmatprep.subr.mxu0 0.0
        %v1001 = vand.u32 %v581, 4294901760
        %v1002 = vsub.f32 %v581, %v1001
        %1003 = vmatpush1.msra.mxu0 %v1002
        %1004 = vmatprep.subr.mxu0 0.0
        %v1005 = vand.u32 %v582, 4294901760
        %v1006 = vsub.f32 %v582, %v1005
        %1007 = vmatpush1.msra.mxu0 %v1006
        %1008 = vmatprep.subr.mxu0 0.0
        %v1009 = vand.u32 %v583, 4294901760
        %v1010 = vsub.f32 %v583, %v1009
        %1011 = vmatpush1.msra.mxu0 %v1010
        %1012 = vmatprep.subr.mxu0 0.0
        %v1013 = vand.u32 %v584, 4294901760
        %v1014 = vsub.f32 %v584, %v1013
        %1015 = vmatpush1.msra.mxu0 %v1014
        %1016 = vmatprep.subr.mxu0 0.0
        %v1017 = vand.u32 %v585, 4294901760
        %v1018 = vsub.f32 %v585, %v1017
        %1019 = vmatpush1.msra.mxu0 %v1018
        %1020 = vmatprep.subr.mxu0 0.0
        %v1021 = vand.u32 %v586, 4294901760
        %v1022 = vsub.f32 %v586, %v1021
        %1023 = vmatpush1.msra.mxu0 %v1022
        %1024 = vmatprep.subr.mxu0 0.0
        %v1025 = vand.u32 %v587, 4294901760
        %v1026 = vsub.f32 %v587, %v1025
        %1027 = vmatpush1.msra.mxu0 %v1026
        %1028 = vmatprep.subr.mxu0 0.0
        %v1029 = vand.u32 %v588, 4294901760
        %v1030 = vsub.f32 %v588, %v1029
        %1031 = vmatpush1.msra.mxu0 %v1030
        %1032 = vmatprep.subr.mxu0 0.0
        %v1033 = vand.u32 %v589, 4294901760
        %v1034 = vsub.f32 %v589, %v1033
        %1035 = vmatpush1.msra.mxu0 %v1034
        %1036 = vmatprep.subr.mxu0 0.0
        %v1037 = vand.u32 %v590, 4294901760
        %v1038 = vsub.f32 %v590, %v1037
        %1039 = vmatpush1.msra.mxu0 %v1038
        %1040 = vmatprep.subr.mxu0 0.0
        %v1041 = vand.u32 %v591, 4294901760
        %v1042 = vsub.f32 %v591, %v1041
        %1043 = vmatpush1.msra.mxu0 %v1042
        %1044 = vmatprep.subr.mxu0 0.0
        %v1045 = vand.u32 %v592, 4294901760
        %v1046 = vsub.f32 %v592, %v1045
        %1047 = vmatpush1.msra.mxu0 %v1046
        %1048 = vmatprep.subr.mxu0 0.0
        %v1049 = vand.u32 %v593, 4294901760
        %v1050 = vsub.f32 %v593, %v1049
        %1051 = vmatpush1.msra.mxu0 %v1050
        %1052 = vmatprep.subr.mxu0 0.0
        %v1053 = vand.u32 %v594, 4294901760
        %v1054 = vsub.f32 %v594, %v1053
        %1055 = vmatpush1.msra.mxu0 %v1054
        %1056 = vmatprep.subr.mxu0 0.0
        %v1057 = vand.u32 %v595, 4294901760
        %v1058 = vsub.f32 %v595, %v1057
        %1059 = vmatpush1.msra.mxu0 %v1058
        %1060 = vmatprep.subr.mxu0 0.0
        %v1061 = vand.u32 %v596, 4294901760
        %v1062 = vsub.f32 %v596, %v1061
        %1063 = vmatpush1.msra.mxu0 %v1062
        %1064 = vmatprep.subr.mxu0 0.0
        %v1065 = vand.u32 %v597, 4294901760
        %v1066 = vsub.f32 %v597, %v1065
        %1067 = vmatpush1.msra.mxu0 %v1066
        %1068 = vmatprep.subr.mxu0 0.0
        %v1069 = vand.u32 %v598, 4294901760
        %v1070 = vsub.f32 %v598, %v1069
        %1071 = vmatpush1.msra.mxu0 %v1070
        %1072 = vmatprep.subr.mxu0 0.0
        %v1073 = vand.u32 %v599, 4294901760
        %v1074 = vsub.f32 %v599, %v1073
        %1075 = vmatpush1.msra.mxu0 %v1074
        %1076 = vmatprep.subr.mxu0 0.0
        %v1077 = vand.u32 %v600, 4294901760
        %v1078 = vsub.f32 %v600, %v1077
        %1079 = vmatpush1.msra.mxu0 %v1078
        %1080 = vmatprep.subr.mxu0 0.0
        %v1081 = vand.u32 %v601, 4294901760
        %v1082 = vsub.f32 %v601, %v1081
        %1083 = vmatpush1.msra.mxu0 %v1082
        %1084 = vmatprep.subr.mxu0 0.0
        %v1085 = vand.u32 %v602, 4294901760
        %v1086 = vsub.f32 %v602, %v1085
        %1087 = vmatpush1.msra.mxu0 %v1086
        %1088 = vmatprep.subr.mxu0 0.0
        %v1089 = vand.u32 %v603, 4294901760
        %v1090 = vsub.f32 %v603, %v1089
        %1091 = vmatpush1.msra.mxu0 %v1090
        %v1092 = vand.u32 %v570, 4294901760
        %v1093 = vsub.f32 %v570, %v1092
        %1094 = vmatprep.mubr.f32.mxu0 %v1093
        %v1095 = vand.u32 %v569, 4294901760
        %v1096 = vsub.f32 %v569, %v1095
        %1097 = vmatmul.mubr.f32.gmra.mrb[0].mxu0 %v1096
        %v1098 = vpop.f32.mrb[0].mxu0
        %v1099 = vadd.f32 %v961, %v1098
        %v1100 = vpop.f32.mrb[0].mxu0
        %1101 = vdwg.mxu0
        %1102 = vmatprep.subr.mxu0 0.0
        %v1103 = vand.u32 %v572, 4294901760
        %1104 = vmatpush1.msra.mxu0 %v1103
        %1105 = vmatprep.subr.mxu0 0.0
        %v1106 = vand.u32 %v573, 4294901760
        %1107 = vmatpush1.msra.mxu0 %v1106
        %1108 = vmatprep.subr.mxu0 0.0
        %v1109 = vand.u32 %v574, 4294901760
        %1110 = vmatpush1.msra.mxu0 %v1109
        %1111 = vmatprep.subr.mxu0 0.0
        %v1112 = vand.u32 %v575, 4294901760
        %1113 = vmatpush1.msra.mxu0 %v1112
        %1114 = vmatprep.subr.mxu0 0.0
        %v1115 = vand.u32 %v576, 4294901760
        %1116 = vmatpush1.msra.mxu0 %v1115
        %1117 = vmatprep.subr.mxu0 0.0
        %v1118 = vand.u32 %v577, 4294901760
        %1119 = vmatpush1.msra.mxu0 %v1118
        %1120 = vmatprep.subr.mxu0 0.0
        %v1121 = vand.u32 %v578, 4294901760
        %1122 = vmatpush1.msra.mxu0 %v1121
        %1123 = vmatprep.subr.mxu0 0.0
        %v1124 = vand.u32 %v579, 4294901760
        %1125 = vmatpush1.msra.mxu0 %v1124
        %1126 = vmatprep.subr.mxu0 0.0
        %v1127 = vand.u32 %v580, 4294901760
        %1128 = vmatpush1.msra.mxu0 %v1127
        %1129 = vmatprep.subr.mxu0 0.0
        %v1130 = vand.u32 %v581, 4294901760
        %1131 = vmatpush1.msra.mxu0 %v1130
        %1132 = vmatprep.subr.mxu0 0.0
        %v1133 = vand.u32 %v582, 4294901760
        %1134 = vmatpush1.msra.mxu0 %v1133
        %1135 = vmatprep.subr.mxu0 0.0
        %v1136 = vand.u32 %v583, 4294901760
        %1137 = vmatpush1.msra.mxu0 %v1136
        %1138 = vmatprep.subr.mxu0 0.0
        %v1139 = vand.u32 %v584, 4294901760
        %1140 = vmatpush1.msra.mxu0 %v1139
        %1141 = vmatprep.subr.mxu0 0.0
        %v1142 = vand.u32 %v585, 4294901760
        %1143 = vmatpush1.msra.mxu0 %v1142
        %1144 = vmatprep.subr.mxu0 0.0
        %v1145 = vand.u32 %v586, 4294901760
        %1146 = vmatpush1.msra.mxu0 %v1145
        %1147 = vmatprep.subr.mxu0 0.0
        %v1148 = vand.u32 %v587, 4294901760
        %1149 = vmatpush1.msra.mxu0 %v1148
        %1150 = vmatprep.subr.mxu0 0.0
        %v1151 = vand.u32 %v588, 4294901760
        %1152 = vmatpush1.msra.mxu0 %v1151
        %1153 = vmatprep.subr.mxu0 0.0
        %v1154 = vand.u32 %v589, 4294901760
        %1155 = vmatpush1.msra.mxu0 %v1154
        %1156 = vmatprep.subr.mxu0 0.0
        %v1157 = vand.u32 %v590, 4294901760
        %1158 = vmatpush1.msra.mxu0 %v1157
        %1159 = vmatprep.subr.mxu0 0.0
        %v1160 = vand.u32 %v591, 4294901760
        %1161 = vmatpush1.msra.mxu0 %v1160
        %1162 = vmatprep.subr.mxu0 0.0
        %v1163 = vand.u32 %v592, 4294901760
        %1164 = vmatpush1.msra.mxu0 %v1163
        %1165 = vmatprep.subr.mxu0 0.0
        %v1166 = vand.u32 %v593, 4294901760
        %1167 = vmatpush1.msra.mxu0 %v1166
        %1168 = vmatprep.subr.mxu0 0.0
        %v1169 = vand.u32 %v594, 4294901760
        %1170 = vmatpush1.msra.mxu0 %v1169
        %1171 = vmatprep.subr.mxu0 0.0
        %v1172 = vand.u32 %v595, 4294901760
        %1173 = vmatpush1.msra.mxu0 %v1172
        %1174 = vmatprep.subr.mxu0 0.0
        %v1175 = vand.u32 %v596, 4294901760
        %1176 = vmatpush1.msra.mxu0 %v1175
        %1177 = vmatprep.subr.mxu0 0.0
        %v1178 = vand.u32 %v597, 4294901760
        %1179 = vmatpush1.msra.mxu0 %v1178
        %1180 = vmatprep.subr.mxu0 0.0
        %v1181 = vand.u32 %v598, 4294901760
        %1182 = vmatpush1.msra.mxu0 %v1181
        %1183 = vmatprep.subr.mxu0 0.0
        %v1184 = vand.u32 %v599, 4294901760
        %1185 = vmatpush1.msra.mxu0 %v1184
        %1186 = vmatprep.subr.mxu0 0.0
        %v1187 = vand.u32 %v600, 4294901760
        %1188 = vmatpush1.msra.mxu0 %v1187
        %1189 = vmatprep.subr.mxu0 0.0
        %v1190 = vand.u32 %v601, 4294901760
        %1191 = vmatpush1.msra.mxu0 %v1190
        %1192 = vmatprep.subr.mxu0 0.0
        %v1193 = vand.u32 %v602, 4294901760
        %1194 = vmatpush1.msra.mxu0 %v1193
        %1195 = vmatprep.subr.mxu0 0.0
        %v1196 = vand.u32 %v603, 4294901760
        %1197 = vmatpush1.msra.mxu0 %v1196
        %v1198 = vand.u32 %v570, 4294901760
        %v1199 = vsub.f32 %v570, %v1198
        %v1200 = vand.u32 %v1199, 4294901760
        %1201 = vmatprep.mubr.f32.mxu0 %v1200
        %v1202 = vand.u32 %v569, 4294901760
        %v1203 = vsub.f32 %v569, %v1202
        %v1204 = vand.u32 %v1203, 4294901760
        %1205 = vmatmul.mubr.f32.gmra.mrb[0].mxu0 %v1204
        %v1206 = vpop.f32.mrb[0].mxu0
        %v1207 = vadd.f32 %v1099, %v1206
        %v1208 = vpop.f32.mrb[0].mxu0
        %1209 = vdwg.mxu0
        %1210 = vmatprep.subr.mxu0 0.0
        %v1211 = vand.u32 %v572, 4294901760
        %v1212 = vsub.f32 %v572, %v1211
        %v1213 = vand.u32 %v1212, 4294901760
        %1214 = vmatpush1.msra.mxu0 %v1213
        %1215 = vmatprep.subr.mxu0 0.0
        %v1216 = vand.u32 %v573, 4294901760
        %v1217 = vsub.f32 %v573, %v1216
        %v1218 = vand.u32 %v1217, 4294901760
        %1219 = vmatpush1.msra.mxu0 %v1218
        %1220 = vmatprep.subr.mxu0 0.0
        %v1221 = vand.u32 %v574, 4294901760
        %v1222 = vsub.f32 %v574, %v1221
        %v1223 = vand.u32 %v1222, 4294901760
        %1224 = vmatpush1.msra.mxu0 %v1223
        %1225 = vmatprep.subr.mxu0 0.0
        %v1226 = vand.u32 %v575, 4294901760
        %v1227 = vsub.f32 %v575, %v1226
        %v1228 = vand.u32 %v1227, 4294901760
        %1229 = vmatpush1.msra.mxu0 %v1228
        %1230 = vmatprep.subr.mxu0 0.0
        %v1231 = vand.u32 %v576, 4294901760
        %v1232 = vsub.f32 %v576, %v1231
        %v1233 = vand.u32 %v1232, 4294901760
        %1234 = vmatpush1.msra.mxu0 %v1233
        %1235 = vmatprep.subr.mxu0 0.0
        %v1236 = vand.u32 %v577, 4294901760
        %v1237 = vsub.f32 %v577, %v1236
        %v1238 = vand.u32 %v1237, 4294901760
        %1239 = vmatpush1.msra.mxu0 %v1238
        %1240 = vmatprep.subr.mxu0 0.0
        %v1241 = vand.u32 %v578, 4294901760
        %v1242 = vsub.f32 %v578, %v1241
        %v1243 = vand.u32 %v1242, 4294901760
        %1244 = vmatpush1.msra.mxu0 %v1243
        %1245 = vmatprep.subr.mxu0 0.0
        %v1246 = vand.u32 %v579, 4294901760
        %v1247 = vsub.f32 %v579, %v1246
        %v1248 = vand.u32 %v1247, 4294901760
        %1249 = vmatpush1.msra.mxu0 %v1248
        %1250 = vmatprep.subr.mxu0 0.0
        %v1251 = vand.u32 %v580, 4294901760
        %v1252 = vsub.f32 %v580, %v1251
        %v1253 = vand.u32 %v1252, 4294901760
        %1254 = vmatpush1.msra.mxu0 %v1253
        %1255 = vmatprep.subr.mxu0 0.0
        %v1256 = vand.u32 %v581, 4294901760
        %v1257 = vsub.f32 %v581, %v1256
        %v1258 = vand.u32 %v1257, 4294901760
        %1259 = vmatpush1.msra.mxu0 %v1258
        %1260 = vmatprep.subr.mxu0 0.0
        %v1261 = vand.u32 %v582, 4294901760
        %v1262 = vsub.f32 %v582, %v1261
        %v1263 = vand.u32 %v1262, 4294901760
        %1264 = vmatpush1.msra.mxu0 %v1263
        %1265 = vmatprep.subr.mxu0 0.0
        %v1266 = vand.u32 %v583, 4294901760
        %v1267 = vsub.f32 %v583, %v1266
        %v1268 = vand.u32 %v1267, 4294901760
        %1269 = vmatpush1.msra.mxu0 %v1268
        %1270 = vmatprep.subr.mxu0 0.0
        %v1271 = vand.u32 %v584, 4294901760
        %v1272 = vsub.f32 %v584, %v1271
        %v1273 = vand.u32 %v1272, 4294901760
        %1274 = vmatpush1.msra.mxu0 %v1273
        %1275 = vmatprep.subr.mxu0 0.0
        %v1276 = vand.u32 %v585, 4294901760
        %v1277 = vsub.f32 %v585, %v1276
        %v1278 = vand.u32 %v1277, 4294901760
        %1279 = vmatpush1.msra.mxu0 %v1278
        %1280 = vmatprep.subr.mxu0 0.0
        %v1281 = vand.u32 %v586, 4294901760
        %v1282 = vsub.f32 %v586, %v1281
        %v1283 = vand.u32 %v1282, 4294901760
        %1284 = vmatpush1.msra.mxu0 %v1283
        %1285 = vmatprep.subr.mxu0 0.0
        %v1286 = vand.u32 %v587, 4294901760
        %v1287 = vsub.f32 %v587, %v1286
        %v1288 = vand.u32 %v1287, 4294901760
        %1289 = vmatpush1.msra.mxu0 %v1288
        %1290 = vmatprep.subr.mxu0 0.0
        %v1291 = vand.u32 %v588, 4294901760
        %v1292 = vsub.f32 %v588, %v1291
        %v1293 = vand.u32 %v1292, 4294901760
        %1294 = vmatpush1.msra.mxu0 %v1293
        %1295 = vmatprep.subr.mxu0 0.0
        %v1296 = vand.u32 %v589, 4294901760
        %v1297 = vsub.f32 %v589, %v1296
        %v1298 = vand.u32 %v1297, 4294901760
        %1299 = vmatpush1.msra.mxu0 %v1298
        %1300 = vmatprep.subr.mxu0 0.0
        %v1301 = vand.u32 %v590, 4294901760
        %v1302 = vsub.f32 %v590, %v1301
        %v1303 = vand.u32 %v1302, 4294901760
        %1304 = vmatpush1.msra.mxu0 %v1303
        %1305 = vmatprep.subr.mxu0 0.0
        %v1306 = vand.u32 %v591, 4294901760
        %v1307 = vsub.f32 %v591, %v1306
        %v1308 = vand.u32 %v1307, 4294901760
        %1309 = vmatpush1.msra.mxu0 %v1308
        %1310 = vmatprep.subr.mxu0 0.0
        %v1311 = vand.u32 %v592, 4294901760
        %v1312 = vsub.f32 %v592, %v1311
        %v1313 = vand.u32 %v1312, 4294901760
        %1314 = vmatpush1.msra.mxu0 %v1313
        %1315 = vmatprep.subr.mxu0 0.0
        %v1316 = vand.u32 %v593, 4294901760
        %v1317 = vsub.f32 %v593, %v1316
        %v1318 = vand.u32 %v1317, 4294901760
        %1319 = vmatpush1.msra.mxu0 %v1318
        %1320 = vmatprep.subr.mxu0 0.0
        %v1321 = vand.u32 %v594, 4294901760
        %v1322 = vsub.f32 %v594, %v1321
        %v1323 = vand.u32 %v1322, 4294901760
        %1324 = vmatpush1.msra.mxu0 %v1323
        %1325 = vmatprep.subr.mxu0 0.0
        %v1326 = vand.u32 %v595, 4294901760
        %v1327 = vsub.f32 %v595, %v1326
        %v1328 = vand.u32 %v1327, 4294901760
        %1329 = vmatpush1.msra.mxu0 %v1328
        %1330 = vmatprep.subr.mxu0 0.0
        %v1331 = vand.u32 %v596, 4294901760
        %v1332 = vsub.f32 %v596, %v1331
        %v1333 = vand.u32 %v1332, 4294901760
        %1334 = vmatpush1.msra.mxu0 %v1333
        %1335 = vmatprep.subr.mxu0 0.0
        %v1336 = vand.u32 %v597, 4294901760
        %v1337 = vsub.f32 %v597, %v1336
        %v1338 = vand.u32 %v1337, 4294901760
        %1339 = vmatpush1.msra.mxu0 %v1338
        %1340 = vmatprep.subr.mxu0 0.0
        %v1341 = vand.u32 %v598, 4294901760
        %v1342 = vsub.f32 %v598, %v1341
        %v1343 = vand.u32 %v1342, 4294901760
        %1344 = vmatpush1.msra.mxu0 %v1343
        %1345 = vmatprep.subr.mxu0 0.0
        %v1346 = vand.u32 %v599, 4294901760
        %v1347 = vsub.f32 %v599, %v1346
        %v1348 = vand.u32 %v1347, 4294901760
        %1349 = vmatpush1.msra.mxu0 %v1348
        %1350 = vmatprep.subr.mxu0 0.0
        %v1351 = vand.u32 %v600, 4294901760
        %v1352 = vsub.f32 %v600, %v1351
        %v1353 = vand.u32 %v1352, 4294901760
        %1354 = vmatpush1.msra.mxu0 %v1353
        %1355 = vmatprep.subr.mxu0 0.0
        %v1356 = vand.u32 %v601, 4294901760
        %v1357 = vsub.f32 %v601, %v1356
        %v1358 = vand.u32 %v1357, 4294901760
        %1359 = vmatpush1.msra.mxu0 %v1358
        %1360 = vmatprep.subr.mxu0 0.0
        %v1361 = vand.u32 %v602, 4294901760
        %v1362 = vsub.f32 %v602, %v1361
        %v1363 = vand.u32 %v1362, 4294901760
        %1364 = vmatpush1.msra.mxu0 %v1363
        %1365 = vmatprep.subr.mxu0 0.0
        %v1366 = vand.u32 %v603, 4294901760
        %v1367 = vsub.f32 %v603, %v1366
        %v1368 = vand.u32 %v1367, 4294901760
        %1369 = vmatpush1.msra.mxu0 %v1368
        %v1370 = vand.u32 %v570, 4294901760
        %1371 = vmatprep.mubr.f32.mxu0 %v1370
        %v1372 = vand.u32 %v569, 4294901760
        %1373 = vmatmul.mubr.f32.gmra.mrb[0].mxu0 %v1372
        %v1374 = vpop.f32.mrb[0].mxu0
        %v1375 = vadd.f32 %v1207, %v1374
        %v1376 = vpop.f32.mrb[0].mxu0
        %1377 = vdwg.mxu0
        %1378 = vmatprep.subr.mxu0 0.0
        %v1379 = vand.u32 %v572, 4294901760
        %1380 = vmatpush1.msra.mxu0 %v1379
        %1381 = vmatprep.subr.mxu0 0.0
        %v1382 = vand.u32 %v573, 4294901760
        %1383 = vmatpush1.msra.mxu0 %v1382
        %1384 = vmatprep.subr.mxu0 0.0
        %v1385 = vand.u32 %v574, 4294901760
        %1386 = vmatpush1.msra.mxu0 %v1385
        %1387 = vmatprep.subr.mxu0 0.0
        %v1388 = vand.u32 %v575, 4294901760
        %1389 = vmatpush1.msra.mxu0 %v1388
        %1390 = vmatprep.subr.mxu0 0.0
        %v1391 = vand.u32 %v576, 4294901760
        %1392 = vmatpush1.msra.mxu0 %v1391
        %1393 = vmatprep.subr.mxu0 0.0
        %v1394 = vand.u32 %v577, 4294901760
        %1395 = vmatpush1.msra.mxu0 %v1394
        %1396 = vmatprep.subr.mxu0 0.0
        %v1397 = vand.u32 %v578, 4294901760
        %1398 = vmatpush1.msra.mxu0 %v1397
        %1399 = vmatprep.subr.mxu0 0.0
        %v1400 = vand.u32 %v579, 4294901760
        %1401 = vmatpush1.msra.mxu0 %v1400
        %1402 = vmatprep.subr.mxu0 0.0
        %v1403 = vand.u32 %v580, 4294901760
        %1404 = vmatpush1.msra.mxu0 %v1403
        %1405 = vmatprep.subr.mxu0 0.0
        %v1406 = vand.u32 %v581, 4294901760
        %1407 = vmatpush1.msra.mxu0 %v1406
        %1408 = vmatprep.subr.mxu0 0.0
        %v1409 = vand.u32 %v582, 4294901760
        %1410 = vmatpush1.msra.mxu0 %v1409
        %1411 = vmatprep.subr.mxu0 0.0
        %v1412 = vand.u32 %v583, 4294901760
        %1413 = vmatpush1.msra.mxu0 %v1412
        %1414 = vmatprep.subr.mxu0 0.0
        %v1415 = vand.u32 %v584, 4294901760
        %1416 = vmatpush1.msra.mxu0 %v1415
        %1417 = vmatprep.subr.mxu0 0.0
        %v1418 = vand.u32 %v585, 4294901760
        %1419 = vmatpush1.msra.mxu0 %v1418
        %1420 = vmatprep.subr.mxu0 0.0
        %v1421 = vand.u32 %v586, 4294901760
        %1422 = vmatpush1.msra.mxu0 %v1421
        %1423 = vmatprep.subr.mxu0 0.0
        %v1424 = vand.u32 %v587, 4294901760
        %1425 = vmatpush1.msra.mxu0 %v1424
        %1426 = vmatprep.subr.mxu0 0.0
        %v1427 = vand.u32 %v588, 4294901760
        %1428 = vmatpush1.msra.mxu0 %v1427
        %1429 = vmatprep.subr.mxu0 0.0
        %v1430 = vand.u32 %v589, 4294901760
        %1431 = vmatpush1.msra.mxu0 %v1430
        %1432 = vmatprep.subr.mxu0 0.0
        %v1433 = vand.u32 %v590, 4294901760
        %1434 = vmatpush1.msra.mxu0 %v1433
        %1435 = vmatprep.subr.mxu0 0.0
        %v1436 = vand.u32 %v591, 4294901760
        %1437 = vmatpush1.msra.mxu0 %v1436
        %1438 = vmatprep.subr.mxu0 0.0
        %v1439 = vand.u32 %v592, 4294901760
        %1440 = vmatpush1.msra.mxu0 %v1439
        %1441 = vmatprep.subr.mxu0 0.0
        %v1442 = vand.u32 %v593, 4294901760
        %1443 = vmatpush1.msra.mxu0 %v1442
        %1444 = vmatprep.subr.mxu0 0.0
        %v1445 = vand.u32 %v594, 4294901760
        %1446 = vmatpush1.msra.mxu0 %v1445
        %1447 = vmatprep.subr.mxu0 0.0
        %v1448 = vand.u32 %v595, 4294901760
        %1449 = vmatpush1.msra.mxu0 %v1448
        %1450 = vmatprep.subr.mxu0 0.0
        %v1451 = vand.u32 %v596, 4294901760
        %1452 = vmatpush1.msra.mxu0 %v1451
        %1453 = vmatprep.subr.mxu0 0.0
        %v1454 = vand.u32 %v597, 4294901760
        %1455 = vmatpush1.msra.mxu0 %v1454
        %1456 = vmatprep.subr.mxu0 0.0
        %v1457 = vand.u32 %v598, 4294901760
        %1458 = vmatpush1.msra.mxu0 %v1457
        %1459 = vmatprep.subr.mxu0 0.0
        %v1460 = vand.u32 %v599, 4294901760
        %1461 = vmatpush1.msra.mxu0 %v1460
        %1462 = vmatprep.subr.mxu0 0.0
        %v1463 = vand.u32 %v600, 4294901760
        %1464 = vmatpush1.msra.mxu0 %v1463
        %1465 = vmatprep.subr.mxu0 0.0
        %v1466 = vand.u32 %v601, 4294901760
        %1467 = vmatpush1.msra.mxu0 %v1466
        %1468 = vmatprep.subr.mxu0 0.0
        %v1469 = vand.u32 %v602, 4294901760
        %1470 = vmatpush1.msra.mxu0 %v1469
        %1471 = vmatprep.subr.mxu0 0.0
        %v1472 = vand.u32 %v603, 4294901760
        %1473 = vmatpush1.msra.mxu0 %v1472
        %v1474 = vand.u32 %v570, 4294901760
        %1475 = vmatprep.mubr.f32.mxu0 %v1474
        %v1476 = vand.u32 %v569, 4294901760
        %1477 = vmatmul.mubr.f32.gmra.mrb[0].mxu0 %v1476
        %v1478 = vpop.f32.mrb[0].mxu0
        %v1479 = vadd.f32 %v1375, %v1478
        %v1480 = vpop.f32.mrb[0].mxu0
        %1481 = vdwg.mxu0
        %1482 = vmatprep.subr.mxu0 0.0
        %v1483 = vand.u32 %v604, 4294901760
        %1484 = vmatpush1.msra.mxu0 %v1483
        %1485 = vmatprep.subr.mxu0 0.0
        %v1486 = vand.u32 %v605, 4294901760
        %1487 = vmatpush1.msra.mxu0 %v1486
        %1488 = vmatprep.subr.mxu0 0.0
        %v1489 = vand.u32 %v606, 4294901760
        %1490 = vmatpush1.msra.mxu0 %v1489
        %1491 = vmatprep.subr.mxu0 0.0
        %v1492 = vand.u32 %v607, 4294901760
        %1493 = vmatpush1.msra.mxu0 %v1492
        %1494 = vmatprep.subr.mxu0 0.0
        %v1495 = vand.u32 %v608, 4294901760
        %1496 = vmatpush1.msra.mxu0 %v1495
        %1497 = vmatprep.subr.mxu0 0.0
        %v1498 = vand.u32 %v609, 4294901760
        %1499 = vmatpush1.msra.mxu0 %v1498
        %1500 = vmatprep.subr.mxu0 0.0
        %v1501 = vand.u32 %v610, 4294901760
        %1502 = vmatpush1.msra.mxu0 %v1501
        %1503 = vmatprep.subr.mxu0 0.0
        %v1504 = vand.u32 %v611, 4294901760
        %1505 = vmatpush1.msra.mxu0 %v1504
        %1506 = vmatprep.subr.mxu0 0.0
        %v1507 = vand.u32 %v612, 4294901760
        %1508 = vmatpush1.msra.mxu0 %v1507
        %1509 = vmatprep.subr.mxu0 0.0
        %v1510 = vand.u32 %v613, 4294901760
        %1511 = vmatpush1.msra.mxu0 %v1510
        %1512 = vmatprep.subr.mxu0 0.0
        %v1513 = vand.u32 %v614, 4294901760
        %1514 = vmatpush1.msra.mxu0 %v1513
        %1515 = vmatprep.subr.mxu0 0.0
        %v1516 = vand.u32 %v615, 4294901760
        %1517 = vmatpush1.msra.mxu0 %v1516
        %1518 = vmatprep.subr.mxu0 0.0
        %v1519 = vand.u32 %v616, 4294901760
        %1520 = vmatpush1.msra.mxu0 %v1519
        %1521 = vmatprep.subr.mxu0 0.0
        %v1522 = vand.u32 %v617, 4294901760
        %1523 = vmatpush1.msra.mxu0 %v1522
        %1524 = vmatprep.subr.mxu0 0.0
        %v1525 = vand.u32 %v618, 4294901760
        %1526 = vmatpush1.msra.mxu0 %v1525
        %1527 = vmatprep.subr.mxu0 0.0
        %v1528 = vand.u32 %v619, 4294901760
        %1529 = vmatpush1.msra.mxu0 %v1528
        %1530 = vmatprep.subr.mxu0 0.0
        %1531 = vmatpush1.msra.mxu0 0.0
        %1532 = vmatprep.subr.mxu0 0.0
        %1533 = vmatpush1.msra.mxu0 0.0
        %1534 = vmatprep.subr.mxu0 0.0
        %1535 = vmatpush1.msra.mxu0 0.0
        %1536 = vmatprep.subr.mxu0 0.0
        %1537 = vmatpush1.msra.mxu0 0.0
        %1538 = vmatprep.subr.mxu0 0.0
        %1539 = vmatpush1.msra.mxu0 0.0
        %1540 = vmatprep.subr.mxu0 0.0
        %1541 = vmatpush1.msra.mxu0 0.0
        %1542 = vmatprep.subr.mxu0 0.0
        %1543 = vmatpush1.msra.mxu0 0.0
        %1544 = vmatprep.subr.mxu0 0.0
        %1545 = vmatpush1.msra.mxu0 0.0
        %1546 = vmatprep.subr.mxu0 0.0
        %1547 = vmatpush1.msra.mxu0 0.0
        %1548 = vmatprep.subr.mxu0 0.0
        %1549 = vmatpush1.msra.mxu0 0.0
        %1550 = vmatprep.subr.mxu0 0.0
        %1551 = vmatpush1.msra.mxu0 0.0
        %1552 = vmatprep.subr.mxu0 0.0
        %1553 = vmatpush1.msra.mxu0 0.0
        %1554 = vmatprep.subr.mxu0 0.0
        %1555 = vmatpush1.msra.mxu0 0.0
        %1556 = vmatprep.subr.mxu0 0.0
        %1557 = vmatpush1.msra.mxu0 0.0
        %1558 = vmatprep.subr.mxu0 0.0
        %1559 = vmatpush1.msra.mxu0 0.0
        %1560 = vmatprep.subr.mxu0 0.0
        %1561 = vmatpush1.msra.mxu0 0.0
        %1562 = vmatprep.mubr.f32.mxu0 0.0
        %v1563 = vand.u32 %v571, 4294901760
        %v1564 = vsub.f32 %v571, %v1563
        %v1565 = vand.u32 %v1564, 4294901760
        %v1566 = vsub.f32 %v1564, %v1565
        %v1567 = vand.u32 %v1566, 4294901760
        %1568 = vmatmul.mubr.f32.gmra.mrb[0].mxu0 %v1567
        %v1569 = vpop.f32.mrb[0].mxu0
        %v1570 = vadd.f32 %v1479, %v1569
        %v1571 = vpop.f32.mrb[0].mxu0
        %1572 = vdwg.mxu0
        %1573 = vmatprep.subr.mxu0 0.0
        %v1574 = vand.u32 %v604, 4294901760
        %v1575 = vsub.f32 %v604, %v1574
        %v1576 = vand.u32 %v1575, 4294901760
        %v1577 = vsub.f32 %v1575, %v1576
        %v1578 = vand.u32 %v1577, 4294901760
        %1579 = vmatpush1.msra.mxu0 %v1578
        %1580 = vmatprep.subr.mxu0 0.0
        %v1581 = vand.u32 %v605, 4294901760
        %v1582 = vsub.f32 %v605, %v1581
        %v1583 = vand.u32 %v1582, 4294901760
        %v1584 = vsub.f32 %v1582, %v1583
        %v1585 = vand.u32 %v1584, 4294901760
        %1586 = vmatpush1.msra.mxu0 %v1585
        %1587 = vmatprep.subr.mxu0 0.0
        %v1588 = vand.u32 %v606, 4294901760
        %v1589 = vsub.f32 %v606, %v1588
        %v1590 = vand.u32 %v1589, 4294901760
        %v1591 = vsub.f32 %v1589, %v1590
        %v1592 = vand.u32 %v1591, 4294901760
        %1593 = vmatpush1.msra.mxu0 %v1592
        %1594 = vmatprep.subr.mxu0 0.0
        %v1595 = vand.u32 %v607, 4294901760
        %v1596 = vsub.f32 %v607, %v1595
        %v1597 = vand.u32 %v1596, 4294901760
        %v1598 = vsub.f32 %v1596, %v1597
        %v1599 = vand.u32 %v1598, 4294901760
        %1600 = vmatpush1.msra.mxu0 %v1599
        %1601 = vmatprep.subr.mxu0 0.0
        %v1602 = vand.u32 %v608, 4294901760
        %v1603 = vsub.f32 %v608, %v1602
        %v1604 = vand.u32 %v1603, 4294901760
        %v1605 = vsub.f32 %v1603, %v1604
        %v1606 = vand.u32 %v1605, 4294901760
        %1607 = vmatpush1.msra.mxu0 %v1606
        %1608 = vmatprep.subr.mxu0 0.0
        %v1609 = vand.u32 %v609, 4294901760
        %v1610 = vsub.f32 %v609, %v1609
        %v1611 = vand.u32 %v1610, 4294901760
        %v1612 = vsub.f32 %v1610, %v1611
        %v1613 = vand.u32 %v1612, 4294901760
        %1614 = vmatpush1.msra.mxu0 %v1613
        %1615 = vmatprep.subr.mxu0 0.0
        %v1616 = vand.u32 %v610, 4294901760
        %v1617 = vsub.f32 %v610, %v1616
        %v1618 = vand.u32 %v1617, 4294901760
        %v1619 = vsub.f32 %v1617, %v1618
        %v1620 = vand.u32 %v1619, 4294901760
        %1621 = vmatpush1.msra.mxu0 %v1620
        %1622 = vmatprep.subr.mxu0 0.0
        %v1623 = vand.u32 %v611, 4294901760
        %v1624 = vsub.f32 %v611, %v1623
        %v1625 = vand.u32 %v1624, 4294901760
        %v1626 = vsub.f32 %v1624, %v1625
        %v1627 = vand.u32 %v1626, 4294901760
        %1628 = vmatpush1.msra.mxu0 %v1627
        %1629 = vmatprep.subr.mxu0 0.0
        %v1630 = vand.u32 %v612, 4294901760
        %v1631 = vsub.f32 %v612, %v1630
        %v1632 = vand.u32 %v1631, 4294901760
        %v1633 = vsub.f32 %v1631, %v1632
        %v1634 = vand.u32 %v1633, 4294901760
        %1635 = vmatpush1.msra.mxu0 %v1634
        %1636 = vmatprep.subr.mxu0 0.0
        %v1637 = vand.u32 %v613, 4294901760
        %v1638 = vsub.f32 %v613, %v1637
        %v1639 = vand.u32 %v1638, 4294901760
        %v1640 = vsub.f32 %v1638, %v1639
        %v1641 = vand.u32 %v1640, 4294901760
        %1642 = vmatpush1.msra.mxu0 %v1641
        %1643 = vmatprep.subr.mxu0 0.0
        %v1644 = vand.u32 %v614, 4294901760
        %v1645 = vsub.f32 %v614, %v1644
        %v1646 = vand.u32 %v1645, 4294901760
        %v1647 = vsub.f32 %v1645, %v1646
        %v1648 = vand.u32 %v1647, 4294901760
        %1649 = vmatpush1.msra.mxu0 %v1648
        %1650 = vmatprep.subr.mxu0 0.0
        %v1651 = vand.u32 %v615, 4294901760
        %v1652 = vsub.f32 %v615, %v1651
        %v1653 = vand.u32 %v1652, 4294901760
        %v1654 = vsub.f32 %v1652, %v1653
        %v1655 = vand.u32 %v1654, 4294901760
        %1656 = vmatpush1.msra.mxu0 %v1655
        %1657 = vmatprep.subr.mxu0 0.0
        %v1658 = vand.u32 %v616, 4294901760
        %v1659 = vsub.f32 %v616, %v1658
        %v1660 = vand.u32 %v1659, 4294901760
        %v1661 = vsub.f32 %v1659, %v1660
        %v1662 = vand.u32 %v1661, 4294901760
        %1663 = vmatpush1.msra.mxu0 %v1662
        %1664 = vmatprep.subr.mxu0 0.0
        %v1665 = vand.u32 %v617, 4294901760
        %v1666 = vsub.f32 %v617, %v1665
        %v1667 = vand.u32 %v1666, 4294901760
        %v1668 = vsub.f32 %v1666, %v1667
        %v1669 = vand.u32 %v1668, 4294901760
        %1670 = vmatpush1.msra.mxu0 %v1669
        %1671 = vmatprep.subr.mxu0 0.0
        %v1672 = vand.u32 %v618, 4294901760
        %v1673 = vsub.f32 %v618, %v1672
        %v1674 = vand.u32 %v1673, 4294901760
        %v1675 = vsub.f32 %v1673, %v1674
        %v1676 = vand.u32 %v1675, 4294901760
        %1677 = vmatpush1.msra.mxu0 %v1676
        %1678 = vmatprep.subr.mxu0 0.0
        %v1679 = vand.u32 %v619, 4294901760
        %v1680 = vsub.f32 %v619, %v1679
        %v1681 = vand.u32 %v1680, 4294901760
        %v1682 = vsub.f32 %v1680, %v1681
        %v1683 = vand.u32 %v1682, 4294901760
        %1684 = vmatpush1.msra.mxu0 %v1683
        %1685 = vmatprep.subr.mxu0 0.0
        %1686 = vmatpush1.msra.mxu0 0.0
        %1687 = vmatprep.subr.mxu0 0.0
        %1688 = vmatpush1.msra.mxu0 0.0
        %1689 = vmatprep.subr.mxu0 0.0
        %1690 = vmatpush1.msra.mxu0 0.0
        %1691 = vmatprep.subr.mxu0 0.0
        %1692 = vmatpush1.msra.mxu0 0.0
        %1693 = vmatprep.subr.mxu0 0.0
        %1694 = vmatpush1.msra.mxu0 0.0
        %1695 = vmatprep.subr.mxu0 0.0
        %1696 = vmatpush1.msra.mxu0 0.0
        %1697 = vmatprep.subr.mxu0 0.0
        %1698 = vmatpush1.msra.mxu0 0.0
        %1699 = vmatprep.subr.mxu0 0.0
        %1700 = vmatpush1.msra.mxu0 0.0
        %1701 = vmatprep.subr.mxu0 0.0
        %1702 = vmatpush1.msra.mxu0 0.0
        %1703 = vmatprep.subr.mxu0 0.0
        %1704 = vmatpush1.msra.mxu0 0.0
        %1705 = vmatprep.subr.mxu0 0.0
        %1706 = vmatpush1.msra.mxu0 0.0
        %1707 = vmatprep.subr.mxu0 0.0
        %1708 = vmatpush1.msra.mxu0 0.0
        %1709 = vmatprep.subr.mxu0 0.0
        %1710 = vmatpush1.msra.mxu0 0.0
        %1711 = vmatprep.subr.mxu0 0.0
        %1712 = vmatpush1.msra.mxu0 0.0
        %1713 = vmatprep.subr.mxu0 0.0
        %1714 = vmatpush1.msra.mxu0 0.0
        %1715 = vmatprep.subr.mxu0 0.0
        %1716 = vmatpush1.msra.mxu0 0.0
        %1717 = vmatprep.mubr.f32.mxu0 0.0
        %v1718 = vand.u32 %v571, 4294901760
        %1719 = vmatmul.mubr.f32.gmra.mrb[0].mxu0 %v1718
        %v1720 = vpop.f32.mrb[0].mxu0
        %v1721 = vadd.f32 %v1570, %v1720
        %v1722 = vpop.f32.mrb[0].mxu0
        %1723 = vdwg.mxu0
        %1724 = vmatprep.subr.mxu0 0.0
        %v1725 = vand.u32 %v604, 4294901760
        %v1726 = vsub.f32 %v604, %v1725
        %1727 = vmatpush1.msra.mxu0 %v1726
        %1728 = vmatprep.subr.mxu0 0.0
        %v1729 = vand.u32 %v605, 4294901760
        %v1730 = vsub.f32 %v605, %v1729
        %1731 = vmatpush1.msra.mxu0 %v1730
        %1732 = vmatprep.subr.mxu0 0.0
        %v1733 = vand.u32 %v606, 4294901760
        %v1734 = vsub.f32 %v606, %v1733
        %1735 = vmatpush1.msra.mxu0 %v1734
        %1736 = vmatprep.subr.mxu0 0.0
        %v1737 = vand.u32 %v607, 4294901760
        %v1738 = vsub.f32 %v607, %v1737
        %1739 = vmatpush1.msra.mxu0 %v1738
        %1740 = vmatprep.subr.mxu0 0.0
        %v1741 = vand.u32 %v608, 4294901760
        %v1742 = vsub.f32 %v608, %v1741
        %1743 = vmatpush1.msra.mxu0 %v1742
        %1744 = vmatprep.subr.mxu0 0.0
        %v1745 = vand.u32 %v609, 4294901760
        %v1746 = vsub.f32 %v609, %v1745
        %1747 = vmatpush1.msra.mxu0 %v1746
        %1748 = vmatprep.subr.mxu0 0.0
        %v1749 = vand.u32 %v610, 4294901760
        %v1750 = vsub.f32 %v610, %v1749
        %1751 = vmatpush1.msra.mxu0 %v1750
        %1752 = vmatprep.subr.mxu0 0.0
        %v1753 = vand.u32 %v611, 4294901760
        %v1754 = vsub.f32 %v611, %v1753
        %1755 = vmatpush1.msra.mxu0 %v1754
        %1756 = vmatprep.subr.mxu0 0.0
        %v1757 = vand.u32 %v612, 4294901760
        %v1758 = vsub.f32 %v612, %v1757
        %1759 = vmatpush1.msra.mxu0 %v1758
        %1760 = vmatprep.subr.mxu0 0.0
        %v1761 = vand.u32 %v613, 4294901760
        %v1762 = vsub.f32 %v613, %v1761
        %1763 = vmatpush1.msra.mxu0 %v1762
        %1764 = vmatprep.subr.mxu0 0.0
        %v1765 = vand.u32 %v614, 4294901760
        %v1766 = vsub.f32 %v614, %v1765
        %1767 = vmatpush1.msra.mxu0 %v1766
        %1768 = vmatprep.subr.mxu0 0.0
        %v1769 = vand.u32 %v615, 4294901760
        %v1770 = vsub.f32 %v615, %v1769
        %1771 = vmatpush1.msra.mxu0 %v1770
        %1772 = vmatprep.subr.mxu0 0.0
        %v1773 = vand.u32 %v616, 4294901760
        %v1774 = vsub.f32 %v616, %v1773
        %1775 = vmatpush1.msra.mxu0 %v1774
        %1776 = vmatprep.subr.mxu0 0.0
        %v1777 = vand.u32 %v617, 4294901760
        %v1778 = vsub.f32 %v617, %v1777
        %1779 = vmatpush1.msra.mxu0 %v1778
        %1780 = vmatprep.subr.mxu0 0.0
        %v1781 = vand.u32 %v618, 4294901760
        %v1782 = vsub.f32 %v618, %v1781
        %1783 = vmatpush1.msra.mxu0 %v1782
        %1784 = vmatprep.subr.mxu0 0.0
        %v1785 = vand.u32 %v619, 4294901760
        %v1786 = vsub.f32 %v619, %v1785
        %1787 = vmatpush1.msra.mxu0 %v1786
        %1788 = vmatprep.subr.mxu0 0.0
        %1789 = vmatpush1.msra.mxu0 0.0
        %1790 = vmatprep.subr.mxu0 0.0
        %1791 = vmatpush1.msra.mxu0 0.0
        %1792 = vmatprep.subr.mxu0 0.0
        %1793 = vmatpush1.msra.mxu0 0.0
        %1794 = vmatprep.subr.mxu0 0.0
        %1795 = vmatpush1.msra.mxu0 0.0
        %1796 = vmatprep.subr.mxu0 0.0
        %1797 = vmatpush1.msra.mxu0 0.0
        %1798 = vmatprep.subr.mxu0 0.0
        %1799 = vmatpush1.msra.mxu0 0.0
        %1800 = vmatprep.subr.mxu0 0.0
        %1801 = vmatpush1.msra.mxu0 0.0
        %1802 = vmatprep.subr.mxu0 0.0
        %1803 = vmatpush1.msra.mxu0 0.0
        %1804 = vmatprep.subr.mxu0 0.0
        %1805 = vmatpush1.msra.mxu0 0.0
        %1806 = vmatprep.subr.mxu0 0.0
        %1807 = vmatpush1.msra.mxu0 0.0
        %1808 = vmatprep.subr.mxu0 0.0
        %1809 = vmatpush1.msra.mxu0 0.0
        %1810 = vmatprep.subr.mxu0 0.0
        %1811 = vmatpush1.msra.mxu0 0.0
        %1812 = vmatprep.subr.mxu0 0.0
        %1813 = vmatpush1.msra.mxu0 0.0
        %1814 = vmatprep.subr.mxu0 0.0
        %1815 = vmatpush1.msra.mxu0 0.0
        %1816 = vmatprep.subr.mxu0 0.0
        %1817 = vmatpush1.msra.mxu0 0.0
        %1818 = vmatprep.subr.mxu0 0.0
        %1819 = vmatpush1.msra.mxu0 0.0
        %1820 = vmatprep.mubr.f32.mxu0 0.0
        %v1821 = vand.u32 %v571, 4294901760
        %v1822 = vsub.f32 %v571, %v1821
        %1823 = vmatmul.mubr.f32.gmra.mrb[0].mxu0 %v1822
        %v1824 = vpop.f32.mrb[0].mxu0
        %v1825 = vadd.f32 %v1721, %v1824
        %v1826 = vpop.f32.mrb[0].mxu0
        %1827 = vdwg.mxu0
        %1828 = vmatprep.subr.mxu0 0.0
        %v1829 = vand.u32 %v604, 4294901760
        %1830 = vmatpush1.msra.mxu0 %v1829
        %1831 = vmatprep.subr.mxu0 0.0
        %v1832 = vand.u32 %v605, 4294901760
        %1833 = vmatpush1.msra.mxu0 %v1832
        %1834 = vmatprep.subr.mxu0 0.0
        %v1835 = vand.u32 %v606, 4294901760
        %1836 = vmatpush1.msra.mxu0 %v1835
        %1837 = vmatprep.subr.mxu0 0.0
        %v1838 = vand.u32 %v607, 4294901760
        %1839 = vmatpush1.msra.mxu0 %v1838
        %1840 = vmatprep.subr.mxu0 0.0
        %v1841 = vand.u32 %v608, 4294901760
        %1842 = vmatpush1.msra.mxu0 %v1841
        %1843 = vmatprep.subr.mxu0 0.0
        %v1844 = vand.u32 %v609, 4294901760
        %1845 = vmatpush1.msra.mxu0 %v1844
        %1846 = vmatprep.subr.mxu0 0.0
        %v1847 = vand.u32 %v610, 4294901760
        %1848 = vmatpush1.msra.mxu0 %v1847
        %1849 = vmatprep.subr.mxu0 0.0
        %v1850 = vand.u32 %v611, 4294901760
        %1851 = vmatpush1.msra.mxu0 %v1850
        %1852 = vmatprep.subr.mxu0 0.0
        %v1853 = vand.u32 %v612, 4294901760
        %1854 = vmatpush1.msra.mxu0 %v1853
        %1855 = vmatprep.subr.mxu0 0.0
        %v1856 = vand.u32 %v613, 4294901760
        %1857 = vmatpush1.msra.mxu0 %v1856
        %1858 = vmatprep.subr.mxu0 0.0
        %v1859 = vand.u32 %v614, 4294901760
        %1860 = vmatpush1.msra.mxu0 %v1859
        %1861 = vmatprep.subr.mxu0 0.0
        %v1862 = vand.u32 %v615, 4294901760
        %1863 = vmatpush1.msra.mxu0 %v1862
        %1864 = vmatprep.subr.mxu0 0.0
        %v1865 = vand.u32 %v616, 4294901760
        %1866 = vmatpush1.msra.mxu0 %v1865
        %1867 = vmatprep.subr.mxu0 0.0
        %v1868 = vand.u32 %v617, 4294901760
        %1869 = vmatpush1.msra.mxu0 %v1868
        %1870 = vmatprep.subr.mxu0 0.0
        %v1871 = vand.u32 %v618, 4294901760
        %1872 = vmatpush1.msra.mxu0 %v1871
        %1873 = vmatprep.subr.mxu0 0.0
        %v1874 = vand.u32 %v619, 4294901760
        %1875 = vmatpush1.msra.mxu0 %v1874
        %1876 = vmatprep.subr.mxu0 0.0
        %1877 = vmatpush1.msra.mxu0 0.0
        %1878 = vmatprep.subr.mxu0 0.0
        %1879 = vmatpush1.msra.mxu0 0.0
        %1880 = vmatprep.subr.mxu0 0.0
        %1881 = vmatpush1.msra.mxu0 0.0
        %1882 = vmatprep.subr.mxu0 0.0
        %1883 = vmatpush1.msra.mxu0 0.0
        %1884 = vmatprep.subr.mxu0 0.0
        %1885 = vmatpush1.msra.mxu0 0.0
        %1886 = vmatprep.subr.mxu0 0.0
        %1887 = vmatpush1.msra.mxu0 0.0
        %1888 = vmatprep.subr.mxu0 0.0
        %1889 = vmatpush1.msra.mxu0 0.0
        %1890 = vmatprep.subr.mxu0 0.0
        %1891 = vmatpush1.msra.mxu0 0.0
        %1892 = vmatprep.subr.mxu0 0.0
        %1893 = vmatpush1.msra.mxu0 0.0
        %1894 = vmatprep.subr.mxu0 0.0
        %1895 = vmatpush1.msra.mxu0 0.0
        %1896 = vmatprep.subr.mxu0 0.0
        %1897 = vmatpush1.msra.mxu0 0.0
        %1898 = vmatprep.subr.mxu0 0.0
        %1899 = vmatpush1.msra.mxu0 0.0
        %1900 = vmatprep.subr.mxu0 0.0
        %1901 = vmatpush1.msra.mxu0 0.0
        %1902 = vmatprep.subr.mxu0 0.0
        %1903 = vmatpush1.msra.mxu0 0.0
        %1904 = vmatprep.subr.mxu0 0.0
        %1905 = vmatpush1.msra.mxu0 0.0
        %1906 = vmatprep.subr.mxu0 0.0
        %1907 = vmatpush1.msra.mxu0 0.0
        %1908 = vmatprep.mubr.f32.mxu0 0.0
        %v1909 = vand.u32 %v571, 4294901760
        %v1910 = vsub.f32 %v571, %v1909
        %v1911 = vand.u32 %v1910, 4294901760
        %1912 = vmatmul.mubr.f32.gmra.mrb[0].mxu0 %v1911
        %v1913 = vpop.f32.mrb[0].mxu0
        %v1914 = vadd.f32 %v1825, %v1913
        %v1915 = vpop.f32.mrb[0].mxu0
        %1916 = vdwg.mxu0
        %1917 = vmatprep.subr.mxu0 0.0
        %v1918 = vand.u32 %v604, 4294901760
        %v1919 = vsub.f32 %v604, %v1918
        %v1920 = vand.u32 %v1919, 4294901760
        %1921 = vmatpush1.msra.mxu0 %v1920
        %1922 = vmatprep.subr.mxu0 0.0
        %v1923 = vand.u32 %v605, 4294901760
        %v1924 = vsub.f32 %v605, %v1923
        %v1925 = vand.u32 %v1924, 4294901760
        %1926 = vmatpush1.msra.mxu0 %v1925
        %1927 = vmatprep.subr.mxu0 0.0
        %v1928 = vand.u32 %v606, 4294901760
        %v1929 = vsub.f32 %v606, %v1928
        %v1930 = vand.u32 %v1929, 4294901760
        %1931 = vmatpush1.msra.mxu0 %v1930
        %1932 = vmatprep.subr.mxu0 0.0
        %v1933 = vand.u32 %v607, 4294901760
        %v1934 = vsub.f32 %v607, %v1933
        %v1935 = vand.u32 %v1934, 4294901760
        %1936 = vmatpush1.msra.mxu0 %v1935
        %1937 = vmatprep.subr.mxu0 0.0
        %v1938 = vand.u32 %v608, 4294901760
        %v1939 = vsub.f32 %v608, %v1938
        %v1940 = vand.u32 %v1939, 4294901760
        %1941 = vmatpush1.msra.mxu0 %v1940
        %1942 = vmatprep.subr.mxu0 0.0
        %v1943 = vand.u32 %v609, 4294901760
        %v1944 = vsub.f32 %v609, %v1943
        %v1945 = vand.u32 %v1944, 4294901760
        %1946 = vmatpush1.msra.mxu0 %v1945
        %1947 = vmatprep.subr.mxu0 0.0
        %v1948 = vand.u32 %v610, 4294901760
        %v1949 = vsub.f32 %v610, %v1948
        %v1950 = vand.u32 %v1949, 4294901760
        %1951 = vmatpush1.msra.mxu0 %v1950
        %1952 = vmatprep.subr.mxu0 0.0
        %v1953 = vand.u32 %v611, 4294901760
        %v1954 = vsub.f32 %v611, %v1953
        %v1955 = vand.u32 %v1954, 4294901760
        %1956 = vmatpush1.msra.mxu0 %v1955
        %1957 = vmatprep.subr.mxu0 0.0
        %v1958 = vand.u32 %v612, 4294901760
        %v1959 = vsub.f32 %v612, %v1958
        %v1960 = vand.u32 %v1959, 4294901760
        %1961 = vmatpush1.msra.mxu0 %v1960
        %1962 = vmatprep.subr.mxu0 0.0
        %v1963 = vand.u32 %v613, 4294901760
        %v1964 = vsub.f32 %v613, %v1963
        %v1965 = vand.u32 %v1964, 4294901760
        %1966 = vmatpush1.msra.mxu0 %v1965
        %1967 = vmatprep.subr.mxu0 0.0
        %v1968 = vand.u32 %v614, 4294901760
        %v1969 = vsub.f32 %v614, %v1968
        %v1970 = vand.u32 %v1969, 4294901760
        %1971 = vmatpush1.msra.mxu0 %v1970
        %1972 = vmatprep.subr.mxu0 0.0
        %v1973 = vand.u32 %v615, 4294901760
        %v1974 = vsub.f32 %v615, %v1973
        %v1975 = vand.u32 %v1974, 4294901760
        %1976 = vmatpush1.msra.mxu0 %v1975
        %1977 = vmatprep.subr.mxu0 0.0
        %v1978 = vand.u32 %v616, 4294901760
        %v1979 = vsub.f32 %v616, %v1978
        %v1980 = vand.u32 %v1979, 4294901760
        %1981 = vmatpush1.msra.mxu0 %v1980
        %1982 = vmatprep.subr.mxu0 0.0
        %v1983 = vand.u32 %v617, 4294901760
        %v1984 = vsub.f32 %v617, %v1983
        %v1985 = vand.u32 %v1984, 4294901760
        %1986 = vmatpush1.msra.mxu0 %v1985
        %1987 = vmatprep.subr.mxu0 0.0
        %v1988 = vand.u32 %v618, 4294901760
        %v1989 = vsub.f32 %v618, %v1988
        %v1990 = vand.u32 %v1989, 4294901760
        %1991 = vmatpush1.msra.mxu0 %v1990
        %1992 = vmatprep.subr.mxu0 0.0
        %v1993 = vand.u32 %v619, 4294901760
        %v1994 = vsub.f32 %v619, %v1993
        %v1995 = vand.u32 %v1994, 4294901760
        %1996 = vmatpush1.msra.mxu0 %v1995
        %1997 = vmatprep.subr.mxu0 0.0
        %1998 = vmatpush1.msra.mxu0 0.0
        %1999 = vmatprep.subr.mxu0 0.0
        %2000 = vmatpush1.msra.mxu0 0.0
        %2001 = vmatprep.subr.mxu0 0.0
        %2002 = vmatpush1.msra.mxu0 0.0
        %2003 = vmatprep.subr.mxu0 0.0
        %2004 = vmatpush1.msra.mxu0 0.0
        %2005 = vmatprep.subr.mxu0 0.0
        %2006 = vmatpush1.msra.mxu0 0.0
        %2007 = vmatprep.subr.mxu0 0.0
        %2008 = vmatpush1.msra.mxu0 0.0
        %2009 = vmatprep.subr.mxu0 0.0
        %2010 = vmatpush1.msra.mxu0 0.0
        %2011 = vmatprep.subr.mxu0 0.0
        %2012 = vmatpush1.msra.mxu0 0.0
        %2013 = vmatprep.subr.mxu0 0.0
        %2014 = vmatpush1.msra.mxu0 0.0
        %2015 = vmatprep.subr.mxu0 0.0
        %2016 = vmatpush1.msra.mxu0 0.0
        %2017 = vmatprep.subr.mxu0 0.0
        %2018 = vmatpush1.msra.mxu0 0.0
        %2019 = vmatprep.subr.mxu0 0.0
        %2020 = vmatpush1.msra.mxu0 0.0
        %2021 = vmatprep.subr.mxu0 0.0
        %2022 = vmatpush1.msra.mxu0 0.0
        %2023 = vmatprep.subr.mxu0 0.0
        %2024 = vmatpush1.msra.mxu0 0.0
        %2025 = vmatprep.subr.mxu0 0.0
        %2026 = vmatpush1.msra.mxu0 0.0
        %2027 = vmatprep.subr.mxu0 0.0
        %2028 = vmatpush1.msra.mxu0 0.0
        %2029 = vmatprep.mubr.f32.mxu0 0.0
        %v2030 = vand.u32 %v571, 4294901760
        %2031 = vmatmul.mubr.f32.gmra.mrb[0].mxu0 %v2030
        %v2032 = vpop.f32.mrb[0].mxu0
        %v2033 = vadd.f32 %v1914, %v2032
        %v2034 = vpop.f32.mrb[0].mxu0
        %2035 = vdwg.mxu0
        %2036 = vmatprep.subr.mxu0 0.0
        %v2037 = vand.u32 %v604, 4294901760
        %2038 = vmatpush1.msra.mxu0 %v2037
        %2039 = vmatprep.subr.mxu0 0.0
        %v2040 = vand.u32 %v605, 4294901760
        %2041 = vmatpush1.msra.mxu0 %v2040
        %2042 = vmatprep.subr.mxu0 0.0
        %v2043 = vand.u32 %v606, 4294901760
        %2044 = vmatpush1.msra.mxu0 %v2043
        %2045 = vmatprep.subr.mxu0 0.0
        %v2046 = vand.u32 %v607, 4294901760
        %2047 = vmatpush1.msra.mxu0 %v2046
        %2048 = vmatprep.subr.mxu0 0.0
        %v2049 = vand.u32 %v608, 4294901760
        %2050 = vmatpush1.msra.mxu0 %v2049
        %2051 = vmatprep.subr.mxu0 0.0
        %v2052 = vand.u32 %v609, 4294901760
        %2053 = vmatpush1.msra.mxu0 %v2052
        %2054 = vmatprep.subr.mxu0 0.0
        %v2055 = vand.u32 %v610, 4294901760
        %2056 = vmatpush1.msra.mxu0 %v2055
        %2057 = vmatprep.subr.mxu0 0.0
        %v2058 = vand.u32 %v611, 4294901760
        %2059 = vmatpush1.msra.mxu0 %v2058
        %2060 = vmatprep.subr.mxu0 0.0
        %v2061 = vand.u32 %v612, 4294901760
        %2062 = vmatpush1.msra.mxu0 %v2061
        %2063 = vmatprep.subr.mxu0 0.0
        %v2064 = vand.u32 %v613, 4294901760
        %2065 = vmatpush1.msra.mxu0 %v2064
        %2066 = vmatprep.subr.mxu0 0.0
        %v2067 = vand.u32 %v614, 4294901760
        %2068 = vmatpush1.msra.mxu0 %v2067
        %2069 = vmatprep.subr.mxu0 0.0
        %v2070 = vand.u32 %v615, 4294901760
        %2071 = vmatpush1.msra.mxu0 %v2070
        %2072 = vmatprep.subr.mxu0 0.0
        %v2073 = vand.u32 %v616, 4294901760
        %2074 = vmatpush1.msra.mxu0 %v2073
        %2075 = vmatprep.subr.mxu0 0.0
        %v2076 = vand.u32 %v617, 4294901760
        %2077 = vmatpush1.msra.mxu0 %v2076
        %2078 = vmatprep.subr.mxu0 0.0
        %v2079 = vand.u32 %v618, 4294901760
        %2080 = vmatpush1.msra.mxu0 %v2079
        %2081 = vmatprep.subr.mxu0 0.0
        %v2082 = vand.u32 %v619, 4294901760
        %2083 = vmatpush1.msra.mxu0 %v2082
        %2084 = vmatprep.subr.mxu0 0.0
        %2085 = vmatpush1.msra.mxu0 0.0
        %2086 = vmatprep.subr.mxu0 0.0
        %2087 = vmatpush1.msra.mxu0 0.0
        %2088 = vmatprep.subr.mxu0 0.0
        %2089 = vmatpush1.msra.mxu0 0.0
        %2090 = vmatprep.subr.mxu0 0.0
        %2091 = vmatpush1.msra.mxu0 0.0
        %2092 = vmatprep.subr.mxu0 0.0
        %2093 = vmatpush1.msra.mxu0 0.0
        %2094 = vmatprep.subr.mxu0 0.0
        %2095 = vmatpush1.msra.mxu0 0.0
        %2096 = vmatprep.subr.mxu0 0.0
        %2097 = vmatpush1.msra.mxu0 0.0
        %2098 = vmatprep.subr.mxu0 0.0
        %2099 = vmatpush1.msra.mxu0 0.0
        %2100 = vmatprep.subr.mxu0 0.0
        %2101 = vmatpush1.msra.mxu0 0.0
        %2102 = vmatprep.subr.mxu0 0.0
        %2103 = vmatpush1.msra.mxu0 0.0
        %2104 = vmatprep.subr.mxu0 0.0
        %2105 = vmatpush1.msra.mxu0 0.0
        %2106 = vmatprep.subr.mxu0 0.0
        %2107 = vmatpush1.msra.mxu0 0.0
        %2108 = vmatprep.subr.mxu0 0.0
        %2109 = vmatpush1.msra.mxu0 0.0
        %2110 = vmatprep.subr.mxu0 0.0
        %2111 = vmatpush1.msra.mxu0 0.0
        %2112 = vmatprep.subr.mxu0 0.0
        %2113 = vmatpush1.msra.mxu0 0.0
        %2114 = vmatprep.subr.mxu0 0.0
        %2115 = vmatpush1.msra.mxu0 0.0
        %2116 = vmatprep.mubr.f32.mxu0 0.0
        %v2117 = vand.u32 %v571, 4294901760
        %2118 = vmatmul.mubr.f32.gmra.mrb[0].mxu0 %v2117
        %v2119 = vpop.f32.mrb[0].mxu0
        %v2120 = vadd.f32 %v2033, %v2119
        %v2121 = vpop.f32.mrb[0].mxu0
        %2122 = vdwg.mxu0
        %2123 = vmatprep.subr.mxu0 0.0
        %v2124 = vand.u32 %v550, 4294901760
        %2125 = vmatpush1.msra.mxu0 %v2124
        %2126 = vmatprep.subr.mxu0 0.0
        %v2127 = vand.u32 %v551, 4294901760
        %2128 = vmatpush1.msra.mxu0 %v2127
        %2129 = vmatprep.subr.mxu0 0.0
        %v2130 = vand.u32 %v552, 4294901760
        %2131 = vmatpush1.msra.mxu0 %v2130
        %2132 = vmatprep.subr.mxu0 0.0
        %v2133 = vand.u32 %v553, 4294901760
        %2134 = vmatpush1.msra.mxu0 %v2133
        %2135 = vmatprep.subr.mxu0 0.0
        %v2136 = vand.u32 %v554, 4294901760
        %2137 = vmatpush1.msra.mxu0 %v2136
        %2138 = vmatprep.subr.mxu0 0.0
        %v2139 = vand.u32 %v555, 4294901760
        %2140 = vmatpush1.msra.mxu0 %v2139
        %2141 = vmatprep.subr.mxu0 0.0
        %v2142 = vand.u32 %v556, 4294901760
        %2143 = vmatpush1.msra.mxu0 %v2142
        %2144 = vmatprep.subr.mxu0 0.0
        %v2145 = vand.u32 %v557, 4294901760
        %2146 = vmatpush1.msra.mxu0 %v2145
        %2147 = vmatprep.subr.mxu0 0.0
        %v2148 = vand.u32 %v558, 4294901760
        %2149 = vmatpush1.msra.mxu0 %v2148
        %2150 = vmatprep.subr.mxu0 0.0
        %v2151 = vand.u32 %v559, 4294901760
        %2152 = vmatpush1.msra.mxu0 %v2151
        %2153 = vmatprep.subr.mxu0 0.0
        %v2154 = vand.u32 %v560, 4294901760
        %2155 = vmatpush1.msra.mxu0 %v2154
        %2156 = vmatprep.subr.mxu0 0.0
        %v2157 = vand.u32 %v561, 4294901760
        %2158 = vmatpush1.msra.mxu0 %v2157
        %2159 = vmatprep.subr.mxu0 0.0
        %v2160 = vand.u32 %v562, 4294901760
        %2161 = vmatpush1.msra.mxu0 %v2160
        %2162 = vmatprep.subr.mxu0 0.0
        %v2163 = vand.u32 %v563, 4294901760
        %2164 = vmatpush1.msra.mxu0 %v2163
        %2165 = vmatprep.subr.mxu0 0.0
        %v2166 = vand.u32 %v564, 4294901760
        %2167 = vmatpush1.msra.mxu0 %v2166
        %2168 = vmatprep.subr.mxu0 0.0
        %v2169 = vand.u32 %v565, 4294901760
        %2170 = vmatpush1.msra.mxu0 %v2169
        %2171 = vmatprep.subr.mxu0 0.0
        %2172 = vmatpush1.msra.mxu0 0.0
        %2173 = vmatprep.subr.mxu0 0.0
        %2174 = vmatpush1.msra.mxu0 0.0
        %2175 = vmatprep.subr.mxu0 0.0
        %2176 = vmatpush1.msra.mxu0 0.0
        %2177 = vmatprep.subr.mxu0 0.0
        %2178 = vmatpush1.msra.mxu0 0.0
        %2179 = vmatprep.subr.mxu0 0.0
        %2180 = vmatpush1.msra.mxu0 0.0
        %2181 = vmatprep.subr.mxu0 0.0
        %2182 = vmatpush1.msra.mxu0 0.0
        %2183 = vmatprep.subr.mxu0 0.0
        %2184 = vmatpush1.msra.mxu0 0.0
        %2185 = vmatprep.subr.mxu0 0.0
        %2186 = vmatpush1.msra.mxu0 0.0
        %2187 = vmatprep.subr.mxu0 0.0
        %2188 = vmatpush1.msra.mxu0 0.0
        %2189 = vmatprep.subr.mxu0 0.0
        %2190 = vmatpush1.msra.mxu0 0.0
        %2191 = vmatprep.subr.mxu0 0.0
        %2192 = vmatpush1.msra.mxu0 0.0
        %2193 = vmatprep.subr.mxu0 0.0
        %2194 = vmatpush1.msra.mxu0 0.0
        %2195 = vmatprep.subr.mxu0 0.0
        %2196 = vmatpush1.msra.mxu0 0.0
        %2197 = vmatprep.subr.mxu0 0.0
        %2198 = vmatpush1.msra.mxu0 0.0
        %2199 = vmatprep.subr.mxu0 0.0
        %2200 = vmatpush1.msra.mxu0 0.0
        %2201 = vmatprep.subr.mxu0 0.0
        %2202 = vmatpush1.msra.mxu0 0.0
        %2203 = vmatprep.mubr.f32.mxu0 0.0
        %v2204 = vand.u32 %v549, 4294901760
        %v2205 = vsub.f32 %v549, %v2204
        %v2206 = vand.u32 %v2205, 4294901760
        %v2207 = vsub.f32 %v2205, %v2206
        %v2208 = vand.u32 %v2207, 4294901760
        %2209 = vmatmul.mubr.f32.gmra.mrb[0].mxu0 %v2208
        %v2210 = vpop.f32.mrb[0].mxu0
        %v2211 = vadd.f32 %v2120, %v2210
        %v2212 = vpop.f32.mrb[0].mxu0
        %2213 = vdwg.mxu0
        %2214 = vmatprep.subr.mxu0 0.0
        %v2215 = vand.u32 %v550, 4294901760
        %v2216 = vsub.f32 %v550, %v2215
        %v2217 = vand.u32 %v2216, 4294901760
        %v2218 = vsub.f32 %v2216, %v2217
        %v2219 = vand.u32 %v2218, 4294901760
        %2220 = vmatpush1.msra.mxu0 %v2219
        %2221 = vmatprep.subr.mxu0 0.0
        %v2222 = vand.u32 %v551, 4294901760
        %v2223 = vsub.f32 %v551, %v2222
        %v2224 = vand.u32 %v2223, 4294901760
        %v2225 = vsub.f32 %v2223, %v2224
        %v2226 = vand.u32 %v2225, 4294901760
        %2227 = vmatpush1.msra.mxu0 %v2226
        %2228 = vmatprep.subr.mxu0 0.0
        %v2229 = vand.u32 %v552, 4294901760
        %v2230 = vsub.f32 %v552, %v2229
        %v2231 = vand.u32 %v2230, 4294901760
        %v2232 = vsub.f32 %v2230, %v2231
        %v2233 = vand.u32 %v2232, 4294901760
        %2234 = vmatpush1.msra.mxu0 %v2233
        %2235 = vmatprep.subr.mxu0 0.0
        %v2236 = vand.u32 %v553, 4294901760
        %v2237 = vsub.f32 %v553, %v2236
        %v2238 = vand.u32 %v2237, 4294901760
        %v2239 = vsub.f32 %v2237, %v2238
        %v2240 = vand.u32 %v2239, 4294901760
        %2241 = vmatpush1.msra.mxu0 %v2240
        %2242 = vmatprep.subr.mxu0 0.0
        %v2243 = vand.u32 %v554, 4294901760
        %v2244 = vsub.f32 %v554, %v2243
        %v2245 = vand.u32 %v2244, 4294901760
        %v2246 = vsub.f32 %v2244, %v2245
        %v2247 = vand.u32 %v2246, 4294901760
        %2248 = vmatpush1.msra.mxu0 %v2247
        %2249 = vmatprep.subr.mxu0 0.0
        %v2250 = vand.u32 %v555, 4294901760
        %v2251 = vsub.f32 %v555, %v2250
        %v2252 = vand.u32 %v2251, 4294901760
        %v2253 = vsub.f32 %v2251, %v2252
        %v2254 = vand.u32 %v2253, 4294901760
        %2255 = vmatpush1.msra.mxu0 %v2254
        %2256 = vmatprep.subr.mxu0 0.0
        %v2257 = vand.u32 %v556, 4294901760
        %v2258 = vsub.f32 %v556, %v2257
        %v2259 = vand.u32 %v2258, 4294901760
        %v2260 = vsub.f32 %v2258, %v2259
        %v2261 = vand.u32 %v2260, 4294901760
        %2262 = vmatpush1.msra.mxu0 %v2261
        %2263 = vmatprep.subr.mxu0 0.0
        %v2264 = vand.u32 %v557, 4294901760
        %v2265 = vsub.f32 %v557, %v2264
        %v2266 = vand.u32 %v2265, 4294901760
        %v2267 = vsub.f32 %v2265, %v2266
        %v2268 = vand.u32 %v2267, 4294901760
        %2269 = vmatpush1.msra.mxu0 %v2268
        %2270 = vmatprep.subr.mxu0 0.0
        %v2271 = vand.u32 %v558, 4294901760
        %v2272 = vsub.f32 %v558, %v2271
        %v2273 = vand.u32 %v2272, 4294901760
        %v2274 = vsub.f32 %v2272, %v2273
        %v2275 = vand.u32 %v2274, 4294901760
        %2276 = vmatpush1.msra.mxu0 %v2275
        %2277 = vmatprep.subr.mxu0 0.0
        %v2278 = vand.u32 %v559, 4294901760
        %v2279 = vsub.f32 %v559, %v2278
        %v2280 = vand.u32 %v2279, 4294901760
        %v2281 = vsub.f32 %v2279, %v2280
        %v2282 = vand.u32 %v2281, 4294901760
        %2283 = vmatpush1.msra.mxu0 %v2282
        %2284 = vmatprep.subr.mxu0 0.0
        %v2285 = vand.u32 %v560, 4294901760
        %v2286 = vsub.f32 %v560, %v2285
        %v2287 = vand.u32 %v2286, 4294901760
        %v2288 = vsub.f32 %v2286, %v2287
        %v2289 = vand.u32 %v2288, 4294901760
        %2290 = vmatpush1.msra.mxu0 %v2289
        %2291 = vmatprep.subr.mxu0 0.0
        %v2292 = vand.u32 %v561, 4294901760
        %v2293 = vsub.f32 %v561, %v2292
        %v2294 = vand.u32 %v2293, 4294901760
        %v2295 = vsub.f32 %v2293, %v2294
        %v2296 = vand.u32 %v2295, 4294901760
        %2297 = vmatpush1.msra.mxu0 %v2296
        %2298 = vmatprep.subr.mxu0 0.0
        %v2299 = vand.u32 %v562, 4294901760
        %v2300 = vsub.f32 %v562, %v2299
        %v2301 = vand.u32 %v2300, 4294901760
        %v2302 = vsub.f32 %v2300, %v2301
        %v2303 = vand.u32 %v2302, 4294901760
        %2304 = vmatpush1.msra.mxu0 %v2303
        %2305 = vmatprep.subr.mxu0 0.0
        %v2306 = vand.u32 %v563, 4294901760
        %v2307 = vsub.f32 %v563, %v2306
        %v2308 = vand.u32 %v2307, 4294901760
        %v2309 = vsub.f32 %v2307, %v2308
        %v2310 = vand.u32 %v2309, 4294901760
        %2311 = vmatpush1.msra.mxu0 %v2310
        %2312 = vmatprep.subr.mxu0 0.0
        %v2313 = vand.u32 %v564, 4294901760
        %v2314 = vsub.f32 %v564, %v2313
        %v2315 = vand.u32 %v2314, 4294901760
        %v2316 = vsub.f32 %v2314, %v2315
        %v2317 = vand.u32 %v2316, 4294901760
        %2318 = vmatpush1.msra.mxu0 %v2317
        %2319 = vmatprep.subr.mxu0 0.0
        %v2320 = vand.u32 %v565, 4294901760
        %v2321 = vsub.f32 %v565, %v2320
        %v2322 = vand.u32 %v2321, 4294901760
        %v2323 = vsub.f32 %v2321, %v2322
        %v2324 = vand.u32 %v2323, 4294901760
        %2325 = vmatpush1.msra.mxu0 %v2324
        %2326 = vmatprep.subr.mxu0 0.0
        %2327 = vmatpush1.msra.mxu0 0.0
        %2328 = vmatprep.subr.mxu0 0.0
        %2329 = vmatpush1.msra.mxu0 0.0
        %2330 = vmatprep.subr.mxu0 0.0
        %2331 = vmatpush1.msra.mxu0 0.0
        %2332 = vmatprep.subr.mxu0 0.0
        %2333 = vmatpush1.msra.mxu0 0.0
        %2334 = vmatprep.subr.mxu0 0.0
        %2335 = vmatpush1.msra.mxu0 0.0
        %2336 = vmatprep.subr.mxu0 0.0
        %2337 = vmatpush1.msra.mxu0 0.0
        %2338 = vmatprep.subr.mxu0 0.0
        %2339 = vmatpush1.msra.mxu0 0.0
        %2340 = vmatprep.subr.mxu0 0.0
        %2341 = vmatpush1.msra.mxu0 0.0
        %2342 = vmatprep.subr.mxu0 0.0
        %2343 = vmatpush1.msra.mxu0 0.0
        %2344 = vmatprep.subr.mxu0 0.0
        %2345 = vmatpush1.msra.mxu0 0.0
        %2346 = vmatprep.subr.mxu0 0.0
        %2347 = vmatpush1.msra.mxu0 0.0
        %2348 = vmatprep.subr.mxu0 0.0
        %2349 = vmatpush1.msra.mxu0 0.0
        %2350 = vmatprep.subr.mxu0 0.0
        %2351 = vmatpush1.msra.mxu0 0.0
        %2352 = vmatprep.subr.mxu0 0.0
        %2353 = vmatpush1.msra.mxu0 0.0
        %2354 = vmatprep.subr.mxu0 0.0
        %2355 = vmatpush1.msra.mxu0 0.0
        %2356 = vmatprep.subr.mxu0 0.0
        %2357 = vmatpush1.msra.mxu0 0.0
        %2358 = vmatprep.mubr.f32.mxu0 0.0
        %v2359 = vand.u32 %v549, 4294901760
        %2360 = vmatmul.mubr.f32.gmra.mrb[0].mxu0 %v2359
        %v2361 = vpop.f32.mrb[0].mxu0
        %v2362 = vadd.f32 %v2211, %v2361
        %v2363 = vpop.f32.mrb[0].mxu0
        %2364 = vdwg.mxu0
        %2365 = vmatprep.subr.mxu0 0.0
        %v2366 = vand.u32 %v550, 4294901760
        %v2367 = vsub.f32 %v550, %v2366
        %2368 = vmatpush1.msra.mxu0 %v2367
        %2369 = vmatprep.subr.mxu0 0.0
        %v2370 = vand.u32 %v551, 4294901760
        %v2371 = vsub.f32 %v551, %v2370
        %2372 = vmatpush1.msra.mxu0 %v2371
        %2373 = vmatprep.subr.mxu0 0.0
        %v2374 = vand.u32 %v552, 4294901760
        %v2375 = vsub.f32 %v552, %v2374
        %2376 = vmatpush1.msra.mxu0 %v2375
        %2377 = vmatprep.subr.mxu0 0.0
        %v2378 = vand.u32 %v553, 4294901760
        %v2379 = vsub.f32 %v553, %v2378
        %2380 = vmatpush1.msra.mxu0 %v2379
        %2381 = vmatprep.subr.mxu0 0.0
        %v2382 = vand.u32 %v554, 4294901760
        %v2383 = vsub.f32 %v554, %v2382
        %2384 = vmatpush1.msra.mxu0 %v2383
        %2385 = vmatprep.subr.mxu0 0.0
        %v2386 = vand.u32 %v555, 4294901760
        %v2387 = vsub.f32 %v555, %v2386
        %2388 = vmatpush1.msra.mxu0 %v2387
        %2389 = vmatprep.subr.mxu0 0.0
        %v2390 = vand.u32 %v556, 4294901760
        %v2391 = vsub.f32 %v556, %v2390
        %2392 = vmatpush1.msra.mxu0 %v2391
        %2393 = vmatprep.subr.mxu0 0.0
        %v2394 = vand.u32 %v557, 4294901760
        %v2395 = vsub.f32 %v557, %v2394
        %2396 = vmatpush1.msra.mxu0 %v2395
        %2397 = vmatprep.subr.mxu0 0.0
        %v2398 = vand.u32 %v558, 4294901760
        %v2399 = vsub.f32 %v558, %v2398
        %2400 = vmatpush1.msra.mxu0 %v2399
        %2401 = vmatprep.subr.mxu0 0.0
        %v2402 = vand.u32 %v559, 4294901760
        %v2403 = vsub.f32 %v559, %v2402
        %2404 = vmatpush1.msra.mxu0 %v2403
        %2405 = vmatprep.subr.mxu0 0.0
        %v2406 = vand.u32 %v560, 4294901760
        %v2407 = vsub.f32 %v560, %v2406
        %2408 = vmatpush1.msra.mxu0 %v2407
        %2409 = vmatprep.subr.mxu0 0.0
        %v2410 = vand.u32 %v561, 4294901760
        %v2411 = vsub.f32 %v561, %v2410
        %2412 = vmatpush1.msra.mxu0 %v2411
        %2413 = vmatprep.subr.mxu0 0.0
        %v2414 = vand.u32 %v562, 4294901760
        %v2415 = vsub.f32 %v562, %v2414
        %2416 = vmatpush1.msra.mxu0 %v2415
        %2417 = vmatprep.subr.mxu0 0.0
        %v2418 = vand.u32 %v563, 4294901760
        %v2419 = vsub.f32 %v563, %v2418
        %2420 = vmatpush1.msra.mxu0 %v2419
        %2421 = vmatprep.subr.mxu0 0.0
        %v2422 = vand.u32 %v564, 4294901760
        %v2423 = vsub.f32 %v564, %v2422
        %2424 = vmatpush1.msra.mxu0 %v2423
        %2425 = vmatprep.subr.mxu0 0.0
        %v2426 = vand.u32 %v565, 4294901760
        %v2427 = vsub.f32 %v565, %v2426
        %2428 = vmatpush1.msra.mxu0 %v2427
        %2429 = vmatprep.subr.mxu0 0.0
        %2430 = vmatpush1.msra.mxu0 0.0
        %2431 = vmatprep.subr.mxu0 0.0
        %2432 = vmatpush1.msra.mxu0 0.0
        %2433 = vmatprep.subr.mxu0 0.0
        %2434 = vmatpush1.msra.mxu0 0.0
        %2435 = vmatprep.subr.mxu0 0.0
        %2436 = vmatpush1.msra.mxu0 0.0
        %2437 = vmatprep.subr.mxu0 0.0
        %2438 = vmatpush1.msra.mxu0 0.0
        %2439 = vmatprep.subr.mxu0 0.0
        %2440 = vmatpush1.msra.mxu0 0.0
        %2441 = vmatprep.subr.mxu0 0.0
        %2442 = vmatpush1.msra.mxu0 0.0
        %2443 = vmatprep.subr.mxu0 0.0
        %2444 = vmatpush1.msra.mxu0 0.0
        %2445 = vmatprep.subr.mxu0 0.0
        %2446 = vmatpush1.msra.mxu0 0.0
        %2447 = vmatprep.subr.mxu0 0.0
        %2448 = vmatpush1.msra.mxu0 0.0
        %2449 = vmatprep.subr.mxu0 0.0
        %2450 = vmatpush1.msra.mxu0 0.0
        %2451 = vmatprep.subr.mxu0 0.0
        %2452 = vmatpush1.msra.mxu0 0.0
        %2453 = vmatprep.subr.mxu0 0.0
        %2454 = vmatpush1.msra.mxu0 0.0
        %2455 = vmatprep.subr.mxu0 0.0
        %2456 = vmatpush1.msra.mxu0 0.0
        %2457 = vmatprep.subr.mxu0 0.0
        %2458 = vmatpush1.msra.mxu0 0.0
        %2459 = vmatprep.subr.mxu0 0.0
        %2460 = vmatpush1.msra.mxu0 0.0
        %2461 = vmatprep.mubr.f32.mxu0 0.0
        %v2462 = vand.u32 %v549, 4294901760
        %v2463 = vsub.f32 %v549, %v2462
        %2464 = vmatmul.mubr.f32.gmra.mrb[0].mxu0 %v2463
        %v2465 = vpop.f32.mrb[0].mxu0
        %v2466 = vadd.f32 %v2362, %v2465
        %v2467 = vpop.f32.mrb[0].mxu0
        %2468 = vdwg.mxu0
        %2469 = vmatprep.subr.mxu0 0.0
        %v2470 = vand.u32 %v550, 4294901760
        %2471 = vmatpush1.msra.mxu0 %v2470
        %2472 = vmatprep.subr.mxu0 0.0
        %v2473 = vand.u32 %v551, 4294901760
        %2474 = vmatpush1.msra.mxu0 %v2473
        %2475 = vmatprep.subr.mxu0 0.0
        %v2476 = vand.u32 %v552, 4294901760
        %2477 = vmatpush1.msra.mxu0 %v2476
        %2478 = vmatprep.subr.mxu0 0.0
        %v2479 = vand.u32 %v553, 4294901760
        %2480 = vmatpush1.msra.mxu0 %v2479
        %2481 = vmatprep.subr.mxu0 0.0
        %v2482 = vand.u32 %v554, 4294901760
        %2483 = vmatpush1.msra.mxu0 %v2482
        %2484 = vmatprep.subr.mxu0 0.0
        %v2485 = vand.u32 %v555, 4294901760
        %2486 = vmatpush1.msra.mxu0 %v2485
        %2487 = vmatprep.subr.mxu0 0.0
        %v2488 = vand.u32 %v556, 4294901760
        %2489 = vmatpush1.msra.mxu0 %v2488
        %2490 = vmatprep.subr.mxu0 0.0
        %v2491 = vand.u32 %v557, 4294901760
        %2492 = vmatpush1.msra.mxu0 %v2491
        %2493 = vmatprep.subr.mxu0 0.0
        %v2494 = vand.u32 %v558, 4294901760
        %2495 = vmatpush1.msra.mxu0 %v2494
        %2496 = vmatprep.subr.mxu0 0.0
        %v2497 = vand.u32 %v559, 4294901760
        %2498 = vmatpush1.msra.mxu0 %v2497
        %2499 = vmatprep.subr.mxu0 0.0
        %v2500 = vand.u32 %v560, 4294901760
        %2501 = vmatpush1.msra.mxu0 %v2500
        %2502 = vmatprep.subr.mxu0 0.0
        %v2503 = vand.u32 %v561, 4294901760
        %2504 = vmatpush1.msra.mxu0 %v2503
        %2505 = vmatprep.subr.mxu0 0.0
        %v2506 = vand.u32 %v562, 4294901760
        %2507 = vmatpush1.msra.mxu0 %v2506
        %2508 = vmatprep.subr.mxu0 0.0
        %v2509 = vand.u32 %v563, 4294901760
        %2510 = vmatpush1.msra.mxu0 %v2509
        %2511 = vmatprep.subr.mxu0 0.0
        %v2512 = vand.u32 %v564, 4294901760
        %2513 = vmatpush1.msra.mxu0 %v2512
        %2514 = vmatprep.subr.mxu0 0.0
        %v2515 = vand.u32 %v565, 4294901760
        %2516 = vmatpush1.msra.mxu0 %v2515
        %2517 = vmatprep.subr.mxu0 0.0
        %2518 = vmatpush1.msra.mxu0 0.0
        %2519 = vmatprep.subr.mxu0 0.0
        %2520 = vmatpush1.msra.mxu0 0.0
        %2521 = vmatprep.subr.mxu0 0.0
        %2522 = vmatpush1.msra.mxu0 0.0
        %2523 = vmatprep.subr.mxu0 0.0
        %2524 = vmatpush1.msra.mxu0 0.0
        %2525 = vmatprep.subr.mxu0 0.0
        %2526 = vmatpush1.msra.mxu0 0.0
        %2527 = vmatprep.subr.mxu0 0.0
        %2528 = vmatpush1.msra.mxu0 0.0
        %2529 = vmatprep.subr.mxu0 0.0
        %2530 = vmatpush1.msra.mxu0 0.0
        %2531 = vmatprep.subr.mxu0 0.0
        %2532 = vmatpush1.msra.mxu0 0.0
        %2533 = vmatprep.subr.mxu0 0.0
        %2534 = vmatpush1.msra.mxu0 0.0
        %2535 = vmatprep.subr.mxu0 0.0
        %2536 = vmatpush1.msra.mxu0 0.0
        %2537 = vmatprep.subr.mxu0 0.0
        %2538 = vmatpush1.msra.mxu0 0.0
        %2539 = vmatprep.subr.mxu0 0.0
        %2540 = vmatpush1.msra.mxu0 0.0
        %2541 = vmatprep.subr.mxu0 0.0
        %2542 = vmatpush1.msra.mxu0 0.0
        %2543 = vmatprep.subr.mxu0 0.0
        %2544 = vmatpush1.msra.mxu0 0.0
        %2545 = vmatprep.subr.mxu0 0.0
        %2546 = vmatpush1.msra.mxu0 0.0
        %2547 = vmatprep.subr.mxu0 0.0
        %2548 = vmatpush1.msra.mxu0 0.0
        %2549 = vmatprep.mubr.f32.mxu0 0.0
        %v2550 = vand.u32 %v549, 4294901760
        %v2551 = vsub.f32 %v549, %v2550
        %v2552 = vand.u32 %v2551, 4294901760
        %2553 = vmatmul.mubr.f32.gmra.mrb[0].mxu0 %v2552
        %v2554 = vpop.f32.mrb[0].mxu0
        %v2555 = vadd.f32 %v2466, %v2554
        %v2556 = vpop.f32.mrb[0].mxu0
        %2557 = vdwg.mxu0
        %2558 = vmatprep.subr.mxu0 0.0
        %v2559 = vand.u32 %v550, 4294901760
        %v2560 = vsub.f32 %v550, %v2559
        %v2561 = vand.u32 %v2560, 4294901760
        %2562 = vmatpush1.msra.mxu0 %v2561
        %2563 = vmatprep.subr.mxu0 0.0
        %v2564 = vand.u32 %v551, 4294901760
        %v2565 = vsub.f32 %v551, %v2564
        %v2566 = vand.u32 %v2565, 4294901760
        %2567 = vmatpush1.msra.mxu0 %v2566
        %2568 = vmatprep.subr.mxu0 0.0
        %v2569 = vand.u32 %v552, 4294901760
        %v2570 = vsub.f32 %v552, %v2569
        %v2571 = vand.u32 %v2570, 4294901760
        %2572 = vmatpush1.msra.mxu0 %v2571
        %2573 = vmatprep.subr.mxu0 0.0
        %v2574 = vand.u32 %v553, 4294901760
        %v2575 = vsub.f32 %v553, %v2574
        %v2576 = vand.u32 %v2575, 4294901760
        %2577 = vmatpush1.msra.mxu0 %v2576
        %2578 = vmatprep.subr.mxu0 0.0
        %v2579 = vand.u32 %v554, 4294901760
        %v2580 = vsub.f32 %v554, %v2579
        %v2581 = vand.u32 %v2580, 4294901760
        %2582 = vmatpush1.msra.mxu0 %v2581
        %2583 = vmatprep.subr.mxu0 0.0
        %v2584 = vand.u32 %v555, 4294901760
        %v2585 = vsub.f32 %v555, %v2584
        %v2586 = vand.u32 %v2585, 4294901760
        %2587 = vmatpush1.msra.mxu0 %v2586
        %2588 = vmatprep.subr.mxu0 0.0
        %v2589 = vand.u32 %v556, 4294901760
        %v2590 = vsub.f32 %v556, %v2589
        %v2591 = vand.u32 %v2590, 4294901760
        %2592 = vmatpush1.msra.mxu0 %v2591
        %2593 = vmatprep.subr.mxu0 0.0
        %v2594 = vand.u32 %v557, 4294901760
        %v2595 = vsub.f32 %v557, %v2594
        %v2596 = vand.u32 %v2595, 4294901760
        %2597 = vmatpush1.msra.mxu0 %v2596
        %2598 = vmatprep.subr.mxu0 0.0
        %v2599 = vand.u32 %v558, 4294901760
        %v2600 = vsub.f32 %v558, %v2599
        %v2601 = vand.u32 %v2600, 4294901760
        %2602 = vmatpush1.msra.mxu0 %v2601
        %2603 = vmatprep.subr.mxu0 0.0
        %v2604 = vand.u32 %v559, 4294901760
        %v2605 = vsub.f32 %v559, %v2604
        %v2606 = vand.u32 %v2605, 4294901760
        %2607 = vmatpush1.msra.mxu0 %v2606
        %2608 = vmatprep.subr.mxu0 0.0
        %v2609 = vand.u32 %v560, 4294901760
        %v2610 = vsub.f32 %v560, %v2609
        %v2611 = vand.u32 %v2610, 4294901760
        %2612 = vmatpush1.msra.mxu0 %v2611
        %2613 = vmatprep.subr.mxu0 0.0
        %v2614 = vand.u32 %v561, 4294901760
        %v2615 = vsub.f32 %v561, %v2614
        %v2616 = vand.u32 %v2615, 4294901760
        %2617 = vmatpush1.msra.mxu0 %v2616
        %2618 = vmatprep.subr.mxu0 0.0
        %v2619 = vand.u32 %v562, 4294901760
        %v2620 = vsub.f32 %v562, %v2619
        %v2621 = vand.u32 %v2620, 4294901760
        %2622 = vmatpush1.msra.mxu0 %v2621
        %2623 = vmatprep.subr.mxu0 0.0
        %v2624 = vand.u32 %v563, 4294901760
        %v2625 = vsub.f32 %v563, %v2624
        %v2626 = vand.u32 %v2625, 4294901760
        %2627 = vmatpush1.msra.mxu0 %v2626
        %2628 = vmatprep.subr.mxu0 0.0
        %v2629 = vand.u32 %v564, 4294901760
        %v2630 = vsub.f32 %v564, %v2629
        %v2631 = vand.u32 %v2630, 4294901760
        %2632 = vmatpush1.msra.mxu0 %v2631
        %2633 = vmatprep.subr.mxu0 0.0
        %v2634 = vand.u32 %v565, 4294901760
        %v2635 = vsub.f32 %v565, %v2634
        %v2636 = vand.u32 %v2635, 4294901760
        %2637 = vmatpush1.msra.mxu0 %v2636
        %2638 = vmatprep.subr.mxu0 0.0
        %2639 = vmatpush1.msra.mxu0 0.0
        %2640 = vmatprep.subr.mxu0 0.0
        %2641 = vmatpush1.msra.mxu0 0.0
        %2642 = vmatprep.subr.mxu0 0.0
        %2643 = vmatpush1.msra.mxu0 0.0
        %2644 = vmatprep.subr.mxu0 0.0
        %2645 = vmatpush1.msra.mxu0 0.0
        %2646 = vmatprep.subr.mxu0 0.0
        %2647 = vmatpush1.msra.mxu0 0.0
        %2648 = vmatprep.subr.mxu0 0.0
        %2649 = vmatpush1.msra.mxu0 0.0
        %2650 = vmatprep.subr.mxu0 0.0
        %2651 = vmatpush1.msra.mxu0 0.0
        %2652 = vmatprep.subr.mxu0 0.0
        %2653 = vmatpush1.msra.mxu0 0.0
        %2654 = vmatprep.subr.mxu0 0.0
        %2655 = vmatpush1.msra.mxu0 0.0
        %2656 = vmatprep.subr.mxu0 0.0
        %2657 = vmatpush1.msra.mxu0 0.0
        %2658 = vmatprep.subr.mxu0 0.0
        %2659 = vmatpush1.msra.mxu0 0.0
        %2660 = vmatprep.subr.mxu0 0.0
        %2661 = vmatpush1.msra.mxu0 0.0
        %2662 = vmatprep.subr.mxu0 0.0
        %2663 = vmatpush1.msra.mxu0 0.0
        %2664 = vmatprep.subr.mxu0 0.0
        %2665 = vmatpush1.msra.mxu0 0.0
        %2666 = vmatprep.subr.mxu0 0.0
        %2667 = vmatpush1.msra.mxu0 0.0
        %2668 = vmatprep.subr.mxu0 0.0
        %2669 = vmatpush1.msra.mxu0 0.0
        %2670 = vmatprep.mubr.f32.mxu0 0.0
        %v2671 = vand.u32 %v549, 4294901760
        %2672 = vmatmul.mubr.f32.gmra.mrb[0].mxu0 %v2671
        %v2673 = vpop.f32.mrb[0].mxu0
        %v2674 = vadd.f32 %v2555, %v2673
        %v2675 = vpop.f32.mrb[0].mxu0
        %2676 = vdwg.mxu0
        %2677 = vmatprep.subr.mxu0 0.0
        %v2678 = vand.u32 %v550, 4294901760
        %2679 = vmatpush1.msra.mxu0 %v2678
        %2680 = vmatprep.subr.mxu0 0.0
        %v2681 = vand.u32 %v551, 4294901760
        %2682 = vmatpush1.msra.mxu0 %v2681
        %2683 = vmatprep.subr.mxu0 0.0
        %v2684 = vand.u32 %v552, 4294901760
        %2685 = vmatpush1.msra.mxu0 %v2684
        %2686 = vmatprep.subr.mxu0 0.0
        %v2687 = vand.u32 %v553, 4294901760
        %2688 = vmatpush1.msra.mxu0 %v2687
        %2689 = vmatprep.subr.mxu0 0.0
        %v2690 = vand.u32 %v554, 4294901760
        %2691 = vmatpush1.msra.mxu0 %v2690
        %2692 = vmatprep.subr.mxu0 0.0
        %v2693 = vand.u32 %v555, 4294901760
        %2694 = vmatpush1.msra.mxu0 %v2693
        %2695 = vmatprep.subr.mxu0 0.0
        %v2696 = vand.u32 %v556, 4294901760
        %2697 = vmatpush1.msra.mxu0 %v2696
        %2698 = vmatprep.subr.mxu0 0.0
        %v2699 = vand.u32 %v557, 4294901760
        %2700 = vmatpush1.msra.mxu0 %v2699
        %2701 = vmatprep.subr.mxu0 0.0
        %v2702 = vand.u32 %v558, 4294901760
        %2703 = vmatpush1.msra.mxu0 %v2702
        %2704 = vmatprep.subr.mxu0 0.0
        %v2705 = vand.u32 %v559, 4294901760
        %2706 = vmatpush1.msra.mxu0 %v2705
        %2707 = vmatprep.subr.mxu0 0.0
        %v2708 = vand.u32 %v560, 4294901760
        %2709 = vmatpush1.msra.mxu0 %v2708
        %2710 = vmatprep.subr.mxu0 0.0
        %v2711 = vand.u32 %v561, 4294901760
        %2712 = vmatpush1.msra.mxu0 %v2711
        %2713 = vmatprep.subr.mxu0 0.0
        %v2714 = vand.u32 %v562, 4294901760
        %2715 = vmatpush1.msra.mxu0 %v2714
        %2716 = vmatprep.subr.mxu0 0.0
        %v2717 = vand.u32 %v563, 4294901760
        %2718 = vmatpush1.msra.mxu0 %v2717
        %2719 = vmatprep.subr.mxu0 0.0
        %v2720 = vand.u32 %v564, 4294901760
        %2721 = vmatpush1.msra.mxu0 %v2720
        %2722 = vmatprep.subr.mxu0 0.0
        %v2723 = vand.u32 %v565, 4294901760
        %2724 = vmatpush1.msra.mxu0 %v2723
        %2725 = vmatprep.subr.mxu0 0.0
        %2726 = vmatpush1.msra.mxu0 0.0
        %2727 = vmatprep.subr.mxu0 0.0
        %2728 = vmatpush1.msra.mxu0 0.0
        %2729 = vmatprep.subr.mxu0 0.0
        %2730 = vmatpush1.msra.mxu0 0.0
        %2731 = vmatprep.subr.mxu0 0.0
        %2732 = vmatpush1.msra.mxu0 0.0
        %2733 = vmatprep.subr.mxu0 0.0
        %2734 = vmatpush1.msra.mxu0 0.0
        %2735 = vmatprep.subr.mxu0 0.0
        %2736 = vmatpush1.msra.mxu0 0.0
        %2737 = vmatprep.subr.mxu0 0.0
        %2738 = vmatpush1.msra.mxu0 0.0
        %2739 = vmatprep.subr.mxu0 0.0
        %2740 = vmatpush1.msra.mxu0 0.0
        %2741 = vmatprep.subr.mxu0 0.0
        %2742 = vmatpush1.msra.mxu0 0.0
        %2743 = vmatprep.subr.mxu0 0.0
        %2744 = vmatpush1.msra.mxu0 0.0
        %2745 = vmatprep.subr.mxu0 0.0
        %2746 = vmatpush1.msra.mxu0 0.0
        %2747 = vmatprep.subr.mxu0 0.0
        %2748 = vmatpush1.msra.mxu0 0.0
        %2749 = vmatprep.subr.mxu0 0.0
        %2750 = vmatpush1.msra.mxu0 0.0
        %2751 = vmatprep.subr.mxu0 0.0
        %2752 = vmatpush1.msra.mxu0 0.0
        %2753 = vmatprep.subr.mxu0 0.0
        %2754 = vmatpush1.msra.mxu0 0.0
        %2755 = vmatprep.subr.mxu0 0.0
        %2756 = vmatpush1.msra.mxu0 0.0
        %2757 = vmatprep.mubr.f32.mxu0 0.0
        %v2758 = vand.u32 %v549, 4294901760
        %2759 = vmatmul.mubr.f32.gmra.mrb[0].mxu0 %v2758
        %v2760 = vpop.f32.mrb[0].mxu0
        %v2761 = vadd.f32 %v2674, %v2760
        %v2762 = vpop.f32.mrb[0].mxu0
        %2763 = vdwg.mxu0
        %v2764 = vld [vmem:[%s547] sm:$0xff]
        %v2765 = vld [vmem:[%s547 + $0x8] sm:$0xff]
        %v2766 = vld [vmem:[%s547 + $0x10] sm:$0xff]
        %v2767 = vmul.f32 %v2764, %v2764
        %v2768 = vmul.f32 %v2765, %v2765
        %v2769 = vmul.f32 %v2766, %v2766
        %v2770 = vld [vmem:[%s5] sm:$0xff]
        %v2771 = vld [vmem:[%s5 + $0x8] sm:$0xff]
        %v2772 = vld [vmem:[%s5 + $0x10] sm:$0xff]
        %v2773 = vld [vmem:[%s5 + $0x18] sm:$0xff]
        %v2774 = vld [vmem:[%s5 + $0x20] sm:$0xff]
        %v2775 = vld [vmem:[%s5 + $0x28] sm:$0xff]
        %v2776 = vld [vmem:[%s5 + $0x30] sm:$0xff]
        %v2777 = vld [vmem:[%s5 + $0x38] sm:$0xff]
        %v2778 = vld [vmem:[%s5 + $0x40] sm:$0xff]
        %v2779 = vld [vmem:[%s5 + $0x48] sm:$0xff]
        %v2780 = vld [vmem:[%s5 + $0x50] sm:$0xff]
        %v2781 = vld [vmem:[%s5 + $0x58] sm:$0xff]
        %v2782 = vld [vmem:[%s5 + $0x60] sm:$0xff]
        %v2783 = vld [vmem:[%s5 + $0x68] sm:$0xff]
        %v2784 = vld [vmem:[%s5 + $0x70] sm:$0xff]
        %v2785 = vld [vmem:[%s5 + $0x78] sm:$0xff]
        %v2786 = vld [vmem:[%s5 + $0x80] sm:$0xff]
        %v2787 = vld [vmem:[%s5 + $0x88] sm:$0xff]
        %v2788 = vld [vmem:[%s5 + $0x90] sm:$0xff]
        %v2789 = vld [vmem:[%s5 + $0x98] sm:$0xff]
        %v2790 = vld [vmem:[%s5 + $0xa0] sm:$0xff]
        %v2791 = vld [vmem:[%s5 + $0xa8] sm:$0xff]
        %v2792 = vld [vmem:[%s5 + $0xb0] sm:$0xff]
        %v2793 = vld [vmem:[%s5 + $0xb8] sm:$0xff]
        %v2794 = vld [vmem:[%s5 + $0xc0] sm:$0xff]
        %v2795 = vld [vmem:[%s5 + $0xc8] sm:$0xff]
        %v2796 = vld [vmem:[%s5 + $0xd0] sm:$0xff]
        %v2797 = vld [vmem:[%s5 + $0xd8] sm:$0xff]
        %v2798 = vld [vmem:[%s5 + $0xe0] sm:$0xff]
        %v2799 = vld [vmem:[%s5 + $0xe8] sm:$0xff]
        %v2800 = vld [vmem:[%s5 + $0xf0] sm:$0xff]
        %v2801 = vld [vmem:[%s5 + $0xf8] sm:$0xff]
        %v2802 = vld [vmem:[%s5 + $0x100] sm:$0xff]
        %v2803 = vld [vmem:[%s5 + $0x108] sm:$0xff]
        %v2804 = vld [vmem:[%s5 + $0x110] sm:$0xff]
        %v2805 = vld [vmem:[%s5 + $0x118] sm:$0xff]
        %v2806 = vld [vmem:[%s5 + $0x120] sm:$0xff]
        %v2807 = vld [vmem:[%s5 + $0x128] sm:$0xff]
        %v2808 = vld [vmem:[%s5 + $0x130] sm:$0xff]
        %v2809 = vld [vmem:[%s5 + $0x138] sm:$0xff]
        %vm2810 = vcmask 523264
        %v2812 = vsel %vm2810, %v2769, 0
        %2814 = vmatprep.subr.mxu0 0.0
        %v2815 = vand.u32 %v2770, 4294901760
        %2816 = vmatpush1.msra.mxu0 %v2815
        %2817 = vmatprep.subr.mxu0 0.0
        %v2818 = vand.u32 %v2771, 4294901760
        %2819 = vmatpush1.msra.mxu0 %v2818
        %2820 = vmatprep.subr.mxu0 0.0
        %v2821 = vand.u32 %v2772, 4294901760
        %2822 = vmatpush1.msra.mxu0 %v2821
        %2823 = vmatprep.subr.mxu0 0.0
        %v2824 = vand.u32 %v2773, 4294901760
        %2825 = vmatpush1.msra.mxu0 %v2824
        %2826 = vmatprep.subr.mxu0 0.0
        %v2827 = vand.u32 %v2774, 4294901760
        %2828 = vmatpush1.msra.mxu0 %v2827
        %2829 = vmatprep.subr.mxu0 0.0
        %v2830 = vand.u32 %v2775, 4294901760
        %2831 = vmatpush1.msra.mxu0 %v2830
        %2832 = vmatprep.subr.mxu0 0.0
        %v2833 = vand.u32 %v2776, 4294901760
        %2834 = vmatpush1.msra.mxu0 %v2833
        %2835 = vmatprep.subr.mxu0 0.0
        %v2836 = vand.u32 %v2777, 4294901760
        %2837 = vmatpush1.msra.mxu0 %v2836
        %2838 = vmatprep.subr.mxu0 0.0
        %v2839 = vand.u32 %v2778, 4294901760
        %2840 = vmatpush1.msra.mxu0 %v2839
        %2841 = vmatprep.subr.mxu0 0.0
        %v2842 = vand.u32 %v2779, 4294901760
        %2843 = vmatpush1.msra.mxu0 %v2842
        %2844 = vmatprep.subr.mxu0 0.0
        %v2845 = vand.u32 %v2780, 4294901760
        %2846 = vmatpush1.msra.mxu0 %v2845
        %2847 = vmatprep.subr.mxu0 0.0
        %v2848 = vand.u32 %v2781, 4294901760
        %2849 = vmatpush1.msra.mxu0 %v2848
        %2850 = vmatprep.subr.mxu0 0.0
        %v2851 = vand.u32 %v2782, 4294901760
        %2852 = vmatpush1.msra.mxu0 %v2851
        %2853 = vmatprep.subr.mxu0 0.0
        %v2854 = vand.u32 %v2783, 4294901760
        %2855 = vmatpush1.msra.mxu0 %v2854
        %2856 = vmatprep.subr.mxu0 0.0
        %v2857 = vand.u32 %v2784, 4294901760
        %2858 = vmatpush1.msra.mxu0 %v2857
        %2859 = vmatprep.subr.mxu0 0.0
        %v2860 = vand.u32 %v2785, 4294901760
        %2861 = vmatpush1.msra.mxu0 %v2860
        %2862 = vmatprep.subr.mxu0 0.0
        %v2863 = vand.u32 %v2786, 4294901760
        %2864 = vmatpush1.msra.mxu0 %v2863
        %2865 = vmatprep.subr.mxu0 0.0
        %v2866 = vand.u32 %v2787, 4294901760
        %2867 = vmatpush1.msra.mxu0 %v2866
        %2868 = vmatprep.subr.mxu0 0.0
        %v2869 = vand.u32 %v2788, 4294901760
        %2870 = vmatpush1.msra.mxu0 %v2869
        %2871 = vmatprep.subr.mxu0 0.0
        %v2872 = vand.u32 %v2789, 4294901760
        %2873 = vmatpush1.msra.mxu0 %v2872
        %2874 = vmatprep.subr.mxu0 0.0
        %v2875 = vand.u32 %v2790, 4294901760
        %2876 = vmatpush1.msra.mxu0 %v2875
        %2877 = vmatprep.subr.mxu0 0.0
        %v2878 = vand.u32 %v2791, 4294901760
        %2879 = vmatpush1.msra.mxu0 %v2878
        %2880 = vmatprep.subr.mxu0 0.0
        %v2881 = vand.u32 %v2792, 4294901760
        %2882 = vmatpush1.msra.mxu0 %v2881
        %2883 = vmatprep.subr.mxu0 0.0
        %v2884 = vand.u32 %v2793, 4294901760
        %2885 = vmatpush1.msra.mxu0 %v2884
        %2886 = vmatprep.subr.mxu0 0.0
        %v2887 = vand.u32 %v2794, 4294901760
        %2888 = vmatpush1.msra.mxu0 %v2887
        %2889 = vmatprep.subr.mxu0 0.0
        %v2890 = vand.u32 %v2795, 4294901760
        %2891 = vmatpush1.msra.mxu0 %v2890
        %2892 = vmatprep.subr.mxu0 0.0
        %v2893 = vand.u32 %v2796, 4294901760
        %2894 = vmatpush1.msra.mxu0 %v2893
        %2895 = vmatprep.subr.mxu0 0.0
        %v2896 = vand.u32 %v2797, 4294901760
        %2897 = vmatpush1.msra.mxu0 %v2896
        %2898 = vmatprep.subr.mxu0 0.0
        %v2899 = vand.u32 %v2798, 4294901760
        %2900 = vmatpush1.msra.mxu0 %v2899
        %2901 = vmatprep.subr.mxu0 0.0
        %v2902 = vand.u32 %v2799, 4294901760
        %2903 = vmatpush1.msra.mxu0 %v2902
        %2904 = vmatprep.subr.mxu0 0.0
        %v2905 = vand.u32 %v2800, 4294901760
        %2906 = vmatpush1.msra.mxu0 %v2905
        %2907 = vmatprep.subr.mxu0 0.0
        %v2908 = vand.u32 %v2801, 4294901760
        %2909 = vmatpush1.msra.mxu0 %v2908
        %v2910 = vand.u32 %v2768, 4294901760
        %v2911 = vsub.f32 %v2768, %v2910
        %v2912 = vand.u32 %v2911, 4294901760
        %v2913 = vsub.f32 %v2911, %v2912
        %v2914 = vand.u32 %v2913, 4294901760
        %2915 = vmatprep.mubr.f32.mxu0 %v2914
        %v2916 = vand.u32 %v2767, 4294901760
        %v2917 = vsub.f32 %v2767, %v2916
        %v2918 = vand.u32 %v2917, 4294901760
        %v2919 = vsub.f32 %v2917, %v2918
        %v2920 = vand.u32 %v2919, 4294901760
        %2921 = vmatmul.mubr.f32.gmra.mrb[0].mxu0 %v2920
        %v2922 = vpop.f32.mrb[0].mxu0
        %v2923 = vadd.f32 0.0, %v2922
        %v2924 = vpop.f32.mrb[0].mxu0
        %2925 = vdwg.mxu0
        %2926 = vmatprep.subr.mxu0 0.0
        %v2927 = vand.u32 %v2770, 4294901760
        %v2928 = vsub.f32 %v2770, %v2927
        %v2929 = vand.u32 %v2928, 4294901760
        %v2930 = vsub.f32 %v2928, %v2929
        %v2931 = vand.u32 %v2930, 4294901760
        %2932 = vmatpush1.msra.mxu0 %v2931
        %2933 = vmatprep.subr.mxu0 0.0
        %v2934 = vand.u32 %v2771, 4294901760
        %v2935 = vsub.f32 %v2771, %v2934
        %v2936 = vand.u32 %v2935, 4294901760
        %v2937 = vsub.f32 %v2935, %v2936
        %v2938 = vand.u32 %v2937, 4294901760
        %2939 = vmatpush1.msra.mxu0 %v2938
        %2940 = vmatprep.subr.mxu0 0.0
        %v2941 = vand.u32 %v2772, 4294901760
        %v2942 = vsub.f32 %v2772, %v2941
        %v2943 = vand.u32 %v2942, 4294901760
        %v2944 = vsub.f32 %v2942, %v2943
        %v2945 = vand.u32 %v2944, 4294901760
        %2946 = vmatpush1.msra.mxu0 %v2945
        %2947 = vmatprep.subr.mxu0 0.0
        %v2948 = vand.u32 %v2773, 4294901760
        %v2949 = vsub.f32 %v2773, %v2948
        %v2950 = vand.u32 %v2949, 4294901760
        %v2951 = vsub.f32 %v2949, %v2950
        %v2952 = vand.u32 %v2951, 4294901760
        %2953 = vmatpush1.msra.mxu0 %v2952
        %2954 = vmatprep.subr.mxu0 0.0
        %v2955 = vand.u32 %v2774, 4294901760
        %v2956 = vsub.f32 %v2774, %v2955
        %v2957 = vand.u32 %v2956, 4294901760
        %v2958 = vsub.f32 %v2956, %v2957
        %v2959 = vand.u32 %v2958, 4294901760
        %2960 = vmatpush1.msra.mxu0 %v2959
        %2961 = vmatprep.subr.mxu0 0.0
        %v2962 = vand.u32 %v2775, 4294901760
        %v2963 = vsub.f32 %v2775, %v2962
        %v2964 = vand.u32 %v2963, 4294901760
        %v2965 = vsub.f32 %v2963, %v2964
        %v2966 = vand.u32 %v2965, 4294901760
        %2967 = vmatpush1.msra.mxu0 %v2966
        %2968 = vmatprep.subr.mxu0 0.0
        %v2969 = vand.u32 %v2776, 4294901760
        %v2970 = vsub.f32 %v2776, %v2969
        %v2971 = vand.u32 %v2970, 4294901760
        %v2972 = vsub.f32 %v2970, %v2971
        %v2973 = vand.u32 %v2972, 4294901760
        %2974 = vmatpush1.msra.mxu0 %v2973
        %2975 = vmatprep.subr.mxu0 0.0
        %v2976 = vand.u32 %v2777, 4294901760
        %v2977 = vsub.f32 %v2777, %v2976
        %v2978 = vand.u32 %v2977, 4294901760
        %v2979 = vsub.f32 %v2977, %v2978
        %v2980 = vand.u32 %v2979, 4294901760
        %2981 = vmatpush1.msra.mxu0 %v2980
        %2982 = vmatprep.subr.mxu0 0.0
        %v2983 = vand.u32 %v2778, 4294901760
        %v2984 = vsub.f32 %v2778, %v2983
        %v2985 = vand.u32 %v2984, 4294901760
        %v2986 = vsub.f32 %v2984, %v2985
        %v2987 = vand.u32 %v2986, 4294901760
        %2988 = vmatpush1.msra.mxu0 %v2987
        %2989 = vmatprep.subr.mxu0 0.0
        %v2990 = vand.u32 %v2779, 4294901760
        %v2991 = vsub.f32 %v2779, %v2990
        %v2992 = vand.u32 %v2991, 4294901760
        %v2993 = vsub.f32 %v2991, %v2992
        %v2994 = vand.u32 %v2993, 4294901760
        %2995 = vmatpush1.msra.mxu0 %v2994
        %2996 = vmatprep.subr.mxu0 0.0
        %v2997 = vand.u32 %v2780, 4294901760
        %v2998 = vsub.f32 %v2780, %v2997
        %v2999 = vand.u32 %v2998, 4294901760
        %v3000 = vsub.f32 %v2998, %v2999
        %v3001 = vand.u32 %v3000, 4294901760
        %3002 = vmatpush1.msra.mxu0 %v3001
        %3003 = vmatprep.subr.mxu0 0.0
        %v3004 = vand.u32 %v2781, 4294901760
        %v3005 = vsub.f32 %v2781, %v3004
        %v3006 = vand.u32 %v3005, 4294901760
        %v3007 = vsub.f32 %v3005, %v3006
        %v3008 = vand.u32 %v3007, 4294901760
        %3009 = vmatpush1.msra.mxu0 %v3008
        %3010 = vmatprep.subr.mxu0 0.0
        %v3011 = vand.u32 %v2782, 4294901760
        %v3012 = vsub.f32 %v2782, %v3011
        %v3013 = vand.u32 %v3012, 4294901760
        %v3014 = vsub.f32 %v3012, %v3013
        %v3015 = vand.u32 %v3014, 4294901760
        %3016 = vmatpush1.msra.mxu0 %v3015
        %3017 = vmatprep.subr.mxu0 0.0
        %v3018 = vand.u32 %v2783, 4294901760
        %v3019 = vsub.f32 %v2783, %v3018
        %v3020 = vand.u32 %v3019, 4294901760
        %v3021 = vsub.f32 %v3019, %v3020
        %v3022 = vand.u32 %v3021, 4294901760
        %3023 = vmatpush1.msra.mxu0 %v3022
        %3024 = vmatprep.subr.mxu0 0.0
        %v3025 = vand.u32 %v2784, 4294901760
        %v3026 = vsub.f32 %v2784, %v3025
        %v3027 = vand.u32 %v3026, 4294901760
        %v3028 = vsub.f32 %v3026, %v3027
        %v3029 = vand.u32 %v3028, 4294901760
        %3030 = vmatpush1.msra.mxu0 %v3029
        %3031 = vmatprep.subr.mxu0 0.0
        %v3032 = vand.u32 %v2785, 4294901760
        %v3033 = vsub.f32 %v2785, %v3032
        %v3034 = vand.u32 %v3033, 4294901760
        %v3035 = vsub.f32 %v3033, %v3034
        %v3036 = vand.u32 %v3035, 4294901760
        %3037 = vmatpush1.msra.mxu0 %v3036
        %3038 = vmatprep.subr.mxu0 0.0
        %v3039 = vand.u32 %v2786, 4294901760
        %v3040 = vsub.f32 %v2786, %v3039
        %v3041 = vand.u32 %v3040, 4294901760
        %v3042 = vsub.f32 %v3040, %v3041
        %v3043 = vand.u32 %v3042, 4294901760
        %3044 = vmatpush1.msra.mxu0 %v3043
        %3045 = vmatprep.subr.mxu0 0.0
        %v3046 = vand.u32 %v2787, 4294901760
        %v3047 = vsub.f32 %v2787, %v3046
        %v3048 = vand.u32 %v3047, 4294901760
        %v3049 = vsub.f32 %v3047, %v3048
        %v3050 = vand.u32 %v3049, 4294901760
        %3051 = vmatpush1.msra.mxu0 %v3050
        %3052 = vmatprep.subr.mxu0 0.0
        %v3053 = vand.u32 %v2788, 4294901760
        %v3054 = vsub.f32 %v2788, %v3053
        %v3055 = vand.u32 %v3054, 4294901760
        %v3056 = vsub.f32 %v3054, %v3055
        %v3057 = vand.u32 %v3056, 4294901760
        %3058 = vmatpush1.msra.mxu0 %v3057
        %3059 = vmatprep.subr.mxu0 0.0
        %v3060 = vand.u32 %v2789, 4294901760
        %v3061 = vsub.f32 %v2789, %v3060
        %v3062 = vand.u32 %v3061, 4294901760
        %v3063 = vsub.f32 %v3061, %v3062
        %v3064 = vand.u32 %v3063, 4294901760
        %3065 = vmatpush1.msra.mxu0 %v3064
        %3066 = vmatprep.subr.mxu0 0.0
        %v3067 = vand.u32 %v2790, 4294901760
        %v3068 = vsub.f32 %v2790, %v3067
        %v3069 = vand.u32 %v3068, 4294901760
        %v3070 = vsub.f32 %v3068, %v3069
        %v3071 = vand.u32 %v3070, 4294901760
        %3072 = vmatpush1.msra.mxu0 %v3071
        %3073 = vmatprep.subr.mxu0 0.0
        %v3074 = vand.u32 %v2791, 4294901760
        %v3075 = vsub.f32 %v2791, %v3074
        %v3076 = vand.u32 %v3075, 4294901760
        %v3077 = vsub.f32 %v3075, %v3076
        %v3078 = vand.u32 %v3077, 4294901760
        %3079 = vmatpush1.msra.mxu0 %v3078
        %3080 = vmatprep.subr.mxu0 0.0
        %v3081 = vand.u32 %v2792, 4294901760
        %v3082 = vsub.f32 %v2792, %v3081
        %v3083 = vand.u32 %v3082, 4294901760
        %v3084 = vsub.f32 %v3082, %v3083
        %v3085 = vand.u32 %v3084, 4294901760
        %3086 = vmatpush1.msra.mxu0 %v3085
        %3087 = vmatprep.subr.mxu0 0.0
        %v3088 = vand.u32 %v2793, 4294901760
        %v3089 = vsub.f32 %v2793, %v3088
        %v3090 = vand.u32 %v3089, 4294901760
        %v3091 = vsub.f32 %v3089, %v3090
        %v3092 = vand.u32 %v3091, 4294901760
        %3093 = vmatpush1.msra.mxu0 %v3092
        %3094 = vmatprep.subr.mxu0 0.0
        %v3095 = vand.u32 %v2794, 4294901760
        %v3096 = vsub.f32 %v2794, %v3095
        %v3097 = vand.u32 %v3096, 4294901760
        %v3098 = vsub.f32 %v3096, %v3097
        %v3099 = vand.u32 %v3098, 4294901760
        %3100 = vmatpush1.msra.mxu0 %v3099
        %3101 = vmatprep.subr.mxu0 0.0
        %v3102 = vand.u32 %v2795, 4294901760
        %v3103 = vsub.f32 %v2795, %v3102
        %v3104 = vand.u32 %v3103, 4294901760
        %v3105 = vsub.f32 %v3103, %v3104
        %v3106 = vand.u32 %v3105, 4294901760
        %3107 = vmatpush1.msra.mxu0 %v3106
        %3108 = vmatprep.subr.mxu0 0.0
        %v3109 = vand.u32 %v2796, 4294901760
        %v3110 = vsub.f32 %v2796, %v3109
        %v3111 = vand.u32 %v3110, 4294901760
        %v3112 = vsub.f32 %v3110, %v3111
        %v3113 = vand.u32 %v3112, 4294901760
        %3114 = vmatpush1.msra.mxu0 %v3113
        %3115 = vmatprep.subr.mxu0 0.0
        %v3116 = vand.u32 %v2797, 4294901760
        %v3117 = vsub.f32 %v2797, %v3116
        %v3118 = vand.u32 %v3117, 4294901760
        %v3119 = vsub.f32 %v3117, %v3118
        %v3120 = vand.u32 %v3119, 4294901760
        %3121 = vmatpush1.msra.mxu0 %v3120
        %3122 = vmatprep.subr.mxu0 0.0
        %v3123 = vand.u32 %v2798, 4294901760
        %v3124 = vsub.f32 %v2798, %v3123
        %v3125 = vand.u32 %v3124, 4294901760
        %v3126 = vsub.f32 %v3124, %v3125
        %v3127 = vand.u32 %v3126, 4294901760
        %3128 = vmatpush1.msra.mxu0 %v3127
        %3129 = vmatprep.subr.mxu0 0.0
        %v3130 = vand.u32 %v2799, 4294901760
        %v3131 = vsub.f32 %v2799, %v3130
        %v3132 = vand.u32 %v3131, 4294901760
        %v3133 = vsub.f32 %v3131, %v3132
        %v3134 = vand.u32 %v3133, 4294901760
        %3135 = vmatpush1.msra.mxu0 %v3134
        %3136 = vmatprep.subr.mxu0 0.0
        %v3137 = vand.u32 %v2800, 4294901760
        %v3138 = vsub.f32 %v2800, %v3137
        %v3139 = vand.u32 %v3138, 4294901760
        %v3140 = vsub.f32 %v3138, %v3139
        %v3141 = vand.u32 %v3140, 4294901760
        %3142 = vmatpush1.msra.mxu0 %v3141
        %3143 = vmatprep.subr.mxu0 0.0
        %v3144 = vand.u32 %v2801, 4294901760
        %v3145 = vsub.f32 %v2801, %v3144
        %v3146 = vand.u32 %v3145, 4294901760
        %v3147 = vsub.f32 %v3145, %v3146
        %v3148 = vand.u32 %v3147, 4294901760
        %3149 = vmatpush1.msra.mxu0 %v3148
        %v3150 = vand.u32 %v2768, 4294901760
        %3151 = vmatprep.mubr.f32.mxu0 %v3150
        %v3152 = vand.u32 %v2767, 4294901760
        %3153 = vmatmul.mubr.f32.gmra.mrb[0].mxu0 %v3152
        %v3154 = vpop.f32.mrb[0].mxu0
        %v3155 = vadd.f32 %v2923, %v3154
        %v3156 = vpop.f32.mrb[0].mxu0
        %3157 = vdwg.mxu0
        %3158 = vmatprep.subr.mxu0 0.0
        %v3159 = vand.u32 %v2770, 4294901760
        %v3160 = vsub.f32 %v2770, %v3159
        %3161 = vmatpush1.msra.mxu0 %v3160
        %3162 = vmatprep.subr.mxu0 0.0
        %v3163 = vand.u32 %v2771, 4294901760
        %v3164 = vsub.f32 %v2771, %v3163
        %3165 = vmatpush1.msra.mxu0 %v3164
        %3166 = vmatprep.subr.mxu0 0.0
        %v3167 = vand.u32 %v2772, 4294901760
        %v3168 = vsub.f32 %v2772, %v3167
        %3169 = vmatpush1.msra.mxu0 %v3168
        %3170 = vmatprep.subr.mxu0 0.0
        %v3171 = vand.u32 %v2773, 4294901760
        %v3172 = vsub.f32 %v2773, %v3171
        %3173 = vmatpush1.msra.mxu0 %v3172
        %3174 = vmatprep.subr.mxu0 0.0
        %v3175 = vand.u32 %v2774, 4294901760
        %v3176 = vsub.f32 %v2774, %v3175
        %3177 = vmatpush1.msra.mxu0 %v3176
        %3178 = vmatprep.subr.mxu0 0.0
        %v3179 = vand.u32 %v2775, 4294901760
        %v3180 = vsub.f32 %v2775, %v3179
        %3181 = vmatpush1.msra.mxu0 %v3180
        %3182 = vmatprep.subr.mxu0 0.0
        %v3183 = vand.u32 %v2776, 4294901760
        %v3184 = vsub.f32 %v2776, %v3183
        %3185 = vmatpush1.msra.mxu0 %v3184
        %3186 = vmatprep.subr.mxu0 0.0
        %v3187 = vand.u32 %v2777, 4294901760
        %v3188 = vsub.f32 %v2777, %v3187
        %3189 = vmatpush1.msra.mxu0 %v3188
        %3190 = vmatprep.subr.mxu0 0.0
        %v3191 = vand.u32 %v2778, 4294901760
        %v3192 = vsub.f32 %v2778, %v3191
        %3193 = vmatpush1.msra.mxu0 %v3192
        %3194 = vmatprep.subr.mxu0 0.0
        %v3195 = vand.u32 %v2779, 4294901760
        %v3196 = vsub.f32 %v2779, %v3195
        %3197 = vmatpush1.msra.mxu0 %v3196
        %3198 = vmatprep.subr.mxu0 0.0
        %v3199 = vand.u32 %v2780, 4294901760
        %v3200 = vsub.f32 %v2780, %v3199
        %3201 = vmatpush1.msra.mxu0 %v3200
        %3202 = vmatprep.subr.mxu0 0.0
        %v3203 = vand.u32 %v2781, 4294901760
        %v3204 = vsub.f32 %v2781, %v3203
        %3205 = vmatpush1.msra.mxu0 %v3204
        %3206 = vmatprep.subr.mxu0 0.0
        %v3207 = vand.u32 %v2782, 4294901760
        %v3208 = vsub.f32 %v2782, %v3207
        %3209 = vmatpush1.msra.mxu0 %v3208
        %3210 = vmatprep.subr.mxu0 0.0
        %v3211 = vand.u32 %v2783, 4294901760
        %v3212 = vsub.f32 %v2783, %v3211
        %3213 = vmatpush1.msra.mxu0 %v3212
        %3214 = vmatprep.subr.mxu0 0.0
        %v3215 = vand.u32 %v2784, 4294901760
        %v3216 = vsub.f32 %v2784, %v3215
        %3217 = vmatpush1.msra.mxu0 %v3216
        %3218 = vmatprep.subr.mxu0 0.0
        %v3219 = vand.u32 %v2785, 4294901760
        %v3220 = vsub.f32 %v2785, %v3219
        %3221 = vmatpush1.msra.mxu0 %v3220
        %3222 = vmatprep.subr.mxu0 0.0
        %v3223 = vand.u32 %v2786, 4294901760
        %v3224 = vsub.f32 %v2786, %v3223
        %3225 = vmatpush1.msra.mxu0 %v3224
        %3226 = vmatprep.subr.mxu0 0.0
        %v3227 = vand.u32 %v2787, 4294901760
        %v3228 = vsub.f32 %v2787, %v3227
        %3229 = vmatpush1.msra.mxu0 %v3228
        %3230 = vmatprep.subr.mxu0 0.0
        %v3231 = vand.u32 %v2788, 4294901760
        %v3232 = vsub.f32 %v2788, %v3231
        %3233 = vmatpush1.msra.mxu0 %v3232
        %3234 = vmatprep.subr.mxu0 0.0
        %v3235 = vand.u32 %v2789, 4294901760
        %v3236 = vsub.f32 %v2789, %v3235
        %3237 = vmatpush1.msra.mxu0 %v3236
        %3238 = vmatprep.subr.mxu0 0.0
        %v3239 = vand.u32 %v2790, 4294901760
        %v3240 = vsub.f32 %v2790, %v3239
        %3241 = vmatpush1.msra.mxu0 %v3240
        %3242 = vmatprep.subr.mxu0 0.0
        %v3243 = vand.u32 %v2791, 4294901760
        %v3244 = vsub.f32 %v2791, %v3243
        %3245 = vmatpush1.msra.mxu0 %v3244
        %3246 = vmatprep.subr.mxu0 0.0
        %v3247 = vand.u32 %v2792, 4294901760
        %v3248 = vsub.f32 %v2792, %v3247
        %3249 = vmatpush1.msra.mxu0 %v3248
        %3250 = vmatprep.subr.mxu0 0.0
        %v3251 = vand.u32 %v2793, 4294901760
        %v3252 = vsub.f32 %v2793, %v3251
        %3253 = vmatpush1.msra.mxu0 %v3252
        %3254 = vmatprep.subr.mxu0 0.0
        %v3255 = vand.u32 %v2794, 4294901760
        %v3256 = vsub.f32 %v2794, %v3255
        %3257 = vmatpush1.msra.mxu0 %v3256
        %3258 = vmatprep.subr.mxu0 0.0
        %v3259 = vand.u32 %v2795, 4294901760
        %v3260 = vsub.f32 %v2795, %v3259
        %3261 = vmatpush1.msra.mxu0 %v3260
        %3262 = vmatprep.subr.mxu0 0.0
        %v3263 = vand.u32 %v2796, 4294901760
        %v3264 = vsub.f32 %v2796, %v3263
        %3265 = vmatpush1.msra.mxu0 %v3264
        %3266 = vmatprep.subr.mxu0 0.0
        %v3267 = vand.u32 %v2797, 4294901760
        %v3268 = vsub.f32 %v2797, %v3267
        %3269 = vmatpush1.msra.mxu0 %v3268
        %3270 = vmatprep.subr.mxu0 0.0
        %v3271 = vand.u32 %v2798, 4294901760
        %v3272 = vsub.f32 %v2798, %v3271
        %3273 = vmatpush1.msra.mxu0 %v3272
        %3274 = vmatprep.subr.mxu0 0.0
        %v3275 = vand.u32 %v2799, 4294901760
        %v3276 = vsub.f32 %v2799, %v3275
        %3277 = vmatpush1.msra.mxu0 %v3276
        %3278 = vmatprep.subr.mxu0 0.0
        %v3279 = vand.u32 %v2800, 4294901760
        %v3280 = vsub.f32 %v2800, %v3279
        %3281 = vmatpush1.msra.mxu0 %v3280
        %3282 = vmatprep.subr.mxu0 0.0
        %v3283 = vand.u32 %v2801, 4294901760
        %v3284 = vsub.f32 %v2801, %v3283
        %3285 = vmatpush1.msra.mxu0 %v3284
        %v3286 = vand.u32 %v2768, 4294901760
        %v3287 = vsub.f32 %v2768, %v3286
        %3288 = vmatprep.mubr.f32.mxu0 %v3287
        %v3289 = vand.u32 %v2767, 4294901760
        %v3290 = vsub.f32 %v2767, %v3289
        %3291 = vmatmul.mubr.f32.gmra.mrb[0].mxu0 %v3290
        %v3292 = vpop.f32.mrb[0].mxu0
        %v3293 = vadd.f32 %v3155, %v3292
        %v3294 = vpop.f32.mrb[0].mxu0
        %3295 = vdwg.mxu0
        %3296 = vmatprep.subr.mxu0 0.0
        %v3297 = vand.u32 %v2770, 4294901760
        %3298 = vmatpush1.msra.mxu0 %v3297
        %3299 = vmatprep.subr.mxu0 0.0
        %v3300 = vand.u32 %v2771, 4294901760
        %3301 = vmatpush1.msra.mxu0 %v3300
        %3302 = vmatprep.subr.mxu0 0.0
        %v3303 = vand.u32 %v2772, 4294901760
        %3304 = vmatpush1.msra.mxu0 %v3303
        %3305 = vmatprep.subr.mxu0 0.0
        %v3306 = vand.u32 %v2773, 4294901760
        %3307 = vmatpush1.msra.mxu0 %v3306
        %3308 = vmatprep.subr.mxu0 0.0
        %v3309 = vand.u32 %v2774, 4294901760
        %3310 = vmatpush1.msra.mxu0 %v3309
        %3311 = vmatprep.subr.mxu0 0.0
        %v3312 = vand.u32 %v2775, 4294901760
        %3313 = vmatpush1.msra.mxu0 %v3312
        %3314 = vmatprep.subr.mxu0 0.0
        %v3315 = vand.u32 %v2776, 4294901760
        %3316 = vmatpush1.msra.mxu0 %v3315
        %3317 = vmatprep.subr.mxu0 0.0
        %v3318 = vand.u32 %v2777, 4294901760
        %3319 = vmatpush1.msra.mxu0 %v3318
        %3320 = vmatprep.subr.mxu0 0.0
        %v3321 = vand.u32 %v2778, 4294901760
        %3322 = vmatpush1.msra.mxu0 %v3321
        %3323 = vmatprep.subr.mxu0 0.0
        %v3324 = vand.u32 %v2779, 4294901760
        %3325 = vmatpush1.msra.mxu0 %v3324
        %3326 = vmatprep.subr.mxu0 0.0
        %v3327 = vand.u32 %v2780, 4294901760
        %3328 = vmatpush1.msra.mxu0 %v3327
        %3329 = vmatprep.subr.mxu0 0.0
        %v3330 = vand.u32 %v2781, 4294901760
        %3331 = vmatpush1.msra.mxu0 %v3330
        %3332 = vmatprep.subr.mxu0 0.0
        %v3333 = vand.u32 %v2782, 4294901760
        %3334 = vmatpush1.msra.mxu0 %v3333
        %3335 = vmatprep.subr.mxu0 0.0
        %v3336 = vand.u32 %v2783, 4294901760
        %3337 = vmatpush1.msra.mxu0 %v3336
        %3338 = vmatprep.subr.mxu0 0.0
        %v3339 = vand.u32 %v2784, 4294901760
        %3340 = vmatpush1.msra.mxu0 %v3339
        %3341 = vmatprep.subr.mxu0 0.0
        %v3342 = vand.u32 %v2785, 4294901760
        %3343 = vmatpush1.msra.mxu0 %v3342
        %3344 = vmatprep.subr.mxu0 0.0
        %v3345 = vand.u32 %v2786, 4294901760
        %3346 = vmatpush1.msra.mxu0 %v3345
        %3347 = vmatprep.subr.mxu0 0.0
        %v3348 = vand.u32 %v2787, 4294901760
        %3349 = vmatpush1.msra.mxu0 %v3348
        %3350 = vmatprep.subr.mxu0 0.0
        %v3351 = vand.u32 %v2788, 4294901760
        %3352 = vmatpush1.msra.mxu0 %v3351
        %3353 = vmatprep.subr.mxu0 0.0
        %v3354 = vand.u32 %v2789, 4294901760
        %3355 = vmatpush1.msra.mxu0 %v3354
        %3356 = vmatprep.subr.mxu0 0.0
        %v3357 = vand.u32 %v2790, 4294901760
        %3358 = vmatpush1.msra.mxu0 %v3357
        %3359 = vmatprep.subr.mxu0 0.0
        %v3360 = vand.u32 %v2791, 4294901760
        %3361 = vmatpush1.msra.mxu0 %v3360
        %3362 = vmatprep.subr.mxu0 0.0
        %v3363 = vand.u32 %v2792, 4294901760
        %3364 = vmatpush1.msra.mxu0 %v3363
        %3365 = vmatprep.subr.mxu0 0.0
        %v3366 = vand.u32 %v2793, 4294901760
        %3367 = vmatpush1.msra.mxu0 %v3366
        %3368 = vmatprep.subr.mxu0 0.0
        %v3369 = vand.u32 %v2794, 4294901760
        %3370 = vmatpush1.msra.mxu0 %v3369
        %3371 = vmatprep.subr.mxu0 0.0
        %v3372 = vand.u32 %v2795, 4294901760
        %3373 = vmatpush1.msra.mxu0 %v3372
        %3374 = vmatprep.subr.mxu0 0.0
        %v3375 = vand.u32 %v2796, 4294901760
        %3376 = vmatpush1.msra.mxu0 %v3375
        %3377 = vmatprep.subr.mxu0 0.0
        %v3378 = vand.u32 %v2797, 4294901760
        %3379 = vmatpush1.msra.mxu0 %v3378
        %3380 = vmatprep.subr.mxu0 0.0
        %v3381 = vand.u32 %v2798, 4294901760
        %3382 = vmatpush1.msra.mxu0 %v3381
        %3383 = vmatprep.subr.mxu0 0.0
        %v3384 = vand.u32 %v2799, 4294901760
        %3385 = vmatpush1.msra.mxu0 %v3384
        %3386 = vmatprep.subr.mxu0 0.0
        %v3387 = vand.u32 %v2800, 4294901760
        %3388 = vmatpush1.msra.mxu0 %v3387
        %3389 = vmatprep.subr.mxu0 0.0
        %v3390 = vand.u32 %v2801, 4294901760
        %3391 = vmatpush1.msra.mxu0 %v3390
        %v3392 = vand.u32 %v2768, 4294901760
        %v3393 = vsub.f32 %v2768, %v3392
        %v3394 = vand.u32 %v3393, 4294901760
        %3395 = vmatprep.mubr.f32.mxu0 %v3394
        %v3396 = vand.u32 %v2767, 4294901760
        %v3397 = vsub.f32 %v2767, %v3396
        %v3398 = vand.u32 %v3397, 4294901760
        %3399 = vmatmul.mubr.f32.gmra.mrb[0].mxu0 %v3398
        %v3400 = vpop.f32.mrb[0].mxu0
        %v3401 = vadd.f32 %v3293, %v3400
        %v3402 = vpop.f32.mrb[0].mxu0
        %3403 = vdwg.mxu0
        %3404 = vmatprep.subr.mxu0 0.0
        %v3405 = vand.u32 %v2770, 4294901760
        %v3406 = vsub.f32 %v2770, %v3405
        %v3407 = vand.u32 %v3406, 4294901760
        %3408 = vmatpush1.msra.mxu0 %v3407
        %3409 = vmatprep.subr.mxu0 0.0
        %v3410 = vand.u32 %v2771, 4294901760
        %v3411 = vsub.f32 %v2771, %v3410
        %v3412 = vand.u32 %v3411, 4294901760
        %3413 = vmatpush1.msra.mxu0 %v3412
        %3414 = vmatprep.subr.mxu0 0.0
        %v3415 = vand.u32 %v2772, 4294901760
        %v3416 = vsub.f32 %v2772, %v3415
        %v3417 = vand.u32 %v3416, 4294901760
        %3418 = vmatpush1.msra.mxu0 %v3417
        %3419 = vmatprep.subr.mxu0 0.0
        %v3420 = vand.u32 %v2773, 4294901760
        %v3421 = vsub.f32 %v2773, %v3420
        %v3422 = vand.u32 %v3421, 4294901760
        %3423 = vmatpush1.msra.mxu0 %v3422
        %3424 = vmatprep.subr.mxu0 0.0
        %v3425 = vand.u32 %v2774, 4294901760
        %v3426 = vsub.f32 %v2774, %v3425
        %v3427 = vand.u32 %v3426, 4294901760
        %3428 = vmatpush1.msra.mxu0 %v3427
        %3429 = vmatprep.subr.mxu0 0.0
        %v3430 = vand.u32 %v2775, 4294901760
        %v3431 = vsub.f32 %v2775, %v3430
        %v3432 = vand.u32 %v3431, 4294901760
        %3433 = vmatpush1.msra.mxu0 %v3432
        %3434 = vmatprep.subr.mxu0 0.0
        %v3435 = vand.u32 %v2776, 4294901760
        %v3436 = vsub.f32 %v2776, %v3435
        %v3437 = vand.u32 %v3436, 4294901760
        %3438 = vmatpush1.msra.mxu0 %v3437
        %3439 = vmatprep.subr.mxu0 0.0
        %v3440 = vand.u32 %v2777, 4294901760
        %v3441 = vsub.f32 %v2777, %v3440
        %v3442 = vand.u32 %v3441, 4294901760
        %3443 = vmatpush1.msra.mxu0 %v3442
        %3444 = vmatprep.subr.mxu0 0.0
        %v3445 = vand.u32 %v2778, 4294901760
        %v3446 = vsub.f32 %v2778, %v3445
        %v3447 = vand.u32 %v3446, 4294901760
        %3448 = vmatpush1.msra.mxu0 %v3447
        %3449 = vmatprep.subr.mxu0 0.0
        %v3450 = vand.u32 %v2779, 4294901760
        %v3451 = vsub.f32 %v2779, %v3450
        %v3452 = vand.u32 %v3451, 4294901760
        %3453 = vmatpush1.msra.mxu0 %v3452
        %3454 = vmatprep.subr.mxu0 0.0
        %v3455 = vand.u32 %v2780, 4294901760
        %v3456 = vsub.f32 %v2780, %v3455
        %v3457 = vand.u32 %v3456, 4294901760
        %3458 = vmatpush1.msra.mxu0 %v3457
        %3459 = vmatprep.subr.mxu0 0.0
        %v3460 = vand.u32 %v2781, 4294901760
        %v3461 = vsub.f32 %v2781, %v3460
        %v3462 = vand.u32 %v3461, 4294901760
        %3463 = vmatpush1.msra.mxu0 %v3462
        %3464 = vmatprep.subr.mxu0 0.0
        %v3465 = vand.u32 %v2782, 4294901760
        %v3466 = vsub.f32 %v2782, %v3465
        %v3467 = vand.u32 %v3466, 4294901760
        %3468 = vmatpush1.msra.mxu0 %v3467
        %3469 = vmatprep.subr.mxu0 0.0
        %v3470 = vand.u32 %v2783, 4294901760
        %v3471 = vsub.f32 %v2783, %v3470
        %v3472 = vand.u32 %v3471, 4294901760
        %3473 = vmatpush1.msra.mxu0 %v3472
        %3474 = vmatprep.subr.mxu0 0.0
        %v3475 = vand.u32 %v2784, 4294901760
        %v3476 = vsub.f32 %v2784, %v3475
        %v3477 = vand.u32 %v3476, 4294901760
        %3478 = vmatpush1.msra.mxu0 %v3477
        %3479 = vmatprep.subr.mxu0 0.0
        %v3480 = vand.u32 %v2785, 4294901760
        %v3481 = vsub.f32 %v2785, %v3480
        %v3482 = vand.u32 %v3481, 4294901760
        %3483 = vmatpush1.msra.mxu0 %v3482
        %3484 = vmatprep.subr.mxu0 0.0
        %v3485 = vand.u32 %v2786, 4294901760
        %v3486 = vsub.f32 %v2786, %v3485
        %v3487 = vand.u32 %v3486, 4294901760
        %3488 = vmatpush1.msra.mxu0 %v3487
        %3489 = vmatprep.subr.mxu0 0.0
        %v3490 = vand.u32 %v2787, 4294901760
        %v3491 = vsub.f32 %v2787, %v3490
        %v3492 = vand.u32 %v3491, 4294901760
        %3493 = vmatpush1.msra.mxu0 %v3492
        %3494 = vmatprep.subr.mxu0 0.0
        %v3495 = vand.u32 %v2788, 4294901760
        %v3496 = vsub.f32 %v2788, %v3495
        %v3497 = vand.u32 %v3496, 4294901760
        %3498 = vmatpush1.msra.mxu0 %v3497
        %3499 = vmatprep.subr.mxu0 0.0
        %v3500 = vand.u32 %v2789, 4294901760
        %v3501 = vsub.f32 %v2789, %v3500
        %v3502 = vand.u32 %v3501, 4294901760
        %3503 = vmatpush1.msra.mxu0 %v3502
        %3504 = vmatprep.subr.mxu0 0.0
        %v3505 = vand.u32 %v2790, 4294901760
        %v3506 = vsub.f32 %v2790, %v3505
        %v3507 = vand.u32 %v3506, 4294901760
        %3508 = vmatpush1.msra.mxu0 %v3507
        %3509 = vmatprep.subr.mxu0 0.0
        %v3510 = vand.u32 %v2791, 4294901760
        %v3511 = vsub.f32 %v2791, %v3510
        %v3512 = vand.u32 %v3511, 4294901760
        %3513 = vmatpush1.msra.mxu0 %v3512
        %3514 = vmatprep.subr.mxu0 0.0
        %v3515 = vand.u32 %v2792, 4294901760
        %v3516 = vsub.f32 %v2792, %v3515
        %v3517 = vand.u32 %v3516, 4294901760
        %3518 = vmatpush1.msra.mxu0 %v3517
        %3519 = vmatprep.subr.mxu0 0.0
        %v3520 = vand.u32 %v2793, 4294901760
        %v3521 = vsub.f32 %v2793, %v3520
        %v3522 = vand.u32 %v3521, 4294901760
        %3523 = vmatpush1.msra.mxu0 %v3522
        %3524 = vmatprep.subr.mxu0 0.0
        %v3525 = vand.u32 %v2794, 4294901760
        %v3526 = vsub.f32 %v2794, %v3525
        %v3527 = vand.u32 %v3526, 4294901760
        %3528 = vmatpush1.msra.mxu0 %v3527
        %3529 = vmatprep.subr.mxu0 0.0
        %v3530 = vand.u32 %v2795, 4294901760
        %v3531 = vsub.f32 %v2795, %v3530
        %v3532 = vand.u32 %v3531, 4294901760
        %3533 = vmatpush1.msra.mxu0 %v3532
        %3534 = vmatprep.subr.mxu0 0.0
        %v3535 = vand.u32 %v2796, 4294901760
        %v3536 = vsub.f32 %v2796, %v3535
        %v3537 = vand.u32 %v3536, 4294901760
        %3538 = vmatpush1.msra.mxu0 %v3537
        %3539 = vmatprep.subr.mxu0 0.0
        %v3540 = vand.u32 %v2797, 4294901760
        %v3541 = vsub.f32 %v2797, %v3540
        %v3542 = vand.u32 %v3541, 4294901760
        %3543 = vmatpush1.msra.mxu0 %v3542
        %3544 = vmatprep.subr.mxu0 0.0
        %v3545 = vand.u32 %v2798, 4294901760
        %v3546 = vsub.f32 %v2798, %v3545
        %v3547 = vand.u32 %v3546, 4294901760
        %3548 = vmatpush1.msra.mxu0 %v3547
        %3549 = vmatprep.subr.mxu0 0.0
        %v3550 = vand.u32 %v2799, 4294901760
        %v3551 = vsub.f32 %v2799, %v3550
        %v3552 = vand.u32 %v3551, 4294901760
        %3553 = vmatpush1.msra.mxu0 %v3552
        %3554 = vmatprep.subr.mxu0 0.0
        %v3555 = vand.u32 %v2800, 4294901760
        %v3556 = vsub.f32 %v2800, %v3555
        %v3557 = vand.u32 %v3556, 4294901760
        %3558 = vmatpush1.msra.mxu0 %v3557
        %3559 = vmatprep.subr.mxu0 0.0
        %v3560 = vand.u32 %v2801, 4294901760
        %v3561 = vsub.f32 %v2801, %v3560
        %v3562 = vand.u32 %v3561, 4294901760
        %3563 = vmatpush1.msra.mxu0 %v3562
        %v3564 = vand.u32 %v2768, 4294901760
        %3565 = vmatprep.mubr.f32.mxu0 %v3564
        %v3566 = vand.u32 %v2767, 4294901760
        %3567 = vmatmul.mubr.f32.gmra.mrb[0].mxu0 %v3566
        %v3568 = vpop.f32.mrb[0].mxu0
        %v3569 = vadd.f32 %v3401, %v3568
        %v3570 = vpop.f32.mrb[0].mxu0
        %3571 = vdwg.mxu0
        %3572 = vmatprep.subr.mxu0 0.0
        %v3573 = vand.u32 %v2770, 4294901760
        %3574 = vmatpush1.msra.mxu0 %v3573
        %3575 = vmatprep.subr.mxu0 0.0
        %v3576 = vand.u32 %v2771, 4294901760
        %3577 = vmatpush1.msra.mxu0 %v3576
        %3578 = vmatprep.subr.mxu0 0.0
        %v3579 = vand.u32 %v2772, 4294901760
        %3580 = vmatpush1.msra.mxu0 %v3579
        %3581 = vmatprep.subr.mxu0 0.0
        %v3582 = vand.u32 %v2773, 4294901760
        %3583 = vmatpush1.msra.mxu0 %v3582
        %3584 = vmatprep.subr.mxu0 0.0
        %v3585 = vand.u32 %v2774, 4294901760
        %3586 = vmatpush1.msra.mxu0 %v3585
        %3587 = vmatprep.subr.mxu0 0.0
        %v3588 = vand.u32 %v2775, 4294901760
        %3589 = vmatpush1.msra.mxu0 %v3588
        %3590 = vmatprep.subr.mxu0 0.0
        %v3591 = vand.u32 %v2776, 4294901760
        %3592 = vmatpush1.msra.mxu0 %v3591
        %3593 = vmatprep.subr.mxu0 0.0
        %v3594 = vand.u32 %v2777, 4294901760
        %3595 = vmatpush1.msra.mxu0 %v3594
        %3596 = vmatprep.subr.mxu0 0.0
        %v3597 = vand.u32 %v2778, 4294901760
        %3598 = vmatpush1.msra.mxu0 %v3597
        %3599 = vmatprep.subr.mxu0 0.0
        %v3600 = vand.u32 %v2779, 4294901760
        %3601 = vmatpush1.msra.mxu0 %v3600
        %3602 = vmatprep.subr.mxu0 0.0
        %v3603 = vand.u32 %v2780, 4294901760
        %3604 = vmatpush1.msra.mxu0 %v3603
        %3605 = vmatprep.subr.mxu0 0.0
        %v3606 = vand.u32 %v2781, 4294901760
        %3607 = vmatpush1.msra.mxu0 %v3606
        %3608 = vmatprep.subr.mxu0 0.0
        %v3609 = vand.u32 %v2782, 4294901760
        %3610 = vmatpush1.msra.mxu0 %v3609
        %3611 = vmatprep.subr.mxu0 0.0
        %v3612 = vand.u32 %v2783, 4294901760
        %3613 = vmatpush1.msra.mxu0 %v3612
        %3614 = vmatprep.subr.mxu0 0.0
        %v3615 = vand.u32 %v2784, 4294901760
        %3616 = vmatpush1.msra.mxu0 %v3615
        %3617 = vmatprep.subr.mxu0 0.0
        %v3618 = vand.u32 %v2785, 4294901760
        %3619 = vmatpush1.msra.mxu0 %v3618
        %3620 = vmatprep.subr.mxu0 0.0
        %v3621 = vand.u32 %v2786, 4294901760
        %3622 = vmatpush1.msra.mxu0 %v3621
        %3623 = vmatprep.subr.mxu0 0.0
        %v3624 = vand.u32 %v2787, 4294901760
        %3625 = vmatpush1.msra.mxu0 %v3624
        %3626 = vmatprep.subr.mxu0 0.0
        %v3627 = vand.u32 %v2788, 4294901760
        %3628 = vmatpush1.msra.mxu0 %v3627
        %3629 = vmatprep.subr.mxu0 0.0
        %v3630 = vand.u32 %v2789, 4294901760
        %3631 = vmatpush1.msra.mxu0 %v3630
        %3632 = vmatprep.subr.mxu0 0.0
        %v3633 = vand.u32 %v2790, 4294901760
        %3634 = vmatpush1.msra.mxu0 %v3633
        %3635 = vmatprep.subr.mxu0 0.0
        %v3636 = vand.u32 %v2791, 4294901760
        %3637 = vmatpush1.msra.mxu0 %v3636
        %3638 = vmatprep.subr.mxu0 0.0
        %v3639 = vand.u32 %v2792, 4294901760
        %3640 = vmatpush1.msra.mxu0 %v3639
        %3641 = vmatprep.subr.mxu0 0.0
        %v3642 = vand.u32 %v2793, 4294901760
        %3643 = vmatpush1.msra.mxu0 %v3642
        %3644 = vmatprep.subr.mxu0 0.0
        %v3645 = vand.u32 %v2794, 4294901760
        %3646 = vmatpush1.msra.mxu0 %v3645
        %3647 = vmatprep.subr.mxu0 0.0
        %v3648 = vand.u32 %v2795, 4294901760
        %3649 = vmatpush1.msra.mxu0 %v3648
        %3650 = vmatprep.subr.mxu0 0.0
        %v3651 = vand.u32 %v2796, 4294901760
        %3652 = vmatpush1.msra.mxu0 %v3651
        %3653 = vmatprep.subr.mxu0 0.0
        %v3654 = vand.u32 %v2797, 4294901760
        %3655 = vmatpush1.msra.mxu0 %v3654
        %3656 = vmatprep.subr.mxu0 0.0
        %v3657 = vand.u32 %v2798, 4294901760
        %3658 = vmatpush1.msra.mxu0 %v3657
        %3659 = vmatprep.subr.mxu0 0.0
        %v3660 = vand.u32 %v2799, 4294901760
        %3661 = vmatpush1.msra.mxu0 %v3660
        %3662 = vmatprep.subr.mxu0 0.0
        %v3663 = vand.u32 %v2800, 4294901760
        %3664 = vmatpush1.msra.mxu0 %v3663
        %3665 = vmatprep.subr.mxu0 0.0
        %v3666 = vand.u32 %v2801, 4294901760
        %3667 = vmatpush1.msra.mxu0 %v3666
        %v3668 = vand.u32 %v2768, 4294901760
        %3669 = vmatprep.mubr.f32.mxu0 %v3668
        %v3670 = vand.u32 %v2767, 4294901760
        %3671 = vmatmul.mubr.f32.gmra.mrb[0].mxu0 %v3670
        %v3672 = vpop.f32.mrb[0].mxu0
        %v3673 = vadd.f32 %v3569, %v3672
        %v3674 = vpop.f32.mrb[0].mxu0
        %3675 = vdwg.mxu0
        %3676 = vmatprep.subr.mxu0 0.0
        %v3677 = vand.u32 %v2802, 4294901760
        %3678 = vmatpush1.msra.mxu0 %v3677
        %3679 = vmatprep.subr.mxu0 0.0
        %v3680 = vand.u32 %v2803, 4294901760
        %3681 = vmatpush1.msra.mxu0 %v3680
        %3682 = vmatprep.subr.mxu0 0.0
        %v3683 = vand.u32 %v2804, 4294901760
        %3684 = vmatpush1.msra.mxu0 %v3683
        %3685 = vmatprep.subr.mxu0 0.0
        %v3686 = vand.u32 %v2805, 4294901760
        %3687 = vmatpush1.msra.mxu0 %v3686
        %3688 = vmatprep.subr.mxu0 0.0
        %v3689 = vand.u32 %v2806, 4294901760
        %3690 = vmatpush1.msra.mxu0 %v3689
        %3691 = vmatprep.subr.mxu0 0.0
        %v3692 = vand.u32 %v2807, 4294901760
        %3693 = vmatpush1.msra.mxu0 %v3692
        %3694 = vmatprep.subr.mxu0 0.0
        %v3695 = vand.u32 %v2808, 4294901760
        %3696 = vmatpush1.msra.mxu0 %v3695
        %3697 = vmatprep.subr.mxu0 0.0
        %v3698 = vand.u32 %v2809, 4294901760
        %3699 = vmatpush1.msra.mxu0 %v3698
        %3700 = vmatprep.subr.mxu0 0.0
        %3701 = vmatpush1.msra.mxu0 0.0
        %3702 = vmatprep.subr.mxu0 0.0
        %3703 = vmatpush1.msra.mxu0 0.0
        %3704 = vmatprep.subr.mxu0 0.0
        %3705 = vmatpush1.msra.mxu0 0.0
        %3706 = vmatprep.subr.mxu0 0.0
        %3707 = vmatpush1.msra.mxu0 0.0
        %3708 = vmatprep.subr.mxu0 0.0
        %3709 = vmatpush1.msra.mxu0 0.0
        %3710 = vmatprep.subr.mxu0 0.0
        %3711 = vmatpush1.msra.mxu0 0.0
        %3712 = vmatprep.subr.mxu0 0.0
        %3713 = vmatpush1.msra.mxu0 0.0
        %3714 = vmatprep.subr.mxu0 0.0
        %3715 = vmatpush1.msra.mxu0 0.0
        %3716 = vmatprep.subr.mxu0 0.0
        %3717 = vmatpush1.msra.mxu0 0.0
        %3718 = vmatprep.subr.mxu0 0.0
        %3719 = vmatpush1.msra.mxu0 0.0
        %3720 = vmatprep.subr.mxu0 0.0
        %3721 = vmatpush1.msra.mxu0 0.0
        %3722 = vmatprep.subr.mxu0 0.0
        %3723 = vmatpush1.msra.mxu0 0.0
        %3724 = vmatprep.subr.mxu0 0.0
        %3725 = vmatpush1.msra.mxu0 0.0
        %3726 = vmatprep.subr.mxu0 0.0
        %3727 = vmatpush1.msra.mxu0 0.0
        %3728 = vmatprep.subr.mxu0 0.0
        %3729 = vmatpush1.msra.mxu0 0.0
        %3730 = vmatprep.subr.mxu0 0.0
        %3731 = vmatpush1.msra.mxu0 0.0
        %3732 = vmatprep.subr.mxu0 0.0
        %3733 = vmatpush1.msra.mxu0 0.0
        %3734 = vmatprep.subr.mxu0 0.0
        %3735 = vmatpush1.msra.mxu0 0.0
        %3736 = vmatprep.subr.mxu0 0.0
        %3737 = vmatpush1.msra.mxu0 0.0
        %3738 = vmatprep.subr.mxu0 0.0
        %3739 = vmatpush1.msra.mxu0 0.0
        %3740 = vmatprep.subr.mxu0 0.0
        %3741 = vmatpush1.msra.mxu0 0.0
        %3742 = vmatprep.subr.mxu0 0.0
        %3743 = vmatpush1.msra.mxu0 0.0
        %3744 = vmatprep.subr.mxu0 0.0
        %3745 = vmatpush1.msra.mxu0 0.0
        %3746 = vmatprep.subr.mxu0 0.0
        %3747 = vmatpush1.msra.mxu0 0.0
        %3748 = vmatprep.mubr.f32.mxu0 0.0
        %v3749 = vand.u32 %v2812, 4294901760
        %v3750 = vsub.f32 %v2812, %v3749
        %v3751 = vand.u32 %v3750, 4294901760
        %v3752 = vsub.f32 %v3750, %v3751
        %v3753 = vand.u32 %v3752, 4294901760
        %3754 = vmatmul.mubr.f32.gmra.mrb[0].mxu0 %v3753
        %v3755 = vpop.f32.mrb[0].mxu0
        %v3756 = vadd.f32 %v3673, %v3755
        %v3757 = vpop.f32.mrb[0].mxu0
        %3758 = vdwg.mxu0
        %3759 = vmatprep.subr.mxu0 0.0
        %v3760 = vand.u32 %v2802, 4294901760
        %v3761 = vsub.f32 %v2802, %v3760
        %v3762 = vand.u32 %v3761, 4294901760
        %v3763 = vsub.f32 %v3761, %v3762
        %v3764 = vand.u32 %v3763, 4294901760
        %3765 = vmatpush1.msra.mxu0 %v3764
        %3766 = vmatprep.subr.mxu0 0.0
        %v3767 = vand.u32 %v2803, 4294901760
        %v3768 = vsub.f32 %v2803, %v3767
        %v3769 = vand.u32 %v3768, 4294901760
        %v3770 = vsub.f32 %v3768, %v3769
        %v3771 = vand.u32 %v3770, 4294901760
        %3772 = vmatpush1.msra.mxu0 %v3771
        %3773 = vmatprep.subr.mxu0 0.0
        %v3774 = vand.u32 %v2804, 4294901760
        %v3775 = vsub.f32 %v2804, %v3774
        %v3776 = vand.u32 %v3775, 4294901760
        %v3777 = vsub.f32 %v3775, %v3776
        %v3778 = vand.u32 %v3777, 4294901760
        %3779 = vmatpush1.msra.mxu0 %v3778
        %3780 = vmatprep.subr.mxu0 0.0
        %v3781 = vand.u32 %v2805, 4294901760
        %v3782 = vsub.f32 %v2805, %v3781
        %v3783 = vand.u32 %v3782, 4294901760
        %v3784 = vsub.f32 %v3782, %v3783
        %v3785 = vand.u32 %v3784, 4294901760
        %3786 = vmatpush1.msra.mxu0 %v3785
        %3787 = vmatprep.subr.mxu0 0.0
        %v3788 = vand.u32 %v2806, 4294901760
        %v3789 = vsub.f32 %v2806, %v3788
        %v3790 = vand.u32 %v3789, 4294901760
        %v3791 = vsub.f32 %v3789, %v3790
        %v3792 = vand.u32 %v3791, 4294901760
        %3793 = vmatpush1.msra.mxu0 %v3792
        %3794 = vmatprep.subr.mxu0 0.0
        %v3795 = vand.u32 %v2807, 4294901760
        %v3796 = vsub.f32 %v2807, %v3795
        %v3797 = vand.u32 %v3796, 4294901760
        %v3798 = vsub.f32 %v3796, %v3797
        %v3799 = vand.u32 %v3798, 4294901760
        %3800 = vmatpush1.msra.mxu0 %v3799
        %3801 = vmatprep.subr.mxu0 0.0
        %v3802 = vand.u32 %v2808, 4294901760
        %v3803 = vsub.f32 %v2808, %v3802
        %v3804 = vand.u32 %v3803, 4294901760
        %v3805 = vsub.f32 %v3803, %v3804
        %v3806 = vand.u32 %v3805, 4294901760
        %3807 = vmatpush1.msra.mxu0 %v3806
        %3808 = vmatprep.subr.mxu0 0.0
        %v3809 = vand.u32 %v2809, 4294901760
        %v3810 = vsub.f32 %v2809, %v3809
        %v3811 = vand.u32 %v3810, 4294901760
        %v3812 = vsub.f32 %v3810, %v3811
        %v3813 = vand.u32 %v3812, 4294901760
        %3814 = vmatpush1.msra.mxu0 %v3813
        %3815 = vmatprep.subr.mxu0 0.0
        %3816 = vmatpush1.msra.mxu0 0.0
        %3817 = vmatprep.subr.mxu0 0.0
        %3818 = vmatpush1.msra.mxu0 0.0
        %3819 = vmatprep.subr.mxu0 0.0
        %3820 = vmatpush1.msra.mxu0 0.0
        %3821 = vmatprep.subr.mxu0 0.0
        %3822 = vmatpush1.msra.mxu0 0.0
        %3823 = vmatprep.subr.mxu0 0.0
        %3824 = vmatpush1.msra.mxu0 0.0
        %3825 = vmatprep.subr.mxu0 0.0
        %3826 = vmatpush1.msra.mxu0 0.0
        %3827 = vmatprep.subr.mxu0 0.0
        %3828 = vmatpush1.msra.mxu0 0.0
        %3829 = vmatprep.subr.mxu0 0.0
        %3830 = vmatpush1.msra.mxu0 0.0
        %3831 = vmatprep.subr.mxu0 0.0
        %3832 = vmatpush1.msra.mxu0 0.0
        %3833 = vmatprep.subr.mxu0 0.0
        %3834 = vmatpush1.msra.mxu0 0.0
        %3835 = vmatprep.subr.mxu0 0.0
        %3836 = vmatpush1.msra.mxu0 0.0
        %3837 = vmatprep.subr.mxu0 0.0
        %3838 = vmatpush1.msra.mxu0 0.0
        %3839 = vmatprep.subr.mxu0 0.0
        %3840 = vmatpush1.msra.mxu0 0.0
        %3841 = vmatprep.subr.mxu0 0.0
        %3842 = vmatpush1.msra.mxu0 0.0
        %3843 = vmatprep.subr.mxu0 0.0
        %3844 = vmatpush1.msra.mxu0 0.0
        %3845 = vmatprep.subr.mxu0 0.0
        %3846 = vmatpush1.msra.mxu0 0.0
        %3847 = vmatprep.subr.mxu0 0.0
        %3848 = vmatpush1.msra.mxu0 0.0
        %3849 = vmatprep.subr.mxu0 0.0
        %3850 = vmatpush1.msra.mxu0 0.0
        %3851 = vmatprep.subr.mxu0 0.0
        %3852 = vmatpush1.msra.mxu0 0.0
        %3853 = vmatprep.subr.mxu0 0.0
        %3854 = vmatpush1.msra.mxu0 0.0
        %3855 = vmatprep.subr.mxu0 0.0
        %3856 = vmatpush1.msra.mxu0 0.0
        %3857 = vmatprep.subr.mxu0 0.0
        %3858 = vmatpush1.msra.mxu0 0.0
        %3859 = vmatprep.subr.mxu0 0.0
        %3860 = vmatpush1.msra.mxu0 0.0
        %3861 = vmatprep.subr.mxu0 0.0
        %3862 = vmatpush1.msra.mxu0 0.0
        %3863 = vmatprep.mubr.f32.mxu0 0.0
        %v3864 = vand.u32 %v2812, 4294901760
        %3865 = vmatmul.mubr.f32.gmra.mrb[0].mxu0 %v3864
        %v3866 = vpop.f32.mrb[0].mxu0
        %v3867 = vadd.f32 %v3756, %v3866
        %v3868 = vpop.f32.mrb[0].mxu0
        %3869 = vdwg.mxu0
        %3870 = vmatprep.subr.mxu0 0.0
        %v3871 = vand.u32 %v2802, 4294901760
        %v3872 = vsub.f32 %v2802, %v3871
        %3873 = vmatpush1.msra.mxu0 %v3872
        %3874 = vmatprep.subr.mxu0 0.0
        %v3875 = vand.u32 %v2803, 4294901760
        %v3876 = vsub.f32 %v2803, %v3875
        %3877 = vmatpush1.msra.mxu0 %v3876
        %3878 = vmatprep.subr.mxu0 0.0
        %v3879 = vand.u32 %v2804, 4294901760
        %v3880 = vsub.f32 %v2804, %v3879
        %3881 = vmatpush1.msra.mxu0 %v3880
        %3882 = vmatprep.subr.mxu0 0.0
        %v3883 = vand.u32 %v2805, 4294901760
        %v3884 = vsub.f32 %v2805, %v3883
        %3885 = vmatpush1.msra.mxu0 %v3884
        %3886 = vmatprep.subr.mxu0 0.0
        %v3887 = vand.u32 %v2806, 4294901760
        %v3888 = vsub.f32 %v2806, %v3887
        %3889 = vmatpush1.msra.mxu0 %v3888
        %3890 = vmatprep.subr.mxu0 0.0
        %v3891 = vand.u32 %v2807, 4294901760
        %v3892 = vsub.f32 %v2807, %v3891
        %3893 = vmatpush1.msra.mxu0 %v3892
        %3894 = vmatprep.subr.mxu0 0.0
        %v3895 = vand.u32 %v2808, 4294901760
        %v3896 = vsub.f32 %v2808, %v3895
        %3897 = vmatpush1.msra.mxu0 %v3896
        %3898 = vmatprep.subr.mxu0 0.0
        %v3899 = vand.u32 %v2809, 4294901760
        %v3900 = vsub.f32 %v2809, %v3899
        %3901 = vmatpush1.msra.mxu0 %v3900
        %3902 = vmatprep.subr.mxu0 0.0
        %3903 = vmatpush1.msra.mxu0 0.0
        %3904 = vmatprep.subr.mxu0 0.0
        %3905 = vmatpush1.msra.mxu0 0.0
        %3906 = vmatprep.subr.mxu0 0.0
        %3907 = vmatpush1.msra.mxu0 0.0
        %3908 = vmatprep.subr.mxu0 0.0
        %3909 = vmatpush1.msra.mxu0 0.0
        %3910 = vmatprep.subr.mxu0 0.0
        %3911 = vmatpush1.msra.mxu0 0.0
        %3912 = vmatprep.subr.mxu0 0.0
        %3913 = vmatpush1.msra.mxu0 0.0
        %3914 = vmatprep.subr.mxu0 0.0
        %3915 = vmatpush1.msra.mxu0 0.0
        %3916 = vmatprep.subr.mxu0 0.0
        %3917 = vmatpush1.msra.mxu0 0.0
        %3918 = vmatprep.subr.mxu0 0.0
        %3919 = vmatpush1.msra.mxu0 0.0
        %3920 = vmatprep.subr.mxu0 0.0
        %3921 = vmatpush1.msra.mxu0 0.0
        %3922 = vmatprep.subr.mxu0 0.0
        %3923 = vmatpush1.msra.mxu0 0.0
        %3924 = vmatprep.subr.mxu0 0.0
        %3925 = vmatpush1.msra.mxu0 0.0
        %3926 = vmatprep.subr.mxu0 0.0
        %3927 = vmatpush1.msra.mxu0 0.0
        %3928 = vmatprep.subr.mxu0 0.0
        %3929 = vmatpush1.msra.mxu0 0.0
        %3930 = vmatprep.subr.mxu0 0.0
        %3931 = vmatpush1.msra.mxu0 0.0
        %3932 = vmatprep.subr.mxu0 0.0
        %3933 = vmatpush1.msra.mxu0 0.0
        %3934 = vmatprep.subr.mxu0 0.0
        %3935 = vmatpush1.msra.mxu0 0.0
        %3936 = vmatprep.subr.mxu0 0.0
        %3937 = vmatpush1.msra.mxu0 0.0
        %3938 = vmatprep.subr.mxu0 0.0
        %3939 = vmatpush1.msra.mxu0 0.0
        %3940 = vmatprep.subr.mxu0 0.0
        %3941 = vmatpush1.msra.mxu0 0.0
        %3942 = vmatprep.subr.mxu0 0.0
        %3943 = vmatpush1.msra.mxu0 0.0
        %3944 = vmatprep.subr.mxu0 0.0
        %3945 = vmatpush1.msra.mxu0 0.0
        %3946 = vmatprep.subr.mxu0 0.0
        %3947 = vmatpush1.msra.mxu0 0.0
        %3948 = vmatprep.subr.mxu0 0.0
        %3949 = vmatpush1.msra.mxu0 0.0
        %3950 = vmatprep.mubr.f32.mxu0 0.0
        %v3951 = vand.u32 %v2812, 4294901760
        %v3952 = vsub.f32 %v2812, %v3951
        %3953 = vmatmul.mubr.f32.gmra.mrb[0].mxu0 %v3952
        %v3954 = vpop.f32.mrb[0].mxu0
        %v3955 = vadd.f32 %v3867, %v3954
        %v3956 = vpop.f32.mrb[0].mxu0
        %3957 = vdwg.mxu0
        %3958 = vmatprep.subr.mxu0 0.0
        %v3959 = vand.u32 %v2802, 4294901760
        %3960 = vmatpush1.msra.mxu0 %v3959
        %3961 = vmatprep.subr.mxu0 0.0
        %v3962 = vand.u32 %v2803, 4294901760
        %3963 = vmatpush1.msra.mxu0 %v3962
        %3964 = vmatprep.subr.mxu0 0.0
        %v3965 = vand.u32 %v2804, 4294901760
        %3966 = vmatpush1.msra.mxu0 %v3965
        %3967 = vmatprep.subr.mxu0 0.0
        %v3968 = vand.u32 %v2805, 4294901760
        %3969 = vmatpush1.msra.mxu0 %v3968
        %3970 = vmatprep.subr.mxu0 0.0
        %v3971 = vand.u32 %v2806, 4294901760
        %3972 = vmatpush1.msra.mxu0 %v3971
        %3973 = vmatprep.subr.mxu0 0.0
        %v3974 = vand.u32 %v2807, 4294901760
        %3975 = vmatpush1.msra.mxu0 %v3974
        %3976 = vmatprep.subr.mxu0 0.0
        %v3977 = vand.u32 %v2808, 4294901760
        %3978 = vmatpush1.msra.mxu0 %v3977
        %3979 = vmatprep.subr.mxu0 0.0
        %v3980 = vand.u32 %v2809, 4294901760
        %3981 = vmatpush1.msra.mxu0 %v3980
        %3982 = vmatprep.subr.mxu0 0.0
        %3983 = vmatpush1.msra.mxu0 0.0
        %3984 = vmatprep.subr.mxu0 0.0
        %3985 = vmatpush1.msra.mxu0 0.0
        %3986 = vmatprep.subr.mxu0 0.0
        %3987 = vmatpush1.msra.mxu0 0.0
        %3988 = vmatprep.subr.mxu0 0.0
        %3989 = vmatpush1.msra.mxu0 0.0
        %3990 = vmatprep.subr.mxu0 0.0
        %3991 = vmatpush1.msra.mxu0 0.0
        %3992 = vmatprep.subr.mxu0 0.0
        %3993 = vmatpush1.msra.mxu0 0.0
        %3994 = vmatprep.subr.mxu0 0.0
        %3995 = vmatpush1.msra.mxu0 0.0
        %3996 = vmatprep.subr.mxu0 0.0
        %3997 = vmatpush1.msra.mxu0 0.0
        %3998 = vmatprep.subr.mxu0 0.0
        %3999 = vmatpush1.msra.mxu0 0.0
        %4000 = vmatprep.subr.mxu0 0.0
        %4001 = vmatpush1.msra.mxu0 0.0
        %4002 = vmatprep.subr.mxu0 0.0
        %4003 = vmatpush1.msra.mxu0 0.0
        %4004 = vmatprep.subr.mxu0 0.0
        %4005 = vmatpush1.msra.mxu0 0.0
        %4006 = vmatprep.subr.mxu0 0.0
        %4007 = vmatpush1.msra.mxu0 0.0
        %4008 = vmatprep.subr.mxu0 0.0
        %4009 = vmatpush1.msra.mxu0 0.0
        %4010 = vmatprep.subr.mxu0 0.0
        %4011 = vmatpush1.msra.mxu0 0.0
        %4012 = vmatprep.subr.mxu0 0.0
        %4013 = vmatpush1.msra.mxu0 0.0
        %4014 = vmatprep.subr.mxu0 0.0
        %4015 = vmatpush1.msra.mxu0 0.0
        %4016 = vmatprep.subr.mxu0 0.0
        %4017 = vmatpush1.msra.mxu0 0.0
        %4018 = vmatprep.subr.mxu0 0.0
        %4019 = vmatpush1.msra.mxu0 0.0
        %4020 = vmatprep.subr.mxu0 0.0
        %4021 = vmatpush1.msra.mxu0 0.0
        %4022 = vmatprep.subr.mxu0 0.0
        %4023 = vmatpush1.msra.mxu0 0.0
        %4024 = vmatprep.subr.mxu0 0.0
        %4025 = vmatpush1.msra.mxu0 0.0
        %4026 = vmatprep.subr.mxu0 0.0
        %4027 = vmatpush1.msra.mxu0 0.0
        %4028 = vmatprep.subr.mxu0 0.0
        %4029 = vmatpush1.msra.mxu0 0.0
        %4030 = vmatprep.mubr.f32.mxu0 0.0
        %v4031 = vand.u32 %v2812, 4294901760
        %v4032 = vsub.f32 %v2812, %v4031
        %v4033 = vand.u32 %v4032, 4294901760
        %4034 = vmatmul.mubr.f32.gmra.mrb[0].mxu0 %v4033
        %v4035 = vpop.f32.mrb[0].mxu0
        %v4036 = vadd.f32 %v3955, %v4035
        %v4037 = vpop.f32.mrb[0].mxu0
        %4038 = vdwg.mxu0
        %4039 = vmatprep.subr.mxu0 0.0
        %v4040 = vand.u32 %v2802, 4294901760
        %v4041 = vsub.f32 %v2802, %v4040
        %v4042 = vand.u32 %v4041, 4294901760
        %4043 = vmatpush1.msra.mxu0 %v4042
        %4044 = vmatprep.subr.mxu0 0.0
        %v4045 = vand.u32 %v2803, 4294901760
        %v4046 = vsub.f32 %v2803, %v4045
        %v4047 = vand.u32 %v4046, 4294901760
        %4048 = vmatpush1.msra.mxu0 %v4047
        %4049 = vmatprep.subr.mxu0 0.0
        %v4050 = vand.u32 %v2804, 4294901760
        %v4051 = vsub.f32 %v2804, %v4050
        %v4052 = vand.u32 %v4051, 4294901760
        %4053 = vmatpush1.msra.mxu0 %v4052
        %4054 = vmatprep.subr.mxu0 0.0
        %v4055 = vand.u32 %v2805, 4294901760
        %v4056 = vsub.f32 %v2805, %v4055
        %v4057 = vand.u32 %v4056, 4294901760
        %4058 = vmatpush1.msra.mxu0 %v4057
        %4059 = vmatprep.subr.mxu0 0.0
        %v4060 = vand.u32 %v2806, 4294901760
        %v4061 = vsub.f32 %v2806, %v4060
        %v4062 = vand.u32 %v4061, 4294901760
        %4063 = vmatpush1.msra.mxu0 %v4062
        %4064 = vmatprep.subr.mxu0 0.0
        %v4065 = vand.u32 %v2807, 4294901760
        %v4066 = vsub.f32 %v2807, %v4065
        %v4067 = vand.u32 %v4066, 4294901760
        %4068 = vmatpush1.msra.mxu0 %v4067
        %4069 = vmatprep.subr.mxu0 0.0
        %v4070 = vand.u32 %v2808, 4294901760
        %v4071 = vsub.f32 %v2808, %v4070
        %v4072 = vand.u32 %v4071, 4294901760
        %4073 = vmatpush1.msra.mxu0 %v4072
        %4074 = vmatprep.subr.mxu0 0.0
        %v4075 = vand.u32 %v2809, 4294901760
        %v4076 = vsub.f32 %v2809, %v4075
        %v4077 = vand.u32 %v4076, 4294901760
        %4078 = vmatpush1.msra.mxu0 %v4077
        %4079 = vmatprep.subr.mxu0 0.0
        %4080 = vmatpush1.msra.mxu0 0.0
        %4081 = vmatprep.subr.mxu0 0.0
        %4082 = vmatpush1.msra.mxu0 0.0
        %4083 = vmatprep.subr.mxu0 0.0
        %4084 = vmatpush1.msra.mxu0 0.0
        %4085 = vmatprep.subr.mxu0 0.0
        %4086 = vmatpush1.msra.mxu0 0.0
        %4087 = vmatprep.subr.mxu0 0.0
        %4088 = vmatpush1.msra.mxu0 0.0
        %4089 = vmatprep.subr.mxu0 0.0
        %4090 = vmatpush1.msra.mxu0 0.0
        %4091 = vmatprep.subr.mxu0 0.0
        %4092 = vmatpush1.msra.mxu0 0.0
        %4093 = vmatprep.subr.mxu0 0.0
        %4094 = vmatpush1.msra.mxu0 0.0
        %4095 = vmatprep.subr.mxu0 0.0
        %4096 = vmatpush1.msra.mxu0 0.0
        %4097 = vmatprep.subr.mxu0 0.0
        %4098 = vmatpush1.msra.mxu0 0.0
        %4099 = vmatprep.subr.mxu0 0.0
        %4100 = vmatpush1.msra.mxu0 0.0
        %4101 = vmatprep.subr.mxu0 0.0
        %4102 = vmatpush1.msra.mxu0 0.0
        %4103 = vmatprep.subr.mxu0 0.0
        %4104 = vmatpush1.msra.mxu0 0.0
        %4105 = vmatprep.subr.mxu0 0.0
        %4106 = vmatpush1.msra.mxu0 0.0
        %4107 = vmatprep.subr.mxu0 0.0
        %4108 = vmatpush1.msra.mxu0 0.0
        %4109 = vmatprep.subr.mxu0 0.0
        %4110 = vmatpush1.msra.mxu0 0.0
        %4111 = vmatprep.subr.mxu0 0.0
        %4112 = vmatpush1.msra.mxu0 0.0
        %4113 = vmatprep.subr.mxu0 0.0
        %4114 = vmatpush1.msra.mxu0 0.0
        %4115 = vmatprep.subr.mxu0 0.0
        %4116 = vmatpush1.msra.mxu0 0.0
        %4117 = vmatprep.subr.mxu0 0.0
        %4118 = vmatpush1.msra.mxu0 0.0
        %4119 = vmatprep.subr.mxu0 0.0
        %4120 = vmatpush1.msra.mxu0 0.0
        %4121 = vmatprep.subr.mxu0 0.0
        %4122 = vmatpush1.msra.mxu0 0.0
        %4123 = vmatprep.subr.mxu0 0.0
        %4124 = vmatpush1.msra.mxu0 0.0
        %4125 = vmatprep.subr.mxu0 0.0
        %4126 = vmatpush1.msra.mxu0 0.0
        %4127 = vmatprep.mubr.f32.mxu0 0.0
        %v4128 = vand.u32 %v2812, 4294901760
        %4129 = vmatmul.mubr.f32.gmra.mrb[0].mxu0 %v4128
        %v4130 = vpop.f32.mrb[0].mxu0
        %v4131 = vadd.f32 %v4036, %v4130
        %v4132 = vpop.f32.mrb[0].mxu0
        %4133 = vdwg.mxu0
        %4134 = vmatprep.subr.mxu0 0.0
        %v4135 = vand.u32 %v2802, 4294901760
        %4136 = vmatpush1.msra.mxu0 %v4135
        %4137 = vmatprep.subr.mxu0 0.0
        %v4138 = vand.u32 %v2803, 4294901760
        %4139 = vmatpush1.msra.mxu0 %v4138
        %4140 = vmatprep.subr.mxu0 0.0
        %v4141 = vand.u32 %v2804, 4294901760
        %4142 = vmatpush1.msra.mxu0 %v4141
        %4143 = vmatprep.subr.mxu0 0.0
        %v4144 = vand.u32 %v2805, 4294901760
        %4145 = vmatpush1.msra.mxu0 %v4144
        %4146 = vmatprep.subr.mxu0 0.0
        %v4147 = vand.u32 %v2806, 4294901760
        %4148 = vmatpush1.msra.mxu0 %v4147
        %4149 = vmatprep.subr.mxu0 0.0
        %v4150 = vand.u32 %v2807, 4294901760
        %4151 = vmatpush1.msra.mxu0 %v4150
        %4152 = vmatprep.subr.mxu0 0.0
        %v4153 = vand.u32 %v2808, 4294901760
        %4154 = vmatpush1.msra.mxu0 %v4153
        %4155 = vmatprep.subr.mxu0 0.0
        %v4156 = vand.u32 %v2809, 4294901760
        %4157 = vmatpush1.msra.mxu0 %v4156
        %4158 = vmatprep.subr.mxu0 0.0
        %4159 = vmatpush1.msra.mxu0 0.0
        %4160 = vmatprep.subr.mxu0 0.0
        %4161 = vmatpush1.msra.mxu0 0.0
        %4162 = vmatprep.subr.mxu0 0.0
        %4163 = vmatpush1.msra.mxu0 0.0
        %4164 = vmatprep.subr.mxu0 0.0
        %4165 = vmatpush1.msra.mxu0 0.0
        %4166 = vmatprep.subr.mxu0 0.0
        %4167 = vmatpush1.msra.mxu0 0.0
        %4168 = vmatprep.subr.mxu0 0.0
        %4169 = vmatpush1.msra.mxu0 0.0
        %4170 = vmatprep.subr.mxu0 0.0
        %4171 = vmatpush1.msra.mxu0 0.0
        %4172 = vmatprep.subr.mxu0 0.0
        %4173 = vmatpush1.msra.mxu0 0.0
        %4174 = vmatprep.subr.mxu0 0.0
        %4175 = vmatpush1.msra.mxu0 0.0
        %4176 = vmatprep.subr.mxu0 0.0
        %4177 = vmatpush1.msra.mxu0 0.0
        %4178 = vmatprep.subr.mxu0 0.0
        %4179 = vmatpush1.msra.mxu0 0.0
        %4180 = vmatprep.subr.mxu0 0.0
        %4181 = vmatpush1.msra.mxu0 0.0
        %4182 = vmatprep.subr.mxu0 0.0
        %4183 = vmatpush1.msra.mxu0 0.0
        %4184 = vmatprep.subr.mxu0 0.0
        %4185 = vmatpush1.msra.mxu0 0.0
        %4186 = vmatprep.subr.mxu0 0.0
        %4187 = vmatpush1.msra.mxu0 0.0
        %4188 = vmatprep.subr.mxu0 0.0
        %4189 = vmatpush1.msra.mxu0 0.0
        %4190 = vmatprep.subr.mxu0 0.0
        %4191 = vmatpush1.msra.mxu0 0.0
        %4192 = vmatprep.subr.mxu0 0.0
        %4193 = vmatpush1.msra.mxu0 0.0
        %4194 = vmatprep.subr.mxu0 0.0
        %4195 = vmatpush1.msra.mxu0 0.0
        %4196 = vmatprep.subr.mxu0 0.0
        %4197 = vmatpush1.msra.mxu0 0.0
        %4198 = vmatprep.subr.mxu0 0.0
        %4199 = vmatpush1.msra.mxu0 0.0
        %4200 = vmatprep.subr.mxu0 0.0
        %4201 = vmatpush1.msra.mxu0 0.0
        %4202 = vmatprep.subr.mxu0 0.0
        %4203 = vmatpush1.msra.mxu0 0.0
        %4204 = vmatprep.subr.mxu0 0.0
        %4205 = vmatpush1.msra.mxu0 0.0
        %4206 = vmatprep.mubr.f32.mxu0 0.0
        %v4207 = vand.u32 %v2812, 4294901760
        %4208 = vmatmul.mubr.f32.gmra.mrb[0].mxu0 %v4207
        %v4209 = vpop.f32.mrb[0].mxu0
        %v4210 = vadd.f32 %v4131, %v4209
        %v4211 = vpop.f32.mrb[0].mxu0
        %4212 = vdwg.mxu0
        %v4213 = vadd.f32 %v2761, %v4210
        %v4214 = vadd.f32 %v4213, 1e-08
        %v4215 = vrsqrt.pop %v4214
        %v4216 = vld [vmem:[%s6] sm:$0xff]
        %v4217 = vld [vmem:[%s6 + $0x8] sm:$0xff]
        %v4218 = vld [vmem:[%s6 + $0x10] sm:$0xff]
        %v4219 = vld [vmem:[%s6 + $0x18] sm:$0xff]
        %vm4220 = vcmask 261120
        %v4222 = vsel %vm4220, %v4215, 0
        %4224 = vmatprep.subr.mxu0 0.0
        %v4225 = vand.u32 %v4216, 4294901760
        %4226 = vmatpush1.msra.mxu0 %v4225
        %4227 = vmatprep.subr.mxu0 0.0
        %v4228 = vand.u32 %v4217, 4294901760
        %4229 = vmatpush1.msra.mxu0 %v4228
        %4230 = vmatprep.subr.mxu0 0.0
        %v4231 = vand.u32 %v4218, 4294901760
        %4232 = vmatpush1.msra.mxu0 %v4231
        %4233 = vmatprep.subr.mxu0 0.0
        %v4234 = vand.u32 %v4219, 4294901760
        %4235 = vmatpush1.msra.mxu0 %v4234
        %4236 = vmatprep.subr.mxu0 0.0
        %4237 = vmatpush1.msra.mxu0 0.0
        %4238 = vmatprep.subr.mxu0 0.0
        %4239 = vmatpush1.msra.mxu0 0.0
        %4240 = vmatprep.subr.mxu0 0.0
        %4241 = vmatpush1.msra.mxu0 0.0
        %4242 = vmatprep.subr.mxu0 0.0
        %4243 = vmatpush1.msra.mxu0 0.0
        %4244 = vmatprep.subr.mxu0 0.0
        %4245 = vmatpush1.msra.mxu0 0.0
        %4246 = vmatprep.subr.mxu0 0.0
        %4247 = vmatpush1.msra.mxu0 0.0
        %4248 = vmatprep.subr.mxu0 0.0
        %4249 = vmatpush1.msra.mxu0 0.0
        %4250 = vmatprep.subr.mxu0 0.0
        %4251 = vmatpush1.msra.mxu0 0.0
        %4252 = vmatprep.subr.mxu0 0.0
        %4253 = vmatpush1.msra.mxu0 0.0
        %4254 = vmatprep.subr.mxu0 0.0
        %4255 = vmatpush1.msra.mxu0 0.0
        %4256 = vmatprep.subr.mxu0 0.0
        %4257 = vmatpush1.msra.mxu0 0.0
        %4258 = vmatprep.subr.mxu0 0.0
        %4259 = vmatpush1.msra.mxu0 0.0
        %4260 = vmatprep.subr.mxu0 0.0
        %4261 = vmatpush1.msra.mxu0 0.0
        %4262 = vmatprep.subr.mxu0 0.0
        %4263 = vmatpush1.msra.mxu0 0.0
        %4264 = vmatprep.subr.mxu0 0.0
        %4265 = vmatpush1.msra.mxu0 0.0
        %4266 = vmatprep.subr.mxu0 0.0
        %4267 = vmatpush1.msra.mxu0 0.0
        %4268 = vmatprep.subr.mxu0 0.0
        %4269 = vmatpush1.msra.mxu0 0.0
        %4270 = vmatprep.subr.mxu0 0.0
        %4271 = vmatpush1.msra.mxu0 0.0
        %4272 = vmatprep.subr.mxu0 0.0
        %4273 = vmatpush1.msra.mxu0 0.0
        %4274 = vmatprep.subr.mxu0 0.0
        %4275 = vmatpush1.msra.mxu0 0.0
        %4276 = vmatprep.subr.mxu0 0.0
        %4277 = vmatpush1.msra.mxu0 0.0
        %4278 = vmatprep.subr.mxu0 0.0
        %4279 = vmatpush1.msra.mxu0 0.0
        %4280 = vmatprep.subr.mxu0 0.0
        %4281 = vmatpush1.msra.mxu0 0.0
        %4282 = vmatprep.subr.mxu0 0.0
        %4283 = vmatpush1.msra.mxu0 0.0
        %4284 = vmatprep.subr.mxu0 0.0
        %4285 = vmatpush1.msra.mxu0 0.0
        %4286 = vmatprep.subr.mxu0 0.0
        %4287 = vmatpush1.msra.mxu0 0.0
        %4288 = vmatprep.subr.mxu0 0.0
        %4289 = vmatpush1.msra.mxu0 0.0
        %4290 = vmatprep.subr.mxu0 0.0
        %4291 = vmatpush1.msra.mxu0 0.0
        %4292 = vmatprep.mubr.f32.mxu0 0.0
        %v4293 = vand.u32 %v4222, 4294901760
        %v4294 = vsub.f32 %v4222, %v4293
        %v4295 = vand.u32 %v4294, 4294901760
        %v4296 = vsub.f32 %v4294, %v4295
        %v4297 = vand.u32 %v4296, 4294901760
        %4298 = vmatmul.mubr.f32.gmra.mrb[0].mxu0 %v4297
        %v4299 = vpop.f32.mrb[0].mxu0
        %v4300 = vadd.f32 0.0, %v4299
        %v4301 = vpop.f32.mrb[0].mxu0
        %4302 = vdwg.mxu0
        %4303 = vmatprep.subr.mxu0 0.0
        %v4304 = vand.u32 %v4216, 4294901760
        %v4305 = vsub.f32 %v4216, %v4304
        %v4306 = vand.u32 %v4305, 4294901760
        %v4307 = vsub.f32 %v4305, %v4306
        %v4308 = vand.u32 %v4307, 4294901760
        %4309 = vmatpush1.msra.mxu0 %v4308
        %4310 = vmatprep.subr.mxu0 0.0
        %v4311 = vand.u32 %v4217, 4294901760
        %v4312 = vsub.f32 %v4217, %v4311
        %v4313 = vand.u32 %v4312, 4294901760
        %v4314 = vsub.f32 %v4312, %v4313
        %v4315 = vand.u32 %v4314, 4294901760
        %4316 = vmatpush1.msra.mxu0 %v4315
        %4317 = vmatprep.subr.mxu0 0.0
        %v4318 = vand.u32 %v4218, 4294901760
        %v4319 = vsub.f32 %v4218, %v4318
        %v4320 = vand.u32 %v4319, 4294901760
        %v4321 = vsub.f32 %v4319, %v4320
        %v4322 = vand.u32 %v4321, 4294901760
        %4323 = vmatpush1.msra.mxu0 %v4322
        %4324 = vmatprep.subr.mxu0 0.0
        %v4325 = vand.u32 %v4219, 4294901760
        %v4326 = vsub.f32 %v4219, %v4325
        %v4327 = vand.u32 %v4326, 4294901760
        %v4328 = vsub.f32 %v4326, %v4327
        %v4329 = vand.u32 %v4328, 4294901760
        %4330 = vmatpush1.msra.mxu0 %v4329
        %4331 = vmatprep.subr.mxu0 0.0
        %4332 = vmatpush1.msra.mxu0 0.0
        %4333 = vmatprep.subr.mxu0 0.0
        %4334 = vmatpush1.msra.mxu0 0.0
        %4335 = vmatprep.subr.mxu0 0.0
        %4336 = vmatpush1.msra.mxu0 0.0
        %4337 = vmatprep.subr.mxu0 0.0
        %4338 = vmatpush1.msra.mxu0 0.0
        %4339 = vmatprep.subr.mxu0 0.0
        %4340 = vmatpush1.msra.mxu0 0.0
        %4341 = vmatprep.subr.mxu0 0.0
        %4342 = vmatpush1.msra.mxu0 0.0
        %4343 = vmatprep.subr.mxu0 0.0
        %4344 = vmatpush1.msra.mxu0 0.0
        %4345 = vmatprep.subr.mxu0 0.0
        %4346 = vmatpush1.msra.mxu0 0.0
        %4347 = vmatprep.subr.mxu0 0.0
        %4348 = vmatpush1.msra.mxu0 0.0
        %4349 = vmatprep.subr.mxu0 0.0
        %4350 = vmatpush1.msra.mxu0 0.0
        %4351 = vmatprep.subr.mxu0 0.0
        %4352 = vmatpush1.msra.mxu0 0.0
        %4353 = vmatprep.subr.mxu0 0.0
        %4354 = vmatpush1.msra.mxu0 0.0
        %4355 = vmatprep.subr.mxu0 0.0
        %4356 = vmatpush1.msra.mxu0 0.0
        %4357 = vmatprep.subr.mxu0 0.0
        %4358 = vmatpush1.msra.mxu0 0.0
        %4359 = vmatprep.subr.mxu0 0.0
        %4360 = vmatpush1.msra.mxu0 0.0
        %4361 = vmatprep.subr.mxu0 0.0
        %4362 = vmatpush1.msra.mxu0 0.0
        %4363 = vmatprep.subr.mxu0 0.0
        %4364 = vmatpush1.msra.mxu0 0.0
        %4365 = vmatprep.subr.mxu0 0.0
        %4366 = vmatpush1.msra.mxu0 0.0
        %4367 = vmatprep.subr.mxu0 0.0
        %4368 = vmatpush1.msra.mxu0 0.0
        %4369 = vmatprep.subr.mxu0 0.0
        %4370 = vmatpush1.msra.mxu0 0.0
        %4371 = vmatprep.subr.mxu0 0.0
        %4372 = vmatpush1.msra.mxu0 0.0
        %4373 = vmatprep.subr.mxu0 0.0
        %4374 = vmatpush1.msra.mxu0 0.0
        %4375 = vmatprep.subr.mxu0 0.0
        %4376 = vmatpush1.msra.mxu0 0.0
        %4377 = vmatprep.subr.mxu0 0.0
        %4378 = vmatpush1.msra.mxu0 0.0
        %4379 = vmatprep.subr.mxu0 0.0
        %4380 = vmatpush1.msra.mxu0 0.0
        %4381 = vmatprep.subr.mxu0 0.0
        %4382 = vmatpush1.msra.mxu0 0.0
        %4383 = vmatprep.subr.mxu0 0.0
        %4384 = vmatpush1.msra.mxu0 0.0
        %4385 = vmatprep.subr.mxu0 0.0
        %4386 = vmatpush1.msra.mxu0 0.0
        %4387 = vmatprep.mubr.f32.mxu0 0.0
        %v4388 = vand.u32 %v4222, 4294901760
        %4389 = vmatmul.mubr.f32.gmra.mrb[0].mxu0 %v4388
        %v4390 = vpop.f32.mrb[0].mxu0
        %v4391 = vadd.f32 %v4300, %v4390
        %v4392 = vpop.f32.mrb[0].mxu0
        %4393 = vdwg.mxu0
        %4394 = vmatprep.subr.mxu0 0.0
        %v4395 = vand.u32 %v4216, 4294901760
        %v4396 = vsub.f32 %v4216, %v4395
        %4397 = vmatpush1.msra.mxu0 %v4396
        %4398 = vmatprep.subr.mxu0 0.0
        %v4399 = vand.u32 %v4217, 4294901760
        %v4400 = vsub.f32 %v4217, %v4399
        %4401 = vmatpush1.msra.mxu0 %v4400
        %4402 = vmatprep.subr.mxu0 0.0
        %v4403 = vand.u32 %v4218, 4294901760
        %v4404 = vsub.f32 %v4218, %v4403
        %4405 = vmatpush1.msra.mxu0 %v4404
        %4406 = vmatprep.subr.mxu0 0.0
        %v4407 = vand.u32 %v4219, 4294901760
        %v4408 = vsub.f32 %v4219, %v4407
        %4409 = vmatpush1.msra.mxu0 %v4408
        %4410 = vmatprep.subr.mxu0 0.0
        %4411 = vmatpush1.msra.mxu0 0.0
        %4412 = vmatprep.subr.mxu0 0.0
        %4413 = vmatpush1.msra.mxu0 0.0
        %4414 = vmatprep.subr.mxu0 0.0
        %4415 = vmatpush1.msra.mxu0 0.0
        %4416 = vmatprep.subr.mxu0 0.0
        %4417 = vmatpush1.msra.mxu0 0.0
        %4418 = vmatprep.subr.mxu0 0.0
        %4419 = vmatpush1.msra.mxu0 0.0
        %4420 = vmatprep.subr.mxu0 0.0
        %4421 = vmatpush1.msra.mxu0 0.0
        %4422 = vmatprep.subr.mxu0 0.0
        %4423 = vmatpush1.msra.mxu0 0.0
        %4424 = vmatprep.subr.mxu0 0.0
        %4425 = vmatpush1.msra.mxu0 0.0
        %4426 = vmatprep.subr.mxu0 0.0
        %4427 = vmatpush1.msra.mxu0 0.0
        %4428 = vmatprep.subr.mxu0 0.0
        %4429 = vmatpush1.msra.mxu0 0.0
        %4430 = vmatprep.subr.mxu0 0.0
        %4431 = vmatpush1.msra.mxu0 0.0
        %4432 = vmatprep.subr.mxu0 0.0
        %4433 = vmatpush1.msra.mxu0 0.0
        %4434 = vmatprep.subr.mxu0 0.0
        %4435 = vmatpush1.msra.mxu0 0.0
        %4436 = vmatprep.subr.mxu0 0.0
        %4437 = vmatpush1.msra.mxu0 0.0
        %4438 = vmatprep.subr.mxu0 0.0
        %4439 = vmatpush1.msra.mxu0 0.0
        %4440 = vmatprep.subr.mxu0 0.0
        %4441 = vmatpush1.msra.mxu0 0.0
        %4442 = vmatprep.subr.mxu0 0.0
        %4443 = vmatpush1.msra.mxu0 0.0
        %4444 = vmatprep.subr.mxu0 0.0
        %4445 = vmatpush1.msra.mxu0 0.0
        %4446 = vmatprep.subr.mxu0 0.0
        %4447 = vmatpush1.msra.mxu0 0.0
        %4448 = vmatprep.subr.mxu0 0.0
        %4449 = vmatpush1.msra.mxu0 0.0
        %4450 = vmatprep.subr.mxu0 0.0
        %4451 = vmatpush1.msra.mxu0 0.0
        %4452 = vmatprep.subr.mxu0 0.0
        %4453 = vmatpush1.msra.mxu0 0.0
        %4454 = vmatprep.subr.mxu0 0.0
        %4455 = vmatpush1.msra.mxu0 0.0
        %4456 = vmatprep.subr.mxu0 0.0
        %4457 = vmatpush1.msra.mxu0 0.0
        %4458 = vmatprep.subr.mxu0 0.0
        %4459 = vmatpush1.msra.mxu0 0.0
        %4460 = vmatprep.subr.mxu0 0.0
        %4461 = vmatpush1.msra.mxu0 0.0
        %4462 = vmatprep.subr.mxu0 0.0
        %4463 = vmatpush1.msra.mxu0 0.0
        %4464 = vmatprep.subr.mxu0 0.0
        %4465 = vmatpush1.msra.mxu0 0.0
        %4466 = vmatprep.mubr.f32.mxu0 0.0
        %v4467 = vand.u32 %v4222, 4294901760
        %v4468 = vsub.f32 %v4222, %v4467
        %4469 = vmatmul.mubr.f32.gmra.mrb[0].mxu0 %v4468
        %v4470 = vpop.f32.mrb[0].mxu0
        %v4471 = vadd.f32 %v4391, %v4470
        %v4472 = vpop.f32.mrb[0].mxu0
        %4473 = vdwg.mxu0
        %4474 = vmatprep.subr.mxu0 0.0
        %v4475 = vand.u32 %v4216, 4294901760
        %4476 = vmatpush1.msra.mxu0 %v4475
        %4477 = vmatprep.subr.mxu0 0.0
        %v4478 = vand.u32 %v4217, 4294901760
        %4479 = vmatpush1.msra.mxu0 %v4478
        %4480 = vmatprep.subr.mxu0 0.0
        %v4481 = vand.u32 %v4218, 4294901760
        %4482 = vmatpush1.msra.mxu0 %v4481
        %4483 = vmatprep.subr.mxu0 0.0
        %v4484 = vand.u32 %v4219, 4294901760
        %4485 = vmatpush1.msra.mxu0 %v4484
        %4486 = vmatprep.subr.mxu0 0.0
        %4487 = vmatpush1.msra.mxu0 0.0
        %4488 = vmatprep.subr.mxu0 0.0
        %4489 = vmatpush1.msra.mxu0 0.0
        %4490 = vmatprep.subr.mxu0 0.0
        %4491 = vmatpush1.msra.mxu0 0.0
        %4492 = vmatprep.subr.mxu0 0.0
        %4493 = vmatpush1.msra.mxu0 0.0
        %4494 = vmatprep.subr.mxu0 0.0
        %4495 = vmatpush1.msra.mxu0 0.0
        %4496 = vmatprep.subr.mxu0 0.0
        %4497 = vmatpush1.msra.mxu0 0.0
        %4498 = vmatprep.subr.mxu0 0.0
        %4499 = vmatpush1.msra.mxu0 0.0
        %4500 = vmatprep.subr.mxu0 0.0
        %4501 = vmatpush1.msra.mxu0 0.0
        %4502 = vmatprep.subr.mxu0 0.0
        %4503 = vmatpush1.msra.mxu0 0.0
        %4504 = vmatprep.subr.mxu0 0.0
        %4505 = vmatpush1.msra.mxu0 0.0
        %4506 = vmatprep.subr.mxu0 0.0
        %4507 = vmatpush1.msra.mxu0 0.0
        %4508 = vmatprep.subr.mxu0 0.0
        %4509 = vmatpush1.msra.mxu0 0.0
        %4510 = vmatprep.subr.mxu0 0.0
        %4511 = vmatpush1.msra.mxu0 0.0
        %4512 = vmatprep.subr.mxu0 0.0
        %4513 = vmatpush1.msra.mxu0 0.0
        %4514 = vmatprep.subr.mxu0 0.0
        %4515 = vmatpush1.msra.mxu0 0.0
        %4516 = vmatprep.subr.mxu0 0.0
        %4517 = vmatpush1.msra.mxu0 0.0
        %4518 = vmatprep.subr.mxu0 0.0
        %4519 = vmatpush1.msra.mxu0 0.0
        %4520 = vmatprep.subr.mxu0 0.0
        %4521 = vmatpush1.msra.mxu0 0.0
        %4522 = vmatprep.subr.mxu0 0.0
        %4523 = vmatpush1.msra.mxu0 0.0
        %4524 = vmatprep.subr.mxu0 0.0
        %4525 = vmatpush1.msra.mxu0 0.0
        %4526 = vmatprep.subr.mxu0 0.0
        %4527 = vmatpush1.msra.mxu0 0.0
        %4528 = vmatprep.subr.mxu0 0.0
        %4529 = vmatpush1.msra.mxu0 0.0
        %4530 = vmatprep.subr.mxu0 0.0
        %4531 = vmatpush1.msra.mxu0 0.0
        %4532 = vmatprep.subr.mxu0 0.0
        %4533 = vmatpush1.msra.mxu0 0.0
        %4534 = vmatprep.subr.mxu0 0.0
        %4535 = vmatpush1.msra.mxu0 0.0
        %4536 = vmatprep.subr.mxu0 0.0
        %4537 = vmatpush1.msra.mxu0 0.0
        %4538 = vmatprep.subr.mxu0 0.0
        %4539 = vmatpush1.msra.mxu0 0.0
        %4540 = vmatprep.subr.mxu0 0.0
        %4541 = vmatpush1.msra.mxu0 0.0
        %4542 = vmatprep.mubr.f32.mxu0 0.0
        %v4543 = vand.u32 %v4222, 4294901760
        %v4544 = vsub.f32 %v4222, %v4543
        %v4545 = vand.u32 %v4544, 4294901760
        %4546 = vmatmul.mubr.f32.gmra.mrb[0].mxu0 %v4545
        %v4547 = vpop.f32.mrb[0].mxu0
        %v4548 = vadd.f32 %v4471, %v4547
        %v4549 = vpop.f32.mrb[0].mxu0
        %4550 = vdwg.mxu0
        %4551 = vmatprep.subr.mxu0 0.0
        %v4552 = vand.u32 %v4216, 4294901760
        %v4553 = vsub.f32 %v4216, %v4552
        %v4554 = vand.u32 %v4553, 4294901760
        %4555 = vmatpush1.msra.mxu0 %v4554
        %4556 = vmatprep.subr.mxu0 0.0
        %v4557 = vand.u32 %v4217, 4294901760
        %v4558 = vsub.f32 %v4217, %v4557
        %v4559 = vand.u32 %v4558, 4294901760
        %4560 = vmatpush1.msra.mxu0 %v4559
        %4561 = vmatprep.subr.mxu0 0.0
        %v4562 = vand.u32 %v4218, 4294901760
        %v4563 = vsub.f32 %v4218, %v4562
        %v4564 = vand.u32 %v4563, 4294901760
        %4565 = vmatpush1.msra.mxu0 %v4564
        %4566 = vmatprep.subr.mxu0 0.0
        %v4567 = vand.u32 %v4219, 4294901760
        %v4568 = vsub.f32 %v4219, %v4567
        %v4569 = vand.u32 %v4568, 4294901760
        %4570 = vmatpush1.msra.mxu0 %v4569
        %4571 = vmatprep.subr.mxu0 0.0
        %4572 = vmatpush1.msra.mxu0 0.0
        %4573 = vmatprep.subr.mxu0 0.0
        %4574 = vmatpush1.msra.mxu0 0.0
        %4575 = vmatprep.subr.mxu0 0.0
        %4576 = vmatpush1.msra.mxu0 0.0
        %4577 = vmatprep.subr.mxu0 0.0
        %4578 = vmatpush1.msra.mxu0 0.0
        %4579 = vmatprep.subr.mxu0 0.0
        %4580 = vmatpush1.msra.mxu0 0.0
        %4581 = vmatprep.subr.mxu0 0.0
        %4582 = vmatpush1.msra.mxu0 0.0
        %4583 = vmatprep.subr.mxu0 0.0
        %4584 = vmatpush1.msra.mxu0 0.0
        %4585 = vmatprep.subr.mxu0 0.0
        %4586 = vmatpush1.msra.mxu0 0.0
        %4587 = vmatprep.subr.mxu0 0.0
        %4588 = vmatpush1.msra.mxu0 0.0
        %4589 = vmatprep.subr.mxu0 0.0
        %4590 = vmatpush1.msra.mxu0 0.0
        %4591 = vmatprep.subr.mxu0 0.0
        %4592 = vmatpush1.msra.mxu0 0.0
        %4593 = vmatprep.subr.mxu0 0.0
        %4594 = vmatpush1.msra.mxu0 0.0
        %4595 = vmatprep.subr.mxu0 0.0
        %4596 = vmatpush1.msra.mxu0 0.0
        %4597 = vmatprep.subr.mxu0 0.0
        %4598 = vmatpush1.msra.mxu0 0.0
        %4599 = vmatprep.subr.mxu0 0.0
        %4600 = vmatpush1.msra.mxu0 0.0
        %4601 = vmatprep.subr.mxu0 0.0
        %4602 = vmatpush1.msra.mxu0 0.0
        %4603 = vmatprep.subr.mxu0 0.0
        %4604 = vmatpush1.msra.mxu0 0.0
        %4605 = vmatprep.subr.mxu0 0.0
        %4606 = vmatpush1.msra.mxu0 0.0
        %4607 = vmatprep.subr.mxu0 0.0
        %4608 = vmatpush1.msra.mxu0 0.0
        %4609 = vmatprep.subr.mxu0 0.0
        %4610 = vmatpush1.msra.mxu0 0.0
        %4611 = vmatprep.subr.mxu0 0.0
        %4612 = vmatpush1.msra.mxu0 0.0
        %4613 = vmatprep.subr.mxu0 0.0
        %4614 = vmatpush1.msra.mxu0 0.0
        %4615 = vmatprep.subr.mxu0 0.0
        %4616 = vmatpush1.msra.mxu0 0.0
        %4617 = vmatprep.subr.mxu0 0.0
        %4618 = vmatpush1.msra.mxu0 0.0
        %4619 = vmatprep.subr.mxu0 0.0
        %4620 = vmatpush1.msra.mxu0 0.0
        %4621 = vmatprep.subr.mxu0 0.0
        %4622 = vmatpush1.msra.mxu0 0.0
        %4623 = vmatprep.subr.mxu0 0.0
        %4624 = vmatpush1.msra.mxu0 0.0
        %4625 = vmatprep.subr.mxu0 0.0
        %4626 = vmatpush1.msra.mxu0 0.0
        %4627 = vmatprep.mubr.f32.mxu0 0.0
        %v4628 = vand.u32 %v4222, 4294901760
        %4629 = vmatmul.mubr.f32.gmra.mrb[0].mxu0 %v4628
        %v4630 = vpop.f32.mrb[0].mxu0
        %v4631 = vadd.f32 %v4548, %v4630
        %v4632 = vpop.f32.mrb[0].mxu0
        %4633 = vdwg.mxu0
        %4634 = vmatprep.subr.mxu0 0.0
        %v4635 = vand.u32 %v4216, 4294901760
        %4636 = vmatpush1.msra.mxu0 %v4635
        %4637 = vmatprep.subr.mxu0 0.0
        %v4638 = vand.u32 %v4217, 4294901760
        %4639 = vmatpush1.msra.mxu0 %v4638
        %4640 = vmatprep.subr.mxu0 0.0
        %v4641 = vand.u32 %v4218, 4294901760
        %4642 = vmatpush1.msra.mxu0 %v4641
        %4643 = vmatprep.subr.mxu0 0.0
        %v4644 = vand.u32 %v4219, 4294901760
        %4645 = vmatpush1.msra.mxu0 %v4644
        %4646 = vmatprep.subr.mxu0 0.0
        %4647 = vmatpush1.msra.mxu0 0.0
        %4648 = vmatprep.subr.mxu0 0.0
        %4649 = vmatpush1.msra.mxu0 0.0
        %4650 = vmatprep.subr.mxu0 0.0
        %4651 = vmatpush1.msra.mxu0 0.0
        %4652 = vmatprep.subr.mxu0 0.0
        %4653 = vmatpush1.msra.mxu0 0.0
        %4654 = vmatprep.subr.mxu0 0.0
        %4655 = vmatpush1.msra.mxu0 0.0
        %4656 = vmatprep.subr.mxu0 0.0
        %4657 = vmatpush1.msra.mxu0 0.0
        %4658 = vmatprep.subr.mxu0 0.0
        %4659 = vmatpush1.msra.mxu0 0.0
        %4660 = vmatprep.subr.mxu0 0.0
        %4661 = vmatpush1.msra.mxu0 0.0
        %4662 = vmatprep.subr.mxu0 0.0
        %4663 = vmatpush1.msra.mxu0 0.0
        %4664 = vmatprep.subr.mxu0 0.0
        %4665 = vmatpush1.msra.mxu0 0.0
        %4666 = vmatprep.subr.mxu0 0.0
        %4667 = vmatpush1.msra.mxu0 0.0
        %4668 = vmatprep.subr.mxu0 0.0
        %4669 = vmatpush1.msra.mxu0 0.0
        %4670 = vmatprep.subr.mxu0 0.0
        %4671 = vmatpush1.msra.mxu0 0.0
        %4672 = vmatprep.subr.mxu0 0.0
        %4673 = vmatpush1.msra.mxu0 0.0
        %4674 = vmatprep.subr.mxu0 0.0
        %4675 = vmatpush1.msra.mxu0 0.0
        %4676 = vmatprep.subr.mxu0 0.0
        %4677 = vmatpush1.msra.mxu0 0.0
        %4678 = vmatprep.subr.mxu0 0.0
        %4679 = vmatpush1.msra.mxu0 0.0
        %4680 = vmatprep.subr.mxu0 0.0
        %4681 = vmatpush1.msra.mxu0 0.0
        %4682 = vmatprep.subr.mxu0 0.0
        %4683 = vmatpush1.msra.mxu0 0.0
        %4684 = vmatprep.subr.mxu0 0.0
        %4685 = vmatpush1.msra.mxu0 0.0
        %4686 = vmatprep.subr.mxu0 0.0
        %4687 = vmatpush1.msra.mxu0 0.0
        %4688 = vmatprep.subr.mxu0 0.0
        %4689 = vmatpush1.msra.mxu0 0.0
        %4690 = vmatprep.subr.mxu0 0.0
        %4691 = vmatpush1.msra.mxu0 0.0
        %4692 = vmatprep.subr.mxu0 0.0
        %4693 = vmatpush1.msra.mxu0 0.0
        %4694 = vmatprep.subr.mxu0 0.0
        %4695 = vmatpush1.msra.mxu0 0.0
        %4696 = vmatprep.subr.mxu0 0.0
        %4697 = vmatpush1.msra.mxu0 0.0
        %4698 = vmatprep.subr.mxu0 0.0
        %4699 = vmatpush1.msra.mxu0 0.0
        %4700 = vmatprep.subr.mxu0 0.0
        %4701 = vmatpush1.msra.mxu0 0.0
        %4702 = vmatprep.mubr.f32.mxu0 0.0
        %v4703 = vand.u32 %v4222, 4294901760
        %4704 = vmatmul.mubr.f32.gmra.mrb[0].mxu0 %v4703
        %v4705 = vpop.f32.mrb[0].mxu0
        %v4706 = vadd.f32 %v4631, %v4705
        %v4707 = vpop.f32.mrb[0].mxu0
        %4708 = vdwg.mxu0
        %v4709 = vmul.f32 %v548, %v4706
        %v4710 = vld [vmem:[%s9] sm:$0x1]
        %v4712 = vlaneseq
        %v4713 = vshrl.u32 %v4712, 7
        %v4714 = vsub.s32 0, %v4713
        %v4715 = vrot.slane %v4710, %v4714
        %v4717 = vmul.f32 %v4709, %v4715
        %v4718 = vld [vmem:[%s12] sm:$0x1]
        %v4720 = vlaneseq
        %v4721 = vshrl.u32 %v4720, 7
        %v4722 = vsub.s32 0, %v4721
        %v4723 = vrot.slane %v4718, %v4722
        %v4725 = vadd.f32 %v4717, %v4723
        %4726 = vst [vmem:[%s519] sm:$0xff] %v4725
        %v4727 = vld [vmem:[%s7] sm:$0xff]
        %v4728 = vld [vmem:[%s7 + $0x8] sm:$0xff]
        %v4729 = vld [vmem:[%s7 + $0x10] sm:$0xff]
        %v4730 = vld [vmem:[%s7 + $0x18] sm:$0xff]
        %v4731 = vld [vmem:[%s7 + $0x20] sm:$0xff]
        %v4732 = vld [vmem:[%s7 + $0x28] sm:$0xff]
        %v4733 = vld [vmem:[%s7 + $0x30] sm:$0xff]
        %v4734 = vld [vmem:[%s7 + $0x38] sm:$0xff]
        %v4735 = vld [vmem:[%s7 + $0x40] sm:$0xff]
        %v4736 = vld [vmem:[%s7 + $0x48] sm:$0xff]
        %v4737 = vld [vmem:[%s7 + $0x50] sm:$0xff]
        %v4738 = vld [vmem:[%s7 + $0x58] sm:$0xff]
        %v4739 = vand.u32 %v4728, 4294901760
        %4740 = vmatprep.subr.mxu0 %v4739
        %v4741 = vand.u32 %v4727, 4294901760
        %4742 = vmatpush1.msra.mxu0 %v4741
        %v4743 = vand.u32 %v4731, 4294901760
        %4744 = vmatprep.subr.mxu0 %v4743
        %v4745 = vand.u32 %v4730, 4294901760
        %4746 = vmatpush1.msra.mxu0 %v4745
        %v4747 = vand.u32 %v4734, 4294901760
        %4748 = vmatprep.subr.mxu0 %v4747
        %v4749 = vand.u32 %v4733, 4294901760
        %4750 = vmatpush1.msra.mxu0 %v4749
        %v4751 = vand.u32 %v4737, 4294901760
        %4752 = vmatprep.subr.mxu0 %v4751
        %v4753 = vand.u32 %v4736, 4294901760
        %4754 = vmatpush1.msra.mxu0 %v4753
        %4755 = vmatprep.subr.mxu0 0.0
        %4756 = vmatpush1.msra.mxu0 0.0
        %4757 = vmatprep.subr.mxu0 0.0
        %4758 = vmatpush1.msra.mxu0 0.0
        %4759 = vmatprep.subr.mxu0 0.0
        %4760 = vmatpush1.msra.mxu0 0.0
        %4761 = vmatprep.subr.mxu0 0.0
        %4762 = vmatpush1.msra.mxu0 0.0
        %4763 = vmatprep.subr.mxu0 0.0
        %4764 = vmatpush1.msra.mxu0 0.0
        %4765 = vmatprep.subr.mxu0 0.0
        %4766 = vmatpush1.msra.mxu0 0.0
        %4767 = vmatprep.subr.mxu0 0.0
        %4768 = vmatpush1.msra.mxu0 0.0
        %4769 = vmatprep.subr.mxu0 0.0
        %4770 = vmatpush1.msra.mxu0 0.0
        %4771 = vmatprep.subr.mxu0 0.0
        %4772 = vmatpush1.msra.mxu0 0.0
        %4773 = vmatprep.subr.mxu0 0.0
        %4774 = vmatpush1.msra.mxu0 0.0
        %4775 = vmatprep.subr.mxu0 0.0
        %4776 = vmatpush1.msra.mxu0 0.0
        %4777 = vmatprep.subr.mxu0 0.0
        %4778 = vmatpush1.msra.mxu0 0.0
        %4779 = vmatprep.subr.mxu0 0.0
        %4780 = vmatpush1.msra.mxu0 0.0
        %4781 = vmatprep.subr.mxu0 0.0
        %4782 = vmatpush1.msra.mxu0 0.0
        %4783 = vmatprep.subr.mxu0 0.0
        %4784 = vmatpush1.msra.mxu0 0.0
        %4785 = vmatprep.subr.mxu0 0.0
        %4786 = vmatpush1.msra.mxu0 0.0
        %4787 = vmatprep.subr.mxu0 0.0
        %4788 = vmatpush1.msra.mxu0 0.0
        %4789 = vmatprep.subr.mxu0 0.0
        %4790 = vmatpush1.msra.mxu0 0.0
        %4791 = vmatprep.subr.mxu0 0.0
        %4792 = vmatpush1.msra.mxu0 0.0
        %4793 = vmatprep.subr.mxu0 0.0
        %4794 = vmatpush1.msra.mxu0 0.0
        %4795 = vmatprep.subr.mxu0 0.0
        %4796 = vmatpush1.msra.mxu0 0.0
        %4797 = vmatprep.subr.mxu0 0.0
        %4798 = vmatpush1.msra.mxu0 0.0
        %4799 = vmatprep.subr.mxu0 0.0
        %4800 = vmatpush1.msra.mxu0 0.0
        %4801 = vmatprep.subr.mxu0 0.0
        %4802 = vmatpush1.msra.mxu0 0.0
        %4803 = vmatprep.subr.mxu0 0.0
        %4804 = vmatpush1.msra.mxu0 0.0
        %4805 = vmatprep.subr.mxu0 0.0
        %4806 = vmatpush1.msra.mxu0 0.0
        %4807 = vmatprep.subr.mxu0 0.0
        %4808 = vmatpush1.msra.mxu0 0.0
        %4809 = vmatprep.subr.mxu0 0.0
        %4810 = vmatpush1.msra.mxu0 0.0
        %4811 = vmatprep.mubr.f32.mxu0 0.0
        %v4812 = vand.u32 %v4222, 4294901760
        %v4813 = vsub.f32 %v4222, %v4812
        %v4814 = vand.u32 %v4813, 4294901760
        %v4815 = vsub.f32 %v4813, %v4814
        %v4816 = vand.u32 %v4815, 4294901760
        %4817 = vmatmul.mubr.f32.gmra.mrb[0].mxu0 %v4816
        %v4818 = vpop.f32.mrb[0].mxu0
        %v4819 = vadd.f32 0.0, %v4818
        %v4820 = vpop.f32.mrb[0].mxu0
        %v4821 = vadd.f32 0.0, %v4820
        %4822 = vdwg.mxu0
        %v4823 = vand.u32 %v4728, 4294901760
        %v4824 = vsub.f32 %v4728, %v4823
        %v4825 = vand.u32 %v4824, 4294901760
        %v4826 = vsub.f32 %v4824, %v4825
        %v4827 = vand.u32 %v4826, 4294901760
        %4828 = vmatprep.subr.mxu0 %v4827
        %v4829 = vand.u32 %v4727, 4294901760
        %v4830 = vsub.f32 %v4727, %v4829
        %v4831 = vand.u32 %v4830, 4294901760
        %v4832 = vsub.f32 %v4830, %v4831
        %v4833 = vand.u32 %v4832, 4294901760
        %4834 = vmatpush1.msra.mxu0 %v4833
        %v4835 = vand.u32 %v4731, 4294901760
        %v4836 = vsub.f32 %v4731, %v4835
        %v4837 = vand.u32 %v4836, 4294901760
        %v4838 = vsub.f32 %v4836, %v4837
        %v4839 = vand.u32 %v4838, 4294901760
        %4840 = vmatprep.subr.mxu0 %v4839
        %v4841 = vand.u32 %v4730, 4294901760
        %v4842 = vsub.f32 %v4730, %v4841
        %v4843 = vand.u32 %v4842, 4294901760
        %v4844 = vsub.f32 %v4842, %v4843
        %v4845 = vand.u32 %v4844, 4294901760
        %4846 = vmatpush1.msra.mxu0 %v4845
        %v4847 = vand.u32 %v4734, 4294901760
        %v4848 = vsub.f32 %v4734, %v4847
        %v4849 = vand.u32 %v4848, 4294901760
        %v4850 = vsub.f32 %v4848, %v4849
        %v4851 = vand.u32 %v4850, 4294901760
        %4852 = vmatprep.subr.mxu0 %v4851
        %v4853 = vand.u32 %v4733, 4294901760
        %v4854 = vsub.f32 %v4733, %v4853
        %v4855 = vand.u32 %v4854, 4294901760
        %v4856 = vsub.f32 %v4854, %v4855
        %v4857 = vand.u32 %v4856, 4294901760
        %4858 = vmatpush1.msra.mxu0 %v4857
        %v4859 = vand.u32 %v4737, 4294901760
        %v4860 = vsub.f32 %v4737, %v4859
        %v4861 = vand.u32 %v4860, 4294901760
        %v4862 = vsub.f32 %v4860, %v4861
        %v4863 = vand.u32 %v4862, 4294901760
        %4864 = vmatprep.subr.mxu0 %v4863
        %v4865 = vand.u32 %v4736, 4294901760
        %v4866 = vsub.f32 %v4736, %v4865
        %v4867 = vand.u32 %v4866, 4294901760
        %v4868 = vsub.f32 %v4866, %v4867
        %v4869 = vand.u32 %v4868, 4294901760
        %4870 = vmatpush1.msra.mxu0 %v4869
        %4871 = vmatprep.subr.mxu0 0.0
        %4872 = vmatpush1.msra.mxu0 0.0
        %4873 = vmatprep.subr.mxu0 0.0
        %4874 = vmatpush1.msra.mxu0 0.0
        %4875 = vmatprep.subr.mxu0 0.0
        %4876 = vmatpush1.msra.mxu0 0.0
        %4877 = vmatprep.subr.mxu0 0.0
        %4878 = vmatpush1.msra.mxu0 0.0
        %4879 = vmatprep.subr.mxu0 0.0
        %4880 = vmatpush1.msra.mxu0 0.0
        %4881 = vmatprep.subr.mxu0 0.0
        %4882 = vmatpush1.msra.mxu0 0.0
        %4883 = vmatprep.subr.mxu0 0.0
        %4884 = vmatpush1.msra.mxu0 0.0
        %4885 = vmatprep.subr.mxu0 0.0
        %4886 = vmatpush1.msra.mxu0 0.0
        %4887 = vmatprep.subr.mxu0 0.0
        %4888 = vmatpush1.msra.mxu0 0.0
        %4889 = vmatprep.subr.mxu0 0.0
        %4890 = vmatpush1.msra.mxu0 0.0
        %4891 = vmatprep.subr.mxu0 0.0
        %4892 = vmatpush1.msra.mxu0 0.0
        %4893 = vmatprep.subr.mxu0 0.0
        %4894 = vmatpush1.msra.mxu0 0.0
        %4895 = vmatprep.subr.mxu0 0.0
        %4896 = vmatpush1.msra.mxu0 0.0
        %4897 = vmatprep.subr.mxu0 0.0
        %4898 = vmatpush1.msra.mxu0 0.0
        %4899 = vmatprep.subr.mxu0 0.0
        %4900 = vmatpush1.msra.mxu0 0.0
        %4901 = vmatprep.subr.mxu0 0.0
        %4902 = vmatpush1.msra.mxu0 0.0
        %4903 = vmatprep.subr.mxu0 0.0
        %4904 = vmatpush1.msra.mxu0 0.0
        %4905 = vmatprep.subr.mxu0 0.0
        %4906 = vmatpush1.msra.mxu0 0.0
        %4907 = vmatprep.subr.mxu0 0.0
        %4908 = vmatpush1.msra.mxu0 0.0
        %4909 = vmatprep.subr.mxu0 0.0
        %4910 = vmatpush1.msra.mxu0 0.0
        %4911 = vmatprep.subr.mxu0 0.0
        %4912 = vmatpush1.msra.mxu0 0.0
        %4913 = vmatprep.subr.mxu0 0.0
        %4914 = vmatpush1.msra.mxu0 0.0
        %4915 = vmatprep.subr.mxu0 0.0
        %4916 = vmatpush1.msra.mxu0 0.0
        %4917 = vmatprep.subr.mxu0 0.0
        %4918 = vmatpush1.msra.mxu0 0.0
        %4919 = vmatprep.subr.mxu0 0.0
        %4920 = vmatpush1.msra.mxu0 0.0
        %4921 = vmatprep.subr.mxu0 0.0
        %4922 = vmatpush1.msra.mxu0 0.0
        %4923 = vmatprep.subr.mxu0 0.0
        %4924 = vmatpush1.msra.mxu0 0.0
        %4925 = vmatprep.subr.mxu0 0.0
        %4926 = vmatpush1.msra.mxu0 0.0
        %4927 = vmatprep.mubr.f32.mxu0 0.0
        %v4928 = vand.u32 %v4222, 4294901760
        %4929 = vmatmul.mubr.f32.gmra.mrb[0].mxu0 %v4928
        %v4930 = vpop.f32.mrb[0].mxu0
        %v4931 = vadd.f32 %v4819, %v4930
        %v4932 = vpop.f32.mrb[0].mxu0
        %v4933 = vadd.f32 %v4821, %v4932
        %4934 = vdwg.mxu0
        %v4935 = vand.u32 %v4728, 4294901760
        %v4936 = vsub.f32 %v4728, %v4935
        %4937 = vmatprep.subr.mxu0 %v4936
        %v4938 = vand.u32 %v4727, 4294901760
        %v4939 = vsub.f32 %v4727, %v4938
        %4940 = vmatpush1.msra.mxu0 %v4939
        %v4941 = vand.u32 %v4731, 4294901760
        %v4942 = vsub.f32 %v4731, %v4941
        %4943 = vmatprep.subr.mxu0 %v4942
        %v4944 = vand.u32 %v4730, 4294901760
        %v4945 = vsub.f32 %v4730, %v4944
        %4946 = vmatpush1.msra.mxu0 %v4945
        %v4947 = vand.u32 %v4734, 4294901760
        %v4948 = vsub.f32 %v4734, %v4947
        %4949 = vmatprep.subr.mxu0 %v4948
        %v4950 = vand.u32 %v4733, 4294901760
        %v4951 = vsub.f32 %v4733, %v4950
        %4952 = vmatpush1.msra.mxu0 %v4951
        %v4953 = vand.u32 %v4737, 4294901760
        %v4954 = vsub.f32 %v4737, %v4953
        %4955 = vmatprep.subr.mxu0 %v4954
        %v4956 = vand.u32 %v4736, 4294901760
        %v4957 = vsub.f32 %v4736, %v4956
        %4958 = vmatpush1.msra.mxu0 %v4957
        %4959 = vmatprep.subr.mxu0 0.0
        %4960 = vmatpush1.msra.mxu0 0.0
        %4961 = vmatprep.subr.mxu0 0.0
        %4962 = vmatpush1.msra.mxu0 0.0
        %4963 = vmatprep.subr.mxu0 0.0
        %4964 = vmatpush1.msra.mxu0 0.0
        %4965 = vmatprep.subr.mxu0 0.0
        %4966 = vmatpush1.msra.mxu0 0.0
        %4967 = vmatprep.subr.mxu0 0.0
        %4968 = vmatpush1.msra.mxu0 0.0
        %4969 = vmatprep.subr.mxu0 0.0
        %4970 = vmatpush1.msra.mxu0 0.0
        %4971 = vmatprep.subr.mxu0 0.0
        %4972 = vmatpush1.msra.mxu0 0.0
        %4973 = vmatprep.subr.mxu0 0.0
        %4974 = vmatpush1.msra.mxu0 0.0
        %4975 = vmatprep.subr.mxu0 0.0
        %4976 = vmatpush1.msra.mxu0 0.0
        %4977 = vmatprep.subr.mxu0 0.0
        %4978 = vmatpush1.msra.mxu0 0.0
        %4979 = vmatprep.subr.mxu0 0.0
        %4980 = vmatpush1.msra.mxu0 0.0
        %4981 = vmatprep.subr.mxu0 0.0
        %4982 = vmatpush1.msra.mxu0 0.0
        %4983 = vmatprep.subr.mxu0 0.0
        %4984 = vmatpush1.msra.mxu0 0.0
        %4985 = vmatprep.subr.mxu0 0.0
        %4986 = vmatpush1.msra.mxu0 0.0
        %4987 = vmatprep.subr.mxu0 0.0
        %4988 = vmatpush1.msra.mxu0 0.0
        %4989 = vmatprep.subr.mxu0 0.0
        %4990 = vmatpush1.msra.mxu0 0.0
        %4991 = vmatprep.subr.mxu0 0.0
        %4992 = vmatpush1.msra.mxu0 0.0
        %4993 = vmatprep.subr.mxu0 0.0
        %4994 = vmatpush1.msra.mxu0 0.0
        %4995 = vmatprep.subr.mxu0 0.0
        %4996 = vmatpush1.msra.mxu0 0.0
        %4997 = vmatprep.subr.mxu0 0.0
        %4998 = vmatpush1.msra.mxu0 0.0
        %4999 = vmatprep.subr.mxu0 0.0
        %5000 = vmatpush1.msra.mxu0 0.0
        %5001 = vmatprep.subr.mxu0 0.0
        %5002 = vmatpush1.msra.mxu0 0.0
        %5003 = vmatprep.subr.mxu0 0.0
        %5004 = vmatpush1.msra.mxu0 0.0
        %5005 = vmatprep.subr.mxu0 0.0
        %5006 = vmatpush1.msra.mxu0 0.0
        %5007 = vmatprep.subr.mxu0 0.0
        %5008 = vmatpush1.msra.mxu0 0.0
        %5009 = vmatprep.subr.mxu0 0.0
        %5010 = vmatpush1.msra.mxu0 0.0
        %5011 = vmatprep.subr.mxu0 0.0
        %5012 = vmatpush1.msra.mxu0 0.0
        %5013 = vmatprep.subr.mxu0 0.0
        %5014 = vmatpush1.msra.mxu0 0.0
        %5015 = vmatprep.mubr.f32.mxu0 0.0
        %v5016 = vand.u32 %v4222, 4294901760
        %v5017 = vsub.f32 %v4222, %v5016
        %5018 = vmatmul.mubr.f32.gmra.mrb[0].mxu0 %v5017
        %v5019 = vpop.f32.mrb[0].mxu0
        %v5020 = vadd.f32 %v4931, %v5019
        %v5021 = vpop.f32.mrb[0].mxu0
        %v5022 = vadd.f32 %v4933, %v5021
        %5023 = vdwg.mxu0
        %v5024 = vand.u32 %v4728, 4294901760
        %5025 = vmatprep.subr.mxu0 %v5024
        %v5026 = vand.u32 %v4727, 4294901760
        %5027 = vmatpush1.msra.mxu0 %v5026
        %v5028 = vand.u32 %v4731, 4294901760
        %5029 = vmatprep.subr.mxu0 %v5028
        %v5030 = vand.u32 %v4730, 4294901760
        %5031 = vmatpush1.msra.mxu0 %v5030
        %v5032 = vand.u32 %v4734, 4294901760
        %5033 = vmatprep.subr.mxu0 %v5032
        %v5034 = vand.u32 %v4733, 4294901760
        %5035 = vmatpush1.msra.mxu0 %v5034
        %v5036 = vand.u32 %v4737, 4294901760
        %5037 = vmatprep.subr.mxu0 %v5036
        %v5038 = vand.u32 %v4736, 4294901760
        %5039 = vmatpush1.msra.mxu0 %v5038
        %5040 = vmatprep.subr.mxu0 0.0
        %5041 = vmatpush1.msra.mxu0 0.0
        %5042 = vmatprep.subr.mxu0 0.0
        %5043 = vmatpush1.msra.mxu0 0.0
        %5044 = vmatprep.subr.mxu0 0.0
        %5045 = vmatpush1.msra.mxu0 0.0
        %5046 = vmatprep.subr.mxu0 0.0
        %5047 = vmatpush1.msra.mxu0 0.0
        %5048 = vmatprep.subr.mxu0 0.0
        %5049 = vmatpush1.msra.mxu0 0.0
        %5050 = vmatprep.subr.mxu0 0.0
        %5051 = vmatpush1.msra.mxu0 0.0
        %5052 = vmatprep.subr.mxu0 0.0
        %5053 = vmatpush1.msra.mxu0 0.0
        %5054 = vmatprep.subr.mxu0 0.0
        %5055 = vmatpush1.msra.mxu0 0.0
        %5056 = vmatprep.subr.mxu0 0.0
        %5057 = vmatpush1.msra.mxu0 0.0
        %5058 = vmatprep.subr.mxu0 0.0
        %5059 = vmatpush1.msra.mxu0 0.0
        %5060 = vmatprep.subr.mxu0 0.0
        %5061 = vmatpush1.msra.mxu0 0.0
        %5062 = vmatprep.subr.mxu0 0.0
        %5063 = vmatpush1.msra.mxu0 0.0
        %5064 = vmatprep.subr.mxu0 0.0
        %5065 = vmatpush1.msra.mxu0 0.0
        %5066 = vmatprep.subr.mxu0 0.0
        %5067 = vmatpush1.msra.mxu0 0.0
        %5068 = vmatprep.subr.mxu0 0.0
        %5069 = vmatpush1.msra.mxu0 0.0
        %5070 = vmatprep.subr.mxu0 0.0
        %5071 = vmatpush1.msra.mxu0 0.0
        %5072 = vmatprep.subr.mxu0 0.0
        %5073 = vmatpush1.msra.mxu0 0.0
        %5074 = vmatprep.subr.mxu0 0.0
        %5075 = vmatpush1.msra.mxu0 0.0
        %5076 = vmatprep.subr.mxu0 0.0
        %5077 = vmatpush1.msra.mxu0 0.0
        %5078 = vmatprep.subr.mxu0 0.0
        %5079 = vmatpush1.msra.mxu0 0.0
        %5080 = vmatprep.subr.mxu0 0.0
        %5081 = vmatpush1.msra.mxu0 0.0
        %5082 = vmatprep.subr.mxu0 0.0
        %5083 = vmatpush1.msra.mxu0 0.0
        %5084 = vmatprep.subr.mxu0 0.0
        %5085 = vmatpush1.msra.mxu0 0.0
        %5086 = vmatprep.subr.mxu0 0.0
        %5087 = vmatpush1.msra.mxu0 0.0
        %5088 = vmatprep.subr.mxu0 0.0
        %5089 = vmatpush1.msra.mxu0 0.0
        %5090 = vmatprep.subr.mxu0 0.0
        %5091 = vmatpush1.msra.mxu0 0.0
        %5092 = vmatprep.subr.mxu0 0.0
        %5093 = vmatpush1.msra.mxu0 0.0
        %5094 = vmatprep.subr.mxu0 0.0
        %5095 = vmatpush1.msra.mxu0 0.0
        %5096 = vmatprep.mubr.f32.mxu0 0.0
        %v5097 = vand.u32 %v4222, 4294901760
        %v5098 = vsub.f32 %v4222, %v5097
        %v5099 = vand.u32 %v5098, 4294901760
        %5100 = vmatmul.mubr.f32.gmra.mrb[0].mxu0 %v5099
        %v5101 = vpop.f32.mrb[0].mxu0
        %v5102 = vadd.f32 %v5020, %v5101
        %v5103 = vpop.f32.mrb[0].mxu0
        %v5104 = vadd.f32 %v5022, %v5103
        %5105 = vdwg.mxu0
        %v5106 = vand.u32 %v4728, 4294901760
        %v5107 = vsub.f32 %v4728, %v5106
        %v5108 = vand.u32 %v5107, 4294901760
        %5109 = vmatprep.subr.mxu0 %v5108
        %v5110 = vand.u32 %v4727, 4294901760
        %v5111 = vsub.f32 %v4727, %v5110
        %v5112 = vand.u32 %v5111, 4294901760
        %5113 = vmatpush1.msra.mxu0 %v5112
        %v5114 = vand.u32 %v4731, 4294901760
        %v5115 = vsub.f32 %v4731, %v5114
        %v5116 = vand.u32 %v5115, 4294901760
        %5117 = vmatprep.subr.mxu0 %v5116
        %v5118 = vand.u32 %v4730, 4294901760
        %v5119 = vsub.f32 %v4730, %v5118
        %v5120 = vand.u32 %v5119, 4294901760
        %5121 = vmatpush1.msra.mxu0 %v5120
        %v5122 = vand.u32 %v4734, 4294901760
        %v5123 = vsub.f32 %v4734, %v5122
        %v5124 = vand.u32 %v5123, 4294901760
        %5125 = vmatprep.subr.mxu0 %v5124
        %v5126 = vand.u32 %v4733, 4294901760
        %v5127 = vsub.f32 %v4733, %v5126
        %v5128 = vand.u32 %v5127, 4294901760
        %5129 = vmatpush1.msra.mxu0 %v5128
        %v5130 = vand.u32 %v4737, 4294901760
        %v5131 = vsub.f32 %v4737, %v5130
        %v5132 = vand.u32 %v5131, 4294901760
        %5133 = vmatprep.subr.mxu0 %v5132
        %v5134 = vand.u32 %v4736, 4294901760
        %v5135 = vsub.f32 %v4736, %v5134
        %v5136 = vand.u32 %v5135, 4294901760
        %5137 = vmatpush1.msra.mxu0 %v5136
        %5138 = vmatprep.subr.mxu0 0.0
        %5139 = vmatpush1.msra.mxu0 0.0
        %5140 = vmatprep.subr.mxu0 0.0
        %5141 = vmatpush1.msra.mxu0 0.0
        %5142 = vmatprep.subr.mxu0 0.0
        %5143 = vmatpush1.msra.mxu0 0.0
        %5144 = vmatprep.subr.mxu0 0.0
        %5145 = vmatpush1.msra.mxu0 0.0
        %5146 = vmatprep.subr.mxu0 0.0
        %5147 = vmatpush1.msra.mxu0 0.0
        %5148 = vmatprep.subr.mxu0 0.0
        %5149 = vmatpush1.msra.mxu0 0.0
        %5150 = vmatprep.subr.mxu0 0.0
        %5151 = vmatpush1.msra.mxu0 0.0
        %5152 = vmatprep.subr.mxu0 0.0
        %5153 = vmatpush1.msra.mxu0 0.0
        %5154 = vmatprep.subr.mxu0 0.0
        %5155 = vmatpush1.msra.mxu0 0.0
        %5156 = vmatprep.subr.mxu0 0.0
        %5157 = vmatpush1.msra.mxu0 0.0
        %5158 = vmatprep.subr.mxu0 0.0
        %5159 = vmatpush1.msra.mxu0 0.0
        %5160 = vmatprep.subr.mxu0 0.0
        %5161 = vmatpush1.msra.mxu0 0.0
        %5162 = vmatprep.subr.mxu0 0.0
        %5163 = vmatpush1.msra.mxu0 0.0
        %5164 = vmatprep.subr.mxu0 0.0
        %5165 = vmatpush1.msra.mxu0 0.0
        %5166 = vmatprep.subr.mxu0 0.0
        %5167 = vmatpush1.msra.mxu0 0.0
        %5168 = vmatprep.subr.mxu0 0.0
        %5169 = vmatpush1.msra.mxu0 0.0
        %5170 = vmatprep.subr.mxu0 0.0
        %5171 = vmatpush1.msra.mxu0 0.0
        %5172 = vmatprep.subr.mxu0 0.0
        %5173 = vmatpush1.msra.mxu0 0.0
        %5174 = vmatprep.subr.mxu0 0.0
        %5175 = vmatpush1.msra.mxu0 0.0
        %5176 = vmatprep.subr.mxu0 0.0
        %5177 = vmatpush1.msra.mxu0 0.0
        %5178 = vmatprep.subr.mxu0 0.0
        %5179 = vmatpush1.msra.mxu0 0.0
        %5180 = vmatprep.subr.mxu0 0.0
        %5181 = vmatpush1.msra.mxu0 0.0
        %5182 = vmatprep.subr.mxu0 0.0
        %5183 = vmatpush1.msra.mxu0 0.0
        %5184 = vmatprep.subr.mxu0 0.0
        %5185 = vmatpush1.msra.mxu0 0.0
        %5186 = vmatprep.subr.mxu0 0.0
        %5187 = vmatpush1.msra.mxu0 0.0
        %5188 = vmatprep.subr.mxu0 0.0
        %5189 = vmatpush1.msra.mxu0 0.0
        %5190 = vmatprep.subr.mxu0 0.0
        %5191 = vmatpush1.msra.mxu0 0.0
        %5192 = vmatprep.subr.mxu0 0.0
        %5193 = vmatpush1.msra.mxu0 0.0
        %5194 = vmatprep.mubr.f32.mxu0 0.0
        %v5195 = vand.u32 %v4222, 4294901760
        %5196 = vmatmul.mubr.f32.gmra.mrb[0].mxu0 %v5195
        %v5197 = vpop.f32.mrb[0].mxu0
        %v5198 = vadd.f32 %v5102, %v5197
        %v5199 = vpop.f32.mrb[0].mxu0
        %v5200 = vadd.f32 %v5104, %v5199
        %5201 = vdwg.mxu0
        %v5202 = vand.u32 %v4728, 4294901760
        %5203 = vmatprep.subr.mxu0 %v5202
        %v5204 = vand.u32 %v4727, 4294901760
        %5205 = vmatpush1.msra.mxu0 %v5204
        %v5206 = vand.u32 %v4731, 4294901760
        %5207 = vmatprep.subr.mxu0 %v5206
        %v5208 = vand.u32 %v4730, 4294901760
        %5209 = vmatpush1.msra.mxu0 %v5208
        %v5210 = vand.u32 %v4734, 4294901760
        %5211 = vmatprep.subr.mxu0 %v5210
        %v5212 = vand.u32 %v4733, 4294901760
        %5213 = vmatpush1.msra.mxu0 %v5212
        %v5214 = vand.u32 %v4737, 4294901760
        %5215 = vmatprep.subr.mxu0 %v5214
        %v5216 = vand.u32 %v4736, 4294901760
        %5217 = vmatpush1.msra.mxu0 %v5216
        %5218 = vmatprep.subr.mxu0 0.0
        %5219 = vmatpush1.msra.mxu0 0.0
        %5220 = vmatprep.subr.mxu0 0.0
        %5221 = vmatpush1.msra.mxu0 0.0
        %5222 = vmatprep.subr.mxu0 0.0
        %5223 = vmatpush1.msra.mxu0 0.0
        %5224 = vmatprep.subr.mxu0 0.0
        %5225 = vmatpush1.msra.mxu0 0.0
        %5226 = vmatprep.subr.mxu0 0.0
        %5227 = vmatpush1.msra.mxu0 0.0
        %5228 = vmatprep.subr.mxu0 0.0
        %5229 = vmatpush1.msra.mxu0 0.0
        %5230 = vmatprep.subr.mxu0 0.0
        %5231 = vmatpush1.msra.mxu0 0.0
        %5232 = vmatprep.subr.mxu0 0.0
        %5233 = vmatpush1.msra.mxu0 0.0
        %5234 = vmatprep.subr.mxu0 0.0
        %5235 = vmatpush1.msra.mxu0 0.0
        %5236 = vmatprep.subr.mxu0 0.0
        %5237 = vmatpush1.msra.mxu0 0.0
        %5238 = vmatprep.subr.mxu0 0.0
        %5239 = vmatpush1.msra.mxu0 0.0
        %5240 = vmatprep.subr.mxu0 0.0
        %5241 = vmatpush1.msra.mxu0 0.0
        %5242 = vmatprep.subr.mxu0 0.0
        %5243 = vmatpush1.msra.mxu0 0.0
        %5244 = vmatprep.subr.mxu0 0.0
        %5245 = vmatpush1.msra.mxu0 0.0
        %5246 = vmatprep.subr.mxu0 0.0
        %5247 = vmatpush1.msra.mxu0 0.0
        %5248 = vmatprep.subr.mxu0 0.0
        %5249 = vmatpush1.msra.mxu0 0.0
        %5250 = vmatprep.subr.mxu0 0.0
        %5251 = vmatpush1.msra.mxu0 0.0
        %5252 = vmatprep.subr.mxu0 0.0
        %5253 = vmatpush1.msra.mxu0 0.0
        %5254 = vmatprep.subr.mxu0 0.0
        %5255 = vmatpush1.msra.mxu0 0.0
        %5256 = vmatprep.subr.mxu0 0.0
        %5257 = vmatpush1.msra.mxu0 0.0
        %5258 = vmatprep.subr.mxu0 0.0
        %5259 = vmatpush1.msra.mxu0 0.0
        %5260 = vmatprep.subr.mxu0 0.0
        %5261 = vmatpush1.msra.mxu0 0.0
        %5262 = vmatprep.subr.mxu0 0.0
        %5263 = vmatpush1.msra.mxu0 0.0
        %5264 = vmatprep.subr.mxu0 0.0
        %5265 = vmatpush1.msra.mxu0 0.0
        %5266 = vmatprep.subr.mxu0 0.0
        %5267 = vmatpush1.msra.mxu0 0.0
        %5268 = vmatprep.subr.mxu0 0.0
        %5269 = vmatpush1.msra.mxu0 0.0
        %5270 = vmatprep.subr.mxu0 0.0
        %5271 = vmatpush1.msra.mxu0 0.0
        %5272 = vmatprep.subr.mxu0 0.0
        %5273 = vmatpush1.msra.mxu0 0.0
        %5274 = vmatprep.mubr.f32.mxu0 0.0
        %v5275 = vand.u32 %v4222, 4294901760
        %5276 = vmatmul.mubr.f32.gmra.mrb[0].mxu0 %v5275
        %v5277 = vpop.f32.mrb[0].mxu0
        %v5278 = vadd.f32 %v5198, %v5277
        %v5279 = vpop.f32.mrb[0].mxu0
        %v5280 = vadd.f32 %v5200, %v5279
        %5281 = vdwg.mxu0
        %5282 = vmatprep.subr.mxu0 0.0
        %v5283 = vand.u32 %v4729, 4294901760
        %5284 = vmatpush1.msra.mxu0 %v5283
        %5285 = vmatprep.subr.mxu0 0.0
        %v5286 = vand.u32 %v4732, 4294901760
        %5287 = vmatpush1.msra.mxu0 %v5286
        %5288 = vmatprep.subr.mxu0 0.0
        %v5289 = vand.u32 %v4735, 4294901760
        %5290 = vmatpush1.msra.mxu0 %v5289
        %5291 = vmatprep.subr.mxu0 0.0
        %v5292 = vand.u32 %v4738, 4294901760
        %5293 = vmatpush1.msra.mxu0 %v5292
        %5294 = vmatprep.subr.mxu0 0.0
        %5295 = vmatpush1.msra.mxu0 0.0
        %5296 = vmatprep.subr.mxu0 0.0
        %5297 = vmatpush1.msra.mxu0 0.0
        %5298 = vmatprep.subr.mxu0 0.0
        %5299 = vmatpush1.msra.mxu0 0.0
        %5300 = vmatprep.subr.mxu0 0.0
        %5301 = vmatpush1.msra.mxu0 0.0
        %5302 = vmatprep.subr.mxu0 0.0
        %5303 = vmatpush1.msra.mxu0 0.0
        %5304 = vmatprep.subr.mxu0 0.0
        %5305 = vmatpush1.msra.mxu0 0.0
        %5306 = vmatprep.subr.mxu0 0.0
        %5307 = vmatpush1.msra.mxu0 0.0
        %5308 = vmatprep.subr.mxu0 0.0
        %5309 = vmatpush1.msra.mxu0 0.0
        %5310 = vmatprep.subr.mxu0 0.0
        %5311 = vmatpush1.msra.mxu0 0.0
        %5312 = vmatprep.subr.mxu0 0.0
        %5313 = vmatpush1.msra.mxu0 0.0
        %5314 = vmatprep.subr.mxu0 0.0
        %5315 = vmatpush1.msra.mxu0 0.0
        %5316 = vmatprep.subr.mxu0 0.0
        %5317 = vmatpush1.msra.mxu0 0.0
        %5318 = vmatprep.subr.mxu0 0.0
        %5319 = vmatpush1.msra.mxu0 0.0
        %5320 = vmatprep.subr.mxu0 0.0
        %5321 = vmatpush1.msra.mxu0 0.0
        %5322 = vmatprep.subr.mxu0 0.0
        %5323 = vmatpush1.msra.mxu0 0.0
        %5324 = vmatprep.subr.mxu0 0.0
        %5325 = vmatpush1.msra.mxu0 0.0
        %5326 = vmatprep.subr.mxu0 0.0
        %5327 = vmatpush1.msra.mxu0 0.0
        %5328 = vmatprep.subr.mxu0 0.0
        %5329 = vmatpush1.msra.mxu0 0.0
        %5330 = vmatprep.subr.mxu0 0.0
        %5331 = vmatpush1.msra.mxu0 0.0
        %5332 = vmatprep.subr.mxu0 0.0
        %5333 = vmatpush1.msra.mxu0 0.0
        %5334 = vmatprep.subr.mxu0 0.0
        %5335 = vmatpush1.msra.mxu0 0.0
        %5336 = vmatprep.subr.mxu0 0.0
        %5337 = vmatpush1.msra.mxu0 0.0
        %5338 = vmatprep.subr.mxu0 0.0
        %5339 = vmatpush1.msra.mxu0 0.0
        %5340 = vmatprep.subr.mxu0 0.0
        %5341 = vmatpush1.msra.mxu0 0.0
        %5342 = vmatprep.subr.mxu0 0.0
        %5343 = vmatpush1.msra.mxu0 0.0
        %5344 = vmatprep.subr.mxu0 0.0
        %5345 = vmatpush1.msra.mxu0 0.0
        %5346 = vmatprep.subr.mxu0 0.0
        %5347 = vmatpush1.msra.mxu0 0.0
        %5348 = vmatprep.subr.mxu0 0.0
        %5349 = vmatpush1.msra.mxu0 0.0
        %5350 = vmatprep.mubr.f32.mxu0 0.0
        %v5351 = vand.u32 %v4222, 4294901760
        %v5352 = vsub.f32 %v4222, %v5351
        %v5353 = vand.u32 %v5352, 4294901760
        %v5354 = vsub.f32 %v5352, %v5353
        %v5355 = vand.u32 %v5354, 4294901760
        %5356 = vmatmul.mubr.f32.gmra.mrb[0].mxu0 %v5355
        %v5357 = vpop.f32.mrb[0].mxu0
        %v5358 = vadd.f32 0.0, %v5357
        %v5359 = vpop.f32.mrb[0].mxu0
        %5360 = vdwg.mxu0
        %5361 = vmatprep.subr.mxu0 0.0
        %v5362 = vand.u32 %v4729, 4294901760
        %v5363 = vsub.f32 %v4729, %v5362
        %v5364 = vand.u32 %v5363, 4294901760
        %v5365 = vsub.f32 %v5363, %v5364
        %v5366 = vand.u32 %v5365, 4294901760
        %5367 = vmatpush1.msra.mxu0 %v5366
        %5368 = vmatprep.subr.mxu0 0.0
        %v5369 = vand.u32 %v4732, 4294901760
        %v5370 = vsub.f32 %v4732, %v5369
        %v5371 = vand.u32 %v5370, 4294901760
        %v5372 = vsub.f32 %v5370, %v5371
        %v5373 = vand.u32 %v5372, 4294901760
        %5374 = vmatpush1.msra.mxu0 %v5373
        %5375 = vmatprep.subr.mxu0 0.0
        %v5376 = vand.u32 %v4735, 4294901760
        %v5377 = vsub.f32 %v4735, %v5376
        %v5378 = vand.u32 %v5377, 4294901760
        %v5379 = vsub.f32 %v5377, %v5378
        %v5380 = vand.u32 %v5379, 4294901760
        %5381 = vmatpush1.msra.mxu0 %v5380
        %5382 = vmatprep.subr.mxu0 0.0
        %v5383 = vand.u32 %v4738, 4294901760
        %v5384 = vsub.f32 %v4738, %v5383
        %v5385 = vand.u32 %v5384, 4294901760
        %v5386 = vsub.f32 %v5384, %v5385
        %v5387 = vand.u32 %v5386, 4294901760
        %5388 = vmatpush1.msra.mxu0 %v5387
        %5389 = vmatprep.subr.mxu0 0.0
        %5390 = vmatpush1.msra.mxu0 0.0
        %5391 = vmatprep.subr.mxu0 0.0
        %5392 = vmatpush1.msra.mxu0 0.0
        %5393 = vmatprep.subr.mxu0 0.0
        %5394 = vmatpush1.msra.mxu0 0.0
        %5395 = vmatprep.subr.mxu0 0.0
        %5396 = vmatpush1.msra.mxu0 0.0
        %5397 = vmatprep.subr.mxu0 0.0
        %5398 = vmatpush1.msra.mxu0 0.0
        %5399 = vmatprep.subr.mxu0 0.0
        %5400 = vmatpush1.msra.mxu0 0.0
        %5401 = vmatprep.subr.mxu0 0.0
        %5402 = vmatpush1.msra.mxu0 0.0
        %5403 = vmatprep.subr.mxu0 0.0
        %5404 = vmatpush1.msra.mxu0 0.0
        %5405 = vmatprep.subr.mxu0 0.0
        %5406 = vmatpush1.msra.mxu0 0.0
        %5407 = vmatprep.subr.mxu0 0.0
        %5408 = vmatpush1.msra.mxu0 0.0
        %5409 = vmatprep.subr.mxu0 0.0
        %5410 = vmatpush1.msra.mxu0 0.0
        %5411 = vmatprep.subr.mxu0 0.0
        %5412 = vmatpush1.msra.mxu0 0.0
        %5413 = vmatprep.subr.mxu0 0.0
        %5414 = vmatpush1.msra.mxu0 0.0
        %5415 = vmatprep.subr.mxu0 0.0
        %5416 = vmatpush1.msra.mxu0 0.0
        %5417 = vmatprep.subr.mxu0 0.0
        %5418 = vmatpush1.msra.mxu0 0.0
        %5419 = vmatprep.subr.mxu0 0.0
        %5420 = vmatpush1.msra.mxu0 0.0
        %5421 = vmatprep.subr.mxu0 0.0
        %5422 = vmatpush1.msra.mxu0 0.0
        %5423 = vmatprep.subr.mxu0 0.0
        %5424 = vmatpush1.msra.mxu0 0.0
        %5425 = vmatprep.subr.mxu0 0.0
        %5426 = vmatpush1.msra.mxu0 0.0
        %5427 = vmatprep.subr.mxu0 0.0
        %5428 = vmatpush1.msra.mxu0 0.0
        %5429 = vmatprep.subr.mxu0 0.0
        %5430 = vmatpush1.msra.mxu0 0.0
        %5431 = vmatprep.subr.mxu0 0.0
        %5432 = vmatpush1.msra.mxu0 0.0
        %5433 = vmatprep.subr.mxu0 0.0
        %5434 = vmatpush1.msra.mxu0 0.0
        %5435 = vmatprep.subr.mxu0 0.0
        %5436 = vmatpush1.msra.mxu0 0.0
        %5437 = vmatprep.subr.mxu0 0.0
        %5438 = vmatpush1.msra.mxu0 0.0
        %5439 = vmatprep.subr.mxu0 0.0
        %5440 = vmatpush1.msra.mxu0 0.0
        %5441 = vmatprep.subr.mxu0 0.0
        %5442 = vmatpush1.msra.mxu0 0.0
        %5443 = vmatprep.subr.mxu0 0.0
        %5444 = vmatpush1.msra.mxu0 0.0
        %5445 = vmatprep.mubr.f32.mxu0 0.0
        %v5446 = vand.u32 %v4222, 4294901760
        %5447 = vmatmul.mubr.f32.gmra.mrb[0].mxu0 %v5446
        %v5448 = vpop.f32.mrb[0].mxu0
        %v5449 = vadd.f32 %v5358, %v5448
        %v5450 = vpop.f32.mrb[0].mxu0
        %5451 = vdwg.mxu0
        %5452 = vmatprep.subr.mxu0 0.0
        %v5453 = vand.u32 %v4729, 4294901760
        %v5454 = vsub.f32 %v4729, %v5453
        %5455 = vmatpush1.msra.mxu0 %v5454
        %5456 = vmatprep.subr.mxu0 0.0
        %v5457 = vand.u32 %v4732, 4294901760
        %v5458 = vsub.f32 %v4732, %v5457
        %5459 = vmatpush1.msra.mxu0 %v5458
        %5460 = vmatprep.subr.mxu0 0.0
        %v5461 = vand.u32 %v4735, 4294901760
        %v5462 = vsub.f32 %v4735, %v5461
        %5463 = vmatpush1.msra.mxu0 %v5462
        %5464 = vmatprep.subr.mxu0 0.0
        %v5465 = vand.u32 %v4738, 4294901760
        %v5466 = vsub.f32 %v4738, %v5465
        %5467 = vmatpush1.msra.mxu0 %v5466
        %5468 = vmatprep.subr.mxu0 0.0
        %5469 = vmatpush1.msra.mxu0 0.0
        %5470 = vmatprep.subr.mxu0 0.0
        %5471 = vmatpush1.msra.mxu0 0.0
        %5472 = vmatprep.subr.mxu0 0.0
        %5473 = vmatpush1.msra.mxu0 0.0
        %5474 = vmatprep.subr.mxu0 0.0
        %5475 = vmatpush1.msra.mxu0 0.0
        %5476 = vmatprep.subr.mxu0 0.0
        %5477 = vmatpush1.msra.mxu0 0.0
        %5478 = vmatprep.subr.mxu0 0.0
        %5479 = vmatpush1.msra.mxu0 0.0
        %5480 = vmatprep.subr.mxu0 0.0
        %5481 = vmatpush1.msra.mxu0 0.0
        %5482 = vmatprep.subr.mxu0 0.0
        %5483 = vmatpush1.msra.mxu0 0.0
        %5484 = vmatprep.subr.mxu0 0.0
        %5485 = vmatpush1.msra.mxu0 0.0
        %5486 = vmatprep.subr.mxu0 0.0
        %5487 = vmatpush1.msra.mxu0 0.0
        %5488 = vmatprep.subr.mxu0 0.0
        %5489 = vmatpush1.msra.mxu0 0.0
        %5490 = vmatprep.subr.mxu0 0.0
        %5491 = vmatpush1.msra.mxu0 0.0
        %5492 = vmatprep.subr.mxu0 0.0
        %5493 = vmatpush1.msra.mxu0 0.0
        %5494 = vmatprep.subr.mxu0 0.0
        %5495 = vmatpush1.msra.mxu0 0.0
        %5496 = vmatprep.subr.mxu0 0.0
        %5497 = vmatpush1.msra.mxu0 0.0
        %5498 = vmatprep.subr.mxu0 0.0
        %5499 = vmatpush1.msra.mxu0 0.0
        %5500 = vmatprep.subr.mxu0 0.0
        %5501 = vmatpush1.msra.mxu0 0.0
        %5502 = vmatprep.subr.mxu0 0.0
        %5503 = vmatpush1.msra.mxu0 0.0
        %5504 = vmatprep.subr.mxu0 0.0
        %5505 = vmatpush1.msra.mxu0 0.0
        %5506 = vmatprep.subr.mxu0 0.0
        %5507 = vmatpush1.msra.mxu0 0.0
        %5508 = vmatprep.subr.mxu0 0.0
        %5509 = vmatpush1.msra.mxu0 0.0
        %5510 = vmatprep.subr.mxu0 0.0
        %5511 = vmatpush1.msra.mxu0 0.0
        %5512 = vmatprep.subr.mxu0 0.0
        %5513 = vmatpush1.msra.mxu0 0.0
        %5514 = vmatprep.subr.mxu0 0.0
        %5515 = vmatpush1.msra.mxu0 0.0
        %5516 = vmatprep.subr.mxu0 0.0
        %5517 = vmatpush1.msra.mxu0 0.0
        %5518 = vmatprep.subr.mxu0 0.0
        %5519 = vmatpush1.msra.mxu0 0.0
        %5520 = vmatprep.subr.mxu0 0.0
        %5521 = vmatpush1.msra.mxu0 0.0
        %5522 = vmatprep.subr.mxu0 0.0
        %5523 = vmatpush1.msra.mxu0 0.0
        %5524 = vmatprep.mubr.f32.mxu0 0.0
        %v5525 = vand.u32 %v4222, 4294901760
        %v5526 = vsub.f32 %v4222, %v5525
        %5527 = vmatmul.mubr.f32.gmra.mrb[0].mxu0 %v5526
        %v5528 = vpop.f32.mrb[0].mxu0
        %v5529 = vadd.f32 %v5449, %v5528
        %v5530 = vpop.f32.mrb[0].mxu0
        %5531 = vdwg.mxu0
        %5532 = vmatprep.subr.mxu0 0.0
        %v5533 = vand.u32 %v4729, 4294901760
        %5534 = vmatpush1.msra.mxu0 %v5533
        %5535 = vmatprep.subr.mxu0 0.0
        %v5536 = vand.u32 %v4732, 4294901760
        %5537 = vmatpush1.msra.mxu0 %v5536
        %5538 = vmatprep.subr.mxu0 0.0
        %v5539 = vand.u32 %v4735, 4294901760
        %5540 = vmatpush1.msra.mxu0 %v5539
        %5541 = vmatprep.subr.mxu0 0.0
        %v5542 = vand.u32 %v4738, 4294901760
        %5543 = vmatpush1.msra.mxu0 %v5542
        %5544 = vmatprep.subr.mxu0 0.0
        %5545 = vmatpush1.msra.mxu0 0.0
        %5546 = vmatprep.subr.mxu0 0.0
        %5547 = vmatpush1.msra.mxu0 0.0
        %5548 = vmatprep.subr.mxu0 0.0
        %5549 = vmatpush1.msra.mxu0 0.0
        %5550 = vmatprep.subr.mxu0 0.0
        %5551 = vmatpush1.msra.mxu0 0.0
        %5552 = vmatprep.subr.mxu0 0.0
        %5553 = vmatpush1.msra.mxu0 0.0
        %5554 = vmatprep.subr.mxu0 0.0
        %5555 = vmatpush1.msra.mxu0 0.0
        %5556 = vmatprep.subr.mxu0 0.0
        %5557 = vmatpush1.msra.mxu0 0.0
        %5558 = vmatprep.subr.mxu0 0.0
        %5559 = vmatpush1.msra.mxu0 0.0
        %5560 = vmatprep.subr.mxu0 0.0
        %5561 = vmatpush1.msra.mxu0 0.0
        %5562 = vmatprep.subr.mxu0 0.0
        %5563 = vmatpush1.msra.mxu0 0.0
        %5564 = vmatprep.subr.mxu0 0.0
        %5565 = vmatpush1.msra.mxu0 0.0
        %5566 = vmatprep.subr.mxu0 0.0
        %5567 = vmatpush1.msra.mxu0 0.0
        %5568 = vmatprep.subr.mxu0 0.0
        %5569 = vmatpush1.msra.mxu0 0.0
        %5570 = vmatprep.subr.mxu0 0.0
        %5571 = vmatpush1.msra.mxu0 0.0
        %5572 = vmatprep.subr.mxu0 0.0
        %5573 = vmatpush1.msra.mxu0 0.0
        %5574 = vmatprep.subr.mxu0 0.0
        %5575 = vmatpush1.msra.mxu0 0.0
        %5576 = vmatprep.subr.mxu0 0.0
        %5577 = vmatpush1.msra.mxu0 0.0
        %5578 = vmatprep.subr.mxu0 0.0
        %5579 = vmatpush1.msra.mxu0 0.0
        %5580 = vmatprep.subr.mxu0 0.0
        %5581 = vmatpush1.msra.mxu0 0.0
        %5582 = vmatprep.subr.mxu0 0.0
        %5583 = vmatpush1.msra.mxu0 0.0
        %5584 = vmatprep.subr.mxu0 0.0
        %5585 = vmatpush1.msra.mxu0 0.0
        %5586 = vmatprep.subr.mxu0 0.0
        %5587 = vmatpush1.msra.mxu0 0.0
        %5588 = vmatprep.subr.mxu0 0.0
        %5589 = vmatpush1.msra.mxu0 0.0
        %5590 = vmatprep.subr.mxu0 0.0
        %5591 = vmatpush1.msra.mxu0 0.0
        %5592 = vmatprep.subr.mxu0 0.0
        %5593 = vmatpush1.msra.mxu0 0.0
        %5594 = vmatprep.subr.mxu0 0.0
        %5595 = vmatpush1.msra.mxu0 0.0
        %5596 = vmatprep.subr.mxu0 0.0
        %5597 = vmatpush1.msra.mxu0 0.0
        %5598 = vmatprep.subr.mxu0 0.0
        %5599 = vmatpush1.msra.mxu0 0.0
        %5600 = vmatprep.mubr.f32.mxu0 0.0
        %v5601 = vand.u32 %v4222, 4294901760
        %v5602 = vsub.f32 %v4222, %v5601
        %v5603 = vand.u32 %v5602, 4294901760
        %5604 = vmatmul.mubr.f32.gmra.mrb[0].mxu0 %v5603
        %v5605 = vpop.f32.mrb[0].mxu0
        %v5606 = vadd.f32 %v5529, %v5605
        %v5607 = vpop.f32.mrb[0].mxu0
        %5608 = vdwg.mxu0
        %5609 = vmatprep.subr.mxu0 0.0
        %v5610 = vand.u32 %v4729, 4294901760
        %v5611 = vsub.f32 %v4729, %v5610
        %v5612 = vand.u32 %v5611, 4294901760
        %5613 = vmatpush1.msra.mxu0 %v5612
        %5614 = vmatprep.subr.mxu0 0.0
        %v5615 = vand.u32 %v4732, 4294901760
        %v5616 = vsub.f32 %v4732, %v5615
        %v5617 = vand.u32 %v5616, 4294901760
        %5618 = vmatpush1.msra.mxu0 %v5617
        %5619 = vmatprep.subr.mxu0 0.0
        %v5620 = vand.u32 %v4735, 4294901760
        %v5621 = vsub.f32 %v4735, %v5620
        %v5622 = vand.u32 %v5621, 4294901760
        %5623 = vmatpush1.msra.mxu0 %v5622
        %5624 = vmatprep.subr.mxu0 0.0
        %v5625 = vand.u32 %v4738, 4294901760
        %v5626 = vsub.f32 %v4738, %v5625
        %v5627 = vand.u32 %v5626, 4294901760
        %5628 = vmatpush1.msra.mxu0 %v5627
        %5629 = vmatprep.subr.mxu0 0.0
        %5630 = vmatpush1.msra.mxu0 0.0
        %5631 = vmatprep.subr.mxu0 0.0
        %5632 = vmatpush1.msra.mxu0 0.0
        %5633 = vmatprep.subr.mxu0 0.0
        %5634 = vmatpush1.msra.mxu0 0.0
        %5635 = vmatprep.subr.mxu0 0.0
        %5636 = vmatpush1.msra.mxu0 0.0
        %5637 = vmatprep.subr.mxu0 0.0
        %5638 = vmatpush1.msra.mxu0 0.0
        %5639 = vmatprep.subr.mxu0 0.0
        %5640 = vmatpush1.msra.mxu0 0.0
        %5641 = vmatprep.subr.mxu0 0.0
        %5642 = vmatpush1.msra.mxu0 0.0
        %5643 = vmatprep.subr.mxu0 0.0
        %5644 = vmatpush1.msra.mxu0 0.0
        %5645 = vmatprep.subr.mxu0 0.0
        %5646 = vmatpush1.msra.mxu0 0.0
        %5647 = vmatprep.subr.mxu0 0.0
        %5648 = vmatpush1.msra.mxu0 0.0
        %5649 = vmatprep.subr.mxu0 0.0
        %5650 = vmatpush1.msra.mxu0 0.0
        %5651 = vmatprep.subr.mxu0 0.0
        %5652 = vmatpush1.msra.mxu0 0.0
        %5653 = vmatprep.subr.mxu0 0.0
        %5654 = vmatpush1.msra.mxu0 0.0
        %5655 = vmatprep.subr.mxu0 0.0
        %5656 = vmatpush1.msra.mxu0 0.0
        %5657 = vmatprep.subr.mxu0 0.0
        %5658 = vmatpush1.msra.mxu0 0.0
        %5659 = vmatprep.subr.mxu0 0.0
        %5660 = vmatpush1.msra.mxu0 0.0
        %5661 = vmatprep.subr.mxu0 0.0
        %5662 = vmatpush1.msra.mxu0 0.0
        %5663 = vmatprep.subr.mxu0 0.0
        %5664 = vmatpush1.msra.mxu0 0.0
        %5665 = vmatprep.subr.mxu0 0.0
        %5666 = vmatpush1.msra.mxu0 0.0
        %5667 = vmatprep.subr.mxu0 0.0
        %5668 = vmatpush1.msra.mxu0 0.0
        %5669 = vmatprep.subr.mxu0 0.0
        %5670 = vmatpush1.msra.mxu0 0.0
        %5671 = vmatprep.subr.mxu0 0.0
        %5672 = vmatpush1.msra.mxu0 0.0
        %5673 = vmatprep.subr.mxu0 0.0
        %5674 = vmatpush1.msra.mxu0 0.0
        %5675 = vmatprep.subr.mxu0 0.0
        %5676 = vmatpush1.msra.mxu0 0.0
        %5677 = vmatprep.subr.mxu0 0.0
        %5678 = vmatpush1.msra.mxu0 0.0
        %5679 = vmatprep.subr.mxu0 0.0
        %5680 = vmatpush1.msra.mxu0 0.0
        %5681 = vmatprep.subr.mxu0 0.0
        %5682 = vmatpush1.msra.mxu0 0.0
        %5683 = vmatprep.subr.mxu0 0.0
        %5684 = vmatpush1.msra.mxu0 0.0
        %5685 = vmatprep.mubr.f32.mxu0 0.0
        %v5686 = vand.u32 %v4222, 4294901760
        %5687 = vmatmul.mubr.f32.gmra.mrb[0].mxu0 %v5686
        %v5688 = vpop.f32.mrb[0].mxu0
        %v5689 = vadd.f32 %v5606, %v5688
        %v5690 = vpop.f32.mrb[0].mxu0
        %5691 = vdwg.mxu0
        %5692 = vmatprep.subr.mxu0 0.0
        %v5693 = vand.u32 %v4729, 4294901760
        %5694 = vmatpush1.msra.mxu0 %v5693
        %5695 = vmatprep.subr.mxu0 0.0
        %v5696 = vand.u32 %v4732, 4294901760
        %5697 = vmatpush1.msra.mxu0 %v5696
        %5698 = vmatprep.subr.mxu0 0.0
        %v5699 = vand.u32 %v4735, 4294901760
        %5700 = vmatpush1.msra.mxu0 %v5699
        %5701 = vmatprep.subr.mxu0 0.0
        %v5702 = vand.u32 %v4738, 4294901760
        %5703 = vmatpush1.msra.mxu0 %v5702
        %5704 = vmatprep.subr.mxu0 0.0
        %5705 = vmatpush1.msra.mxu0 0.0
        %5706 = vmatprep.subr.mxu0 0.0
        %5707 = vmatpush1.msra.mxu0 0.0
        %5708 = vmatprep.subr.mxu0 0.0
        %5709 = vmatpush1.msra.mxu0 0.0
        %5710 = vmatprep.subr.mxu0 0.0
        %5711 = vmatpush1.msra.mxu0 0.0
        %5712 = vmatprep.subr.mxu0 0.0
        %5713 = vmatpush1.msra.mxu0 0.0
        %5714 = vmatprep.subr.mxu0 0.0
        %5715 = vmatpush1.msra.mxu0 0.0
        %5716 = vmatprep.subr.mxu0 0.0
        %5717 = vmatpush1.msra.mxu0 0.0
        %5718 = vmatprep.subr.mxu0 0.0
        %5719 = vmatpush1.msra.mxu0 0.0
        %5720 = vmatprep.subr.mxu0 0.0
        %5721 = vmatpush1.msra.mxu0 0.0
        %5722 = vmatprep.subr.mxu0 0.0
        %5723 = vmatpush1.msra.mxu0 0.0
        %5724 = vmatprep.subr.mxu0 0.0
        %5725 = vmatpush1.msra.mxu0 0.0
        %5726 = vmatprep.subr.mxu0 0.0
        %5727 = vmatpush1.msra.mxu0 0.0
        %5728 = vmatprep.subr.mxu0 0.0
        %5729 = vmatpush1.msra.mxu0 0.0
        %5730 = vmatprep.subr.mxu0 0.0
        %5731 = vmatpush1.msra.mxu0 0.0
        %5732 = vmatprep.subr.mxu0 0.0
        %5733 = vmatpush1.msra.mxu0 0.0
        %5734 = vmatprep.subr.mxu0 0.0
        %5735 = vmatpush1.msra.mxu0 0.0
        %5736 = vmatprep.subr.mxu0 0.0
        %5737 = vmatpush1.msra.mxu0 0.0
        %5738 = vmatprep.subr.mxu0 0.0
        %5739 = vmatpush1.msra.mxu0 0.0
        %5740 = vmatprep.subr.mxu0 0.0
        %5741 = vmatpush1.msra.mxu0 0.0
        %5742 = vmatprep.subr.mxu0 0.0
        %5743 = vmatpush1.msra.mxu0 0.0
        %5744 = vmatprep.subr.mxu0 0.0
        %5745 = vmatpush1.msra.mxu0 0.0
        %5746 = vmatprep.subr.mxu0 0.0
        %5747 = vmatpush1.msra.mxu0 0.0
        %5748 = vmatprep.subr.mxu0 0.0
        %5749 = vmatpush1.msra.mxu0 0.0
        %5750 = vmatprep.subr.mxu0 0.0
        %5751 = vmatpush1.msra.mxu0 0.0
        %5752 = vmatprep.subr.mxu0 0.0
        %5753 = vmatpush1.msra.mxu0 0.0
        %5754 = vmatprep.subr.mxu0 0.0
        %5755 = vmatpush1.msra.mxu0 0.0
        %5756 = vmatprep.subr.mxu0 0.0
        %5757 = vmatpush1.msra.mxu0 0.0
        %5758 = vmatprep.subr.mxu0 0.0
        %5759 = vmatpush1.msra.mxu0 0.0
        %5760 = vmatprep.mubr.f32.mxu0 0.0
        %v5761 = vand.u32 %v4222, 4294901760
        %5762 = vmatmul.mubr.f32.gmra.mrb[0].mxu0 %v5761
        %v5763 = vpop.f32.mrb[0].mxu0
        %v5764 = vadd.f32 %v5689, %v5763
        %v5765 = vpop.f32.mrb[0].mxu0
        %5766 = vdwg.mxu0
        %v5767 = vld [vmem:[%s542] sm:$0xff]
        %v5768 = vld [vmem:[%s542 + $0x8] sm:$0xff]
        %v5769 = vld [vmem:[%s542 + $0x10] sm:$0xff]
        %v5770 = vmul.f32 %v5767, %v5278
        %v5771 = vmul.f32 %v5768, %v5280
        %v5772 = vmul.f32 %v5769, %v5764
        %v5773 = vld [vmem:[%s10] sm:$0x7]
        %v5775 = vlaneseq
        %v5776 = vshrl.u32 %v5775, 7
        %v5777 = vsub.s32 0, %v5776
        %v5778 = vrot.slane %v5773, %v5777
        %v5779 = vlaneseq
        %v5780 = vshrl.u32 %v5779, 7
        %v5781 = vsub.s32 1, %v5780
        %v5782 = vrot.slane %v5773, %v5781
        %v5783 = vlaneseq
        %v5784 = vshrl.u32 %v5783, 7
        %v5785 = vsub.s32 2, %v5784
        %v5786 = vrot.slane %v5773, %v5785
        %v5790 = vmul.f32 %v5770, %v5778
        %v5791 = vmul.f32 %v5771, %v5782
        %v5792 = vmul.f32 %v5772, %v5786
        %5793 = vst [vmem:[%s526] sm:$0xff] %v5790
        %5794 = vst [vmem:[%s526 + $0x8] sm:$0xff] %v5791
        %5795 = vst [vmem:[%s526 + $0x10] sm:$0xff] %v5792
        %v5796 = vld [vmem:[%s8] sm:$0xff]
        %v5797 = vld [vmem:[%s8 + $0x8] sm:$0xff]
        %v5798 = vld [vmem:[%s8 + $0x10] sm:$0xff]
        %v5799 = vld [vmem:[%s8 + $0x18] sm:$0xff]
        %v5800 = vld [vmem:[%s8 + $0x20] sm:$0xff]
        %v5801 = vld [vmem:[%s8 + $0x28] sm:$0xff]
        %v5802 = vld [vmem:[%s8 + $0x30] sm:$0xff]
        %v5803 = vld [vmem:[%s8 + $0x38] sm:$0xff]
        %v5804 = vld [vmem:[%s8 + $0x40] sm:$0xff]
        %v5805 = vld [vmem:[%s8 + $0x48] sm:$0xff]
        %v5806 = vld [vmem:[%s8 + $0x50] sm:$0xff]
        %v5807 = vld [vmem:[%s8 + $0x58] sm:$0xff]
        %v5808 = vand.u32 %v5797, 4294901760
        %5809 = vmatprep.subr.mxu0 %v5808
        %v5810 = vand.u32 %v5796, 4294901760
        %5811 = vmatpush1.msra.mxu0 %v5810
        %v5812 = vand.u32 %v5800, 4294901760
        %5813 = vmatprep.subr.mxu0 %v5812
        %v5814 = vand.u32 %v5799, 4294901760
        %5815 = vmatpush1.msra.mxu0 %v5814
        %v5816 = vand.u32 %v5803, 4294901760
        %5817 = vmatprep.subr.mxu0 %v5816
        %v5818 = vand.u32 %v5802, 4294901760
        %5819 = vmatpush1.msra.mxu0 %v5818
        %v5820 = vand.u32 %v5806, 4294901760
        %5821 = vmatprep.subr.mxu0 %v5820
        %v5822 = vand.u32 %v5805, 4294901760
        %5823 = vmatpush1.msra.mxu0 %v5822
        %5824 = vmatprep.subr.mxu0 0.0
        %5825 = vmatpush1.msra.mxu0 0.0
        %5826 = vmatprep.subr.mxu0 0.0
        %5827 = vmatpush1.msra.mxu0 0.0
        %5828 = vmatprep.subr.mxu0 0.0
        %5829 = vmatpush1.msra.mxu0 0.0
        %5830 = vmatprep.subr.mxu0 0.0
        %5831 = vmatpush1.msra.mxu0 0.0
        %5832 = vmatprep.subr.mxu0 0.0
        %5833 = vmatpush1.msra.mxu0 0.0
        %5834 = vmatprep.subr.mxu0 0.0
        %5835 = vmatpush1.msra.mxu0 0.0
        %5836 = vmatprep.subr.mxu0 0.0
        %5837 = vmatpush1.msra.mxu0 0.0
        %5838 = vmatprep.subr.mxu0 0.0
        %5839 = vmatpush1.msra.mxu0 0.0
        %5840 = vmatprep.subr.mxu0 0.0
        %5841 = vmatpush1.msra.mxu0 0.0
        %5842 = vmatprep.subr.mxu0 0.0
        %5843 = vmatpush1.msra.mxu0 0.0
        %5844 = vmatprep.subr.mxu0 0.0
        %5845 = vmatpush1.msra.mxu0 0.0
        %5846 = vmatprep.subr.mxu0 0.0
        %5847 = vmatpush1.msra.mxu0 0.0
        %5848 = vmatprep.subr.mxu0 0.0
        %5849 = vmatpush1.msra.mxu0 0.0
        %5850 = vmatprep.subr.mxu0 0.0
        %5851 = vmatpush1.msra.mxu0 0.0
        %5852 = vmatprep.subr.mxu0 0.0
        %5853 = vmatpush1.msra.mxu0 0.0
        %5854 = vmatprep.subr.mxu0 0.0
        %5855 = vmatpush1.msra.mxu0 0.0
        %5856 = vmatprep.subr.mxu0 0.0
        %5857 = vmatpush1.msra.mxu0 0.0
        %5858 = vmatprep.subr.mxu0 0.0
        %5859 = vmatpush1.msra.mxu0 0.0
        %5860 = vmatprep.subr.mxu0 0.0
        %5861 = vmatpush1.msra.mxu0 0.0
        %5862 = vmatprep.subr.mxu0 0.0
        %5863 = vmatpush1.msra.mxu0 0.0
        %5864 = vmatprep.subr.mxu0 0.0
        %5865 = vmatpush1.msra.mxu0 0.0
        %5866 = vmatprep.subr.mxu0 0.0
        %5867 = vmatpush1.msra.mxu0 0.0
        %5868 = vmatprep.subr.mxu0 0.0
        %5869 = vmatpush1.msra.mxu0 0.0
        %5870 = vmatprep.subr.mxu0 0.0
        %5871 = vmatpush1.msra.mxu0 0.0
        %5872 = vmatprep.subr.mxu0 0.0
        %5873 = vmatpush1.msra.mxu0 0.0
        %5874 = vmatprep.subr.mxu0 0.0
        %5875 = vmatpush1.msra.mxu0 0.0
        %5876 = vmatprep.subr.mxu0 0.0
        %5877 = vmatpush1.msra.mxu0 0.0
        %5878 = vmatprep.subr.mxu0 0.0
        %5879 = vmatpush1.msra.mxu0 0.0
        %5880 = vmatprep.mubr.f32.mxu0 0.0
        %v5881 = vand.u32 %v4222, 4294901760
        %v5882 = vsub.f32 %v4222, %v5881
        %v5883 = vand.u32 %v5882, 4294901760
        %v5884 = vsub.f32 %v5882, %v5883
        %v5885 = vand.u32 %v5884, 4294901760
        %5886 = vmatmul.mubr.f32.gmra.mrb[0].mxu0 %v5885
        %v5887 = vpop.f32.mrb[0].mxu0
        %v5888 = vadd.f32 0.0, %v5887
        %v5889 = vpop.f32.mrb[0].mxu0
        %v5890 = vadd.f32 0.0, %v5889
        %5891 = vdwg.mxu0
        %v5892 = vand.u32 %v5797, 4294901760
        %v5893 = vsub.f32 %v5797, %v5892
        %v5894 = vand.u32 %v5893, 4294901760
        %v5895 = vsub.f32 %v5893, %v5894
        %v5896 = vand.u32 %v5895, 4294901760
        %5897 = vmatprep.subr.mxu0 %v5896
        %v5898 = vand.u32 %v5796, 4294901760
        %v5899 = vsub.f32 %v5796, %v5898
        %v5900 = vand.u32 %v5899, 4294901760
        %v5901 = vsub.f32 %v5899, %v5900
        %v5902 = vand.u32 %v5901, 4294901760
        %5903 = vmatpush1.msra.mxu0 %v5902
        %v5904 = vand.u32 %v5800, 4294901760
        %v5905 = vsub.f32 %v5800, %v5904
        %v5906 = vand.u32 %v5905, 4294901760
        %v5907 = vsub.f32 %v5905, %v5906
        %v5908 = vand.u32 %v5907, 4294901760
        %5909 = vmatprep.subr.mxu0 %v5908
        %v5910 = vand.u32 %v5799, 4294901760
        %v5911 = vsub.f32 %v5799, %v5910
        %v5912 = vand.u32 %v5911, 4294901760
        %v5913 = vsub.f32 %v5911, %v5912
        %v5914 = vand.u32 %v5913, 4294901760
        %5915 = vmatpush1.msra.mxu0 %v5914
        %v5916 = vand.u32 %v5803, 4294901760
        %v5917 = vsub.f32 %v5803, %v5916
        %v5918 = vand.u32 %v5917, 4294901760
        %v5919 = vsub.f32 %v5917, %v5918
        %v5920 = vand.u32 %v5919, 4294901760
        %5921 = vmatprep.subr.mxu0 %v5920
        %v5922 = vand.u32 %v5802, 4294901760
        %v5923 = vsub.f32 %v5802, %v5922
        %v5924 = vand.u32 %v5923, 4294901760
        %v5925 = vsub.f32 %v5923, %v5924
        %v5926 = vand.u32 %v5925, 4294901760
        %5927 = vmatpush1.msra.mxu0 %v5926
        %v5928 = vand.u32 %v5806, 4294901760
        %v5929 = vsub.f32 %v5806, %v5928
        %v5930 = vand.u32 %v5929, 4294901760
        %v5931 = vsub.f32 %v5929, %v5930
        %v5932 = vand.u32 %v5931, 4294901760
        %5933 = vmatprep.subr.mxu0 %v5932
        %v5934 = vand.u32 %v5805, 4294901760
        %v5935 = vsub.f32 %v5805, %v5934
        %v5936 = vand.u32 %v5935, 4294901760
        %v5937 = vsub.f32 %v5935, %v5936
        %v5938 = vand.u32 %v5937, 4294901760
        %5939 = vmatpush1.msra.mxu0 %v5938
        %5940 = vmatprep.subr.mxu0 0.0
        %5941 = vmatpush1.msra.mxu0 0.0
        %5942 = vmatprep.subr.mxu0 0.0
        %5943 = vmatpush1.msra.mxu0 0.0
        %5944 = vmatprep.subr.mxu0 0.0
        %5945 = vmatpush1.msra.mxu0 0.0
        %5946 = vmatprep.subr.mxu0 0.0
        %5947 = vmatpush1.msra.mxu0 0.0
        %5948 = vmatprep.subr.mxu0 0.0
        %5949 = vmatpush1.msra.mxu0 0.0
        %5950 = vmatprep.subr.mxu0 0.0
        %5951 = vmatpush1.msra.mxu0 0.0
        %5952 = vmatprep.subr.mxu0 0.0
        %5953 = vmatpush1.msra.mxu0 0.0
        %5954 = vmatprep.subr.mxu0 0.0
        %5955 = vmatpush1.msra.mxu0 0.0
        %5956 = vmatprep.subr.mxu0 0.0
        %5957 = vmatpush1.msra.mxu0 0.0
        %5958 = vmatprep.subr.mxu0 0.0
        %5959 = vmatpush1.msra.mxu0 0.0
        %5960 = vmatprep.subr.mxu0 0.0
        %5961 = vmatpush1.msra.mxu0 0.0
        %5962 = vmatprep.subr.mxu0 0.0
        %5963 = vmatpush1.msra.mxu0 0.0
        %5964 = vmatprep.subr.mxu0 0.0
        %5965 = vmatpush1.msra.mxu0 0.0
        %5966 = vmatprep.subr.mxu0 0.0
        %5967 = vmatpush1.msra.mxu0 0.0
        %5968 = vmatprep.subr.mxu0 0.0
        %5969 = vmatpush1.msra.mxu0 0.0
        %5970 = vmatprep.subr.mxu0 0.0
        %5971 = vmatpush1.msra.mxu0 0.0
        %5972 = vmatprep.subr.mxu0 0.0
        %5973 = vmatpush1.msra.mxu0 0.0
        %5974 = vmatprep.subr.mxu0 0.0
        %5975 = vmatpush1.msra.mxu0 0.0
        %5976 = vmatprep.subr.mxu0 0.0
        %5977 = vmatpush1.msra.mxu0 0.0
        %5978 = vmatprep.subr.mxu0 0.0
        %5979 = vmatpush1.msra.mxu0 0.0
        %5980 = vmatprep.subr.mxu0 0.0
        %5981 = vmatpush1.msra.mxu0 0.0
        %5982 = vmatprep.subr.mxu0 0.0
        %5983 = vmatpush1.msra.mxu0 0.0
        %5984 = vmatprep.subr.mxu0 0.0
        %5985 = vmatpush1.msra.mxu0 0.0
        %5986 = vmatprep.subr.mxu0 0.0
        %5987 = vmatpush1.msra.mxu0 0.0
        %5988 = vmatprep.subr.mxu0 0.0
        %5989 = vmatpush1.msra.mxu0 0.0
        %5990 = vmatprep.subr.mxu0 0.0
        %5991 = vmatpush1.msra.mxu0 0.0
        %5992 = vmatprep.subr.mxu0 0.0
        %5993 = vmatpush1.msra.mxu0 0.0
        %5994 = vmatprep.subr.mxu0 0.0
        %5995 = vmatpush1.msra.mxu0 0.0
        %5996 = vmatprep.mubr.f32.mxu0 0.0
        %v5997 = vand.u32 %v4222, 4294901760
        %5998 = vmatmul.mubr.f32.gmra.mrb[0].mxu0 %v5997
        %v5999 = vpop.f32.mrb[0].mxu0
        %v6000 = vadd.f32 %v5888, %v5999
        %v6001 = vpop.f32.mrb[0].mxu0
        %v6002 = vadd.f32 %v5890, %v6001
        %6003 = vdwg.mxu0
        %v6004 = vand.u32 %v5797, 4294901760
        %v6005 = vsub.f32 %v5797, %v6004
        %6006 = vmatprep.subr.mxu0 %v6005
        %v6007 = vand.u32 %v5796, 4294901760
        %v6008 = vsub.f32 %v5796, %v6007
        %6009 = vmatpush1.msra.mxu0 %v6008
        %v6010 = vand.u32 %v5800, 4294901760
        %v6011 = vsub.f32 %v5800, %v6010
        %6012 = vmatprep.subr.mxu0 %v6011
        %v6013 = vand.u32 %v5799, 4294901760
        %v6014 = vsub.f32 %v5799, %v6013
        %6015 = vmatpush1.msra.mxu0 %v6014
        %v6016 = vand.u32 %v5803, 4294901760
        %v6017 = vsub.f32 %v5803, %v6016
        %6018 = vmatprep.subr.mxu0 %v6017
        %v6019 = vand.u32 %v5802, 4294901760
        %v6020 = vsub.f32 %v5802, %v6019
        %6021 = vmatpush1.msra.mxu0 %v6020
        %v6022 = vand.u32 %v5806, 4294901760
        %v6023 = vsub.f32 %v5806, %v6022
        %6024 = vmatprep.subr.mxu0 %v6023
        %v6025 = vand.u32 %v5805, 4294901760
        %v6026 = vsub.f32 %v5805, %v6025
        %6027 = vmatpush1.msra.mxu0 %v6026
        %6028 = vmatprep.subr.mxu0 0.0
        %6029 = vmatpush1.msra.mxu0 0.0
        %6030 = vmatprep.subr.mxu0 0.0
        %6031 = vmatpush1.msra.mxu0 0.0
        %6032 = vmatprep.subr.mxu0 0.0
        %6033 = vmatpush1.msra.mxu0 0.0
        %6034 = vmatprep.subr.mxu0 0.0
        %6035 = vmatpush1.msra.mxu0 0.0
        %6036 = vmatprep.subr.mxu0 0.0
        %6037 = vmatpush1.msra.mxu0 0.0
        %6038 = vmatprep.subr.mxu0 0.0
        %6039 = vmatpush1.msra.mxu0 0.0
        %6040 = vmatprep.subr.mxu0 0.0
        %6041 = vmatpush1.msra.mxu0 0.0
        %6042 = vmatprep.subr.mxu0 0.0
        %6043 = vmatpush1.msra.mxu0 0.0
        %6044 = vmatprep.subr.mxu0 0.0
        %6045 = vmatpush1.msra.mxu0 0.0
        %6046 = vmatprep.subr.mxu0 0.0
        %6047 = vmatpush1.msra.mxu0 0.0
        %6048 = vmatprep.subr.mxu0 0.0
        %6049 = vmatpush1.msra.mxu0 0.0
        %6050 = vmatprep.subr.mxu0 0.0
        %6051 = vmatpush1.msra.mxu0 0.0
        %6052 = vmatprep.subr.mxu0 0.0
        %6053 = vmatpush1.msra.mxu0 0.0
        %6054 = vmatprep.subr.mxu0 0.0
        %6055 = vmatpush1.msra.mxu0 0.0
        %6056 = vmatprep.subr.mxu0 0.0
        %6057 = vmatpush1.msra.mxu0 0.0
        %6058 = vmatprep.subr.mxu0 0.0
        %6059 = vmatpush1.msra.mxu0 0.0
        %6060 = vmatprep.subr.mxu0 0.0
        %6061 = vmatpush1.msra.mxu0 0.0
        %6062 = vmatprep.subr.mxu0 0.0
        %6063 = vmatpush1.msra.mxu0 0.0
        %6064 = vmatprep.subr.mxu0 0.0
        %6065 = vmatpush1.msra.mxu0 0.0
        %6066 = vmatprep.subr.mxu0 0.0
        %6067 = vmatpush1.msra.mxu0 0.0
        %6068 = vmatprep.subr.mxu0 0.0
        %6069 = vmatpush1.msra.mxu0 0.0
        %6070 = vmatprep.subr.mxu0 0.0
        %6071 = vmatpush1.msra.mxu0 0.0
        %6072 = vmatprep.subr.mxu0 0.0
        %6073 = vmatpush1.msra.mxu0 0.0
        %6074 = vmatprep.subr.mxu0 0.0
        %6075 = vmatpush1.msra.mxu0 0.0
        %6076 = vmatprep.subr.mxu0 0.0
        %6077 = vmatpush1.msra.mxu0 0.0
        %6078 = vmatprep.subr.mxu0 0.0
        %6079 = vmatpush1.msra.mxu0 0.0
        %6080 = vmatprep.subr.mxu0 0.0
        %6081 = vmatpush1.msra.mxu0 0.0
        %6082 = vmatprep.subr.mxu0 0.0
        %6083 = vmatpush1.msra.mxu0 0.0
        %6084 = vmatprep.mubr.f32.mxu0 0.0
        %v6085 = vand.u32 %v4222, 4294901760
        %v6086 = vsub.f32 %v4222, %v6085
        %6087 = vmatmul.mubr.f32.gmra.mrb[0].mxu0 %v6086
        %v6088 = vpop.f32.mrb[0].mxu0
        %v6089 = vadd.f32 %v6000, %v6088
        %v6090 = vpop.f32.mrb[0].mxu0
        %v6091 = vadd.f32 %v6002, %v6090
        %6092 = vdwg.mxu0
        %v6093 = vand.u32 %v5797, 4294901760
        %6094 = vmatprep.subr.mxu0 %v6093
        %v6095 = vand.u32 %v5796, 4294901760
        %6096 = vmatpush1.msra.mxu0 %v6095
        %v6097 = vand.u32 %v5800, 4294901760
        %6098 = vmatprep.subr.mxu0 %v6097
        %v6099 = vand.u32 %v5799, 4294901760
        %6100 = vmatpush1.msra.mxu0 %v6099
        %v6101 = vand.u32 %v5803, 4294901760
        %6102 = vmatprep.subr.mxu0 %v6101
        %v6103 = vand.u32 %v5802, 4294901760
        %6104 = vmatpush1.msra.mxu0 %v6103
        %v6105 = vand.u32 %v5806, 4294901760
        %6106 = vmatprep.subr.mxu0 %v6105
        %v6107 = vand.u32 %v5805, 4294901760
        %6108 = vmatpush1.msra.mxu0 %v6107
        %6109 = vmatprep.subr.mxu0 0.0
        %6110 = vmatpush1.msra.mxu0 0.0
        %6111 = vmatprep.subr.mxu0 0.0
        %6112 = vmatpush1.msra.mxu0 0.0
        %6113 = vmatprep.subr.mxu0 0.0
        %6114 = vmatpush1.msra.mxu0 0.0
        %6115 = vmatprep.subr.mxu0 0.0
        %6116 = vmatpush1.msra.mxu0 0.0
        %6117 = vmatprep.subr.mxu0 0.0
        %6118 = vmatpush1.msra.mxu0 0.0
        %6119 = vmatprep.subr.mxu0 0.0
        %6120 = vmatpush1.msra.mxu0 0.0
        %6121 = vmatprep.subr.mxu0 0.0
        %6122 = vmatpush1.msra.mxu0 0.0
        %6123 = vmatprep.subr.mxu0 0.0
        %6124 = vmatpush1.msra.mxu0 0.0
        %6125 = vmatprep.subr.mxu0 0.0
        %6126 = vmatpush1.msra.mxu0 0.0
        %6127 = vmatprep.subr.mxu0 0.0
        %6128 = vmatpush1.msra.mxu0 0.0
        %6129 = vmatprep.subr.mxu0 0.0
        %6130 = vmatpush1.msra.mxu0 0.0
        %6131 = vmatprep.subr.mxu0 0.0
        %6132 = vmatpush1.msra.mxu0 0.0
        %6133 = vmatprep.subr.mxu0 0.0
        %6134 = vmatpush1.msra.mxu0 0.0
        %6135 = vmatprep.subr.mxu0 0.0
        %6136 = vmatpush1.msra.mxu0 0.0
        %6137 = vmatprep.subr.mxu0 0.0
        %6138 = vmatpush1.msra.mxu0 0.0
        %6139 = vmatprep.subr.mxu0 0.0
        %6140 = vmatpush1.msra.mxu0 0.0
        %6141 = vmatprep.subr.mxu0 0.0
        %6142 = vmatpush1.msra.mxu0 0.0
        %6143 = vmatprep.subr.mxu0 0.0
        %6144 = vmatpush1.msra.mxu0 0.0
        %6145 = vmatprep.subr.mxu0 0.0
        %6146 = vmatpush1.msra.mxu0 0.0
        %6147 = vmatprep.subr.mxu0 0.0
        %6148 = vmatpush1.msra.mxu0 0.0
        %6149 = vmatprep.subr.mxu0 0.0
        %6150 = vmatpush1.msra.mxu0 0.0
        %6151 = vmatprep.subr.mxu0 0.0
        %6152 = vmatpush1.msra.mxu0 0.0
        %6153 = vmatprep.subr.mxu0 0.0
        %6154 = vmatpush1.msra.mxu0 0.0
        %6155 = vmatprep.subr.mxu0 0.0
        %6156 = vmatpush1.msra.mxu0 0.0
        %6157 = vmatprep.subr.mxu0 0.0
        %6158 = vmatpush1.msra.mxu0 0.0
        %6159 = vmatprep.subr.mxu0 0.0
        %6160 = vmatpush1.msra.mxu0 0.0
        %6161 = vmatprep.subr.mxu0 0.0
        %6162 = vmatpush1.msra.mxu0 0.0
        %6163 = vmatprep.subr.mxu0 0.0
        %6164 = vmatpush1.msra.mxu0 0.0
        %6165 = vmatprep.mubr.f32.mxu0 0.0
        %v6166 = vand.u32 %v4222, 4294901760
        %v6167 = vsub.f32 %v4222, %v6166
        %v6168 = vand.u32 %v6167, 4294901760
        %6169 = vmatmul.mubr.f32.gmra.mrb[0].mxu0 %v6168
        %v6170 = vpop.f32.mrb[0].mxu0
        %v6171 = vadd.f32 %v6089, %v6170
        %v6172 = vpop.f32.mrb[0].mxu0
        %v6173 = vadd.f32 %v6091, %v6172
        %6174 = vdwg.mxu0
        %v6175 = vand.u32 %v5797, 4294901760
        %v6176 = vsub.f32 %v5797, %v6175
        %v6177 = vand.u32 %v6176, 4294901760
        %6178 = vmatprep.subr.mxu0 %v6177
        %v6179 = vand.u32 %v5796, 4294901760
        %v6180 = vsub.f32 %v5796, %v6179
        %v6181 = vand.u32 %v6180, 4294901760
        %6182 = vmatpush1.msra.mxu0 %v6181
        %v6183 = vand.u32 %v5800, 4294901760
        %v6184 = vsub.f32 %v5800, %v6183
        %v6185 = vand.u32 %v6184, 4294901760
        %6186 = vmatprep.subr.mxu0 %v6185
        %v6187 = vand.u32 %v5799, 4294901760
        %v6188 = vsub.f32 %v5799, %v6187
        %v6189 = vand.u32 %v6188, 4294901760
        %6190 = vmatpush1.msra.mxu0 %v6189
        %v6191 = vand.u32 %v5803, 4294901760
        %v6192 = vsub.f32 %v5803, %v6191
        %v6193 = vand.u32 %v6192, 4294901760
        %6194 = vmatprep.subr.mxu0 %v6193
        %v6195 = vand.u32 %v5802, 4294901760
        %v6196 = vsub.f32 %v5802, %v6195
        %v6197 = vand.u32 %v6196, 4294901760
        %6198 = vmatpush1.msra.mxu0 %v6197
        %v6199 = vand.u32 %v5806, 4294901760
        %v6200 = vsub.f32 %v5806, %v6199
        %v6201 = vand.u32 %v6200, 4294901760
        %6202 = vmatprep.subr.mxu0 %v6201
        %v6203 = vand.u32 %v5805, 4294901760
        %v6204 = vsub.f32 %v5805, %v6203
        %v6205 = vand.u32 %v6204, 4294901760
        %6206 = vmatpush1.msra.mxu0 %v6205
        %6207 = vmatprep.subr.mxu0 0.0
        %6208 = vmatpush1.msra.mxu0 0.0
        %6209 = vmatprep.subr.mxu0 0.0
        %6210 = vmatpush1.msra.mxu0 0.0
        %6211 = vmatprep.subr.mxu0 0.0
        %6212 = vmatpush1.msra.mxu0 0.0
        %6213 = vmatprep.subr.mxu0 0.0
        %6214 = vmatpush1.msra.mxu0 0.0
        %6215 = vmatprep.subr.mxu0 0.0
        %6216 = vmatpush1.msra.mxu0 0.0
        %6217 = vmatprep.subr.mxu0 0.0
        %6218 = vmatpush1.msra.mxu0 0.0
        %6219 = vmatprep.subr.mxu0 0.0
        %6220 = vmatpush1.msra.mxu0 0.0
        %6221 = vmatprep.subr.mxu0 0.0
        %6222 = vmatpush1.msra.mxu0 0.0
        %6223 = vmatprep.subr.mxu0 0.0
        %6224 = vmatpush1.msra.mxu0 0.0
        %6225 = vmatprep.subr.mxu0 0.0
        %6226 = vmatpush1.msra.mxu0 0.0
        %6227 = vmatprep.subr.mxu0 0.0
        %6228 = vmatpush1.msra.mxu0 0.0
        %6229 = vmatprep.subr.mxu0 0.0
        %6230 = vmatpush1.msra.mxu0 0.0
        %6231 = vmatprep.subr.mxu0 0.0
        %6232 = vmatpush1.msra.mxu0 0.0
        %6233 = vmatprep.subr.mxu0 0.0
        %6234 = vmatpush1.msra.mxu0 0.0
        %6235 = vmatprep.subr.mxu0 0.0
        %6236 = vmatpush1.msra.mxu0 0.0
        %6237 = vmatprep.subr.mxu0 0.0
        %6238 = vmatpush1.msra.mxu0 0.0
        %6239 = vmatprep.subr.mxu0 0.0
        %6240 = vmatpush1.msra.mxu0 0.0
        %6241 = vmatprep.subr.mxu0 0.0
        %6242 = vmatpush1.msra.mxu0 0.0
        %6243 = vmatprep.subr.mxu0 0.0
        %6244 = vmatpush1.msra.mxu0 0.0
        %6245 = vmatprep.subr.mxu0 0.0
        %6246 = vmatpush1.msra.mxu0 0.0
        %6247 = vmatprep.subr.mxu0 0.0
        %6248 = vmatpush1.msra.mxu0 0.0
        %6249 = vmatprep.subr.mxu0 0.0
        %6250 = vmatpush1.msra.mxu0 0.0
        %6251 = vmatprep.subr.mxu0 0.0
        %6252 = vmatpush1.msra.mxu0 0.0
        %6253 = vmatprep.subr.mxu0 0.0
        %6254 = vmatpush1.msra.mxu0 0.0
        %6255 = vmatprep.subr.mxu0 0.0
        %6256 = vmatpush1.msra.mxu0 0.0
        %6257 = vmatprep.subr.mxu0 0.0
        %6258 = vmatpush1.msra.mxu0 0.0
        %6259 = vmatprep.subr.mxu0 0.0
        %6260 = vmatpush1.msra.mxu0 0.0
        %6261 = vmatprep.subr.mxu0 0.0
        %6262 = vmatpush1.msra.mxu0 0.0
        %6263 = vmatprep.mubr.f32.mxu0 0.0
        %v6264 = vand.u32 %v4222, 4294901760
        %6265 = vmatmul.mubr.f32.gmra.mrb[0].mxu0 %v6264
        %v6266 = vpop.f32.mrb[0].mxu0
        %v6267 = vadd.f32 %v6171, %v6266
        %v6268 = vpop.f32.mrb[0].mxu0
        %v6269 = vadd.f32 %v6173, %v6268
        %6270 = vdwg.mxu0
        %v6271 = vand.u32 %v5797, 4294901760
        %6272 = vmatprep.subr.mxu0 %v6271
        %v6273 = vand.u32 %v5796, 4294901760
        %6274 = vmatpush1.msra.mxu0 %v6273
        %v6275 = vand.u32 %v5800, 4294901760
        %6276 = vmatprep.subr.mxu0 %v6275
        %v6277 = vand.u32 %v5799, 4294901760
        %6278 = vmatpush1.msra.mxu0 %v6277
        %v6279 = vand.u32 %v5803, 4294901760
        %6280 = vmatprep.subr.mxu0 %v6279
        %v6281 = vand.u32 %v5802, 4294901760
        %6282 = vmatpush1.msra.mxu0 %v6281
        %v6283 = vand.u32 %v5806, 4294901760
        %6284 = vmatprep.subr.mxu0 %v6283
        %v6285 = vand.u32 %v5805, 4294901760
        %6286 = vmatpush1.msra.mxu0 %v6285
        %6287 = vmatprep.subr.mxu0 0.0
        %6288 = vmatpush1.msra.mxu0 0.0
        %6289 = vmatprep.subr.mxu0 0.0
        %6290 = vmatpush1.msra.mxu0 0.0
        %6291 = vmatprep.subr.mxu0 0.0
        %6292 = vmatpush1.msra.mxu0 0.0
        %6293 = vmatprep.subr.mxu0 0.0
        %6294 = vmatpush1.msra.mxu0 0.0
        %6295 = vmatprep.subr.mxu0 0.0
        %6296 = vmatpush1.msra.mxu0 0.0
        %6297 = vmatprep.subr.mxu0 0.0
        %6298 = vmatpush1.msra.mxu0 0.0
        %6299 = vmatprep.subr.mxu0 0.0
        %6300 = vmatpush1.msra.mxu0 0.0
        %6301 = vmatprep.subr.mxu0 0.0
        %6302 = vmatpush1.msra.mxu0 0.0
        %6303 = vmatprep.subr.mxu0 0.0
        %6304 = vmatpush1.msra.mxu0 0.0
        %6305 = vmatprep.subr.mxu0 0.0
        %6306 = vmatpush1.msra.mxu0 0.0
        %6307 = vmatprep.subr.mxu0 0.0
        %6308 = vmatpush1.msra.mxu0 0.0
        %6309 = vmatprep.subr.mxu0 0.0
        %6310 = vmatpush1.msra.mxu0 0.0
        %6311 = vmatprep.subr.mxu0 0.0
        %6312 = vmatpush1.msra.mxu0 0.0
        %6313 = vmatprep.subr.mxu0 0.0
        %6314 = vmatpush1.msra.mxu0 0.0
        %6315 = vmatprep.subr.mxu0 0.0
        %6316 = vmatpush1.msra.mxu0 0.0
        %6317 = vmatprep.subr.mxu0 0.0
        %6318 = vmatpush1.msra.mxu0 0.0
        %6319 = vmatprep.subr.mxu0 0.0
        %6320 = vmatpush1.msra.mxu0 0.0
        %6321 = vmatprep.subr.mxu0 0.0
        %6322 = vmatpush1.msra.mxu0 0.0
        %6323 = vmatprep.subr.mxu0 0.0
        %6324 = vmatpush1.msra.mxu0 0.0
        %6325 = vmatprep.subr.mxu0 0.0
        %6326 = vmatpush1.msra.mxu0 0.0
        %6327 = vmatprep.subr.mxu0 0.0
        %6328 = vmatpush1.msra.mxu0 0.0
        %6329 = vmatprep.subr.mxu0 0.0
        %6330 = vmatpush1.msra.mxu0 0.0
        %6331 = vmatprep.subr.mxu0 0.0
        %6332 = vmatpush1.msra.mxu0 0.0
        %6333 = vmatprep.subr.mxu0 0.0
        %6334 = vmatpush1.msra.mxu0 0.0
        %6335 = vmatprep.subr.mxu0 0.0
        %6336 = vmatpush1.msra.mxu0 0.0
        %6337 = vmatprep.subr.mxu0 0.0
        %6338 = vmatpush1.msra.mxu0 0.0
        %6339 = vmatprep.subr.mxu0 0.0
        %6340 = vmatpush1.msra.mxu0 0.0
        %6341 = vmatprep.subr.mxu0 0.0
        %6342 = vmatpush1.msra.mxu0 0.0
        %6343 = vmatprep.mubr.f32.mxu0 0.0
        %v6344 = vand.u32 %v4222, 4294901760
        %6345 = vmatmul.mubr.f32.gmra.mrb[0].mxu0 %v6344
        %v6346 = vpop.f32.mrb[0].mxu0
        %v6347 = vadd.f32 %v6267, %v6346
        %v6348 = vpop.f32.mrb[0].mxu0
        %v6349 = vadd.f32 %v6269, %v6348
        %6350 = vdwg.mxu0
        %6351 = vmatprep.subr.mxu0 0.0
        %v6352 = vand.u32 %v5798, 4294901760
        %6353 = vmatpush1.msra.mxu0 %v6352
        %6354 = vmatprep.subr.mxu0 0.0
        %v6355 = vand.u32 %v5801, 4294901760
        %6356 = vmatpush1.msra.mxu0 %v6355
        %6357 = vmatprep.subr.mxu0 0.0
        %v6358 = vand.u32 %v5804, 4294901760
        %6359 = vmatpush1.msra.mxu0 %v6358
        %6360 = vmatprep.subr.mxu0 0.0
        %v6361 = vand.u32 %v5807, 4294901760
        %6362 = vmatpush1.msra.mxu0 %v6361
        %6363 = vmatprep.subr.mxu0 0.0
        %6364 = vmatpush1.msra.mxu0 0.0
        %6365 = vmatprep.subr.mxu0 0.0
        %6366 = vmatpush1.msra.mxu0 0.0
        %6367 = vmatprep.subr.mxu0 0.0
        %6368 = vmatpush1.msra.mxu0 0.0
        %6369 = vmatprep.subr.mxu0 0.0
        %6370 = vmatpush1.msra.mxu0 0.0
        %6371 = vmatprep.subr.mxu0 0.0
        %6372 = vmatpush1.msra.mxu0 0.0
        %6373 = vmatprep.subr.mxu0 0.0
        %6374 = vmatpush1.msra.mxu0 0.0
        %6375 = vmatprep.subr.mxu0 0.0
        %6376 = vmatpush1.msra.mxu0 0.0
        %6377 = vmatprep.subr.mxu0 0.0
        %6378 = vmatpush1.msra.mxu0 0.0
        %6379 = vmatprep.subr.mxu0 0.0
        %6380 = vmatpush1.msra.mxu0 0.0
        %6381 = vmatprep.subr.mxu0 0.0
        %6382 = vmatpush1.msra.mxu0 0.0
        %6383 = vmatprep.subr.mxu0 0.0
        %6384 = vmatpush1.msra.mxu0 0.0
        %6385 = vmatprep.subr.mxu0 0.0
        %6386 = vmatpush1.msra.mxu0 0.0
        %6387 = vmatprep.subr.mxu0 0.0
        %6388 = vmatpush1.msra.mxu0 0.0
        %6389 = vmatprep.subr.mxu0 0.0
        %6390 = vmatpush1.msra.mxu0 0.0
        %6391 = vmatprep.subr.mxu0 0.0
        %6392 = vmatpush1.msra.mxu0 0.0
        %6393 = vmatprep.subr.mxu0 0.0
        %6394 = vmatpush1.msra.mxu0 0.0
        %6395 = vmatprep.subr.mxu0 0.0
        %6396 = vmatpush1.msra.mxu0 0.0
        %6397 = vmatprep.subr.mxu0 0.0
        %6398 = vmatpush1.msra.mxu0 0.0
        %6399 = vmatprep.subr.mxu0 0.0
        %6400 = vmatpush1.msra.mxu0 0.0
        %6401 = vmatprep.subr.mxu0 0.0
        %6402 = vmatpush1.msra.mxu0 0.0
        %6403 = vmatprep.subr.mxu0 0.0
        %6404 = vmatpush1.msra.mxu0 0.0
        %6405 = vmatprep.subr.mxu0 0.0
        %6406 = vmatpush1.msra.mxu0 0.0
        %6407 = vmatprep.subr.mxu0 0.0
        %6408 = vmatpush1.msra.mxu0 0.0
        %6409 = vmatprep.subr.mxu0 0.0
        %6410 = vmatpush1.msra.mxu0 0.0
        %6411 = vmatprep.subr.mxu0 0.0
        %6412 = vmatpush1.msra.mxu0 0.0
        %6413 = vmatprep.subr.mxu0 0.0
        %6414 = vmatpush1.msra.mxu0 0.0
        %6415 = vmatprep.subr.mxu0 0.0
        %6416 = vmatpush1.msra.mxu0 0.0
        %6417 = vmatprep.subr.mxu0 0.0
        %6418 = vmatpush1.msra.mxu0 0.0
        %6419 = vmatprep.mubr.f32.mxu0 0.0
        %v6420 = vand.u32 %v4222, 4294901760
        %v6421 = vsub.f32 %v4222, %v6420
        %v6422 = vand.u32 %v6421, 4294901760
        %v6423 = vsub.f32 %v6421, %v6422
        %v6424 = vand.u32 %v6423, 4294901760
        %6425 = vmatmul.mubr.f32.gmra.mrb[0].mxu0 %v6424
        %v6426 = vpop.f32.mrb[0].mxu0
        %v6427 = vadd.f32 0.0, %v6426
        %v6428 = vpop.f32.mrb[0].mxu0
        %6429 = vdwg.mxu0
        %6430 = vmatprep.subr.mxu0 0.0
        %v6431 = vand.u32 %v5798, 4294901760
        %v6432 = vsub.f32 %v5798, %v6431
        %v6433 = vand.u32 %v6432, 4294901760
        %v6434 = vsub.f32 %v6432, %v6433
        %v6435 = vand.u32 %v6434, 4294901760
        %6436 = vmatpush1.msra.mxu0 %v6435
        %6437 = vmatprep.subr.mxu0 0.0
        %v6438 = vand.u32 %v5801, 4294901760
        %v6439 = vsub.f32 %v5801, %v6438
        %v6440 = vand.u32 %v6439, 4294901760
        %v6441 = vsub.f32 %v6439, %v6440
        %v6442 = vand.u32 %v6441, 4294901760
        %6443 = vmatpush1.msra.mxu0 %v6442
        %6444 = vmatprep.subr.mxu0 0.0
        %v6445 = vand.u32 %v5804, 4294901760
        %v6446 = vsub.f32 %v5804, %v6445
        %v6447 = vand.u32 %v6446, 4294901760
        %v6448 = vsub.f32 %v6446, %v6447
        %v6449 = vand.u32 %v6448, 4294901760
        %6450 = vmatpush1.msra.mxu0 %v6449
        %6451 = vmatprep.subr.mxu0 0.0
        %v6452 = vand.u32 %v5807, 4294901760
        %v6453 = vsub.f32 %v5807, %v6452
        %v6454 = vand.u32 %v6453, 4294901760
        %v6455 = vsub.f32 %v6453, %v6454
        %v6456 = vand.u32 %v6455, 4294901760
        %6457 = vmatpush1.msra.mxu0 %v6456
        %6458 = vmatprep.subr.mxu0 0.0
        %6459 = vmatpush1.msra.mxu0 0.0
        %6460 = vmatprep.subr.mxu0 0.0
        %6461 = vmatpush1.msra.mxu0 0.0
        %6462 = vmatprep.subr.mxu0 0.0
        %6463 = vmatpush1.msra.mxu0 0.0
        %6464 = vmatprep.subr.mxu0 0.0
        %6465 = vmatpush1.msra.mxu0 0.0
        %6466 = vmatprep.subr.mxu0 0.0
        %6467 = vmatpush1.msra.mxu0 0.0
        %6468 = vmatprep.subr.mxu0 0.0
        %6469 = vmatpush1.msra.mxu0 0.0
        %6470 = vmatprep.subr.mxu0 0.0
        %6471 = vmatpush1.msra.mxu0 0.0
        %6472 = vmatprep.subr.mxu0 0.0
        %6473 = vmatpush1.msra.mxu0 0.0
        %6474 = vmatprep.subr.mxu0 0.0
        %6475 = vmatpush1.msra.mxu0 0.0
        %6476 = vmatprep.subr.mxu0 0.0
        %6477 = vmatpush1.msra.mxu0 0.0
        %6478 = vmatprep.subr.mxu0 0.0
        %6479 = vmatpush1.msra.mxu0 0.0
        %6480 = vmatprep.subr.mxu0 0.0
        %6481 = vmatpush1.msra.mxu0 0.0
        %6482 = vmatprep.subr.mxu0 0.0
        %6483 = vmatpush1.msra.mxu0 0.0
        %6484 = vmatprep.subr.mxu0 0.0
        %6485 = vmatpush1.msra.mxu0 0.0
        %6486 = vmatprep.subr.mxu0 0.0
        %6487 = vmatpush1.msra.mxu0 0.0
        %6488 = vmatprep.subr.mxu0 0.0
        %6489 = vmatpush1.msra.mxu0 0.0
        %6490 = vmatprep.subr.mxu0 0.0
        %6491 = vmatpush1.msra.mxu0 0.0
        %6492 = vmatprep.subr.mxu0 0.0
        %6493 = vmatpush1.msra.mxu0 0.0
        %6494 = vmatprep.subr.mxu0 0.0
        %6495 = vmatpush1.msra.mxu0 0.0
        %6496 = vmatprep.subr.mxu0 0.0
        %6497 = vmatpush1.msra.mxu0 0.0
        %6498 = vmatprep.subr.mxu0 0.0
        %6499 = vmatpush1.msra.mxu0 0.0
        %6500 = vmatprep.subr.mxu0 0.0
        %6501 = vmatpush1.msra.mxu0 0.0
        %6502 = vmatprep.subr.mxu0 0.0
        %6503 = vmatpush1.msra.mxu0 0.0
        %6504 = vmatprep.subr.mxu0 0.0
        %6505 = vmatpush1.msra.mxu0 0.0
        %6506 = vmatprep.subr.mxu0 0.0
        %6507 = vmatpush1.msra.mxu0 0.0
        %6508 = vmatprep.subr.mxu0 0.0
        %6509 = vmatpush1.msra.mxu0 0.0
        %6510 = vmatprep.subr.mxu0 0.0
        %6511 = vmatpush1.msra.mxu0 0.0
        %6512 = vmatprep.subr.mxu0 0.0
        %6513 = vmatpush1.msra.mxu0 0.0
        %6514 = vmatprep.mubr.f32.mxu0 0.0
        %v6515 = vand.u32 %v4222, 4294901760
        %6516 = vmatmul.mubr.f32.gmra.mrb[0].mxu0 %v6515
        %v6517 = vpop.f32.mrb[0].mxu0
        %v6518 = vadd.f32 %v6427, %v6517
        %v6519 = vpop.f32.mrb[0].mxu0
        %6520 = vdwg.mxu0
        %6521 = vmatprep.subr.mxu0 0.0
        %v6522 = vand.u32 %v5798, 4294901760
        %v6523 = vsub.f32 %v5798, %v6522
        %6524 = vmatpush1.msra.mxu0 %v6523
        %6525 = vmatprep.subr.mxu0 0.0
        %v6526 = vand.u32 %v5801, 4294901760
        %v6527 = vsub.f32 %v5801, %v6526
        %6528 = vmatpush1.msra.mxu0 %v6527
        %6529 = vmatprep.subr.mxu0 0.0
        %v6530 = vand.u32 %v5804, 4294901760
        %v6531 = vsub.f32 %v5804, %v6530
        %6532 = vmatpush1.msra.mxu0 %v6531
        %6533 = vmatprep.subr.mxu0 0.0
        %v6534 = vand.u32 %v5807, 4294901760
        %v6535 = vsub.f32 %v5807, %v6534
        %6536 = vmatpush1.msra.mxu0 %v6535
        %6537 = vmatprep.subr.mxu0 0.0
        %6538 = vmatpush1.msra.mxu0 0.0
        %6539 = vmatprep.subr.mxu0 0.0
        %6540 = vmatpush1.msra.mxu0 0.0
        %6541 = vmatprep.subr.mxu0 0.0
        %6542 = vmatpush1.msra.mxu0 0.0
        %6543 = vmatprep.subr.mxu0 0.0
        %6544 = vmatpush1.msra.mxu0 0.0
        %6545 = vmatprep.subr.mxu0 0.0
        %6546 = vmatpush1.msra.mxu0 0.0
        %6547 = vmatprep.subr.mxu0 0.0
        %6548 = vmatpush1.msra.mxu0 0.0
        %6549 = vmatprep.subr.mxu0 0.0
        %6550 = vmatpush1.msra.mxu0 0.0
        %6551 = vmatprep.subr.mxu0 0.0
        %6552 = vmatpush1.msra.mxu0 0.0
        %6553 = vmatprep.subr.mxu0 0.0
        %6554 = vmatpush1.msra.mxu0 0.0
        %6555 = vmatprep.subr.mxu0 0.0
        %6556 = vmatpush1.msra.mxu0 0.0
        %6557 = vmatprep.subr.mxu0 0.0
        %6558 = vmatpush1.msra.mxu0 0.0
        %6559 = vmatprep.subr.mxu0 0.0
        %6560 = vmatpush1.msra.mxu0 0.0
        %6561 = vmatprep.subr.mxu0 0.0
        %6562 = vmatpush1.msra.mxu0 0.0
        %6563 = vmatprep.subr.mxu0 0.0
        %6564 = vmatpush1.msra.mxu0 0.0
        %6565 = vmatprep.subr.mxu0 0.0
        %6566 = vmatpush1.msra.mxu0 0.0
        %6567 = vmatprep.subr.mxu0 0.0
        %6568 = vmatpush1.msra.mxu0 0.0
        %6569 = vmatprep.subr.mxu0 0.0
        %6570 = vmatpush1.msra.mxu0 0.0
        %6571 = vmatprep.subr.mxu0 0.0
        %6572 = vmatpush1.msra.mxu0 0.0
        %6573 = vmatprep.subr.mxu0 0.0
        %6574 = vmatpush1.msra.mxu0 0.0
        %6575 = vmatprep.subr.mxu0 0.0
        %6576 = vmatpush1.msra.mxu0 0.0
        %6577 = vmatprep.subr.mxu0 0.0
        %6578 = vmatpush1.msra.mxu0 0.0
        %6579 = vmatprep.subr.mxu0 0.0
        %6580 = vmatpush1.msra.mxu0 0.0
        %6581 = vmatprep.subr.mxu0 0.0
        %6582 = vmatpush1.msra.mxu0 0.0
        %6583 = vmatprep.subr.mxu0 0.0
        %6584 = vmatpush1.msra.mxu0 0.0
        %6585 = vmatprep.subr.mxu0 0.0
        %6586 = vmatpush1.msra.mxu0 0.0
        %6587 = vmatprep.subr.mxu0 0.0
        %6588 = vmatpush1.msra.mxu0 0.0
        %6589 = vmatprep.subr.mxu0 0.0
        %6590 = vmatpush1.msra.mxu0 0.0
        %6591 = vmatprep.subr.mxu0 0.0
        %6592 = vmatpush1.msra.mxu0 0.0
        %6593 = vmatprep.mubr.f32.mxu0 0.0
        %v6594 = vand.u32 %v4222, 4294901760
        %v6595 = vsub.f32 %v4222, %v6594
        %6596 = vmatmul.mubr.f32.gmra.mrb[0].mxu0 %v6595
        %v6597 = vpop.f32.mrb[0].mxu0
        %v6598 = vadd.f32 %v6518, %v6597
        %v6599 = vpop.f32.mrb[0].mxu0
        %6600 = vdwg.mxu0
        %6601 = vmatprep.subr.mxu0 0.0
        %v6602 = vand.u32 %v5798, 4294901760
        %6603 = vmatpush1.msra.mxu0 %v6602
        %6604 = vmatprep.subr.mxu0 0.0
        %v6605 = vand.u32 %v5801, 4294901760
        %6606 = vmatpush1.msra.mxu0 %v6605
        %6607 = vmatprep.subr.mxu0 0.0
        %v6608 = vand.u32 %v5804, 4294901760
        %6609 = vmatpush1.msra.mxu0 %v6608
        %6610 = vmatprep.subr.mxu0 0.0
        %v6611 = vand.u32 %v5807, 4294901760
        %6612 = vmatpush1.msra.mxu0 %v6611
        %6613 = vmatprep.subr.mxu0 0.0
        %6614 = vmatpush1.msra.mxu0 0.0
        %6615 = vmatprep.subr.mxu0 0.0
        %6616 = vmatpush1.msra.mxu0 0.0
        %6617 = vmatprep.subr.mxu0 0.0
        %6618 = vmatpush1.msra.mxu0 0.0
        %6619 = vmatprep.subr.mxu0 0.0
        %6620 = vmatpush1.msra.mxu0 0.0
        %6621 = vmatprep.subr.mxu0 0.0
        %6622 = vmatpush1.msra.mxu0 0.0
        %6623 = vmatprep.subr.mxu0 0.0
        %6624 = vmatpush1.msra.mxu0 0.0
        %6625 = vmatprep.subr.mxu0 0.0
        %6626 = vmatpush1.msra.mxu0 0.0
        %6627 = vmatprep.subr.mxu0 0.0
        %6628 = vmatpush1.msra.mxu0 0.0
        %6629 = vmatprep.subr.mxu0 0.0
        %6630 = vmatpush1.msra.mxu0 0.0
        %6631 = vmatprep.subr.mxu0 0.0
        %6632 = vmatpush1.msra.mxu0 0.0
        %6633 = vmatprep.subr.mxu0 0.0
        %6634 = vmatpush1.msra.mxu0 0.0
        %6635 = vmatprep.subr.mxu0 0.0
        %6636 = vmatpush1.msra.mxu0 0.0
        %6637 = vmatprep.subr.mxu0 0.0
        %6638 = vmatpush1.msra.mxu0 0.0
        %6639 = vmatprep.subr.mxu0 0.0
        %6640 = vmatpush1.msra.mxu0 0.0
        %6641 = vmatprep.subr.mxu0 0.0
        %6642 = vmatpush1.msra.mxu0 0.0
        %6643 = vmatprep.subr.mxu0 0.0
        %6644 = vmatpush1.msra.mxu0 0.0
        %6645 = vmatprep.subr.mxu0 0.0
        %6646 = vmatpush1.msra.mxu0 0.0
        %6647 = vmatprep.subr.mxu0 0.0
        %6648 = vmatpush1.msra.mxu0 0.0
        %6649 = vmatprep.subr.mxu0 0.0
        %6650 = vmatpush1.msra.mxu0 0.0
        %6651 = vmatprep.subr.mxu0 0.0
        %6652 = vmatpush1.msra.mxu0 0.0
        %6653 = vmatprep.subr.mxu0 0.0
        %6654 = vmatpush1.msra.mxu0 0.0
        %6655 = vmatprep.subr.mxu0 0.0
        %6656 = vmatpush1.msra.mxu0 0.0
        %6657 = vmatprep.subr.mxu0 0.0
        %6658 = vmatpush1.msra.mxu0 0.0
        %6659 = vmatprep.subr.mxu0 0.0
        %6660 = vmatpush1.msra.mxu0 0.0
        %6661 = vmatprep.subr.mxu0 0.0
        %6662 = vmatpush1.msra.mxu0 0.0
        %6663 = vmatprep.subr.mxu0 0.0
        %6664 = vmatpush1.msra.mxu0 0.0
        %6665 = vmatprep.subr.mxu0 0.0
        %6666 = vmatpush1.msra.mxu0 0.0
        %6667 = vmatprep.subr.mxu0 0.0
        %6668 = vmatpush1.msra.mxu0 0.0
        %6669 = vmatprep.mubr.f32.mxu0 0.0
        %v6670 = vand.u32 %v4222, 4294901760
        %v6671 = vsub.f32 %v4222, %v6670
        %v6672 = vand.u32 %v6671, 4294901760
        %6673 = vmatmul.mubr.f32.gmra.mrb[0].mxu0 %v6672
        %v6674 = vpop.f32.mrb[0].mxu0
        %v6675 = vadd.f32 %v6598, %v6674
        %v6676 = vpop.f32.mrb[0].mxu0
        %6677 = vdwg.mxu0
        %6678 = vmatprep.subr.mxu0 0.0
        %v6679 = vand.u32 %v5798, 4294901760
        %v6680 = vsub.f32 %v5798, %v6679
        %v6681 = vand.u32 %v6680, 4294901760
        %6682 = vmatpush1.msra.mxu0 %v6681
        %6683 = vmatprep.subr.mxu0 0.0
        %v6684 = vand.u32 %v5801, 4294901760
        %v6685 = vsub.f32 %v5801, %v6684
        %v6686 = vand.u32 %v6685, 4294901760
        %6687 = vmatpush1.msra.mxu0 %v6686
        %6688 = vmatprep.subr.mxu0 0.0
        %v6689 = vand.u32 %v5804, 4294901760
        %v6690 = vsub.f32 %v5804, %v6689
        %v6691 = vand.u32 %v6690, 4294901760
        %6692 = vmatpush1.msra.mxu0 %v6691
        %6693 = vmatprep.subr.mxu0 0.0
        %v6694 = vand.u32 %v5807, 4294901760
        %v6695 = vsub.f32 %v5807, %v6694
        %v6696 = vand.u32 %v6695, 4294901760
        %6697 = vmatpush1.msra.mxu0 %v6696
        %6698 = vmatprep.subr.mxu0 0.0
        %6699 = vmatpush1.msra.mxu0 0.0
        %6700 = vmatprep.subr.mxu0 0.0
        %6701 = vmatpush1.msra.mxu0 0.0
        %6702 = vmatprep.subr.mxu0 0.0
        %6703 = vmatpush1.msra.mxu0 0.0
        %6704 = vmatprep.subr.mxu0 0.0
        %6705 = vmatpush1.msra.mxu0 0.0
        %6706 = vmatprep.subr.mxu0 0.0
        %6707 = vmatpush1.msra.mxu0 0.0
        %6708 = vmatprep.subr.mxu0 0.0
        %6709 = vmatpush1.msra.mxu0 0.0
        %6710 = vmatprep.subr.mxu0 0.0
        %6711 = vmatpush1.msra.mxu0 0.0
        %6712 = vmatprep.subr.mxu0 0.0
        %6713 = vmatpush1.msra.mxu0 0.0
        %6714 = vmatprep.subr.mxu0 0.0
        %6715 = vmatpush1.msra.mxu0 0.0
        %6716 = vmatprep.subr.mxu0 0.0
        %6717 = vmatpush1.msra.mxu0 0.0
        %6718 = vmatprep.subr.mxu0 0.0
        %6719 = vmatpush1.msra.mxu0 0.0
        %6720 = vmatprep.subr.mxu0 0.0
        %6721 = vmatpush1.msra.mxu0 0.0
        %6722 = vmatprep.subr.mxu0 0.0
        %6723 = vmatpush1.msra.mxu0 0.0
        %6724 = vmatprep.subr.mxu0 0.0
        %6725 = vmatpush1.msra.mxu0 0.0
        %6726 = vmatprep.subr.mxu0 0.0
        %6727 = vmatpush1.msra.mxu0 0.0
        %6728 = vmatprep.subr.mxu0 0.0
        %6729 = vmatpush1.msra.mxu0 0.0
        %6730 = vmatprep.subr.mxu0 0.0
        %6731 = vmatpush1.msra.mxu0 0.0
        %6732 = vmatprep.subr.mxu0 0.0
        %6733 = vmatpush1.msra.mxu0 0.0
        %6734 = vmatprep.subr.mxu0 0.0
        %6735 = vmatpush1.msra.mxu0 0.0
        %6736 = vmatprep.subr.mxu0 0.0
        %6737 = vmatpush1.msra.mxu0 0.0
        %6738 = vmatprep.subr.mxu0 0.0
        %6739 = vmatpush1.msra.mxu0 0.0
        %6740 = vmatprep.subr.mxu0 0.0
        %6741 = vmatpush1.msra.mxu0 0.0
        %6742 = vmatprep.subr.mxu0 0.0
        %6743 = vmatpush1.msra.mxu0 0.0
        %6744 = vmatprep.subr.mxu0 0.0
        %6745 = vmatpush1.msra.mxu0 0.0
        %6746 = vmatprep.subr.mxu0 0.0
        %6747 = vmatpush1.msra.mxu0 0.0
        %6748 = vmatprep.subr.mxu0 0.0
        %6749 = vmatpush1.msra.mxu0 0.0
        %6750 = vmatprep.subr.mxu0 0.0
        %6751 = vmatpush1.msra.mxu0 0.0
        %6752 = vmatprep.subr.mxu0 0.0
        %6753 = vmatpush1.msra.mxu0 0.0
        %6754 = vmatprep.mubr.f32.mxu0 0.0
        %v6755 = vand.u32 %v4222, 4294901760
        %6756 = vmatmul.mubr.f32.gmra.mrb[0].mxu0 %v6755
        %v6757 = vpop.f32.mrb[0].mxu0
        %v6758 = vadd.f32 %v6675, %v6757
        %v6759 = vpop.f32.mrb[0].mxu0
        %6760 = vdwg.mxu0
        %6761 = vmatprep.subr.mxu0 0.0
        %v6762 = vand.u32 %v5798, 4294901760
        %6763 = vmatpush1.msra.mxu0 %v6762
        %6764 = vmatprep.subr.mxu0 0.0
        %v6765 = vand.u32 %v5801, 4294901760
        %6766 = vmatpush1.msra.mxu0 %v6765
        %6767 = vmatprep.subr.mxu0 0.0
        %v6768 = vand.u32 %v5804, 4294901760
        %6769 = vmatpush1.msra.mxu0 %v6768
        %6770 = vmatprep.subr.mxu0 0.0
        %v6771 = vand.u32 %v5807, 4294901760
        %6772 = vmatpush1.msra.mxu0 %v6771
        %6773 = vmatprep.subr.mxu0 0.0
        %6774 = vmatpush1.msra.mxu0 0.0
        %6775 = vmatprep.subr.mxu0 0.0
        %6776 = vmatpush1.msra.mxu0 0.0
        %6777 = vmatprep.subr.mxu0 0.0
        %6778 = vmatpush1.msra.mxu0 0.0
        %6779 = vmatprep.subr.mxu0 0.0
        %6780 = vmatpush1.msra.mxu0 0.0
        %6781 = vmatprep.subr.mxu0 0.0
        %6782 = vmatpush1.msra.mxu0 0.0
        %6783 = vmatprep.subr.mxu0 0.0
        %6784 = vmatpush1.msra.mxu0 0.0
        %6785 = vmatprep.subr.mxu0 0.0
        %6786 = vmatpush1.msra.mxu0 0.0
        %6787 = vmatprep.subr.mxu0 0.0
        %6788 = vmatpush1.msra.mxu0 0.0
        %6789 = vmatprep.subr.mxu0 0.0
        %6790 = vmatpush1.msra.mxu0 0.0
        %6791 = vmatprep.subr.mxu0 0.0
        %6792 = vmatpush1.msra.mxu0 0.0
        %6793 = vmatprep.subr.mxu0 0.0
        %6794 = vmatpush1.msra.mxu0 0.0
        %6795 = vmatprep.subr.mxu0 0.0
        %6796 = vmatpush1.msra.mxu0 0.0
        %6797 = vmatprep.subr.mxu0 0.0
        %6798 = vmatpush1.msra.mxu0 0.0
        %6799 = vmatprep.subr.mxu0 0.0
        %6800 = vmatpush1.msra.mxu0 0.0
        %6801 = vmatprep.subr.mxu0 0.0
        %6802 = vmatpush1.msra.mxu0 0.0
        %6803 = vmatprep.subr.mxu0 0.0
        %6804 = vmatpush1.msra.mxu0 0.0
        %6805 = vmatprep.subr.mxu0 0.0
        %6806 = vmatpush1.msra.mxu0 0.0
        %6807 = vmatprep.subr.mxu0 0.0
        %6808 = vmatpush1.msra.mxu0 0.0
        %6809 = vmatprep.subr.mxu0 0.0
        %6810 = vmatpush1.msra.mxu0 0.0
        %6811 = vmatprep.subr.mxu0 0.0
        %6812 = vmatpush1.msra.mxu0 0.0
        %6813 = vmatprep.subr.mxu0 0.0
        %6814 = vmatpush1.msra.mxu0 0.0
        %6815 = vmatprep.subr.mxu0 0.0
        %6816 = vmatpush1.msra.mxu0 0.0
        %6817 = vmatprep.subr.mxu0 0.0
        %6818 = vmatpush1.msra.mxu0 0.0
        %6819 = vmatprep.subr.mxu0 0.0
        %6820 = vmatpush1.msra.mxu0 0.0
        %6821 = vmatprep.subr.mxu0 0.0
        %6822 = vmatpush1.msra.mxu0 0.0
        %6823 = vmatprep.subr.mxu0 0.0
        %6824 = vmatpush1.msra.mxu0 0.0
        %6825 = vmatprep.subr.mxu0 0.0
        %6826 = vmatpush1.msra.mxu0 0.0
        %6827 = vmatprep.subr.mxu0 0.0
        %6828 = vmatpush1.msra.mxu0 0.0
        %6829 = vmatprep.mubr.f32.mxu0 0.0
        %v6830 = vand.u32 %v4222, 4294901760
        %6831 = vmatmul.mubr.f32.gmra.mrb[0].mxu0 %v6830
        %v6832 = vpop.f32.mrb[0].mxu0
        %v6833 = vadd.f32 %v6758, %v6832
        %v6834 = vpop.f32.mrb[0].mxu0
        %6835 = vdwg.mxu0
        %v6836 = vld [vmem:[%s547] sm:$0xff]
        %v6837 = vld [vmem:[%s547 + $0x8] sm:$0xff]
        %v6838 = vld [vmem:[%s547 + $0x10] sm:$0xff]
        %v6839 = vmul.f32 %v6836, %v6347
        %v6840 = vmul.f32 %v6837, %v6349
        %v6841 = vmul.f32 %v6838, %v6833
        %v6842 = vld [vmem:[%s11] sm:$0x7]
        %v6844 = vlaneseq
        %v6845 = vshrl.u32 %v6844, 7
        %v6846 = vsub.s32 0, %v6845
        %v6847 = vrot.slane %v6842, %v6846
        %v6848 = vlaneseq
        %v6849 = vshrl.u32 %v6848, 7
        %v6850 = vsub.s32 1, %v6849
        %v6851 = vrot.slane %v6842, %v6850
        %v6852 = vlaneseq
        %v6853 = vshrl.u32 %v6852, 7
        %v6854 = vsub.s32 2, %v6853
        %v6855 = vrot.slane %v6842, %v6854
        %v6859 = vmul.f32 %v6839, %v6847
        %v6860 = vmul.f32 %v6840, %v6851
        %v6861 = vmul.f32 %v6841, %v6855
        %6862 = vst [vmem:[%s533] sm:$0xff] %v6859
        %6863 = vst [vmem:[%s533 + $0x8] sm:$0xff] %v6860
        %6864 = vst.msk [vmem:[%s533 + $0x10] sm:$0xff] %vm2810, %v6861
        %s6865 = sand.u32 %s329, 1
        %s6866 = scalar_lea.sflag [#allocation3], %s6865
        %s6867 = sand.u32 %s329, 1
        %s6868 = smul.addr %s6867, 8
        %s6869 = scalar_lea.vmem [#allocation2], %s6868
        %s6870 = sand.u32 %s33, 1
        %s6871 = scalar_lea.sflag [#allocation5], %s6870
        %s6872 = sand.u32 %s355, 1
        %s6873 = smul.addr %s6872, 24
        %s6874 = scalar_lea.vmem [#allocation4], %s6873
        %s6875 = sand.u32 %s33, 1
        %s6876 = scalar_lea.sflag [#allocation5], %s6875
        %s6877 = sand.u32 %s381, 1
        %s6878 = smul.addr %s6877, 24
        %s6879 = scalar_lea.vmem [#allocation6], %s6878
        // Predicated region
        $region73: #{tpu_custom_call.1} parent=71 // pred_check
          %p6880 = pneg %p339
        $region74: #{tpu_custom_call.1} parent=71 // pred_check_branch
          %6882 = sbr.rel (%p6880) target = $region76
        $region75: #{tpu_custom_call.1} parent=71 // pred_region
          %s6884 = ssub.s32 128, 128
          %6885 = vsyncadd %s6866, %s6884
          %s6886 = smul.addr %s33, 128
          %s6887 = scalar_lea.hbm %s13, %s6886
          %s6889 = sshll.u32 %s6869, 4
          %s6890 = int_to_ptr.vmem [resolvable:$true] %s6889
          %6892 = dma.vmem_to_hbm [thread:$0]  %s6890, 128, %s6887, %s6866
        $region76: #{tpu_custom_call.1} parent=71 // pred_fallthru
          _
        // Predicated region
        $region77: #{tpu_custom_call.1} parent=71 // pred_check
          %p6893 = pneg %p365
        $region78: #{tpu_custom_call.1} parent=71 // pred_check_branch
          %6895 = sbr.rel (%p6893) target = $region80
        $region79: #{tpu_custom_call.1} parent=71 // pred_region
          %s6897 = ssub.s32 384, 384
          %6898 = vsyncadd %s6871, %s6897
          %s6899 = smul.addr %s33, 3
          %s6900 = smul.addr %s6899, 128
          %s6901 = scalar_lea.hbm %s14, %s6900
          %s6903 = sshll.u32 %s6874, 4
          %s6904 = int_to_ptr.vmem [resolvable:$true] %s6903
          %6906 = dma.vmem_to_hbm [thread:$0]  %s6904, 384, %s6901, %s6871
        $region80: #{tpu_custom_call.1} parent=71 // pred_fallthru
          _
        // Predicated region
        $region81: #{tpu_custom_call.1} parent=71 // pred_check
          %p6907 = pneg %p391
        $region82: #{tpu_custom_call.1} parent=71 // pred_check_branch
          %6909 = sbr.rel (%p6907) target = $region84
        $region83: #{tpu_custom_call.1} parent=71 // pred_region
          %s6911 = ssub.s32 384, 384
          %6912 = vsyncadd %s6876, %s6911
          %s6913 = smul.addr %s33, 3
          %s6914 = smul.addr %s6913, 128
          %s6915 = scalar_lea.hbm %s15, %s6914
          %s6917 = sshll.u32 %s6879, 4
          %s6918 = int_to_ptr.vmem [resolvable:$true] %s6917
          %6920 = dma.vmem_to_hbm [thread:$0]  %s6918, 384, %s6915, %s6876
        $region84: #{tpu_custom_call.1} parent=71 // pred_fallthru
          _
      $region72: #{tpu_custom_call.1} parent=5 // pred_fallthru
        _
      %p6921 = scmp.le.s32.totalorder 2, %s28
      // Predicated region
      $region85: #{tpu_custom_call.1} parent=5 // pred_check
        %p6922 = pneg %p6921
      $region86: #{tpu_custom_call.1} parent=5 // pred_check_branch
        %6924 = sbr.rel (%p6922) target = $region88
      $region87: #{tpu_custom_call.1} parent=5 // pred_region
        %s6925 = ssub.s32 %s28, 2
        // Predicated region
        $region89: #{tpu_custom_call.1} parent=87 // pred_check
          %p6926 = pneg %p345
        $region90: #{tpu_custom_call.1} parent=87 // pred_check_branch
          %6928 = sbr.rel (%p6926) target = $region92
        $region91: #{tpu_custom_call.1} parent=87 // pred_region
          %s6929 = sand.u32 %s330, 1
          %s6930 = scalar_lea.sflag [#allocation3], %s6929
          %s6931 = sand.u32 %s330, 1
          %s6932 = smul.addr %s6931, 8
          %s6933 = scalar_lea.vmem [#allocation2], %s6932
          %6934 = dma.done %s6930, 128
        $region92: #{tpu_custom_call.1} parent=87 // pred_fallthru
          _
        // Predicated region
        $region93: #{tpu_custom_call.1} parent=87 // pred_check
          %p6935 = pneg %p371
        $region94: #{tpu_custom_call.1} parent=87 // pred_check_branch
          %6937 = sbr.rel (%p6935) target = $region96
        $region95: #{tpu_custom_call.1} parent=87 // pred_region
          %s6938 = sand.u32 %s34, 1
          %s6939 = scalar_lea.sflag [#allocation5], %s6938
          %s6940 = sand.u32 %s356, 1
          %s6941 = smul.addr %s6940, 24
          %s6942 = scalar_lea.vmem [#allocation4], %s6941
          %6943 = dma.done %s6939, 384
        $region96: #{tpu_custom_call.1} parent=87 // pred_fallthru
          _
        // Predicated region
        $region97: #{tpu_custom_call.1} parent=87 // pred_check
          %p6944 = pneg %p397
        $region98: #{tpu_custom_call.1} parent=87 // pred_check_branch
          %6946 = sbr.rel (%p6944) target = $region100
        $region99: #{tpu_custom_call.1} parent=87 // pred_region
          %s6947 = sand.u32 %s34, 1
          %s6948 = scalar_lea.sflag [#allocation5], %s6947
          %s6949 = sand.u32 %s382, 1
          %s6950 = smul.addr %s6949, 24
          %s6951 = scalar_lea.vmem [#allocation6], %s6950
          %6952 = dma.done %s6948, 384
        $region100: #{tpu_custom_call.1} parent=87 // pred_fallthru
          _
      $region88: #{tpu_custom_call.1} parent=5 // pred_fallthru
        _
    $region6: #{tpu_custom_call.1} parent=1 // loop_footer
      %s32 = sadd.s32 1, %s28
    $region7: #{tpu_custom_call.1} parent=1 // loop_footer_branch
      %27 = sbr.rel target = $region3
    $region8: #{tpu_custom_call.1} parent=1 // loop_exit
      _
    %6953 = vsyncpa [#allocation3], 1
    %s6954 = scalar_lea.sflag [#allocation3], 1
    %6955 = vsyncpa %s6954, 1
    %6956 = vsyncpa [#allocation5], 1
    %s6957 = scalar_lea.sflag [#allocation5], 1
    %6958 = vsyncpa %s6957, 1

</llo_original>
